<compile_context>
chip_gen: v6e
topology: v6e:2x2x1
jax: 0.10.0
libtpu: 0.0.40
codegen_flags: <defaults>
</compile_context>

<pallas_src>
import functools
import math

import jax
import jax.numpy as jnp
from jax import lax
from jax.experimental import pallas as pl
from jax.experimental.pallas import tpu as pltpu

_SQRT2 = math.sqrt(2.0)


def _gelu(x, approximate=False):
    if approximate:
        # tanh approximation: hits the EUP slot (nearly free on v6e/v7x); small deliberate
        # deviation from exact erf.  Default stays exact erf to match the torch reference.
        return jax.nn.gelu(x, approximate=True)
    return x * 0.5 * (1.0 + lax.erf(x / _SQRT2))


def _round_up(x, m):
    return (x + m - 1) // m * m


def _vmem_capacity_bytes():
    try:
        return int(pltpu.get_tpu_info().vmem_capacity_bytes)
    except Exception:
        return 64 << 20  # conservative (v7x per-TensorCore VMEM)


# ----------------------------------------------------------------------------- kernels


def _ffn_resident_kernel(x_ref, gamma_ref, beta_ref, w1_ref, b1_ref, w2_ref, b2_ref,
                         o_ref, *, approx_gelu):
    """Single grid axis over row tiles; full bf16 weights resident in VMEM."""
    x = x_ref[...].astype(jnp.float32)
    mean = jnp.mean(x, axis=-1, keepdims=True)
    var = jnp.mean(jnp.square(x - mean), axis=-1, keepdims=True)
    ln = (x - mean) * lax.rsqrt(var + 1e-5)
    ln = ln * gamma_ref[...] + beta_ref[...]

    h = jnp.dot(ln.astype(w1_ref.dtype), w1_ref[...], preferred_element_type=jnp.float32)
    h = _gelu(h + b1_ref[...], approximate=approx_gelu)

    out = jnp.dot(h.astype(w2_ref.dtype), w2_ref[...], preferred_element_type=jnp.float32)
    o_ref[...] = (out + b2_ref[...] + x).astype(o_ref.dtype)


def _ffn_stream_kernel(x_ref, gamma_ref, beta_ref, w1_ref, b1_ref, w2_ref, b2_ref,
                       o_ref, ln_ref, *, approx_gelu):
    """grid = (row_tiles, d_ff_tiles); k is the innermost ('arbitrary') axis.

    The output block index ignores k -> o_ref (f32) is resident across k and is used
    directly as the accumulator (no separate VMEM scratch accumulator).
    """
    k = pl.program_id(1)

    @pl.when(k == 0)
    def _():
        x = x_ref[...].astype(jnp.float32)
        mean = jnp.mean(x, axis=-1, keepdims=True)
        var = jnp.mean(jnp.square(x - mean), axis=-1, keepdims=True)
        ln = (x - mean) * lax.rsqrt(var + 1e-5)
        ln = ln * gamma_ref[...] + beta_ref[...]
        ln_ref[...] = ln.astype(ln_ref.dtype)
        o_ref[...] = jnp.zeros_like(o_ref)

    h = jnp.dot(ln_ref[...], w1_ref[...], preferred_element_type=jnp.float32)
    h = _gelu(h + b1_ref[...], approximate=approx_gelu)
    o_ref[...] += jnp.dot(h.astype(w2_ref.dtype), w2_ref[...],
                          preferred_element_type=jnp.float32)

    @pl.when(k == pl.num_programs(1) - 1)
    def _():
        o_ref[...] = o_ref[...] + b2_ref[...] + x_ref[...].astype(jnp.float32)


# ----------------------------------------------------------------------------- wrapper


def ffn_forward(x, gamma, beta, w1, b1, w2, b2, *, tm=512, tff=None,
                approx_gelu=False, force_streaming=False):
    """x: (B, S, d_model).  w1: (d_ff, d_model, 1), w2: (d_model, d_ff, 1) (Conv1d weights)."""
    B, S, d_model = x.shape
    d_ff = w1.shape[0]
    assert d_model % 128 == 0, "d_model must be a multiple of 128 (lane width)"

    rows = B * S
    vmem_cap = _vmem_capacity_bytes()
    # Generation-aware budget: ~7/8 of physical VMEM, never above 100 MiB
    # (v5e/v6e: 100 MiB; v7x: ~56 MiB of the 64 MiB per-TensorCore VMEM).
    vmem_budget = min(vmem_cap * 7 // 8, 100 << 20)

    # Row tile: as large as the rows allow (amortizes weight streaming / step overhead),
    # but keep >= 2 row tiles when there is enough work so both v7x TensorCores get tiles.
    tm = min(tm, _round_up(rows, 16))
    if rows >= 512 and _round_up(rows, tm) // tm < 2:
        tm = _round_up((rows + 1) // 2, 16)
    rows_p = _round_up(rows, tm)
    n_rows = rows_p // tm

    x2d = x.reshape(rows, d_model).astype(jnp.float32)
    if rows_p != rows:
        x2d = jnp.pad(x2d, ((0, rows_p - rows), (0, 0)))

    # bf16 weights (MXU fast path, half the VMEM/HBM traffic); f32 accumulation in-kernel.
    # Zero-padding d_ff is exact: padded hidden units are GELU(0 + 0) = 0 and hit zero
    # rows of W2^T, contributing nothing.
    w1_t = jnp.transpose(w1[:, :, 0]).astype(jnp.bfloat16)   # (d_model, d_ff)
    w2_t = jnp.transpose(w2[:, :, 0]).astype(jnp.bfloat16)   # (d_ff, d_model)
    b1_f = b1.astype(jnp.float32).reshape(1, d_ff)
    gamma2 = gamma.astype(jnp.float32).reshape(1, d_model)
    beta2 = beta.astype(jnp.float32).reshape(1, d_model)
    b2_f = b2.astype(jnp.float32).reshape(1, d_model)

    def pad_ff(d_ff_pad):
        if d_ff_pad == d_ff:
            return w1_t, w2_t, b1_f
        return (jnp.pad(w1_t, ((0, 0), (0, d_ff_pad - d_ff))),
                jnp.pad(w2_t, ((0, d_ff_pad - d_ff), (0, 0))),
                jnp.pad(b1_f, ((0, 0), (0, d_ff_pad - d_ff))))

    # ---------------- resident-weight feasibility (budget with double-buffered weights,
    # so the pipeline_mode=Buffered(1) fallback still fits) ----------------
    d_ff_res = _round_up(d_ff, 128)
    weight_bytes_res = 2 * d_model * d_ff_res * 2                     # bf16 W1^T + W2^T
    act_bytes = (2 * tm * d_model * 4      # x tiles (double-buffered f32)
                 + 2 * tm * d_model * 4    # out tiles (double-buffered f32)
                 + tm * d_ff_res * 4       # h intermediate (f32)
                 + tm * d_model * 4)       # ln intermediate (f32)
    resident_ok = (not force_streaming) and \
        (2 * weight_bytes_res + act_bytes + (6 << 20) <= vmem_budget)

    if resident_ok:
        w1_p, w2_p, b1_p = pad_ff(d_ff_res)

        cost = pl.CostEstimate(
            flops=int(4 * rows_p * d_model * d_ff_res),
            transcendentals=int(rows_p * d_ff_res),
            bytes_accessed=int(2 * rows_p * d_model * 4               # x in + out
                               + (w1_p.size + w2_p.size) * 2          # weights, once
                               + (3 * d_model + d_ff_res) * 4),
        )

        def run(single_buffer_weights):
            def wspec(shape):
                if single_buffer_weights:
                    return pl.BlockSpec(shape, lambda i: (0, 0),
                                        pipeline_mode=pl.Buffered(1))
                return pl.BlockSpec(shape, lambda i: (0, 0))

            wfactor = 1 if single_buffer_weights else 2
            est = act_bytes + wfactor * weight_bytes_res + (6 << 20)
            vmem_limit = int(min(max(est, 32 << 20), vmem_budget))

            return pl.pallas_call(
                functools.partial(_ffn_resident_kernel, approx_gelu=approx_gelu),
                out_shape=jax.ShapeDtypeStruct((rows_p, d_model), jnp.float32),
                grid_spec=pltpu.PrefetchScalarGridSpec(
                    num_scalar_prefetch=0,
                    grid=(n_rows,),
                    in_specs=[
                        pl.BlockSpec((tm, d_model), lambda i: (i, 0)),   # x rows
                        pl.BlockSpec((1, d_model), lambda i: (0, 0)),    # gamma
                        pl.BlockSpec((1, d_model), lambda i: (0, 0)),    # beta
                        wspec((d_model, d_ff_res)),                      # W1^T (resident)
                        pl.BlockSpec((1, d_ff_res), lambda i: (0, 0)),   # b1
                        wspec((d_ff_res, d_model)),                      # W2^T (resident)
                        pl.BlockSpec((1, d_model), lambda i: (0, 0)),    # b2
                    ],
                    out_specs=pl.BlockSpec((tm, d_model), lambda i: (i, 0)),
                ),
                compiler_params=pltpu.CompilerParams(
                    dimension_semantics=("parallel",),
                    vmem_limit_bytes=vmem_limit,
                ),
                cost_estimate=cost,
            )(x2d, gamma2, beta2, w1_p, b1_p, w2_p, b2_f)

        try:
            out2d = run(True)          # single-buffered resident weights
        except Exception:
            out2d = run(False)         # fallback: plain (double-buffered) BlockSpecs

    else:
        # ---------------- streaming path: tile d_ff ----------------
        if tff is None:
            def stream_bytes(t):
                return (2 * 2 * d_model * t * 2    # W1^T/W2^T slices, bf16, double-buffered
                        + 2 * tm * d_model * 4     # x tiles
                        + 2 * tm * d_model * 4     # out tiles
                        + tm * t * 4               # h intermediate
                        + tm * d_model * 2         # ln scratch (bf16)
                        + (6 << 20))
            tff = min(_round_up(d_ff, 256), 1024)
            while tff > 256 and stream_bytes(tff) > vmem_budget:
                tff -= 256
        tff = max(128, min(_round_up(tff, 128), _round_up(d_ff, 128)))
        d_ff_p = _round_up(d_ff, tff)
        n_ff = d_ff_p // tff
        w1_p, w2_p, b1_p = pad_ff(d_ff_p)

        est = (2 * 2 * d_model * tff * 2 + 4 * tm * d_model * 4
               + tm * tff * 4 + tm * d_model * 2 + (6 << 20))
        vmem_limit = int(min(max(est, 32 << 20), vmem_budget))

        cost = pl.CostEstimate(
            flops=int(4 * rows_p * d_model * d_ff_p),
            transcendentals=int(rows_p * d_ff_p),
            bytes_accessed=int(2 * rows_p * d_model * 4
                               + n_rows * (w1_p.size + w2_p.size) * 2   # re-streamed weights
                               + (3 * d_model + d_ff_p) * 4),
        )

        out2d = pl.pallas_call(
            functools.partial(_ffn_stream_kernel, approx_gelu=approx_gelu),
            out_shape=jax.ShapeDtypeStruct((rows_p, d_model), jnp.float32),
            grid_spec=pltpu.PrefetchScalarGridSpec(
                num_scalar_prefetch=0,
                grid=(n_rows, n_ff),
                in_specs=[
                    pl.BlockSpec((tm, d_model), lambda i, k: (i, 0)),    # x rows
                    pl.BlockSpec((1, d_model), lambda i, k: (0, 0)),     # gamma
                    pl.BlockSpec((1, d_model), lambda i, k: (0, 0)),     # beta
                    pl.BlockSpec((d_model, tff), lambda i, k: (0, k)),   # W1^T slice
                    pl.BlockSpec((1, tff), lambda i, k: (0, k)),         # b1 slice
                    pl.BlockSpec((tff, d_model), lambda i, k: (k, 0)),   # W2^T slice
                    pl.BlockSpec((1, d_model), lambda i, k: (0, 0)),     # b2
                ],
                out_specs=pl.BlockSpec((tm, d_model), lambda i, k: (i, 0)),
                scratch_shapes=[
                    pltpu.VMEM((tm, d_model), jnp.bfloat16),   # LayerNorm stash
                ],
            ),
            compiler_params=pltpu.CompilerParams(
                dimension_semantics=("parallel", "arbitrary"),
                vmem_limit_bytes=vmem_limit,
            ),
            cost_estimate=cost,
        )(x2d, gamma2, beta2, w1_p, b1_p, w2_p, b2_f)

    return out2d[:rows].reshape(B, S, d_model).astype(x.dtype)


# ----------------------------------------------------------------------------- reference


def ffn_reference(x, gamma, beta, w1, b1, w2, b2):
    """Pure-JAX f32 reference matching the PyTorch forward (eval mode)."""
    xf = x.astype(jnp.float32)
    mean = jnp.mean(xf, axis=-1, keepdims=True)
    var = jnp.mean(jnp.square(xf - mean), axis=-1, keepdims=True)
    ln = (xf - mean) / jnp.sqrt(var + 1e-5) * gamma + beta
    h = jnp.einsum('bsd,fd->bsf', ln, w1[:, :, 0]) + b1
    h = h * 0.5 * (1.0 + lax.erf(h / _SQRT2))
    out = jnp.einsum('bsf,df->bsd', h, w2[:, :, 0]) + b2
    return (xf + out).astype(x.dtype)


if __name__ == "__main__":
    # Small shapes consistent with the module's forward: x is (batch, seq, d_model).
    B, S = 2, 192
    d_model, d_ff = 256, 512

    key = jax.random.PRNGKey(0)
    kx, k1, k2, k3, k4 = jax.random.split(key, 5)

    x = jax.random.normal(kx, (B, S, d_model), dtype=jnp.float32)

    # Deterministic parameter init (Conv1d-style shapes: (out, in, 1))
    w1 = jax.random.normal(k1, (d_ff, d_model, 1), dtype=jnp.float32) * (1.0 / math.sqrt(d_model))
    b1 = jax.random.normal(k2, (d_ff,), dtype=jnp.float32) * 0.01
    w2 = jax.random.normal(k3, (d_model, d_ff, 1), dtype=jnp.float32) * (1.0 / math.sqrt(d_ff))
    b2 = jax.random.normal(k4, (d_model,), dtype=jnp.float32) * 0.01
    gamma = jnp.ones((d_model,), dtype=jnp.float32)
    beta = jnp.zeros((d_model,), dtype=jnp.float32)

    ref = ffn_reference(x, gamma, beta, w1, b1, w2, b2)

    # 1) resident-weight fast path (the common configuration)
    out = ffn_forward(x, gamma, beta, w1, b1, w2, b2)
    out = jax.block_until_ready(out)
    assert out.shape == (B, S, d_model)
    max_err = jnp.max(jnp.abs(out - ref))
    assert jnp.allclose(out, ref, atol=2e-2, rtol=2e-2), f"resident max abs err {max_err}"

    # 2) streaming path (d_ff tiled; output block used as the accumulator)
    out_s = ffn_forward(x, gamma, beta, w1, b1, w2, b2, force_streaming=True, tff=256)
    out_s = jax.block_until_ready(out_s)
    max_err_s = jnp.max(jnp.abs(out_s - ref))
    assert jnp.allclose(out_s, ref, atol=2e-2, rtol=2e-2), f"stream max abs err {max_err_s}"

    print("KERNEL_OK")
</pallas_src>

<mosaic_0001>
module attributes {stable_mosaic.version = 11 : i64} {
  func.func @_ffn_resident_kernel(%arg0: i32, %arg1: memref<384x256xf32, #tpu.memory_space<vmem>>, %arg2: memref<1x256xf32, #tpu.memory_space<vmem>>, %arg3: memref<1x256xf32, #tpu.memory_space<vmem>>, %arg4: memref<256x512xbf16, #tpu.memory_space<vmem>>, %arg5: memref<1x512xf32, #tpu.memory_space<vmem>>, %arg6: memref<512x256xbf16, #tpu.memory_space<vmem>>, %arg7: memref<1x256xf32, #tpu.memory_space<vmem>>, %arg8: memref<384x256xf32, #tpu.memory_space<vmem>>) attributes {dimension_semantics = [#tpu.dimension_semantics<parallel>], iteration_bounds = array<i64: 1>, scalar_prefetch = 0 : i64, scratch_operands = 0 : i64, tpu.core_type = #tpu.core_type<tc>, window_params = [{transform_indices = @transform_0, window_bounds = array<i64: 384, 256>}, {pipeline_mode = #tpu.pipeline_mode<synchronous>, transform_indices = @transform_1, window_bounds = array<i64: 1, 256>}, {pipeline_mode = #tpu.pipeline_mode<synchronous>, transform_indices = @transform_2, window_bounds = array<i64: 1, 256>}, {pipeline_mode = #tpu.pipeline_mode<synchronous>, transform_indices = @transform_3, window_bounds = array<i64: 256, 512>}, {pipeline_mode = #tpu.pipeline_mode<synchronous>, transform_indices = @transform_4, window_bounds = array<i64: 1, 512>}, {pipeline_mode = #tpu.pipeline_mode<synchronous>, transform_indices = @transform_5, window_bounds = array<i64: 512, 256>}, {pipeline_mode = #tpu.pipeline_mode<synchronous>, transform_indices = @transform_6, window_bounds = array<i64: 1, 256>}, {transform_indices = @transform_7, window_bounds = array<i64: 384, 256>}]} {
    %c0 = arith.constant 0 : index
    %c0_0 = arith.constant 0 : index
    %0 = vector.load %arg1[%c0, %c0_0] : memref<384x256xf32, #tpu.memory_space<vmem>>, vector<384x256xf32>
    %cst = arith.constant dense<0.000000e+00> : vector<384xf32>
    %1 = vector.multi_reduction <add>, %0, %cst [1] : vector<384x256xf32> to vector<384xf32>
    %2 = vector.shape_cast %1 : vector<384xf32> to vector<384x1xf32>
    %cst_1 = arith.constant 2.560000e+02 : f32
    %3 = vector.broadcast %cst_1 : f32 to vector<384x1xf32>
    %4 = arith.divf %2, %3 : vector<384x1xf32>
    %5 = vector.broadcast %4 : vector<384x1xf32> to vector<384x256xf32>
    %6 = arith.subf %0, %5 : vector<384x256xf32>
    %7 = arith.mulf %6, %6 : vector<384x256xf32>
    %cst_2 = arith.constant dense<0.000000e+00> : vector<384xf32>
    %8 = vector.multi_reduction <add>, %7, %cst_2 [1] : vector<384x256xf32> to vector<384xf32>
    %9 = vector.shape_cast %8 : vector<384xf32> to vector<384x1xf32>
    %cst_3 = arith.constant 2.560000e+02 : f32
    %10 = vector.broadcast %cst_3 : f32 to vector<384x1xf32>
    %11 = arith.divf %9, %10 : vector<384x1xf32>
    %12 = vector.broadcast %4 : vector<384x1xf32> to vector<384x256xf32>
    %13 = arith.subf %0, %12 : vector<384x256xf32>
    %cst_4 = arith.constant 9.99999974E-6 : f32
    %14 = vector.broadcast %cst_4 : f32 to vector<384x1xf32>
    %15 = arith.addf %11, %14 : vector<384x1xf32>
    %16 = math.rsqrt %15 : vector<384x1xf32>
    %17 = vector.broadcast %16 : vector<384x1xf32> to vector<384x256xf32>
    %18 = arith.mulf %13, %17 : vector<384x256xf32>
    %c0_5 = arith.constant 0 : index
    %c0_6 = arith.constant 0 : index
    %19 = vector.load %arg2[%c0_5, %c0_6] : memref<1x256xf32, #tpu.memory_space<vmem>>, vector<1x256xf32>
    %20 = vector.broadcast %19 : vector<1x256xf32> to vector<384x256xf32>
    %21 = arith.mulf %18, %20 : vector<384x256xf32>
    %c0_7 = arith.constant 0 : index
    %c0_8 = arith.constant 0 : index
    %22 = vector.load %arg3[%c0_7, %c0_8] : memref<1x256xf32, #tpu.memory_space<vmem>>, vector<1x256xf32>
    %23 = vector.broadcast %22 : vector<1x256xf32> to vector<384x256xf32>
    %24 = arith.addf %21, %23 : vector<384x256xf32>
    %25 = arith.truncf %24 : vector<384x256xf32> to vector<384x256xbf16>
    %c0_9 = arith.constant 0 : index
    %c0_10 = arith.constant 0 : index
    %26 = vector.load %arg4[%c0_9, %c0_10] : memref<256x512xbf16, #tpu.memory_space<vmem>>, vector<256x512xbf16>
    %cst_11 = arith.constant dense<0.000000e+00> : vector<384x512xf32>
    %27 = tpu.matmul %25, %26, %cst_11 {dimension_numbers = #tpu.dot_dimension_numbers<[1], [0], [0], [1], [0, 0, 1, 1], [], []>} : vector<384x256xbf16>, vector<256x512xbf16>, vector<384x512xf32> -> vector<384x512xf32>
    %c0_12 = arith.constant 0 : index
    %c0_13 = arith.constant 0 : index
    %28 = vector.load %arg5[%c0_12, %c0_13] : memref<1x512xf32, #tpu.memory_space<vmem>>, vector<1x512xf32>
    %29 = vector.broadcast %28 : vector<1x512xf32> to vector<384x512xf32>
    %30 = arith.addf %27, %29 : vector<384x512xf32>
    %cst_14 = arith.constant 5.000000e-01 : f32
    %31 = vector.broadcast %cst_14 : f32 to vector<384x512xf32>
    %32 = arith.mulf %30, %31 : vector<384x512xf32>
    %cst_15 = arith.constant 1.41421354 : f32
    %33 = vector.broadcast %cst_15 : f32 to vector<384x512xf32>
    %34 = arith.divf %30, %33 : vector<384x512xf32>
    %35 = math.erf %34 : vector<384x512xf32>
    %cst_16 = arith.constant 1.000000e+00 : f32
    %36 = vector.broadcast %cst_16 : f32 to vector<384x512xf32>
    %37 = arith.addf %36, %35 : vector<384x512xf32>
    %38 = arith.mulf %32, %37 : vector<384x512xf32>
    %39 = arith.truncf %38 : vector<384x512xf32> to vector<384x512xbf16>
    %c0_17 = arith.constant 0 : index
    %c0_18 = arith.constant 0 : index
    %40 = vector.load %arg6[%c0_17, %c0_18] : memref<512x256xbf16, #tpu.memory_space<vmem>>, vector<512x256xbf16>
    %cst_19 = arith.constant dense<0.000000e+00> : vector<384x256xf32>
    %41 = tpu.matmul %39, %40, %cst_19 {dimension_numbers = #tpu.dot_dimension_numbers<[1], [0], [0], [1], [0, 0, 1, 1], [], []>} : vector<384x512xbf16>, vector<512x256xbf16>, vector<384x256xf32> -> vector<384x256xf32>
    %c0_20 = arith.constant 0 : index
    %c0_21 = arith.constant 0 : index
    %42 = vector.load %arg7[%c0_20, %c0_21] : memref<1x256xf32, #tpu.memory_space<vmem>>, vector<1x256xf32>
    %43 = vector.broadcast %42 : vector<1x256xf32> to vector<384x256xf32>
    %44 = arith.addf %41, %43 : vector<384x256xf32>
    %45 = arith.addf %44, %0 : vector<384x256xf32>
    %c0_22 = arith.constant 0 : index
    %c0_23 = arith.constant 0 : index
    %46 = vector.load %arg8[%c0_22, %c0_23] : memref<384x256xf32, #tpu.memory_space<vmem>>, vector<384x256xf32>
    tpu.vector_store %arg8[%c0_22, %c0_23], %45 {strides = array<i32>} : memref<384x256xf32, #tpu.memory_space<vmem>>, vector<384x256xf32>,
    return
  }
  func.func @transform_0(%arg0: i32) -> (i32, i32) {
    %c0_i32 = arith.constant 0 : i32
    %c0_i32_0 = arith.constant 0 : i32
    return %arg0, %c0_i32 : i32, i32
  }
  func.func @transform_1(%arg0: i32) -> (i32, i32) {
    %c0_i32 = arith.constant 0 : i32
    %c0_i32_0 = arith.constant 0 : i32
    %c0_i32_1 = arith.constant 0 : i32
    return %c0_i32, %c0_i32_0 : i32, i32
  }
  func.func @transform_2(%arg0: i32) -> (i32, i32) {
    %c0_i32 = arith.constant 0 : i32
    %c0_i32_0 = arith.constant 0 : i32
    %c0_i32_1 = arith.constant 0 : i32
    return %c0_i32, %c0_i32_0 : i32, i32
  }
  func.func @transform_3(%arg0: i32) -> (i32, i32) {
    %c0_i32 = arith.constant 0 : i32
    %c0_i32_0 = arith.constant 0 : i32
    %c0_i32_1 = arith.constant 0 : i32
    return %c0_i32, %c0_i32_0 : i32, i32
  }
  func.func @transform_4(%arg0: i32) -> (i32, i32) {
    %c0_i32 = arith.constant 0 : i32
    %c0_i32_0 = arith.constant 0 : i32
    %c0_i32_1 = arith.constant 0 : i32
    return %c0_i32, %c0_i32_0 : i32, i32
  }
  func.func @transform_5(%arg0: i32) -> (i32, i32) {
    %c0_i32 = arith.constant 0 : i32
    %c0_i32_0 = arith.constant 0 : i32
    %c0_i32_1 = arith.constant 0 : i32
    return %c0_i32, %c0_i32_0 : i32, i32
  }
  func.func @transform_6(%arg0: i32) -> (i32, i32) {
    %c0_i32 = arith.constant 0 : i32
    %c0_i32_0 = arith.constant 0 : i32
    %c0_i32_1 = arith.constant 0 : i32
    return %c0_i32, %c0_i32_0 : i32, i32
  }
  func.func @transform_7(%arg0: i32) -> (i32, i32) {
    %c0_i32 = arith.constant 0 : i32
    %c0_i32_0 = arith.constant 0 : i32
    return %arg0, %c0_i32 : i32, i32
  }
}

module attributes {stable_mosaic.version = 11 : i64} {
  func.func @_ffn_resident_kernel(%arg0: i32, %arg1: memref<384x256xf32, #tpu.memory_space<vmem>>, %arg2: memref<1x256xf32, #tpu.memory_space<vmem>>, %arg3: memref<1x256xf32, #tpu.memory_space<vmem>>, %arg4: memref<256x512xbf16, #tpu.memory_space<vmem>>, %arg5: memref<1x512xf32, #tpu.memory_space<vmem>>, %arg6: memref<512x256xbf16, #tpu.memory_space<vmem>>, %arg7: memref<1x256xf32, #tpu.memory_space<vmem>>, %arg8: memref<384x256xf32, #tpu.memory_space<vmem>>) attributes {dimension_semantics = [#tpu.dimension_semantics<parallel>], iteration_bounds = array<i64: 1>, scalar_prefetch = 0 : i64, scratch_operands = 0 : i64, tpu.core_type = #tpu.core_type<tc>, window_params = [{transform_indices = @transform_0, window_bounds = array<i64: 384, 256>}, {pipeline_mode = #tpu.pipeline_mode<synchronous>, transform_indices = @transform_1, window_bounds = array<i64: 1, 256>}, {pipeline_mode = #tpu.pipeline_mode<synchronous>, transform_indices = @transform_2, window_bounds = array<i64: 1, 256>}, {pipeline_mode = #tpu.pipeline_mode<synchronous>, transform_indices = @transform_3, window_bounds = array<i64: 256, 512>}, {pipeline_mode = #tpu.pipeline_mode<synchronous>, transform_indices = @transform_4, window_bounds = array<i64: 1, 512>}, {pipeline_mode = #tpu.pipeline_mode<synchronous>, transform_indices = @transform_5, window_bounds = array<i64: 512, 256>}, {pipeline_mode = #tpu.pipeline_mode<synchronous>, transform_indices = @transform_6, window_bounds = array<i64: 1, 256>}, {transform_indices = @transform_7, window_bounds = array<i64: 384, 256>}]} {
    %c0 = arith.constant 0 : index
    %c0_0 = arith.constant 0 : index
    %0 = vector.load %arg1[%c0, %c0_0] : memref<384x256xf32, #tpu.memory_space<vmem>>, vector<384x256xf32>
    %cst = arith.constant dense<0.000000e+00> : vector<384xf32>
    %1 = vector.multi_reduction <add>, %0, %cst [1] : vector<384x256xf32> to vector<384xf32>
    %2 = vector.shape_cast %1 : vector<384xf32> to vector<384x1xf32>
    %cst_1 = arith.constant 2.560000e+02 : f32
    %3 = vector.broadcast %cst_1 : f32 to vector<384x1xf32>
    %4 = arith.divf %2, %3 : vector<384x1xf32>
    %5 = vector.broadcast %4 : vector<384x1xf32> to vector<384x256xf32>
    %6 = arith.subf %0, %5 : vector<384x256xf32>
    %7 = arith.mulf %6, %6 : vector<384x256xf32>
    %cst_2 = arith.constant dense<0.000000e+00> : vector<384xf32>
    %8 = vector.multi_reduction <add>, %7, %cst_2 [1] : vector<384x256xf32> to vector<384xf32>
    %9 = vector.shape_cast %8 : vector<384xf32> to vector<384x1xf32>
    %cst_3 = arith.constant 2.560000e+02 : f32
    %10 = vector.broadcast %cst_3 : f32 to vector<384x1xf32>
    %11 = arith.divf %9, %10 : vector<384x1xf32>
    %12 = vector.broadcast %4 : vector<384x1xf32> to vector<384x256xf32>
    %13 = arith.subf %0, %12 : vector<384x256xf32>
    %cst_4 = arith.constant 9.99999974E-6 : f32
    %14 = vector.broadcast %cst_4 : f32 to vector<384x1xf32>
    %15 = arith.addf %11, %14 : vector<384x1xf32>
    %16 = math.rsqrt %15 : vector<384x1xf32>
    %17 = vector.broadcast %16 : vector<384x1xf32> to vector<384x256xf32>
    %18 = arith.mulf %13, %17 : vector<384x256xf32>
    %c0_5 = arith.constant 0 : index
    %c0_6 = arith.constant 0 : index
    %19 = vector.load %arg2[%c0_5, %c0_6] : memref<1x256xf32, #tpu.memory_space<vmem>>, vector<1x256xf32>
    %20 = vector.broadcast %19 : vector<1x256xf32> to vector<384x256xf32>
    %21 = arith.mulf %18, %20 : vector<384x256xf32>
    %c0_7 = arith.constant 0 : index
    %c0_8 = arith.constant 0 : index
    %22 = vector.load %arg3[%c0_7, %c0_8] : memref<1x256xf32, #tpu.memory_space<vmem>>, vector<1x256xf32>
    %23 = vector.broadcast %22 : vector<1x256xf32> to vector<384x256xf32>
    %24 = arith.addf %21, %23 : vector<384x256xf32>
    %25 = arith.truncf %24 : vector<384x256xf32> to vector<384x256xbf16>
    %c0_9 = arith.constant 0 : index
    %c0_10 = arith.constant 0 : index
    %26 = vector.load %arg4[%c0_9, %c0_10] : memref<256x512xbf16, #tpu.memory_space<vmem>>, vector<256x512xbf16>
    %cst_11 = arith.constant dense<0.000000e+00> : vector<384x512xf32>
    %27 = tpu.matmul %25, %26, %cst_11 {dimension_numbers = #tpu.dot_dimension_numbers<[1], [0], [0], [1], [0, 0, 1, 1], [], []>} : vector<384x256xbf16>, vector<256x512xbf16>, vector<384x512xf32> -> vector<384x512xf32>
    %c0_12 = arith.constant 0 : index
    %c0_13 = arith.constant 0 : index
    %28 = vector.load %arg5[%c0_12, %c0_13] : memref<1x512xf32, #tpu.memory_space<vmem>>, vector<1x512xf32>
    %29 = vector.broadcast %28 : vector<1x512xf32> to vector<384x512xf32>
    %30 = arith.addf %27, %29 : vector<384x512xf32>
    %cst_14 = arith.constant 5.000000e-01 : f32
    %31 = vector.broadcast %cst_14 : f32 to vector<384x512xf32>
    %32 = arith.mulf %30, %31 : vector<384x512xf32>
    %cst_15 = arith.constant 1.41421354 : f32
    %33 = vector.broadcast %cst_15 : f32 to vector<384x512xf32>
    %34 = arith.divf %30, %33 : vector<384x512xf32>
    %35 = math.erf %34 : vector<384x512xf32>
    %cst_16 = arith.constant 1.000000e+00 : f32
    %36 = vector.broadcast %cst_16 : f32 to vector<384x512xf32>
    %37 = arith.addf %36, %35 : vector<384x512xf32>
    %38 = arith.mulf %32, %37 : vector<384x512xf32>
    %39 = arith.truncf %38 : vector<384x512xf32> to vector<384x512xbf16>
    %c0_17 = arith.constant 0 : index
    %c0_18 = arith.constant 0 : index
    %40 = vector.load %arg6[%c0_17, %c0_18] : memref<512x256xbf16, #tpu.memory_space<vmem>>, vector<512x256xbf16>
    %cst_19 = arith.constant dense<0.000000e+00> : vector<384x256xf32>
    %41 = tpu.matmul %39, %40, %cst_19 {dimension_numbers = #tpu.dot_dimension_numbers<[1], [0], [0], [1], [0, 0, 1, 1], [], []>} : vector<384x512xbf16>, vector<512x256xbf16>, vector<384x256xf32> -> vector<384x256xf32>
    %c0_20 = arith.constant 0 : index
    %c0_21 = arith.constant 0 : index
    %42 = vector.load %arg7[%c0_20, %c0_21] : memref<1x256xf32, #tpu.memory_space<vmem>>, vector<1x256xf32>
    %43 = vector.broadcast %42 : vector<1x256xf32> to vector<384x256xf32>
    %44 = arith.addf %41, %43 : vector<384x256xf32>
    %45 = arith.addf %44, %0 : vector<384x256xf32>
    %c0_22 = arith.constant 0 : index
    %c0_23 = arith.constant 0 : index
    %46 = vector.load %arg8[%c0_22, %c0_23] : memref<384x256xf32, #tpu.memory_space<vmem>>, vector<384x256xf32>
    tpu.vector_store %arg8[%c0_22, %c0_23], %45 {strides = array<i32>} : memref<384x256xf32, #tpu.memory_space<vmem>>, vector<384x256xf32>,
    return
  }
  func.func @transform_0(%arg0: i32) -> (i32, i32) {
    %c0_i32 = arith.constant 0 : i32
    %c0_i32_0 = arith.constant 0 : i32
    return %arg0, %c0_i32 : i32, i32
  }
  func.func @transform_1(%arg0: i32) -> (i32, i32) {
    %c0_i32 = arith.constant 0 : i32
    %c0_i32_0 = arith.constant 0 : i32
    %c0_i32_1 = arith.constant 0 : i32
    return %c0_i32, %c0_i32_0 : i32, i32
  }
  func.func @transform_2(%arg0: i32) -> (i32, i32) {
    %c0_i32 = arith.constant 0 : i32
    %c0_i32_0 = arith.constant 0 : i32
    %c0_i32_1 = arith.constant 0 : i32
    return %c0_i32, %c0_i32_0 : i32, i32
  }
  func.func @transform_3(%arg0: i32) -> (i32, i32) {
    %c0_i32 = arith.constant 0 : i32
    %c0_i32_0 = arith.constant 0 : i32
    %c0_i32_1 = arith.constant 0 : i32
    return %c0_i32, %c0_i32_0 : i32, i32
  }
  func.func @transform_4(%arg0: i32) -> (i32, i32) {
    %c0_i32 = arith.constant 0 : i32
    %c0_i32_0 = arith.constant 0 : i32
    %c0_i32_1 = arith.constant 0 : i32
    return %c0_i32, %c0_i32_0 : i32, i32
  }
  func.func @transform_5(%arg0: i32) -> (i32, i32) {
    %c0_i32 = arith.constant 0 : i32
    %c0_i32_0 = arith.constant 0 : i32
    %c0_i32_1 = arith.constant 0 : i32
    return %c0_i32, %c0_i32_0 : i32, i32
  }
  func.func @transform_6(%arg0: i32) -> (i32, i32) {
    %c0_i32 = arith.constant 0 : i32
    %c0_i32_0 = arith.constant 0 : i32
    %c0_i32_1 = arith.constant 0 : i32
    return %c0_i32, %c0_i32_0 : i32, i32
  }
  func.func @transform_7(%arg0: i32) -> (i32, i32) {
    %c0_i32 = arith.constant 0 : i32
    %c0_i32_0 = arith.constant 0 : i32
    return %arg0, %c0_i32 : i32, i32
  }
}

</mosaic_0001>

<llo_original>
// kernel: tpu_custom_call.1
$region0: #{tpu_custom_call.1}
  #allocation0 [shape = 'u32[]', space=smem, size = 0x4, offset = 0x4, fixed_abs, tag = 'smem constant byte address 0x4 - core index']
  #allocation1 [shape = 'u32[144,128]{1,0:T(1,128)}', space=vmem, size = 0x12000, scoped, tag = 'internal scratch']
  %s0 = inlined_call_operand.hbm [shape: f32[384,256], index: 0, kind: input, shape index: {}]
  %s1 = inlined_call_operand.hbm [shape: f32[1,256], index: 1, kind: input, shape index: {}]
  %s2 = inlined_call_operand.vmem [shape: f32[1,256], index: 2, kind: input, shape index: {}]
  %s3 = inlined_call_operand.hbm [shape: bf16[256,512], index: 3, kind: input, shape index: {}]
  %s4 = inlined_call_operand.vmem [shape: f32[1,512], index: 4, kind: input, shape index: {}]
  %s5 = inlined_call_operand.hbm [shape: bf16[512,256], index: 5, kind: input, shape index: {}]
  %s6 = inlined_call_operand.vmem [shape: f32[1,256], index: 6, kind: input, shape index: {}]
  %s7 = inlined_call_operand.hbm [shape: f32[384,256], index: 7, kind: output, shape index: {}]
  %s8 = sld [smem:[#allocation0]]
  $region54: #{tpu_custom_call.1} parent=0
    _
  %s10 = ssub.s32 1, %s8
  %s11 = scalar_select 0, %s10, %s8
  $region1: #{tpu_custom_call.1} parent=0
    #allocation2 [shape = 'u8[393216]{0}', space=vmem, size = 0x60000, scoped, tag = 'input window, operand 0, single buffered']
    #allocation3 [shape = 's32[1]{0}', space=sflag, size = 0x4, scoped, tag = 'scoped memory for tpu_custom_call.1']
    #allocation4 [shape = 's32[1]{0}', space=sflag, size = 0x4, scoped, tag = 'scoped memory for tpu_custom_call.1']
    #allocation5 [shape = 'u8[1024]{0}', space=vmem, size = 0x400, scoped, tag = 'input window, operand 1, single buffered']
    #allocation6 [shape = 's32[1]{0}', space=sflag, size = 0x4, scoped, tag = 'scoped memory for tpu_custom_call.1']
    #allocation7 [shape = 'u8[262144]{0}', space=vmem, size = 0x40000, scoped, tag = 'input window, operand 3, single buffered']
    #allocation8 [shape = 'u8[262144]{0}', space=vmem, size = 0x40000, scoped, tag = 'input window, operand 5, single buffered']
    #allocation9 [shape = 's32[1]{0}', space=sflag, size = 0x4, scoped, tag = 'scoped memory for tpu_custom_call.1']
    #allocation10 [shape = 'u8[393216]{0}', space=vmem, size = 0x60000, scoped, tag = 'output window, operand 0, single buffered']
    %12 = vsyncpa [#allocation3], 0
    %13 = vsyncpa [#allocation6], 0
    %14 = vsyncpa [#allocation9], 0
    %15 = vsyncpa [#allocation4], 0
    // Predicated region
    $region2: #{tpu_custom_call.1} parent=1 // pred_check
      _
    $region3: #{tpu_custom_call.1} parent=1 // pred_check_branch
      %17 = sbr.rel (0) target = $region5
    $region4: #{tpu_custom_call.1} parent=1 // pred_region
      %s19 = ssub.s32 12288, 12288
      %20 = vsyncadd [#allocation3], %s19
      %s21 = sshll.u32 [#allocation2], 4
      %s22 = int_to_ptr.vmem [resolvable:$true] %s21
      %27 = dma.hbm_to_vmem [thread:$0]  %s0, 12288, %s22, [#allocation3], 256, 256, 16
    $region5: #{tpu_custom_call.1} parent=1 // pred_fallthru
      _
    // Predicated region
    $region6: #{tpu_custom_call.1} parent=1 // pred_check
      _
    $region7: #{tpu_custom_call.1} parent=1 // pred_check_branch
      %29 = sbr.rel (0) target = $region9
    $region8: #{tpu_custom_call.1} parent=1 // pred_region
      %s31 = ssub.s32 32, 32
      %32 = vsyncadd [#allocation6], %s31
      %s34 = sshll.u32 [#allocation5], 4
      %s35 = int_to_ptr.vmem [resolvable:$true] %s34
      %37 = dma.hbm_to_vmem [thread:$0]  %s1, 32, %s35, [#allocation6]
    $region9: #{tpu_custom_call.1} parent=1 // pred_fallthru
      _
    // Predicated region
    $region10: #{tpu_custom_call.1} parent=1 // pred_check
      _
    $region11: #{tpu_custom_call.1} parent=1 // pred_check_branch
      %39 = sbr.rel (0) target = $region13
    $region12: #{tpu_custom_call.1} parent=1 // pred_region
      _
    $region13: #{tpu_custom_call.1} parent=1 // pred_fallthru
      _
    // Predicated region
    $region14: #{tpu_custom_call.1} parent=1 // pred_check
      _
    $region15: #{tpu_custom_call.1} parent=1 // pred_check_branch
      %41 = sbr.rel (0) target = $region17
    $region16: #{tpu_custom_call.1} parent=1 // pred_region
      %s43 = ssub.s32 8192, 8192
      %44 = vsyncadd [#allocation6], %s43
      %s45 = sshll.u32 [#allocation7], 4
      %s46 = int_to_ptr.vmem [resolvable:$true] %s45
      %51 = dma.hbm_to_vmem [thread:$0]  %s3, 8192, %s46, [#allocation6], 256, 256, 16
    $region17: #{tpu_custom_call.1} parent=1 // pred_fallthru
      _
    // Predicated region
    $region18: #{tpu_custom_call.1} parent=1 // pred_check
      _
    $region19: #{tpu_custom_call.1} parent=1 // pred_check_branch
      %53 = sbr.rel (0) target = $region21
    $region20: #{tpu_custom_call.1} parent=1 // pred_region
      _
    $region21: #{tpu_custom_call.1} parent=1 // pred_fallthru
      _
    // Predicated region
    $region22: #{tpu_custom_call.1} parent=1 // pred_check
      _
    $region23: #{tpu_custom_call.1} parent=1 // pred_check_branch
      %55 = sbr.rel (0) target = $region25
    $region24: #{tpu_custom_call.1} parent=1 // pred_region
      %s57 = ssub.s32 8192, 8192
      %58 = vsyncadd [#allocation9], %s57
      %s59 = sshll.u32 [#allocation8], 4
      %s60 = int_to_ptr.vmem [resolvable:$true] %s59
      %65 = dma.hbm_to_vmem [thread:$0]  %s5, 8192, %s60, [#allocation9], 128, 128, 8
    $region25: #{tpu_custom_call.1} parent=1 // pred_fallthru
      _
    // Predicated region
    $region26: #{tpu_custom_call.1} parent=1 // pred_check
      _
    $region27: #{tpu_custom_call.1} parent=1 // pred_check_branch
      %67 = sbr.rel (0) target = $region29
    $region28: #{tpu_custom_call.1} parent=1 // pred_region
      _
    $region29: #{tpu_custom_call.1} parent=1 // pred_fallthru
      _
    // Predicated region
    $region30: #{tpu_custom_call.1} parent=1 // pred_check
      _
    $region31: #{tpu_custom_call.1} parent=1 // pred_check_branch
      %69 = sbr.rel (0) target = $region33
    $region32: #{tpu_custom_call.1} parent=1 // pred_region
      %70 = dma.done [#allocation3], 12288
    $region33: #{tpu_custom_call.1} parent=1 // pred_fallthru
      _
    // Predicated region
    $region34: #{tpu_custom_call.1} parent=1 // pred_check
      _
    $region35: #{tpu_custom_call.1} parent=1 // pred_check_branch
      %72 = sbr.rel (0) target = $region37
    $region36: #{tpu_custom_call.1} parent=1 // pred_region
      %73 = dma.done [#allocation6], 32
    $region37: #{tpu_custom_call.1} parent=1 // pred_fallthru
      _
    // Predicated region
    $region38: #{tpu_custom_call.1} parent=1 // pred_check
      _
    $region39: #{tpu_custom_call.1} parent=1 // pred_check_branch
      %75 = sbr.rel (0) target = $region41
    $region40: #{tpu_custom_call.1} parent=1 // pred_region
      %76 = dma.done [#allocation6], 8192
    $region41: #{tpu_custom_call.1} parent=1 // pred_fallthru
      _
    // Predicated region
    $region42: #{tpu_custom_call.1} parent=1 // pred_check
      _
    $region43: #{tpu_custom_call.1} parent=1 // pred_check_branch
      %78 = sbr.rel (0) target = $region45
    $region44: #{tpu_custom_call.1} parent=1 // pred_region
      %79 = dma.done [#allocation9], 8192
    $region45: #{tpu_custom_call.1} parent=1 // pred_fallthru
      _
    %v80 = vld [vmem:[#allocation2] sm:$0xff]
    %v81 = vld [vmem:[#allocation2 + $0x8] sm:$0xff]
    %v82 = vld [vmem:[#allocation2 + $0x10] sm:$0xff]
    %v83 = vld [vmem:[#allocation2 + $0x18] sm:$0xff]
    %v84 = vld [vmem:[#allocation2 + $0x20] sm:$0xff]
    %v85 = vld [vmem:[#allocation2 + $0x28] sm:$0xff]
    %v86 = vld [vmem:[#allocation2 + $0x30] sm:$0xff]
    %v87 = vld [vmem:[#allocation2 + $0x38] sm:$0xff]
    %v88 = vld [vmem:[#allocation2 + $0x40] sm:$0xff]
    %v89 = vld [vmem:[#allocation2 + $0x48] sm:$0xff]
    %v90 = vld [vmem:[#allocation2 + $0x50] sm:$0xff]
    %v91 = vld [vmem:[#allocation2 + $0x58] sm:$0xff]
    %v92 = vld [vmem:[#allocation2 + $0x60] sm:$0xff]
    %v93 = vld [vmem:[#allocation2 + $0x68] sm:$0xff]
    %v94 = vld [vmem:[#allocation2 + $0x70] sm:$0xff]
    %v95 = vld [vmem:[#allocation2 + $0x78] sm:$0xff]
    %v96 = vld [vmem:[#allocation2 + $0x80] sm:$0xff]
    %v97 = vld [vmem:[#allocation2 + $0x88] sm:$0xff]
    %v98 = vld [vmem:[#allocation2 + $0x90] sm:$0xff]
    %v99 = vld [vmem:[#allocation2 + $0x98] sm:$0xff]
    %v100 = vld [vmem:[#allocation2 + $0xa0] sm:$0xff]
    %v101 = vld [vmem:[#allocation2 + $0xa8] sm:$0xff]
    %v102 = vld [vmem:[#allocation2 + $0xb0] sm:$0xff]
    %v103 = vld [vmem:[#allocation2 + $0xb8] sm:$0xff]
    %v104 = vld [vmem:[#allocation2 + $0xc0] sm:$0xff]
    %v105 = vld [vmem:[#allocation2 + $0xc8] sm:$0xff]
    %v106 = vld [vmem:[#allocation2 + $0xd0] sm:$0xff]
    %v107 = vld [vmem:[#allocation2 + $0xd8] sm:$0xff]
    %v108 = vld [vmem:[#allocation2 + $0xe0] sm:$0xff]
    %v109 = vld [vmem:[#allocation2 + $0xe8] sm:$0xff]
    %v110 = vld [vmem:[#allocation2 + $0xf0] sm:$0xff]
    %v111 = vld [vmem:[#allocation2 + $0xf8] sm:$0xff]
    %v112 = vld [vmem:[#allocation2 + $0x100] sm:$0xff]
    %v113 = vld [vmem:[#allocation2 + $0x108] sm:$0xff]
    %v114 = vld [vmem:[#allocation2 + $0x110] sm:$0xff]
    %v115 = vld [vmem:[#allocation2 + $0x118] sm:$0xff]
    %v116 = vld [vmem:[#allocation2 + $0x120] sm:$0xff]
    %v117 = vld [vmem:[#allocation2 + $0x128] sm:$0xff]
    %v118 = vld [vmem:[#allocation2 + $0x130] sm:$0xff]
    %v119 = vld [vmem:[#allocation2 + $0x138] sm:$0xff]
    %v120 = vld [vmem:[#allocation2 + $0x140] sm:$0xff]
    %v121 = vld [vmem:[#allocation2 + $0x148] sm:$0xff]
    %v122 = vld [vmem:[#allocation2 + $0x150] sm:$0xff]
    %v123 = vld [vmem:[#allocation2 + $0x158] sm:$0xff]
    %v124 = vld [vmem:[#allocation2 + $0x160] sm:$0xff]
    %v125 = vld [vmem:[#allocation2 + $0x168] sm:$0xff]
    %v126 = vld [vmem:[#allocation2 + $0x170] sm:$0xff]
    %v127 = vld [vmem:[#allocation2 + $0x178] sm:$0xff]
    %v128 = vld [vmem:[#allocation2 + $0x180] sm:$0xff]
    %v129 = vld [vmem:[#allocation2 + $0x188] sm:$0xff]
    %v130 = vld [vmem:[#allocation2 + $0x190] sm:$0xff]
    %v131 = vld [vmem:[#allocation2 + $0x198] sm:$0xff]
    %v132 = vld [vmem:[#allocation2 + $0x1a0] sm:$0xff]
    %v133 = vld [vmem:[#allocation2 + $0x1a8] sm:$0xff]
    %v134 = vld [vmem:[#allocation2 + $0x1b0] sm:$0xff]
    %v135 = vld [vmem:[#allocation2 + $0x1b8] sm:$0xff]
    %v136 = vld [vmem:[#allocation2 + $0x1c0] sm:$0xff]
    %v137 = vld [vmem:[#allocation2 + $0x1c8] sm:$0xff]
    %v138 = vld [vmem:[#allocation2 + $0x1d0] sm:$0xff]
    %v139 = vld [vmem:[#allocation2 + $0x1d8] sm:$0xff]
    %v140 = vld [vmem:[#allocation2 + $0x1e0] sm:$0xff]
    %v141 = vld [vmem:[#allocation2 + $0x1e8] sm:$0xff]
    %v142 = vld [vmem:[#allocation2 + $0x1f0] sm:$0xff]
    %v143 = vld [vmem:[#allocation2 + $0x1f8] sm:$0xff]
    %v144 = vld [vmem:[#allocation2 + $0x200] sm:$0xff]
    %v145 = vld [vmem:[#allocation2 + $0x208] sm:$0xff]
    %v146 = vld [vmem:[#allocation2 + $0x210] sm:$0xff]
    %v147 = vld [vmem:[#allocation2 + $0x218] sm:$0xff]
    %v148 = vld [vmem:[#allocation2 + $0x220] sm:$0xff]
    %v149 = vld [vmem:[#allocation2 + $0x228] sm:$0xff]
    %v150 = vld [vmem:[#allocation2 + $0x230] sm:$0xff]
    %v151 = vld [vmem:[#allocation2 + $0x238] sm:$0xff]
    %v152 = vld [vmem:[#allocation2 + $0x240] sm:$0xff]
    %v153 = vld [vmem:[#allocation2 + $0x248] sm:$0xff]
    %v154 = vld [vmem:[#allocation2 + $0x250] sm:$0xff]
    %v155 = vld [vmem:[#allocation2 + $0x258] sm:$0xff]
    %v156 = vld [vmem:[#allocation2 + $0x260] sm:$0xff]
    %v157 = vld [vmem:[#allocation2 + $0x268] sm:$0xff]
    %v158 = vld [vmem:[#allocation2 + $0x270] sm:$0xff]
    %v159 = vld [vmem:[#allocation2 + $0x278] sm:$0xff]
    %v160 = vld [vmem:[#allocation2 + $0x280] sm:$0xff]
    %v161 = vld [vmem:[#allocation2 + $0x288] sm:$0xff]
    %v162 = vld [vmem:[#allocation2 + $0x290] sm:$0xff]
    %v163 = vld [vmem:[#allocation2 + $0x298] sm:$0xff]
    %v164 = vld [vmem:[#allocation2 + $0x2a0] sm:$0xff]
    %v165 = vld [vmem:[#allocation2 + $0x2a8] sm:$0xff]
    %v166 = vld [vmem:[#allocation2 + $0x2b0] sm:$0xff]
    %v167 = vld [vmem:[#allocation2 + $0x2b8] sm:$0xff]
    %v168 = vld [vmem:[#allocation2 + $0x2c0] sm:$0xff]
    %v169 = vld [vmem:[#allocation2 + $0x2c8] sm:$0xff]
    %v170 = vld [vmem:[#allocation2 + $0x2d0] sm:$0xff]
    %v171 = vld [vmem:[#allocation2 + $0x2d8] sm:$0xff]
    %v172 = vld [vmem:[#allocation2 + $0x2e0] sm:$0xff]
    %v173 = vld [vmem:[#allocation2 + $0x2e8] sm:$0xff]
    %v174 = vld [vmem:[#allocation2 + $0x2f0] sm:$0xff]
    %v175 = vld [vmem:[#allocation2 + $0x2f8] sm:$0xff]
    %v176 = vadd.f32 %v80, %v81
    %177 = vadd.xlane.f32.xlu0 %v176
    %v178 = vpop.xlane.xlu0 %177
    %v179 = vadd.f32 %v82, %v83
    %180 = vadd.xlane.f32.xlu0 %v179
    %v181 = vpop.xlane.xlu0 %180
    %v182 = vadd.f32 %v84, %v85
    %183 = vadd.xlane.f32.xlu0 %v182
    %v184 = vpop.xlane.xlu0 %183
    %v185 = vadd.f32 %v86, %v87
    %186 = vadd.xlane.f32.xlu0 %v185
    %v187 = vpop.xlane.xlu0 %186
    %v188 = vadd.f32 %v88, %v89
    %189 = vadd.xlane.f32.xlu0 %v188
    %v190 = vpop.xlane.xlu0 %189
    %v191 = vadd.f32 %v90, %v91
    %192 = vadd.xlane.f32.xlu0 %v191
    %v193 = vpop.xlane.xlu0 %192
    %v194 = vadd.f32 %v92, %v93
    %195 = vadd.xlane.f32.xlu0 %v194
    %v196 = vpop.xlane.xlu0 %195
    %v197 = vadd.f32 %v94, %v95
    %198 = vadd.xlane.f32.xlu0 %v197
    %v199 = vpop.xlane.xlu0 %198
    %v200 = vadd.f32 %v96, %v97
    %201 = vadd.xlane.f32.xlu0 %v200
    %v202 = vpop.xlane.xlu0 %201
    %v203 = vadd.f32 %v98, %v99
    %204 = vadd.xlane.f32.xlu0 %v203
    %v205 = vpop.xlane.xlu0 %204
    %v206 = vadd.f32 %v100, %v101
    %207 = vadd.xlane.f32.xlu0 %v206
    %v208 = vpop.xlane.xlu0 %207
    %v209 = vadd.f32 %v102, %v103
    %210 = vadd.xlane.f32.xlu0 %v209
    %v211 = vpop.xlane.xlu0 %210
    %v212 = vadd.f32 %v104, %v105
    %213 = vadd.xlane.f32.xlu0 %v212
    %v214 = vpop.xlane.xlu0 %213
    %v215 = vadd.f32 %v106, %v107
    %216 = vadd.xlane.f32.xlu0 %v215
    %v217 = vpop.xlane.xlu0 %216
    %v218 = vadd.f32 %v108, %v109
    %219 = vadd.xlane.f32.xlu0 %v218
    %v220 = vpop.xlane.xlu0 %219
    %v221 = vadd.f32 %v110, %v111
    %222 = vadd.xlane.f32.xlu0 %v221
    %v223 = vpop.xlane.xlu0 %222
    %v224 = vadd.f32 %v112, %v113
    %225 = vadd.xlane.f32.xlu0 %v224
    %v226 = vpop.xlane.xlu0 %225
    %v227 = vadd.f32 %v114, %v115
    %228 = vadd.xlane.f32.xlu0 %v227
    %v229 = vpop.xlane.xlu0 %228
    %v230 = vadd.f32 %v116, %v117
    %231 = vadd.xlane.f32.xlu0 %v230
    %v232 = vpop.xlane.xlu0 %231
    %v233 = vadd.f32 %v118, %v119
    %234 = vadd.xlane.f32.xlu0 %v233
    %v235 = vpop.xlane.xlu0 %234
    %v236 = vadd.f32 %v120, %v121
    %237 = vadd.xlane.f32.xlu0 %v236
    %v238 = vpop.xlane.xlu0 %237
    %v239 = vadd.f32 %v122, %v123
    %240 = vadd.xlane.f32.xlu0 %v239
    %v241 = vpop.xlane.xlu0 %240
    %v242 = vadd.f32 %v124, %v125
    %243 = vadd.xlane.f32.xlu0 %v242
    %v244 = vpop.xlane.xlu0 %243
    %v245 = vadd.f32 %v126, %v127
    %246 = vadd.xlane.f32.xlu0 %v245
    %v247 = vpop.xlane.xlu0 %246
    %v248 = vadd.f32 %v128, %v129
    %249 = vadd.xlane.f32.xlu0 %v248
    %v250 = vpop.xlane.xlu0 %249
    %v251 = vadd.f32 %v130, %v131
    %252 = vadd.xlane.f32.xlu0 %v251
    %v253 = vpop.xlane.xlu0 %252
    %v254 = vadd.f32 %v132, %v133
    %255 = vadd.xlane.f32.xlu0 %v254
    %v256 = vpop.xlane.xlu0 %255
    %v257 = vadd.f32 %v134, %v135
    %258 = vadd.xlane.f32.xlu0 %v257
    %v259 = vpop.xlane.xlu0 %258
    %v260 = vadd.f32 %v136, %v137
    %261 = vadd.xlane.f32.xlu0 %v260
    %v262 = vpop.xlane.xlu0 %261
    %v263 = vadd.f32 %v138, %v139
    %264 = vadd.xlane.f32.xlu0 %v263
    %v265 = vpop.xlane.xlu0 %264
    %v266 = vadd.f32 %v140, %v141
    %267 = vadd.xlane.f32.xlu0 %v266
    %v268 = vpop.xlane.xlu0 %267
    %v269 = vadd.f32 %v142, %v143
    %270 = vadd.xlane.f32.xlu0 %v269
    %v271 = vpop.xlane.xlu0 %270
    %v272 = vadd.f32 %v144, %v145
    %273 = vadd.xlane.f32.xlu0 %v272
    %v274 = vpop.xlane.xlu0 %273
    %v275 = vadd.f32 %v146, %v147
    %276 = vadd.xlane.f32.xlu0 %v275
    %v277 = vpop.xlane.xlu0 %276
    %v278 = vadd.f32 %v148, %v149
    %279 = vadd.xlane.f32.xlu0 %v278
    %v280 = vpop.xlane.xlu0 %279
    %v281 = vadd.f32 %v150, %v151
    %282 = vadd.xlane.f32.xlu0 %v281
    %v283 = vpop.xlane.xlu0 %282
    %v284 = vadd.f32 %v152, %v153
    %285 = vadd.xlane.f32.xlu0 %v284
    %v286 = vpop.xlane.xlu0 %285
    %v287 = vadd.f32 %v154, %v155
    %288 = vadd.xlane.f32.xlu0 %v287
    %v289 = vpop.xlane.xlu0 %288
    %v290 = vadd.f32 %v156, %v157
    %291 = vadd.xlane.f32.xlu0 %v290
    %v292 = vpop.xlane.xlu0 %291
    %v293 = vadd.f32 %v158, %v159
    %294 = vadd.xlane.f32.xlu0 %v293
    %v295 = vpop.xlane.xlu0 %294
    %v296 = vadd.f32 %v160, %v161
    %297 = vadd.xlane.f32.xlu0 %v296
    %v298 = vpop.xlane.xlu0 %297
    %v299 = vadd.f32 %v162, %v163
    %300 = vadd.xlane.f32.xlu0 %v299
    %v301 = vpop.xlane.xlu0 %300
    %v302 = vadd.f32 %v164, %v165
    %303 = vadd.xlane.f32.xlu0 %v302
    %v304 = vpop.xlane.xlu0 %303
    %v305 = vadd.f32 %v166, %v167
    %306 = vadd.xlane.f32.xlu0 %v305
    %v307 = vpop.xlane.xlu0 %306
    %v308 = vadd.f32 %v168, %v169
    %309 = vadd.xlane.f32.xlu0 %v308
    %v310 = vpop.xlane.xlu0 %309
    %v311 = vadd.f32 %v170, %v171
    %312 = vadd.xlane.f32.xlu0 %v311
    %v313 = vpop.xlane.xlu0 %312
    %v314 = vadd.f32 %v172, %v173
    %315 = vadd.xlane.f32.xlu0 %v314
    %v316 = vpop.xlane.xlu0 %315
    %v317 = vadd.f32 %v174, %v175
    %318 = vadd.xlane.f32.xlu0 %v317
    %v319 = vpop.xlane.xlu0 %318
    %v320 = vrcp.pop 256.0
    %v321 = vmul.f32 %v178, %v320
    %v322 = vmul.f32 %v181, %v320
    %v323 = vmul.f32 %v184, %v320
    %v324 = vmul.f32 %v187, %v320
    %v325 = vmul.f32 %v190, %v320
    %v326 = vmul.f32 %v193, %v320
    %v327 = vmul.f32 %v196, %v320
    %v328 = vmul.f32 %v199, %v320
    %v329 = vmul.f32 %v202, %v320
    %v330 = vmul.f32 %v205, %v320
    %v331 = vmul.f32 %v208, %v320
    %v332 = vmul.f32 %v211, %v320
    %v333 = vmul.f32 %v214, %v320
    %v334 = vmul.f32 %v217, %v320
    %v335 = vmul.f32 %v220, %v320
    %v336 = vmul.f32 %v223, %v320
    %v337 = vmul.f32 %v226, %v320
    %v338 = vmul.f32 %v229, %v320
    %v339 = vmul.f32 %v232, %v320
    %v340 = vmul.f32 %v235, %v320
    %v341 = vmul.f32 %v238, %v320
    %v342 = vmul.f32 %v241, %v320
    %v343 = vmul.f32 %v244, %v320
    %v344 = vmul.f32 %v247, %v320
    %v345 = vmul.f32 %v250, %v320
    %v346 = vmul.f32 %v253, %v320
    %v347 = vmul.f32 %v256, %v320
    %v348 = vmul.f32 %v259, %v320
    %v349 = vmul.f32 %v262, %v320
    %v350 = vmul.f32 %v265, %v320
    %v351 = vmul.f32 %v268, %v320
    %v352 = vmul.f32 %v271, %v320
    %v353 = vmul.f32 %v274, %v320
    %v354 = vmul.f32 %v277, %v320
    %v355 = vmul.f32 %v280, %v320
    %v356 = vmul.f32 %v283, %v320
    %v357 = vmul.f32 %v286, %v320
    %v358 = vmul.f32 %v289, %v320
    %v359 = vmul.f32 %v292, %v320
    %v360 = vmul.f32 %v295, %v320
    %v361 = vmul.f32 %v298, %v320
    %v362 = vmul.f32 %v301, %v320
    %v363 = vmul.f32 %v304, %v320
    %v364 = vmul.f32 %v307, %v320
    %v365 = vmul.f32 %v310, %v320
    %v366 = vmul.f32 %v313, %v320
    %v367 = vmul.f32 %v316, %v320
    %v368 = vmul.f32 %v319, %v320
    %v369 = vsub.f32 %v80, %v321
    %v370 = vsub.f32 %v81, %v321
    %v371 = vsub.f32 %v82, %v322
    %v372 = vsub.f32 %v83, %v322
    %v373 = vsub.f32 %v84, %v323
    %v374 = vsub.f32 %v85, %v323
    %v375 = vsub.f32 %v86, %v324
    %v376 = vsub.f32 %v87, %v324
    %v377 = vsub.f32 %v88, %v325
    %v378 = vsub.f32 %v89, %v325
    %v379 = vsub.f32 %v90, %v326
    %v380 = vsub.f32 %v91, %v326
    %v381 = vsub.f32 %v92, %v327
    %v382 = vsub.f32 %v93, %v327
    %v383 = vsub.f32 %v94, %v328
    %v384 = vsub.f32 %v95, %v328
    %v385 = vsub.f32 %v96, %v329
    %v386 = vsub.f32 %v97, %v329
    %v387 = vsub.f32 %v98, %v330
    %v388 = vsub.f32 %v99, %v330
    %v389 = vsub.f32 %v100, %v331
    %v390 = vsub.f32 %v101, %v331
    %v391 = vsub.f32 %v102, %v332
    %v392 = vsub.f32 %v103, %v332
    %v393 = vsub.f32 %v104, %v333
    %v394 = vsub.f32 %v105, %v333
    %v395 = vsub.f32 %v106, %v334
    %v396 = vsub.f32 %v107, %v334
    %v397 = vsub.f32 %v108, %v335
    %v398 = vsub.f32 %v109, %v335
    %v399 = vsub.f32 %v110, %v336
    %v400 = vsub.f32 %v111, %v336
    %v401 = vsub.f32 %v112, %v337
    %v402 = vsub.f32 %v113, %v337
    %v403 = vsub.f32 %v114, %v338
    %v404 = vsub.f32 %v115, %v338
    %v405 = vsub.f32 %v116, %v339
    %v406 = vsub.f32 %v117, %v339
    %v407 = vsub.f32 %v118, %v340
    %v408 = vsub.f32 %v119, %v340
    %v409 = vsub.f32 %v120, %v341
    %v410 = vsub.f32 %v121, %v341
    %v411 = vsub.f32 %v122, %v342
    %v412 = vsub.f32 %v123, %v342
    %v413 = vsub.f32 %v124, %v343
    %v414 = vsub.f32 %v125, %v343
    %v415 = vsub.f32 %v126, %v344
    %v416 = vsub.f32 %v127, %v344
    %v417 = vsub.f32 %v128, %v345
    %v418 = vsub.f32 %v129, %v345
    %v419 = vsub.f32 %v130, %v346
    %v420 = vsub.f32 %v131, %v346
    %v421 = vsub.f32 %v132, %v347
    %v422 = vsub.f32 %v133, %v347
    %v423 = vsub.f32 %v134, %v348
    %v424 = vsub.f32 %v135, %v348
    %v425 = vsub.f32 %v136, %v349
    %v426 = vsub.f32 %v137, %v349
    %v427 = vsub.f32 %v138, %v350
    %v428 = vsub.f32 %v139, %v350
    %v429 = vsub.f32 %v140, %v351
    %v430 = vsub.f32 %v141, %v351
    %v431 = vsub.f32 %v142, %v352
    %v432 = vsub.f32 %v143, %v352
    %v433 = vsub.f32 %v144, %v353
    %v434 = vsub.f32 %v145, %v353
    %v435 = vsub.f32 %v146, %v354
    %v436 = vsub.f32 %v147, %v354
    %v437 = vsub.f32 %v148, %v355
    %v438 = vsub.f32 %v149, %v355
    %v439 = vsub.f32 %v150, %v356
    %v440 = vsub.f32 %v151, %v356
    %v441 = vsub.f32 %v152, %v357
    %v442 = vsub.f32 %v153, %v357
    %v443 = vsub.f32 %v154, %v358
    %v444 = vsub.f32 %v155, %v358
    %v445 = vsub.f32 %v156, %v359
    %v446 = vsub.f32 %v157, %v359
    %v447 = vsub.f32 %v158, %v360
    %v448 = vsub.f32 %v159, %v360
    %v449 = vsub.f32 %v160, %v361
    %v450 = vsub.f32 %v161, %v361
    %v451 = vsub.f32 %v162, %v362
    %v452 = vsub.f32 %v163, %v362
    %v453 = vsub.f32 %v164, %v363
    %v454 = vsub.f32 %v165, %v363
    %v455 = vsub.f32 %v166, %v364
    %v456 = vsub.f32 %v167, %v364
    %v457 = vsub.f32 %v168, %v365
    %v458 = vsub.f32 %v169, %v365
    %v459 = vsub.f32 %v170, %v366
    %v460 = vsub.f32 %v171, %v366
    %v461 = vsub.f32 %v172, %v367
    %v462 = vsub.f32 %v173, %v367
    %v463 = vsub.f32 %v174, %v368
    %v464 = vsub.f32 %v175, %v368
    %v465 = vmul.f32 %v369, %v369
    %v466 = vmul.f32 %v370, %v370
    %v467 = vmul.f32 %v371, %v371
    %v468 = vmul.f32 %v372, %v372
    %v469 = vmul.f32 %v373, %v373
    %v470 = vmul.f32 %v374, %v374
    %v471 = vmul.f32 %v375, %v375
    %v472 = vmul.f32 %v376, %v376
    %v473 = vmul.f32 %v377, %v377
    %v474 = vmul.f32 %v378, %v378
    %v475 = vmul.f32 %v379, %v379
    %v476 = vmul.f32 %v380, %v380
    %v477 = vmul.f32 %v381, %v381
    %v478 = vmul.f32 %v382, %v382
    %v479 = vmul.f32 %v383, %v383
    %v480 = vmul.f32 %v384, %v384
    %v481 = vmul.f32 %v385, %v385
    %v482 = vmul.f32 %v386, %v386
    %v483 = vmul.f32 %v387, %v387
    %v484 = vmul.f32 %v388, %v388
    %v485 = vmul.f32 %v389, %v389
    %v486 = vmul.f32 %v390, %v390
    %v487 = vmul.f32 %v391, %v391
    %v488 = vmul.f32 %v392, %v392
    %v489 = vmul.f32 %v393, %v393
    %v490 = vmul.f32 %v394, %v394
    %v491 = vmul.f32 %v395, %v395
    %v492 = vmul.f32 %v396, %v396
    %v493 = vmul.f32 %v397, %v397
    %v494 = vmul.f32 %v398, %v398
    %v495 = vmul.f32 %v399, %v399
    %v496 = vmul.f32 %v400, %v400
    %v497 = vmul.f32 %v401, %v401
    %v498 = vmul.f32 %v402, %v402
    %v499 = vmul.f32 %v403, %v403
    %v500 = vmul.f32 %v404, %v404
    %v501 = vmul.f32 %v405, %v405
    %v502 = vmul.f32 %v406, %v406
    %v503 = vmul.f32 %v407, %v407
    %v504 = vmul.f32 %v408, %v408
    %v505 = vmul.f32 %v409, %v409
    %v506 = vmul.f32 %v410, %v410
    %v507 = vmul.f32 %v411, %v411
    %v508 = vmul.f32 %v412, %v412
    %v509 = vmul.f32 %v413, %v413
    %v510 = vmul.f32 %v414, %v414
    %v511 = vmul.f32 %v415, %v415
    %v512 = vmul.f32 %v416, %v416
    %v513 = vmul.f32 %v417, %v417
    %v514 = vmul.f32 %v418, %v418
    %v515 = vmul.f32 %v419, %v419
    %v516 = vmul.f32 %v420, %v420
    %v517 = vmul.f32 %v421, %v421
    %v518 = vmul.f32 %v422, %v422
    %v519 = vmul.f32 %v423, %v423
    %v520 = vmul.f32 %v424, %v424
    %v521 = vmul.f32 %v425, %v425
    %v522 = vmul.f32 %v426, %v426
    %v523 = vmul.f32 %v427, %v427
    %v524 = vmul.f32 %v428, %v428
    %v525 = vmul.f32 %v429, %v429
    %v526 = vmul.f32 %v430, %v430
    %v527 = vmul.f32 %v431, %v431
    %v528 = vmul.f32 %v432, %v432
    %v529 = vmul.f32 %v433, %v433
    %v530 = vmul.f32 %v434, %v434
    %v531 = vmul.f32 %v435, %v435
    %v532 = vmul.f32 %v436, %v436
    %v533 = vmul.f32 %v437, %v437
    %v534 = vmul.f32 %v438, %v438
    %v535 = vmul.f32 %v439, %v439
    %v536 = vmul.f32 %v440, %v440
    %v537 = vmul.f32 %v441, %v441
    %v538 = vmul.f32 %v442, %v442
    %v539 = vmul.f32 %v443, %v443
    %v540 = vmul.f32 %v444, %v444
    %v541 = vmul.f32 %v445, %v445
    %v542 = vmul.f32 %v446, %v446
    %v543 = vmul.f32 %v447, %v447
    %v544 = vmul.f32 %v448, %v448
    %v545 = vmul.f32 %v449, %v449
    %v546 = vmul.f32 %v450, %v450
    %v547 = vmul.f32 %v451, %v451
    %v548 = vmul.f32 %v452, %v452
    %v549 = vmul.f32 %v453, %v453
    %v550 = vmul.f32 %v454, %v454
    %v551 = vmul.f32 %v455, %v455
    %v552 = vmul.f32 %v456, %v456
    %v553 = vmul.f32 %v457, %v457
    %v554 = vmul.f32 %v458, %v458
    %v555 = vmul.f32 %v459, %v459
    %v556 = vmul.f32 %v460, %v460
    %v557 = vmul.f32 %v461, %v461
    %v558 = vmul.f32 %v462, %v462
    %v559 = vmul.f32 %v463, %v463
    %v560 = vmul.f32 %v464, %v464
    %v561 = vadd.f32 %v465, %v466
    %562 = vadd.xlane.f32.xlu0 %v561
    %v563 = vpop.xlane.xlu0 %562
    %v564 = vadd.f32 %v467, %v468
    %565 = vadd.xlane.f32.xlu0 %v564
    %v566 = vpop.xlane.xlu0 %565
    %v567 = vadd.f32 %v469, %v470
    %568 = vadd.xlane.f32.xlu0 %v567
    %v569 = vpop.xlane.xlu0 %568
    %v570 = vadd.f32 %v471, %v472
    %571 = vadd.xlane.f32.xlu0 %v570
    %v572 = vpop.xlane.xlu0 %571
    %v573 = vadd.f32 %v473, %v474
    %574 = vadd.xlane.f32.xlu0 %v573
    %v575 = vpop.xlane.xlu0 %574
    %v576 = vadd.f32 %v475, %v476
    %577 = vadd.xlane.f32.xlu0 %v576
    %v578 = vpop.xlane.xlu0 %577
    %v579 = vadd.f32 %v477, %v478
    %580 = vadd.xlane.f32.xlu0 %v579
    %v581 = vpop.xlane.xlu0 %580
    %v582 = vadd.f32 %v479, %v480
    %583 = vadd.xlane.f32.xlu0 %v582
    %v584 = vpop.xlane.xlu0 %583
    %v585 = vadd.f32 %v481, %v482
    %586 = vadd.xlane.f32.xlu0 %v585
    %v587 = vpop.xlane.xlu0 %586
    %v588 = vadd.f32 %v483, %v484
    %589 = vadd.xlane.f32.xlu0 %v588
    %v590 = vpop.xlane.xlu0 %589
    %v591 = vadd.f32 %v485, %v486
    %592 = vadd.xlane.f32.xlu0 %v591
    %v593 = vpop.xlane.xlu0 %592
    %v594 = vadd.f32 %v487, %v488
    %595 = vadd.xlane.f32.xlu0 %v594
    %v596 = vpop.xlane.xlu0 %595
    %v597 = vadd.f32 %v489, %v490
    %598 = vadd.xlane.f32.xlu0 %v597
    %v599 = vpop.xlane.xlu0 %598
    %v600 = vadd.f32 %v491, %v492
    %601 = vadd.xlane.f32.xlu0 %v600
    %v602 = vpop.xlane.xlu0 %601
    %v603 = vadd.f32 %v493, %v494
    %604 = vadd.xlane.f32.xlu0 %v603
    %v605 = vpop.xlane.xlu0 %604
    %v606 = vadd.f32 %v495, %v496
    %607 = vadd.xlane.f32.xlu0 %v606
    %v608 = vpop.xlane.xlu0 %607
    %v609 = vadd.f32 %v497, %v498
    %610 = vadd.xlane.f32.xlu0 %v609
    %v611 = vpop.xlane.xlu0 %610
    %v612 = vadd.f32 %v499, %v500
    %613 = vadd.xlane.f32.xlu0 %v612
    %v614 = vpop.xlane.xlu0 %613
    %v615 = vadd.f32 %v501, %v502
    %616 = vadd.xlane.f32.xlu0 %v615
    %v617 = vpop.xlane.xlu0 %616
    %v618 = vadd.f32 %v503, %v504
    %619 = vadd.xlane.f32.xlu0 %v618
    %v620 = vpop.xlane.xlu0 %619
    %v621 = vadd.f32 %v505, %v506
    %622 = vadd.xlane.f32.xlu0 %v621
    %v623 = vpop.xlane.xlu0 %622
    %v624 = vadd.f32 %v507, %v508
    %625 = vadd.xlane.f32.xlu0 %v624
    %v626 = vpop.xlane.xlu0 %625
    %v627 = vadd.f32 %v509, %v510
    %628 = vadd.xlane.f32.xlu0 %v627
    %v629 = vpop.xlane.xlu0 %628
    %v630 = vadd.f32 %v511, %v512
    %631 = vadd.xlane.f32.xlu0 %v630
    %v632 = vpop.xlane.xlu0 %631
    %v633 = vadd.f32 %v513, %v514
    %634 = vadd.xlane.f32.xlu0 %v633
    %v635 = vpop.xlane.xlu0 %634
    %v636 = vadd.f32 %v515, %v516
    %637 = vadd.xlane.f32.xlu0 %v636
    %v638 = vpop.xlane.xlu0 %637
    %v639 = vadd.f32 %v517, %v518
    %640 = vadd.xlane.f32.xlu0 %v639
    %v641 = vpop.xlane.xlu0 %640
    %v642 = vadd.f32 %v519, %v520
    %643 = vadd.xlane.f32.xlu0 %v642
    %v644 = vpop.xlane.xlu0 %643
    %v645 = vadd.f32 %v521, %v522
    %646 = vadd.xlane.f32.xlu0 %v645
    %v647 = vpop.xlane.xlu0 %646
    %v648 = vadd.f32 %v523, %v524
    %649 = vadd.xlane.f32.xlu0 %v648
    %v650 = vpop.xlane.xlu0 %649
    %v651 = vadd.f32 %v525, %v526
    %652 = vadd.xlane.f32.xlu0 %v651
    %v653 = vpop.xlane.xlu0 %652
    %v654 = vadd.f32 %v527, %v528
    %655 = vadd.xlane.f32.xlu0 %v654
    %v656 = vpop.xlane.xlu0 %655
    %v657 = vadd.f32 %v529, %v530
    %658 = vadd.xlane.f32.xlu0 %v657
    %v659 = vpop.xlane.xlu0 %658
    %v660 = vadd.f32 %v531, %v532
    %661 = vadd.xlane.f32.xlu0 %v660
    %v662 = vpop.xlane.xlu0 %661
    %v663 = vadd.f32 %v533, %v534
    %664 = vadd.xlane.f32.xlu0 %v663
    %v665 = vpop.xlane.xlu0 %664
    %v666 = vadd.f32 %v535, %v536
    %667 = vadd.xlane.f32.xlu0 %v666
    %v668 = vpop.xlane.xlu0 %667
    %v669 = vadd.f32 %v537, %v538
    %670 = vadd.xlane.f32.xlu0 %v669
    %v671 = vpop.xlane.xlu0 %670
    %v672 = vadd.f32 %v539, %v540
    %673 = vadd.xlane.f32.xlu0 %v672
    %v674 = vpop.xlane.xlu0 %673
    %v675 = vadd.f32 %v541, %v542
    %676 = vadd.xlane.f32.xlu0 %v675
    %v677 = vpop.xlane.xlu0 %676
    %v678 = vadd.f32 %v543, %v544
    %679 = vadd.xlane.f32.xlu0 %v678
    %v680 = vpop.xlane.xlu0 %679
    %v681 = vadd.f32 %v545, %v546
    %682 = vadd.xlane.f32.xlu0 %v681
    %v683 = vpop.xlane.xlu0 %682
    %v684 = vadd.f32 %v547, %v548
    %685 = vadd.xlane.f32.xlu0 %v684
    %v686 = vpop.xlane.xlu0 %685
    %v687 = vadd.f32 %v549, %v550
    %688 = vadd.xlane.f32.xlu0 %v687
    %v689 = vpop.xlane.xlu0 %688
    %v690 = vadd.f32 %v551, %v552
    %691 = vadd.xlane.f32.xlu0 %v690
    %v692 = vpop.xlane.xlu0 %691
    %v693 = vadd.f32 %v553, %v554
    %694 = vadd.xlane.f32.xlu0 %v693
    %v695 = vpop.xlane.xlu0 %694
    %v696 = vadd.f32 %v555, %v556
    %697 = vadd.xlane.f32.xlu0 %v696
    %v698 = vpop.xlane.xlu0 %697
    %v699 = vadd.f32 %v557, %v558
    %700 = vadd.xlane.f32.xlu0 %v699
    %v701 = vpop.xlane.xlu0 %700
    %v702 = vadd.f32 %v559, %v560
    %703 = vadd.xlane.f32.xlu0 %v702
    %v704 = vpop.xlane.xlu0 %703
    %v705 = vmul.f32 %v563, %v320
    %v706 = vmul.f32 %v566, %v320
    %v707 = vmul.f32 %v569, %v320
    %v708 = vmul.f32 %v572, %v320
    %v709 = vmul.f32 %v575, %v320
    %v710 = vmul.f32 %v578, %v320
    %v711 = vmul.f32 %v581, %v320
    %v712 = vmul.f32 %v584, %v320
    %v713 = vmul.f32 %v587, %v320
    %v714 = vmul.f32 %v590, %v320
    %v715 = vmul.f32 %v593, %v320
    %v716 = vmul.f32 %v596, %v320
    %v717 = vmul.f32 %v599, %v320
    %v718 = vmul.f32 %v602, %v320
    %v719 = vmul.f32 %v605, %v320
    %v720 = vmul.f32 %v608, %v320
    %v721 = vmul.f32 %v611, %v320
    %v722 = vmul.f32 %v614, %v320
    %v723 = vmul.f32 %v617, %v320
    %v724 = vmul.f32 %v620, %v320
    %v725 = vmul.f32 %v623, %v320
    %v726 = vmul.f32 %v626, %v320
    %v727 = vmul.f32 %v629, %v320
    %v728 = vmul.f32 %v632, %v320
    %v729 = vmul.f32 %v635, %v320
    %v730 = vmul.f32 %v638, %v320
    %v731 = vmul.f32 %v641, %v320
    %v732 = vmul.f32 %v644, %v320
    %v733 = vmul.f32 %v647, %v320
    %v734 = vmul.f32 %v650, %v320
    %v735 = vmul.f32 %v653, %v320
    %v736 = vmul.f32 %v656, %v320
    %v737 = vmul.f32 %v659, %v320
    %v738 = vmul.f32 %v662, %v320
    %v739 = vmul.f32 %v665, %v320
    %v740 = vmul.f32 %v668, %v320
    %v741 = vmul.f32 %v671, %v320
    %v742 = vmul.f32 %v674, %v320
    %v743 = vmul.f32 %v677, %v320
    %v744 = vmul.f32 %v680, %v320
    %v745 = vmul.f32 %v683, %v320
    %v746 = vmul.f32 %v686, %v320
    %v747 = vmul.f32 %v689, %v320
    %v748 = vmul.f32 %v692, %v320
    %v749 = vmul.f32 %v695, %v320
    %v750 = vmul.f32 %v698, %v320
    %v751 = vmul.f32 %v701, %v320
    %v752 = vmul.f32 %v704, %v320
    %v753 = vadd.f32 %v705, 1e-05
    %v754 = vadd.f32 %v706, 1e-05
    %v755 = vadd.f32 %v707, 1e-05
    %v756 = vadd.f32 %v708, 1e-05
    %v757 = vadd.f32 %v709, 1e-05
    %v758 = vadd.f32 %v710, 1e-05
    %v759 = vadd.f32 %v711, 1e-05
    %v760 = vadd.f32 %v712, 1e-05
    %v761 = vadd.f32 %v713, 1e-05
    %v762 = vadd.f32 %v714, 1e-05
    %v763 = vadd.f32 %v715, 1e-05
    %v764 = vadd.f32 %v716, 1e-05
    %v765 = vadd.f32 %v717, 1e-05
    %v766 = vadd.f32 %v718, 1e-05
    %v767 = vadd.f32 %v719, 1e-05
    %v768 = vadd.f32 %v720, 1e-05
    %v769 = vadd.f32 %v721, 1e-05
    %v770 = vadd.f32 %v722, 1e-05
    %v771 = vadd.f32 %v723, 1e-05
    %v772 = vadd.f32 %v724, 1e-05
    %v773 = vadd.f32 %v725, 1e-05
    %v774 = vadd.f32 %v726, 1e-05
    %v775 = vadd.f32 %v727, 1e-05
    %v776 = vadd.f32 %v728, 1e-05
    %v777 = vadd.f32 %v729, 1e-05
    %v778 = vadd.f32 %v730, 1e-05
    %v779 = vadd.f32 %v731, 1e-05
    %v780 = vadd.f32 %v732, 1e-05
    %v781 = vadd.f32 %v733, 1e-05
    %v782 = vadd.f32 %v734, 1e-05
    %v783 = vadd.f32 %v735, 1e-05
    %v784 = vadd.f32 %v736, 1e-05
    %v785 = vadd.f32 %v737, 1e-05
    %v786 = vadd.f32 %v738, 1e-05
    %v787 = vadd.f32 %v739, 1e-05
    %v788 = vadd.f32 %v740, 1e-05
    %v789 = vadd.f32 %v741, 1e-05
    %v790 = vadd.f32 %v742, 1e-05
    %v791 = vadd.f32 %v743, 1e-05
    %v792 = vadd.f32 %v744, 1e-05
    %v793 = vadd.f32 %v745, 1e-05
    %v794 = vadd.f32 %v746, 1e-05
    %v795 = vadd.f32 %v747, 1e-05
    %v796 = vadd.f32 %v748, 1e-05
    %v797 = vadd.f32 %v749, 1e-05
    %v798 = vadd.f32 %v750, 1e-05
    %v799 = vadd.f32 %v751, 1e-05
    %v800 = vadd.f32 %v752, 1e-05
    %v801 = vrsqrt.pop %v753
    %v802 = vrsqrt.pop %v754
    %v803 = vrsqrt.pop %v755
    %v804 = vrsqrt.pop %v756
    %v805 = vrsqrt.pop %v757
    %v806 = vrsqrt.pop %v758
    %v807 = vrsqrt.pop %v759
    %v808 = vrsqrt.pop %v760
    %v809 = vrsqrt.pop %v761
    %v810 = vrsqrt.pop %v762
    %v811 = vrsqrt.pop %v763
    %v812 = vrsqrt.pop %v764
    %v813 = vrsqrt.pop %v765
    %v814 = vrsqrt.pop %v766
    %v815 = vrsqrt.pop %v767
    %v816 = vrsqrt.pop %v768
    %v817 = vrsqrt.pop %v769
    %v818 = vrsqrt.pop %v770
    %v819 = vrsqrt.pop %v771
    %v820 = vrsqrt.pop %v772
    %v821 = vrsqrt.pop %v773
    %v822 = vrsqrt.pop %v774
    %v823 = vrsqrt.pop %v775
    %v824 = vrsqrt.pop %v776
    %v825 = vrsqrt.pop %v777
    %v826 = vrsqrt.pop %v778
    %v827 = vrsqrt.pop %v779
    %v828 = vrsqrt.pop %v780
    %v829 = vrsqrt.pop %v781
    %v830 = vrsqrt.pop %v782
    %v831 = vrsqrt.pop %v783
    %v832 = vrsqrt.pop %v784
    %v833 = vrsqrt.pop %v785
    %v834 = vrsqrt.pop %v786
    %v835 = vrsqrt.pop %v787
    %v836 = vrsqrt.pop %v788
    %v837 = vrsqrt.pop %v789
    %v838 = vrsqrt.pop %v790
    %v839 = vrsqrt.pop %v791
    %v840 = vrsqrt.pop %v792
    %v841 = vrsqrt.pop %v793
    %v842 = vrsqrt.pop %v794
    %v843 = vrsqrt.pop %v795
    %v844 = vrsqrt.pop %v796
    %v845 = vrsqrt.pop %v797
    %v846 = vrsqrt.pop %v798
    %v847 = vrsqrt.pop %v799
    %v848 = vrsqrt.pop %v800
    %v849 = vmul.f32 %v369, %v801
    %v850 = vmul.f32 %v370, %v801
    %v851 = vmul.f32 %v371, %v802
    %v852 = vmul.f32 %v372, %v802
    %v853 = vmul.f32 %v373, %v803
    %v854 = vmul.f32 %v374, %v803
    %v855 = vmul.f32 %v375, %v804
    %v856 = vmul.f32 %v376, %v804
    %v857 = vmul.f32 %v377, %v805
    %v858 = vmul.f32 %v378, %v805
    %v859 = vmul.f32 %v379, %v806
    %v860 = vmul.f32 %v380, %v806
    %v861 = vmul.f32 %v381, %v807
    %v862 = vmul.f32 %v382, %v807
    %v863 = vmul.f32 %v383, %v808
    %v864 = vmul.f32 %v384, %v808
    %v865 = vmul.f32 %v385, %v809
    %v866 = vmul.f32 %v386, %v809
    %v867 = vmul.f32 %v387, %v810
    %v868 = vmul.f32 %v388, %v810
    %v869 = vmul.f32 %v389, %v811
    %v870 = vmul.f32 %v390, %v811
    %v871 = vmul.f32 %v391, %v812
    %v872 = vmul.f32 %v392, %v812
    %v873 = vmul.f32 %v393, %v813
    %v874 = vmul.f32 %v394, %v813
    %v875 = vmul.f32 %v395, %v814
    %v876 = vmul.f32 %v396, %v814
    %v877 = vmul.f32 %v397, %v815
    %v878 = vmul.f32 %v398, %v815
    %v879 = vmul.f32 %v399, %v816
    %v880 = vmul.f32 %v400, %v816
    %v881 = vmul.f32 %v401, %v817
    %v882 = vmul.f32 %v402, %v817
    %v883 = vmul.f32 %v403, %v818
    %v884 = vmul.f32 %v404, %v818
    %v885 = vmul.f32 %v405, %v819
    %v886 = vmul.f32 %v406, %v819
    %v887 = vmul.f32 %v407, %v820
    %v888 = vmul.f32 %v408, %v820
    %v889 = vmul.f32 %v409, %v821
    %v890 = vmul.f32 %v410, %v821
    %v891 = vmul.f32 %v411, %v822
    %v892 = vmul.f32 %v412, %v822
    %v893 = vmul.f32 %v413, %v823
    %v894 = vmul.f32 %v414, %v823
    %v895 = vmul.f32 %v415, %v824
    %v896 = vmul.f32 %v416, %v824
    %v897 = vmul.f32 %v417, %v825
    %v898 = vmul.f32 %v418, %v825
    %v899 = vmul.f32 %v419, %v826
    %v900 = vmul.f32 %v420, %v826
    %v901 = vmul.f32 %v421, %v827
    %v902 = vmul.f32 %v422, %v827
    %v903 = vmul.f32 %v423, %v828
    %v904 = vmul.f32 %v424, %v828
    %v905 = vmul.f32 %v425, %v829
    %v906 = vmul.f32 %v426, %v829
    %v907 = vmul.f32 %v427, %v830
    %v908 = vmul.f32 %v428, %v830
    %v909 = vmul.f32 %v429, %v831
    %v910 = vmul.f32 %v430, %v831
    %v911 = vmul.f32 %v431, %v832
    %v912 = vmul.f32 %v432, %v832
    %v913 = vmul.f32 %v433, %v833
    %v914 = vmul.f32 %v434, %v833
    %v915 = vmul.f32 %v435, %v834
    %v916 = vmul.f32 %v436, %v834
    %v917 = vmul.f32 %v437, %v835
    %v918 = vmul.f32 %v438, %v835
    %v919 = vmul.f32 %v439, %v836
    %v920 = vmul.f32 %v440, %v836
    %v921 = vmul.f32 %v441, %v837
    %v922 = vmul.f32 %v442, %v837
    %v923 = vmul.f32 %v443, %v838
    %v924 = vmul.f32 %v444, %v838
    %v925 = vmul.f32 %v445, %v839
    %v926 = vmul.f32 %v446, %v839
    %v927 = vmul.f32 %v447, %v840
    %v928 = vmul.f32 %v448, %v840
    %v929 = vmul.f32 %v449, %v841
    %v930 = vmul.f32 %v450, %v841
    %v931 = vmul.f32 %v451, %v842
    %v932 = vmul.f32 %v452, %v842
    %v933 = vmul.f32 %v453, %v843
    %v934 = vmul.f32 %v454, %v843
    %v935 = vmul.f32 %v455, %v844
    %v936 = vmul.f32 %v456, %v844
    %v937 = vmul.f32 %v457, %v845
    %v938 = vmul.f32 %v458, %v845
    %v939 = vmul.f32 %v459, %v846
    %v940 = vmul.f32 %v460, %v846
    %v941 = vmul.f32 %v461, %v847
    %v942 = vmul.f32 %v462, %v847
    %v943 = vmul.f32 %v463, %v848
    %v944 = vmul.f32 %v464, %v848
    %v945 = vld [vmem:[#allocation5] sm:$0x3]
    %v947 = vlaneseq
    %v948 = vshrl.u32 %v947, 7
    %v949 = vsub.s32 0, %v948
    %v950 = vrot.slane %v945, %v949
    %v951 = vlaneseq
    %v952 = vshrl.u32 %v951, 7
    %v953 = vsub.s32 1, %v952
    %v954 = vrot.slane %v945, %v953
    %v957 = vmul.f32 %v849, %v950
    %v958 = vmul.f32 %v850, %v954
    %v959 = vmul.f32 %v851, %v950
    %v960 = vmul.f32 %v852, %v954
    %v961 = vmul.f32 %v853, %v950
    %v962 = vmul.f32 %v854, %v954
    %v963 = vmul.f32 %v855, %v950
    %v964 = vmul.f32 %v856, %v954
    %v965 = vmul.f32 %v857, %v950
    %v966 = vmul.f32 %v858, %v954
    %v967 = vmul.f32 %v859, %v950
    %v968 = vmul.f32 %v860, %v954
    %v969 = vmul.f32 %v861, %v950
    %v970 = vmul.f32 %v862, %v954
    %v971 = vmul.f32 %v863, %v950
    %v972 = vmul.f32 %v864, %v954
    %v973 = vmul.f32 %v865, %v950
    %v974 = vmul.f32 %v866, %v954
    %v975 = vmul.f32 %v867, %v950
    %v976 = vmul.f32 %v868, %v954
    %v977 = vmul.f32 %v869, %v950
    %v978 = vmul.f32 %v870, %v954
    %v979 = vmul.f32 %v871, %v950
    %v980 = vmul.f32 %v872, %v954
    %v981 = vmul.f32 %v873, %v950
    %v982 = vmul.f32 %v874, %v954
    %v983 = vmul.f32 %v875, %v950
    %v984 = vmul.f32 %v876, %v954
    %v985 = vmul.f32 %v877, %v950
    %v986 = vmul.f32 %v878, %v954
    %v987 = vmul.f32 %v879, %v950
    %v988 = vmul.f32 %v880, %v954
    %v989 = vmul.f32 %v881, %v950
    %v990 = vmul.f32 %v882, %v954
    %v991 = vmul.f32 %v883, %v950
    %v992 = vmul.f32 %v884, %v954
    %v993 = vmul.f32 %v885, %v950
    %v994 = vmul.f32 %v886, %v954
    %v995 = vmul.f32 %v887, %v950
    %v996 = vmul.f32 %v888, %v954
    %v997 = vmul.f32 %v889, %v950
    %v998 = vmul.f32 %v890, %v954
    %v999 = vmul.f32 %v891, %v950
    %v1000 = vmul.f32 %v892, %v954
    %v1001 = vmul.f32 %v893, %v950
    %v1002 = vmul.f32 %v894, %v954
    %v1003 = vmul.f32 %v895, %v950
    %v1004 = vmul.f32 %v896, %v954
    %v1005 = vmul.f32 %v897, %v950
    %v1006 = vmul.f32 %v898, %v954
    %v1007 = vmul.f32 %v899, %v950
    %v1008 = vmul.f32 %v900, %v954
    %v1009 = vmul.f32 %v901, %v950
    %v1010 = vmul.f32 %v902, %v954
    %v1011 = vmul.f32 %v903, %v950
    %v1012 = vmul.f32 %v904, %v954
    %v1013 = vmul.f32 %v905, %v950
    %v1014 = vmul.f32 %v906, %v954
    %v1015 = vmul.f32 %v907, %v950
    %v1016 = vmul.f32 %v908, %v954
    %v1017 = vmul.f32 %v909, %v950
    %v1018 = vmul.f32 %v910, %v954
    %v1019 = vmul.f32 %v911, %v950
    %v1020 = vmul.f32 %v912, %v954
    %v1021 = vmul.f32 %v913, %v950
    %v1022 = vmul.f32 %v914, %v954
    %v1023 = vmul.f32 %v915, %v950
    %v1024 = vmul.f32 %v916, %v954
    %v1025 = vmul.f32 %v917, %v950
    %v1026 = vmul.f32 %v918, %v954
    %v1027 = vmul.f32 %v919, %v950
    %v1028 = vmul.f32 %v920, %v954
    %v1029 = vmul.f32 %v921, %v950
    %v1030 = vmul.f32 %v922, %v954
    %v1031 = vmul.f32 %v923, %v950
    %v1032 = vmul.f32 %v924, %v954
    %v1033 = vmul.f32 %v925, %v950
    %v1034 = vmul.f32 %v926, %v954
    %v1035 = vmul.f32 %v927, %v950
    %v1036 = vmul.f32 %v928, %v954
    %v1037 = vmul.f32 %v929, %v950
    %v1038 = vmul.f32 %v930, %v954
    %v1039 = vmul.f32 %v931, %v950
    %v1040 = vmul.f32 %v932, %v954
    %v1041 = vmul.f32 %v933, %v950
    %v1042 = vmul.f32 %v934, %v954
    %v1043 = vmul.f32 %v935, %v950
    %v1044 = vmul.f32 %v936, %v954
    %v1045 = vmul.f32 %v937, %v950
    %v1046 = vmul.f32 %v938, %v954
    %v1047 = vmul.f32 %v939, %v950
    %v1048 = vmul.f32 %v940, %v954
    %v1049 = vmul.f32 %v941, %v950
    %v1050 = vmul.f32 %v942, %v954
    %v1051 = vmul.f32 %v943, %v950
    %v1052 = vmul.f32 %v944, %v954
    %v1053 = vld [vmem:[%s2] sm:$0x3]
    %v1055 = vlaneseq
    %v1056 = vshrl.u32 %v1055, 7
    %v1057 = vsub.s32 0, %v1056
    %v1058 = vrot.slane %v1053, %v1057
    %v1059 = vlaneseq
    %v1060 = vshrl.u32 %v1059, 7
    %v1061 = vsub.s32 1, %v1060
    %v1062 = vrot.slane %v1053, %v1061
    %v1065 = vadd.f32 %v957, %v1058
    %v1066 = vadd.f32 %v958, %v1062
    %v1067 = vadd.f32 %v959, %v1058
    %v1068 = vadd.f32 %v960, %v1062
    %v1069 = vadd.f32 %v961, %v1058
    %v1070 = vadd.f32 %v962, %v1062
    %v1071 = vadd.f32 %v963, %v1058
    %v1072 = vadd.f32 %v964, %v1062
    %v1073 = vadd.f32 %v965, %v1058
    %v1074 = vadd.f32 %v966, %v1062
    %v1075 = vadd.f32 %v967, %v1058
    %v1076 = vadd.f32 %v968, %v1062
    %v1077 = vadd.f32 %v969, %v1058
    %v1078 = vadd.f32 %v970, %v1062
    %v1079 = vadd.f32 %v971, %v1058
    %v1080 = vadd.f32 %v972, %v1062
    %v1081 = vadd.f32 %v973, %v1058
    %v1082 = vadd.f32 %v974, %v1062
    %v1083 = vadd.f32 %v975, %v1058
    %v1084 = vadd.f32 %v976, %v1062
    %v1085 = vadd.f32 %v977, %v1058
    %v1086 = vadd.f32 %v978, %v1062
    %v1087 = vadd.f32 %v979, %v1058
    %v1088 = vadd.f32 %v980, %v1062
    %v1089 = vadd.f32 %v981, %v1058
    %v1090 = vadd.f32 %v982, %v1062
    %v1091 = vadd.f32 %v983, %v1058
    %v1092 = vadd.f32 %v984, %v1062
    %v1093 = vadd.f32 %v985, %v1058
    %v1094 = vadd.f32 %v986, %v1062
    %v1095 = vadd.f32 %v987, %v1058
    %v1096 = vadd.f32 %v988, %v1062
    %v1097 = vadd.f32 %v989, %v1058
    %v1098 = vadd.f32 %v990, %v1062
    %v1099 = vadd.f32 %v991, %v1058
    %v1100 = vadd.f32 %v992, %v1062
    %v1101 = vadd.f32 %v993, %v1058
    %v1102 = vadd.f32 %v994, %v1062
    %v1103 = vadd.f32 %v995, %v1058
    %v1104 = vadd.f32 %v996, %v1062
    %v1105 = vadd.f32 %v997, %v1058
    %v1106 = vadd.f32 %v998, %v1062
    %v1107 = vadd.f32 %v999, %v1058
    %v1108 = vadd.f32 %v1000, %v1062
    %v1109 = vadd.f32 %v1001, %v1058
    %v1110 = vadd.f32 %v1002, %v1062
    %v1111 = vadd.f32 %v1003, %v1058
    %v1112 = vadd.f32 %v1004, %v1062
    %v1113 = vadd.f32 %v1005, %v1058
    %v1114 = vadd.f32 %v1006, %v1062
    %v1115 = vadd.f32 %v1007, %v1058
    %v1116 = vadd.f32 %v1008, %v1062
    %v1117 = vadd.f32 %v1009, %v1058
    %v1118 = vadd.f32 %v1010, %v1062
    %v1119 = vadd.f32 %v1011, %v1058
    %v1120 = vadd.f32 %v1012, %v1062
    %v1121 = vadd.f32 %v1013, %v1058
    %v1122 = vadd.f32 %v1014, %v1062
    %v1123 = vadd.f32 %v1015, %v1058
    %v1124 = vadd.f32 %v1016, %v1062
    %v1125 = vadd.f32 %v1017, %v1058
    %v1126 = vadd.f32 %v1018, %v1062
    %v1127 = vadd.f32 %v1019, %v1058
    %v1128 = vadd.f32 %v1020, %v1062
    %v1129 = vadd.f32 %v1021, %v1058
    %v1130 = vadd.f32 %v1022, %v1062
    %v1131 = vadd.f32 %v1023, %v1058
    %v1132 = vadd.f32 %v1024, %v1062
    %v1133 = vadd.f32 %v1025, %v1058
    %v1134 = vadd.f32 %v1026, %v1062
    %v1135 = vadd.f32 %v1027, %v1058
    %v1136 = vadd.f32 %v1028, %v1062
    %v1137 = vadd.f32 %v1029, %v1058
    %v1138 = vadd.f32 %v1030, %v1062
    %v1139 = vadd.f32 %v1031, %v1058
    %v1140 = vadd.f32 %v1032, %v1062
    %v1141 = vadd.f32 %v1033, %v1058
    %v1142 = vadd.f32 %v1034, %v1062
    %v1143 = vadd.f32 %v1035, %v1058
    %v1144 = vadd.f32 %v1036, %v1062
    %v1145 = vadd.f32 %v1037, %v1058
    %v1146 = vadd.f32 %v1038, %v1062
    %v1147 = vadd.f32 %v1039, %v1058
    %v1148 = vadd.f32 %v1040, %v1062
    %v1149 = vadd.f32 %v1041, %v1058
    %v1150 = vadd.f32 %v1042, %v1062
    %v1151 = vadd.f32 %v1043, %v1058
    %v1152 = vadd.f32 %v1044, %v1062
    %v1153 = vadd.f32 %v1045, %v1058
    %v1154 = vadd.f32 %v1046, %v1062
    %v1155 = vadd.f32 %v1047, %v1058
    %v1156 = vadd.f32 %v1048, %v1062
    %v1157 = vadd.f32 %v1049, %v1058
    %v1158 = vadd.f32 %v1050, %v1062
    %v1159 = vadd.f32 %v1051, %v1058
    %v1160 = vadd.f32 %v1052, %v1062
    %v1161 = vpack.c.bf16 %v1067, %v1065
    %v1162 = vpack.c.bf16 %v1068, %v1066
    %v1163 = vpack.c.bf16 %v1071, %v1069
    %v1164 = vpack.c.bf16 %v1072, %v1070
    %v1165 = vpack.c.bf16 %v1075, %v1073
    %v1166 = vpack.c.bf16 %v1076, %v1074
    %v1167 = vpack.c.bf16 %v1079, %v1077
    %v1168 = vpack.c.bf16 %v1080, %v1078
    %v1169 = vpack.c.bf16 %v1083, %v1081
    %v1170 = vpack.c.bf16 %v1084, %v1082
    %v1171 = vpack.c.bf16 %v1087, %v1085
    %v1172 = vpack.c.bf16 %v1088, %v1086
    %v1173 = vpack.c.bf16 %v1091, %v1089
    %v1174 = vpack.c.bf16 %v1092, %v1090
    %v1175 = vpack.c.bf16 %v1095, %v1093
    %v1176 = vpack.c.bf16 %v1096, %v1094
    %v1177 = vpack.c.bf16 %v1099, %v1097
    %v1178 = vpack.c.bf16 %v1100, %v1098
    %v1179 = vpack.c.bf16 %v1103, %v1101
    %v1180 = vpack.c.bf16 %v1104, %v1102
    %v1181 = vpack.c.bf16 %v1107, %v1105
    %v1182 = vpack.c.bf16 %v1108, %v1106
    %v1183 = vpack.c.bf16 %v1111, %v1109
    %v1184 = vpack.c.bf16 %v1112, %v1110
    %v1185 = vpack.c.bf16 %v1115, %v1113
    %v1186 = vpack.c.bf16 %v1116, %v1114
    %v1187 = vpack.c.bf16 %v1119, %v1117
    %v1188 = vpack.c.bf16 %v1120, %v1118
    %v1189 = vpack.c.bf16 %v1123, %v1121
    %v1190 = vpack.c.bf16 %v1124, %v1122
    %v1191 = vpack.c.bf16 %v1127, %v1125
    %v1192 = vpack.c.bf16 %v1128, %v1126
    %v1193 = vpack.c.bf16 %v1131, %v1129
    %v1194 = vpack.c.bf16 %v1132, %v1130
    %v1195 = vpack.c.bf16 %v1135, %v1133
    %v1196 = vpack.c.bf16 %v1136, %v1134
    %v1197 = vpack.c.bf16 %v1139, %v1137
    %v1198 = vpack.c.bf16 %v1140, %v1138
    %v1199 = vpack.c.bf16 %v1143, %v1141
    %v1200 = vpack.c.bf16 %v1144, %v1142
    %v1201 = vpack.c.bf16 %v1147, %v1145
    %v1202 = vpack.c.bf16 %v1148, %v1146
    %v1203 = vpack.c.bf16 %v1151, %v1149
    %v1204 = vpack.c.bf16 %v1152, %v1150
    %v1205 = vpack.c.bf16 %v1155, %v1153
    %v1206 = vpack.c.bf16 %v1156, %v1154
    %v1207 = vpack.c.bf16 %v1159, %v1157
    %v1208 = vpack.c.bf16 %v1160, %v1158
    %v1209 = vld [vmem:[#allocation7] sm:$0xff]
    %v1210 = vld [vmem:[#allocation7 + $0x8] sm:$0xff]
    %v1211 = vld [vmem:[#allocation7 + $0x10] sm:$0xff]
    %v1212 = vld [vmem:[#allocation7 + $0x18] sm:$0xff]
    %v1213 = vld [vmem:[#allocation7 + $0x20] sm:$0xff]
    %v1214 = vld [vmem:[#allocation7 + $0x28] sm:$0xff]
    %v1215 = vld [vmem:[#allocation7 + $0x30] sm:$0xff]
    %v1216 = vld [vmem:[#allocation7 + $0x38] sm:$0xff]
    %v1217 = vld [vmem:[#allocation7 + $0x40] sm:$0xff]
    %v1218 = vld [vmem:[#allocation7 + $0x48] sm:$0xff]
    %v1219 = vld [vmem:[#allocation7 + $0x50] sm:$0xff]
    %v1220 = vld [vmem:[#allocation7 + $0x58] sm:$0xff]
    %v1221 = vld [vmem:[#allocation7 + $0x60] sm:$0xff]
    %v1222 = vld [vmem:[#allocation7 + $0x68] sm:$0xff]
    %v1223 = vld [vmem:[#allocation7 + $0x70] sm:$0xff]
    %v1224 = vld [vmem:[#allocation7 + $0x78] sm:$0xff]
    %v1225 = vld [vmem:[#allocation7 + $0x80] sm:$0xff]
    %v1226 = vld [vmem:[#allocation7 + $0x88] sm:$0xff]
    %v1227 = vld [vmem:[#allocation7 + $0x90] sm:$0xff]
    %v1228 = vld [vmem:[#allocation7 + $0x98] sm:$0xff]
    %v1229 = vld [vmem:[#allocation7 + $0xa0] sm:$0xff]
    %v1230 = vld [vmem:[#allocation7 + $0xa8] sm:$0xff]
    %v1231 = vld [vmem:[#allocation7 + $0xb0] sm:$0xff]
    %v1232 = vld [vmem:[#allocation7 + $0xb8] sm:$0xff]
    %v1233 = vld [vmem:[#allocation7 + $0xc0] sm:$0xff]
    %v1234 = vld [vmem:[#allocation7 + $0xc8] sm:$0xff]
    %v1235 = vld [vmem:[#allocation7 + $0xd0] sm:$0xff]
    %v1236 = vld [vmem:[#allocation7 + $0xd8] sm:$0xff]
    %v1237 = vld [vmem:[#allocation7 + $0xe0] sm:$0xff]
    %v1238 = vld [vmem:[#allocation7 + $0xe8] sm:$0xff]
    %v1239 = vld [vmem:[#allocation7 + $0xf0] sm:$0xff]
    %v1240 = vld [vmem:[#allocation7 + $0xf8] sm:$0xff]
    %v1241 = vld [vmem:[#allocation7 + $0x100] sm:$0xff]
    %v1242 = vld [vmem:[#allocation7 + $0x108] sm:$0xff]
    %v1243 = vld [vmem:[#allocation7 + $0x110] sm:$0xff]
    %v1244 = vld [vmem:[#allocation7 + $0x118] sm:$0xff]
    %v1245 = vld [vmem:[#allocation7 + $0x120] sm:$0xff]
    %v1246 = vld [vmem:[#allocation7 + $0x128] sm:$0xff]
    %v1247 = vld [vmem:[#allocation7 + $0x130] sm:$0xff]
    %v1248 = vld [vmem:[#allocation7 + $0x138] sm:$0xff]
    %v1249 = vld [vmem:[#allocation7 + $0x140] sm:$0xff]
    %v1250 = vld [vmem:[#allocation7 + $0x148] sm:$0xff]
    %v1251 = vld [vmem:[#allocation7 + $0x150] sm:$0xff]
    %v1252 = vld [vmem:[#allocation7 + $0x158] sm:$0xff]
    %v1253 = vld [vmem:[#allocation7 + $0x160] sm:$0xff]
    %v1254 = vld [vmem:[#allocation7 + $0x168] sm:$0xff]
    %v1255 = vld [vmem:[#allocation7 + $0x170] sm:$0xff]
    %v1256 = vld [vmem:[#allocation7 + $0x178] sm:$0xff]
    %v1257 = vld [vmem:[#allocation7 + $0x180] sm:$0xff]
    %v1258 = vld [vmem:[#allocation7 + $0x188] sm:$0xff]
    %v1259 = vld [vmem:[#allocation7 + $0x190] sm:$0xff]
    %v1260 = vld [vmem:[#allocation7 + $0x198] sm:$0xff]
    %v1261 = vld [vmem:[#allocation7 + $0x1a0] sm:$0xff]
    %v1262 = vld [vmem:[#allocation7 + $0x1a8] sm:$0xff]
    %v1263 = vld [vmem:[#allocation7 + $0x1b0] sm:$0xff]
    %v1264 = vld [vmem:[#allocation7 + $0x1b8] sm:$0xff]
    %v1265 = vld [vmem:[#allocation7 + $0x1c0] sm:$0xff]
    %v1266 = vld [vmem:[#allocation7 + $0x1c8] sm:$0xff]
    %v1267 = vld [vmem:[#allocation7 + $0x1d0] sm:$0xff]
    %v1268 = vld [vmem:[#allocation7 + $0x1d8] sm:$0xff]
    %v1269 = vld [vmem:[#allocation7 + $0x1e0] sm:$0xff]
    %v1270 = vld [vmem:[#allocation7 + $0x1e8] sm:$0xff]
    %v1271 = vld [vmem:[#allocation7 + $0x1f0] sm:$0xff]
    %v1272 = vld [vmem:[#allocation7 + $0x1f8] sm:$0xff]
    %v1273 = vld [vmem:[%s4] sm:$0xf]
    %v1275 = vlaneseq
    %v1276 = vshrl.u32 %v1275, 7
    %v1277 = vsub.s32 0, %v1276
    %v1278 = vrot.slane %v1273, %v1277
    %v1279 = vlaneseq
    %v1280 = vshrl.u32 %v1279, 7
    %v1281 = vsub.s32 1, %v1280
    %v1282 = vrot.slane %v1273, %v1281
    %v1283 = vlaneseq
    %v1284 = vshrl.u32 %v1283, 7
    %v1285 = vsub.s32 2, %v1284
    %v1286 = vrot.slane %v1273, %v1285
    %v1287 = vlaneseq
    %v1288 = vshrl.u32 %v1287, 7
    %v1289 = vsub.s32 3, %v1288
    %v1290 = vrot.slane %v1273, %v1289
    %v1359 = vunpack.c.l.b16 %v1209
    %v1360 = vunpack.c.h.b16 %v1209
    %v1361 = vunpack.c.l.b16 %v1210
    %v1362 = vunpack.c.h.b16 %v1210
    %v1363 = vunpack.c.l.b16 %v1211
    %v1364 = vunpack.c.h.b16 %v1211
    %v1365 = vunpack.c.l.b16 %v1212
    %v1366 = vunpack.c.h.b16 %v1212
    %v1367 = vunpack.c.l.b16 %v1213
    %v1368 = vunpack.c.h.b16 %v1213
    %v1369 = vunpack.c.l.b16 %v1214
    %v1370 = vunpack.c.h.b16 %v1214
    %v1371 = vunpack.c.l.b16 %v1215
    %v1372 = vunpack.c.h.b16 %v1215
    %v1373 = vunpack.c.l.b16 %v1216
    %v1374 = vunpack.c.h.b16 %v1216
    %v1375 = vunpack.c.l.b16 %v1217
    %v1376 = vunpack.c.h.b16 %v1217
    %v1377 = vunpack.c.l.b16 %v1218
    %v1378 = vunpack.c.h.b16 %v1218
    %v1379 = vunpack.c.l.b16 %v1219
    %v1380 = vunpack.c.h.b16 %v1219
    %v1381 = vunpack.c.l.b16 %v1220
    %v1382 = vunpack.c.h.b16 %v1220
    %v1383 = vunpack.c.l.b16 %v1221
    %v1384 = vunpack.c.h.b16 %v1221
    %v1385 = vunpack.c.l.b16 %v1222
    %v1386 = vunpack.c.h.b16 %v1222
    %v1387 = vunpack.c.l.b16 %v1223
    %v1388 = vunpack.c.h.b16 %v1223
    %v1389 = vunpack.c.l.b16 %v1224
    %v1390 = vunpack.c.h.b16 %v1224
    %v1391 = vunpack.c.l.b16 %v1225
    %v1392 = vunpack.c.h.b16 %v1225
    %v1393 = vunpack.c.l.b16 %v1226
    %v1394 = vunpack.c.h.b16 %v1226
    %v1395 = vunpack.c.l.b16 %v1227
    %v1396 = vunpack.c.h.b16 %v1227
    %v1397 = vunpack.c.l.b16 %v1228
    %v1398 = vunpack.c.h.b16 %v1228
    %v1399 = vunpack.c.l.b16 %v1229
    %v1400 = vunpack.c.h.b16 %v1229
    %v1401 = vunpack.c.l.b16 %v1230
    %v1402 = vunpack.c.h.b16 %v1230
    %v1403 = vunpack.c.l.b16 %v1231
    %v1404 = vunpack.c.h.b16 %v1231
    %v1405 = vunpack.c.l.b16 %v1232
    %v1406 = vunpack.c.h.b16 %v1232
    %v1407 = vunpack.c.l.b16 %v1233
    %v1408 = vunpack.c.h.b16 %v1233
    %v1409 = vunpack.c.l.b16 %v1234
    %v1410 = vunpack.c.h.b16 %v1234
    %v1411 = vunpack.c.l.b16 %v1235
    %v1412 = vunpack.c.h.b16 %v1235
    %v1413 = vunpack.c.l.b16 %v1236
    %v1414 = vunpack.c.h.b16 %v1236
    %v1415 = vunpack.c.l.b16 %v1237
    %v1416 = vunpack.c.h.b16 %v1237
    %v1417 = vunpack.c.l.b16 %v1238
    %v1418 = vunpack.c.h.b16 %v1238
    %v1419 = vunpack.c.l.b16 %v1239
    %v1420 = vunpack.c.h.b16 %v1239
    %v1421 = vunpack.c.l.b16 %v1240
    %v1422 = vunpack.c.h.b16 %v1240
    %v1423 = vunpack.c.l.b16 %v1241
    %v1424 = vunpack.c.h.b16 %v1241
    %v1425 = vunpack.c.l.b16 %v1242
    %v1426 = vunpack.c.h.b16 %v1242
    %v1427 = vunpack.c.l.b16 %v1243
    %v1428 = vunpack.c.h.b16 %v1243
    %v1429 = vunpack.c.l.b16 %v1244
    %v1430 = vunpack.c.h.b16 %v1244
    %v1431 = vunpack.c.l.b16 %v1245
    %v1432 = vunpack.c.h.b16 %v1245
    %v1433 = vunpack.c.l.b16 %v1246
    %v1434 = vunpack.c.h.b16 %v1246
    %v1435 = vunpack.c.l.b16 %v1247
    %v1436 = vunpack.c.h.b16 %v1247
    %v1437 = vunpack.c.l.b16 %v1248
    %v1438 = vunpack.c.h.b16 %v1248
    %v1439 = vunpack.c.l.b16 %v1249
    %v1440 = vunpack.c.h.b16 %v1249
    %v1441 = vunpack.c.l.b16 %v1250
    %v1442 = vunpack.c.h.b16 %v1250
    %v1443 = vunpack.c.l.b16 %v1251
    %v1444 = vunpack.c.h.b16 %v1251
    %v1445 = vunpack.c.l.b16 %v1252
    %v1446 = vunpack.c.h.b16 %v1252
    %v1447 = vunpack.c.l.b16 %v1253
    %v1448 = vunpack.c.h.b16 %v1253
    %v1449 = vunpack.c.l.b16 %v1254
    %v1450 = vunpack.c.h.b16 %v1254
    %v1451 = vunpack.c.l.b16 %v1255
    %v1452 = vunpack.c.h.b16 %v1255
    %v1453 = vunpack.c.l.b16 %v1256
    %v1454 = vunpack.c.h.b16 %v1256
    %v1455 = vunpack.c.l.b16 %v1257
    %v1456 = vunpack.c.h.b16 %v1257
    %v1457 = vunpack.c.l.b16 %v1258
    %v1458 = vunpack.c.h.b16 %v1258
    %v1459 = vunpack.c.l.b16 %v1259
    %v1460 = vunpack.c.h.b16 %v1259
    %v1461 = vunpack.c.l.b16 %v1260
    %v1462 = vunpack.c.h.b16 %v1260
    %v1463 = vunpack.c.l.b16 %v1261
    %v1464 = vunpack.c.h.b16 %v1261
    %v1465 = vunpack.c.l.b16 %v1262
    %v1466 = vunpack.c.h.b16 %v1262
    %v1467 = vunpack.c.l.b16 %v1263
    %v1468 = vunpack.c.h.b16 %v1263
    %v1469 = vunpack.c.l.b16 %v1264
    %v1470 = vunpack.c.h.b16 %v1264
    %v1471 = vunpack.c.l.b16 %v1265
    %v1472 = vunpack.c.h.b16 %v1265
    %v1473 = vunpack.c.l.b16 %v1266
    %v1474 = vunpack.c.h.b16 %v1266
    %v1475 = vunpack.c.l.b16 %v1267
    %v1476 = vunpack.c.h.b16 %v1267
    %v1477 = vunpack.c.l.b16 %v1268
    %v1478 = vunpack.c.h.b16 %v1268
    %v1479 = vunpack.c.l.b16 %v1269
    %v1480 = vunpack.c.h.b16 %v1269
    %v1481 = vunpack.c.l.b16 %v1270
    %v1482 = vunpack.c.h.b16 %v1270
    %v1483 = vunpack.c.l.b16 %v1271
    %v1484 = vunpack.c.h.b16 %v1271
    %v1485 = vunpack.c.l.b16 %v1272
    %v1486 = vunpack.c.h.b16 %v1272
    %v1487 = vpack.c.b16 %v1363, %v1359
    %v1488 = vpack.c.b16 %v1364, %v1360
    %v1489 = vpack.c.b16 %v1365, %v1361
    %v1490 = vpack.c.b16 %v1366, %v1362
    %v1491 = vpack.c.b16 %v1371, %v1367
    %v1492 = vpack.c.b16 %v1372, %v1368
    %v1493 = vpack.c.b16 %v1373, %v1369
    %v1494 = vpack.c.b16 %v1374, %v1370
    %v1495 = vpack.c.b16 %v1379, %v1375
    %v1496 = vpack.c.b16 %v1380, %v1376
    %v1497 = vpack.c.b16 %v1381, %v1377
    %v1498 = vpack.c.b16 %v1382, %v1378
    %v1499 = vpack.c.b16 %v1387, %v1383
    %v1500 = vpack.c.b16 %v1388, %v1384
    %v1501 = vpack.c.b16 %v1389, %v1385
    %v1502 = vpack.c.b16 %v1390, %v1386
    %v1503 = vpack.c.b16 %v1395, %v1391
    %v1504 = vpack.c.b16 %v1396, %v1392
    %v1505 = vpack.c.b16 %v1397, %v1393
    %v1506 = vpack.c.b16 %v1398, %v1394
    %v1507 = vpack.c.b16 %v1403, %v1399
    %v1508 = vpack.c.b16 %v1404, %v1400
    %v1509 = vpack.c.b16 %v1405, %v1401
    %v1510 = vpack.c.b16 %v1406, %v1402
    %v1511 = vpack.c.b16 %v1411, %v1407
    %v1512 = vpack.c.b16 %v1412, %v1408
    %v1513 = vpack.c.b16 %v1413, %v1409
    %v1514 = vpack.c.b16 %v1414, %v1410
    %v1515 = vpack.c.b16 %v1419, %v1415
    %v1516 = vpack.c.b16 %v1420, %v1416
    %v1517 = vpack.c.b16 %v1421, %v1417
    %v1518 = vpack.c.b16 %v1422, %v1418
    %v1519 = vpack.c.b16 %v1427, %v1423
    %v1520 = vpack.c.b16 %v1428, %v1424
    %v1521 = vpack.c.b16 %v1429, %v1425
    %v1522 = vpack.c.b16 %v1430, %v1426
    %v1523 = vpack.c.b16 %v1435, %v1431
    %v1524 = vpack.c.b16 %v1436, %v1432
    %v1525 = vpack.c.b16 %v1437, %v1433
    %v1526 = vpack.c.b16 %v1438, %v1434
    %v1527 = vpack.c.b16 %v1443, %v1439
    %v1528 = vpack.c.b16 %v1444, %v1440
    %v1529 = vpack.c.b16 %v1445, %v1441
    %v1530 = vpack.c.b16 %v1446, %v1442
    %v1531 = vpack.c.b16 %v1451, %v1447
    %v1532 = vpack.c.b16 %v1452, %v1448
    %v1533 = vpack.c.b16 %v1453, %v1449
    %v1534 = vpack.c.b16 %v1454, %v1450
    %v1535 = vpack.c.b16 %v1459, %v1455
    %v1536 = vpack.c.b16 %v1460, %v1456
    %v1537 = vpack.c.b16 %v1461, %v1457
    %v1538 = vpack.c.b16 %v1462, %v1458
    %v1539 = vpack.c.b16 %v1467, %v1463
    %v1540 = vpack.c.b16 %v1468, %v1464
    %v1541 = vpack.c.b16 %v1469, %v1465
    %v1542 = vpack.c.b16 %v1470, %v1466
    %v1543 = vpack.c.b16 %v1475, %v1471
    %v1544 = vpack.c.b16 %v1476, %v1472
    %v1545 = vpack.c.b16 %v1477, %v1473
    %v1546 = vpack.c.b16 %v1478, %v1474
    %v1547 = vpack.c.b16 %v1483, %v1479
    %v1548 = vpack.c.b16 %v1484, %v1480
    %v1549 = vpack.c.b16 %v1485, %v1481
    %v1550 = vpack.c.b16 %v1486, %v1482
    %1615 = vmatprep.subr.bf16.mxu0 %v1516
    %1616 = vmatpush1.bf16.msra.mxu0 %v1515
    %1617 = vmatprep.subr.bf16.mxu0 %v1512
    %1618 = vmatpush1.bf16.msra.mxu0 %v1511
    %1619 = vmatprep.subr.bf16.mxu0 %v1508
    %1620 = vmatpush1.bf16.msra.mxu0 %v1507
    %1621 = vmatprep.subr.bf16.mxu0 %v1504
    %1622 = vmatpush1.bf16.msra.mxu0 %v1503
    %1623 = vmatprep.subr.bf16.mxu0 %v1500
    %1624 = vmatpush1.bf16.msra.mxu0 %v1499
    %1625 = vmatprep.subr.bf16.mxu0 %v1496
    %1626 = vmatpush1.bf16.msra.mxu0 %v1495
    %1627 = vmatprep.subr.bf16.mxu0 %v1492
    %1628 = vmatpush1.bf16.msra.mxu0 %v1491
    %1629 = vmatprep.subr.bf16.mxu0 %v1488
    %1630 = vmatpush1.bf16.msra.mxu0 %v1487
    %1631 = vmatprep.subr.bf16.mxu0 %v1548
    %1632 = vmatpush2.bf16.msra.mxu0 %v1547
    %1633 = vmatprep.subr.bf16.mxu0 %v1544
    %1634 = vmatpush2.bf16.msra.mxu0 %v1543
    %1635 = vmatprep.subr.bf16.mxu0 %v1540
    %1636 = vmatpush2.bf16.msra.mxu0 %v1539
    %1637 = vmatprep.subr.bf16.mxu0 %v1536
    %1638 = vmatpush2.bf16.msra.mxu0 %v1535
    %1639 = vmatprep.subr.bf16.mxu0 %v1532
    %1640 = vmatpush2.bf16.msra.mxu0 %v1531
    %1641 = vmatprep.subr.bf16.mxu0 %v1528
    %1642 = vmatpush2.bf16.msra.mxu0 %v1527
    %1643 = vmatprep.subr.bf16.mxu0 %v1524
    %1644 = vmatpush2.bf16.msra.mxu0 %v1523
    %1645 = vmatprep.subr.bf16.mxu0 %v1520
    %1646 = vmatpush2.bf16.msra.mxu0 %v1519
    %1647 = vmatprep.mubr.bf16.mxu0 %v1162
    %1648 = vmatmul.mubr.bf16.gmra.mxu0 %v1161
    %v1649 = vpop.f32.mrf.mxu0
    %v1650 = vadd.f32 %v1278, %v1649
    %v1651 = vpop.f32.mrf.mxu0
    %v1652 = vadd.f32 %v1282, %v1651
    %v1653 = vpop.f32.mrf.mxu0
    %v1654 = vadd.f32 %v1278, %v1653
    %v1655 = vpop.f32.mrf.mxu0
    %v1656 = vadd.f32 %v1282, %v1655
    %1657 = vmatprep.mubr.bf16.mxu0 %v1164
    %1658 = vmatmul.mubr.bf16.gmra.mxu0 %v1163
    %v1659 = vpop.f32.mrf.mxu0
    %v1660 = vadd.f32 %v1278, %v1659
    %v1661 = vpop.f32.mrf.mxu0
    %v1662 = vadd.f32 %v1282, %v1661
    %v1663 = vpop.f32.mrf.mxu0
    %v1664 = vadd.f32 %v1278, %v1663
    %v1665 = vpop.f32.mrf.mxu0
    %v1666 = vadd.f32 %v1282, %v1665
    %1667 = vmatprep.mubr.bf16.mxu0 %v1166
    %1668 = vmatmul.mubr.bf16.gmra.mxu0 %v1165
    %v1669 = vpop.f32.mrf.mxu0
    %v1670 = vadd.f32 %v1278, %v1669
    %v1671 = vpop.f32.mrf.mxu0
    %v1672 = vadd.f32 %v1282, %v1671
    %v1673 = vpop.f32.mrf.mxu0
    %v1674 = vadd.f32 %v1278, %v1673
    %v1675 = vpop.f32.mrf.mxu0
    %v1676 = vadd.f32 %v1282, %v1675
    %1677 = vmatprep.mubr.bf16.mxu0 %v1168
    %1678 = vmatmul.mubr.bf16.gmra.mxu0 %v1167
    %v1679 = vpop.f32.mrf.mxu0
    %v1680 = vadd.f32 %v1278, %v1679
    %v1681 = vpop.f32.mrf.mxu0
    %v1682 = vadd.f32 %v1282, %v1681
    %v1683 = vpop.f32.mrf.mxu0
    %v1684 = vadd.f32 %v1278, %v1683
    %v1685 = vpop.f32.mrf.mxu0
    %v1686 = vadd.f32 %v1282, %v1685
    %1687 = vmatprep.mubr.bf16.mxu0 %v1170
    %1688 = vmatmul.mubr.bf16.gmra.mxu0 %v1169
    %v1689 = vpop.f32.mrf.mxu0
    %v1690 = vadd.f32 %v1278, %v1689
    %v1691 = vpop.f32.mrf.mxu0
    %v1692 = vadd.f32 %v1282, %v1691
    %v1693 = vpop.f32.mrf.mxu0
    %v1694 = vadd.f32 %v1278, %v1693
    %v1695 = vpop.f32.mrf.mxu0
    %v1696 = vadd.f32 %v1282, %v1695
    %1697 = vmatprep.mubr.bf16.mxu0 %v1172
    %1698 = vmatmul.mubr.bf16.gmra.mxu0 %v1171
    %v1699 = vpop.f32.mrf.mxu0
    %v1700 = vadd.f32 %v1278, %v1699
    %v1701 = vpop.f32.mrf.mxu0
    %v1702 = vadd.f32 %v1282, %v1701
    %v1703 = vpop.f32.mrf.mxu0
    %v1704 = vadd.f32 %v1278, %v1703
    %v1705 = vpop.f32.mrf.mxu0
    %v1706 = vadd.f32 %v1282, %v1705
    %1707 = vmatprep.mubr.bf16.mxu0 %v1174
    %1708 = vmatmul.mubr.bf16.gmra.mxu0 %v1173
    %v1709 = vpop.f32.mrf.mxu0
    %v1710 = vadd.f32 %v1278, %v1709
    %v1711 = vpop.f32.mrf.mxu0
    %v1712 = vadd.f32 %v1282, %v1711
    %v1713 = vpop.f32.mrf.mxu0
    %v1714 = vadd.f32 %v1278, %v1713
    %v1715 = vpop.f32.mrf.mxu0
    %v1716 = vadd.f32 %v1282, %v1715
    %1717 = vmatprep.mubr.bf16.mxu0 %v1176
    %1718 = vmatmul.mubr.bf16.gmra.mxu0 %v1175
    %v1719 = vpop.f32.mrf.mxu0
    %v1720 = vadd.f32 %v1278, %v1719
    %v1721 = vpop.f32.mrf.mxu0
    %v1722 = vadd.f32 %v1282, %v1721
    %v1723 = vpop.f32.mrf.mxu0
    %v1724 = vadd.f32 %v1278, %v1723
    %v1725 = vpop.f32.mrf.mxu0
    %v1726 = vadd.f32 %v1282, %v1725
    %1727 = vmatprep.mubr.bf16.mxu0 %v1178
    %1728 = vmatmul.mubr.bf16.gmra.mxu0 %v1177
    %v1729 = vpop.f32.mrf.mxu0
    %v1730 = vadd.f32 %v1278, %v1729
    %v1731 = vpop.f32.mrf.mxu0
    %v1732 = vadd.f32 %v1282, %v1731
    %v1733 = vpop.f32.mrf.mxu0
    %v1734 = vadd.f32 %v1278, %v1733
    %v1735 = vpop.f32.mrf.mxu0
    %v1736 = vadd.f32 %v1282, %v1735
    %1737 = vmatprep.mubr.bf16.mxu0 %v1180
    %1738 = vmatmul.mubr.bf16.gmra.mxu0 %v1179
    %v1739 = vpop.f32.mrf.mxu0
    %v1740 = vadd.f32 %v1278, %v1739
    %v1741 = vpop.f32.mrf.mxu0
    %v1742 = vadd.f32 %v1282, %v1741
    %v1743 = vpop.f32.mrf.mxu0
    %v1744 = vadd.f32 %v1278, %v1743
    %v1745 = vpop.f32.mrf.mxu0
    %v1746 = vadd.f32 %v1282, %v1745
    %1747 = vmatprep.mubr.bf16.mxu0 %v1182
    %1748 = vmatmul.mubr.bf16.gmra.mxu0 %v1181
    %v1749 = vpop.f32.mrf.mxu0
    %v1750 = vadd.f32 %v1278, %v1749
    %v1751 = vpop.f32.mrf.mxu0
    %v1752 = vadd.f32 %v1282, %v1751
    %v1753 = vpop.f32.mrf.mxu0
    %v1754 = vadd.f32 %v1278, %v1753
    %v1755 = vpop.f32.mrf.mxu0
    %v1756 = vadd.f32 %v1282, %v1755
    %1757 = vmatprep.mubr.bf16.mxu0 %v1184
    %1758 = vmatmul.mubr.bf16.gmra.mxu0 %v1183
    %v1759 = vpop.f32.mrf.mxu0
    %v1760 = vadd.f32 %v1278, %v1759
    %v1761 = vpop.f32.mrf.mxu0
    %v1762 = vadd.f32 %v1282, %v1761
    %v1763 = vpop.f32.mrf.mxu0
    %v1764 = vadd.f32 %v1278, %v1763
    %v1765 = vpop.f32.mrf.mxu0
    %v1766 = vadd.f32 %v1282, %v1765
    %1767 = vmatprep.mubr.bf16.mxu0 %v1186
    %1768 = vmatmul.mubr.bf16.gmra.mxu0 %v1185
    %v1769 = vpop.f32.mrf.mxu0
    %v1770 = vadd.f32 %v1278, %v1769
    %v1771 = vpop.f32.mrf.mxu0
    %v1772 = vadd.f32 %v1282, %v1771
    %v1773 = vpop.f32.mrf.mxu0
    %v1774 = vadd.f32 %v1278, %v1773
    %v1775 = vpop.f32.mrf.mxu0
    %v1776 = vadd.f32 %v1282, %v1775
    %1777 = vmatprep.mubr.bf16.mxu0 %v1188
    %1778 = vmatmul.mubr.bf16.gmra.mxu0 %v1187
    %v1779 = vpop.f32.mrf.mxu0
    %v1780 = vadd.f32 %v1278, %v1779
    %v1781 = vpop.f32.mrf.mxu0
    %v1782 = vadd.f32 %v1282, %v1781
    %v1783 = vpop.f32.mrf.mxu0
    %v1784 = vadd.f32 %v1278, %v1783
    %v1785 = vpop.f32.mrf.mxu0
    %v1786 = vadd.f32 %v1282, %v1785
    %1787 = vmatprep.mubr.bf16.mxu0 %v1190
    %1788 = vmatmul.mubr.bf16.gmra.mxu0 %v1189
    %v1789 = vpop.f32.mrf.mxu0
    %v1790 = vadd.f32 %v1278, %v1789
    %v1791 = vpop.f32.mrf.mxu0
    %v1792 = vadd.f32 %v1282, %v1791
    %v1793 = vpop.f32.mrf.mxu0
    %v1794 = vadd.f32 %v1278, %v1793
    %v1795 = vpop.f32.mrf.mxu0
    %v1796 = vadd.f32 %v1282, %v1795
    %1797 = vmatprep.mubr.bf16.mxu0 %v1192
    %1798 = vmatmul.mubr.bf16.gmra.mxu0 %v1191
    %v1799 = vpop.f32.mrf.mxu0
    %v1800 = vadd.f32 %v1278, %v1799
    %v1801 = vpop.f32.mrf.mxu0
    %v1802 = vadd.f32 %v1282, %v1801
    %v1803 = vpop.f32.mrf.mxu0
    %v1804 = vadd.f32 %v1278, %v1803
    %v1805 = vpop.f32.mrf.mxu0
    %v1806 = vadd.f32 %v1282, %v1805
    %1807 = vmatprep.mubr.bf16.mxu0 %v1194
    %1808 = vmatmul.mubr.bf16.gmra.mxu0 %v1193
    %v1809 = vpop.f32.mrf.mxu0
    %v1810 = vadd.f32 %v1278, %v1809
    %v1811 = vpop.f32.mrf.mxu0
    %v1812 = vadd.f32 %v1282, %v1811
    %v1813 = vpop.f32.mrf.mxu0
    %v1814 = vadd.f32 %v1278, %v1813
    %v1815 = vpop.f32.mrf.mxu0
    %v1816 = vadd.f32 %v1282, %v1815
    %1817 = vmatprep.mubr.bf16.mxu0 %v1196
    %1818 = vmatmul.mubr.bf16.gmra.mxu0 %v1195
    %v1819 = vpop.f32.mrf.mxu0
    %v1820 = vadd.f32 %v1278, %v1819
    %v1821 = vpop.f32.mrf.mxu0
    %v1822 = vadd.f32 %v1282, %v1821
    %v1823 = vpop.f32.mrf.mxu0
    %v1824 = vadd.f32 %v1278, %v1823
    %v1825 = vpop.f32.mrf.mxu0
    %v1826 = vadd.f32 %v1282, %v1825
    %1827 = vmatprep.mubr.bf16.mxu0 %v1198
    %1828 = vmatmul.mubr.bf16.gmra.mxu0 %v1197
    %v1829 = vpop.f32.mrf.mxu0
    %v1830 = vadd.f32 %v1278, %v1829
    %v1831 = vpop.f32.mrf.mxu0
    %v1832 = vadd.f32 %v1282, %v1831
    %v1833 = vpop.f32.mrf.mxu0
    %v1834 = vadd.f32 %v1278, %v1833
    %v1835 = vpop.f32.mrf.mxu0
    %v1836 = vadd.f32 %v1282, %v1835
    %1837 = vmatprep.mubr.bf16.mxu0 %v1200
    %1838 = vmatmul.mubr.bf16.gmra.mxu0 %v1199
    %v1839 = vpop.f32.mrf.mxu0
    %v1840 = vadd.f32 %v1278, %v1839
    %v1841 = vpop.f32.mrf.mxu0
    %v1842 = vadd.f32 %v1282, %v1841
    %v1843 = vpop.f32.mrf.mxu0
    %v1844 = vadd.f32 %v1278, %v1843
    %v1845 = vpop.f32.mrf.mxu0
    %v1846 = vadd.f32 %v1282, %v1845
    %1847 = vmatprep.mubr.bf16.mxu0 %v1202
    %1848 = vmatmul.mubr.bf16.gmra.mxu0 %v1201
    %v1849 = vpop.f32.mrf.mxu0
    %v1850 = vadd.f32 %v1278, %v1849
    %v1851 = vpop.f32.mrf.mxu0
    %v1852 = vadd.f32 %v1282, %v1851
    %v1853 = vpop.f32.mrf.mxu0
    %v1854 = vadd.f32 %v1278, %v1853
    %v1855 = vpop.f32.mrf.mxu0
    %v1856 = vadd.f32 %v1282, %v1855
    %1857 = vmatprep.mubr.bf16.mxu0 %v1204
    %1858 = vmatmul.mubr.bf16.gmra.mxu0 %v1203
    %v1859 = vpop.f32.mrf.mxu0
    %v1860 = vadd.f32 %v1278, %v1859
    %v1861 = vpop.f32.mrf.mxu0
    %v1862 = vadd.f32 %v1282, %v1861
    %v1863 = vpop.f32.mrf.mxu0
    %v1864 = vadd.f32 %v1278, %v1863
    %v1865 = vpop.f32.mrf.mxu0
    %v1866 = vadd.f32 %v1282, %v1865
    %1867 = vmatprep.mubr.bf16.mxu0 %v1206
    %1868 = vmatmul.mubr.bf16.gmra.mxu0 %v1205
    %v1869 = vpop.f32.mrf.mxu0
    %v1870 = vadd.f32 %v1278, %v1869
    %v1871 = vpop.f32.mrf.mxu0
    %v1872 = vadd.f32 %v1282, %v1871
    %v1873 = vpop.f32.mrf.mxu0
    %v1874 = vadd.f32 %v1278, %v1873
    %v1875 = vpop.f32.mrf.mxu0
    %v1876 = vadd.f32 %v1282, %v1875
    %1877 = vmatprep.mubr.bf16.mxu0 %v1208
    %1878 = vmatmul.mubr.bf16.gmra.mxu0 %v1207
    %v1879 = vpop.f32.mrf.mxu0
    %v1880 = vadd.f32 %v1278, %v1879
    %v1881 = vpop.f32.mrf.mxu0
    %v1882 = vadd.f32 %v1282, %v1881
    %v1883 = vpop.f32.mrf.mxu0
    %v1884 = vadd.f32 %v1278, %v1883
    %v1885 = vpop.f32.mrf.mxu0
    %v1886 = vadd.f32 %v1282, %v1885
    %1887 = vdwg.mxu0
    %1888 = vmatprep.subr.bf16.mxu0 %v1518
    %1889 = vmatpush1.bf16.msra.mxu0 %v1517
    %1890 = vmatprep.subr.bf16.mxu0 %v1514
    %1891 = vmatpush1.bf16.msra.mxu0 %v1513
    %1892 = vmatprep.subr.bf16.mxu0 %v1510
    %1893 = vmatpush1.bf16.msra.mxu0 %v1509
    %1894 = vmatprep.subr.bf16.mxu0 %v1506
    %1895 = vmatpush1.bf16.msra.mxu0 %v1505
    %1896 = vmatprep.subr.bf16.mxu0 %v1502
    %1897 = vmatpush1.bf16.msra.mxu0 %v1501
    %1898 = vmatprep.subr.bf16.mxu0 %v1498
    %1899 = vmatpush1.bf16.msra.mxu0 %v1497
    %1900 = vmatprep.subr.bf16.mxu0 %v1494
    %1901 = vmatpush1.bf16.msra.mxu0 %v1493
    %1902 = vmatprep.subr.bf16.mxu0 %v1490
    %1903 = vmatpush1.bf16.msra.mxu0 %v1489
    %1904 = vmatprep.subr.bf16.mxu0 %v1550
    %1905 = vmatpush2.bf16.msra.mxu0 %v1549
    %1906 = vmatprep.subr.bf16.mxu0 %v1546
    %1907 = vmatpush2.bf16.msra.mxu0 %v1545
    %1908 = vmatprep.subr.bf16.mxu0 %v1542
    %1909 = vmatpush2.bf16.msra.mxu0 %v1541
    %1910 = vmatprep.subr.bf16.mxu0 %v1538
    %1911 = vmatpush2.bf16.msra.mxu0 %v1537
    %1912 = vmatprep.subr.bf16.mxu0 %v1534
    %1913 = vmatpush2.bf16.msra.mxu0 %v1533
    %1914 = vmatprep.subr.bf16.mxu0 %v1530
    %1915 = vmatpush2.bf16.msra.mxu0 %v1529
    %1916 = vmatprep.subr.bf16.mxu0 %v1526
    %1917 = vmatpush2.bf16.msra.mxu0 %v1525
    %1918 = vmatprep.subr.bf16.mxu0 %v1522
    %1919 = vmatpush2.bf16.msra.mxu0 %v1521
    %1920 = vmatprep.mubr.bf16.mxu0 %v1162
    %1921 = vmatmul.mubr.bf16.gmra.mxu0 %v1161
    %v1922 = vpop.f32.mrf.mxu0
    %v1923 = vadd.f32 %v1286, %v1922
    %v1924 = vpop.f32.mrf.mxu0
    %v1925 = vadd.f32 %v1290, %v1924
    %v1926 = vpop.f32.mrf.mxu0
    %v1927 = vadd.f32 %v1286, %v1926
    %v1928 = vpop.f32.mrf.mxu0
    %v1929 = vadd.f32 %v1290, %v1928
    %1930 = vmatprep.mubr.bf16.mxu0 %v1164
    %1931 = vmatmul.mubr.bf16.gmra.mxu0 %v1163
    %v1932 = vpop.f32.mrf.mxu0
    %v1933 = vadd.f32 %v1286, %v1932
    %v1934 = vpop.f32.mrf.mxu0
    %v1935 = vadd.f32 %v1290, %v1934
    %v1936 = vpop.f32.mrf.mxu0
    %v1937 = vadd.f32 %v1286, %v1936
    %v1938 = vpop.f32.mrf.mxu0
    %v1939 = vadd.f32 %v1290, %v1938
    %1940 = vmatprep.mubr.bf16.mxu0 %v1166
    %1941 = vmatmul.mubr.bf16.gmra.mxu0 %v1165
    %v1942 = vpop.f32.mrf.mxu0
    %v1943 = vadd.f32 %v1286, %v1942
    %v1944 = vpop.f32.mrf.mxu0
    %v1945 = vadd.f32 %v1290, %v1944
    %v1946 = vpop.f32.mrf.mxu0
    %v1947 = vadd.f32 %v1286, %v1946
    %v1948 = vpop.f32.mrf.mxu0
    %v1949 = vadd.f32 %v1290, %v1948
    %1950 = vmatprep.mubr.bf16.mxu0 %v1168
    %1951 = vmatmul.mubr.bf16.gmra.mxu0 %v1167
    %v1952 = vpop.f32.mrf.mxu0
    %v1953 = vadd.f32 %v1286, %v1952
    %v1954 = vpop.f32.mrf.mxu0
    %v1955 = vadd.f32 %v1290, %v1954
    %v1956 = vpop.f32.mrf.mxu0
    %v1957 = vadd.f32 %v1286, %v1956
    %v1958 = vpop.f32.mrf.mxu0
    %v1959 = vadd.f32 %v1290, %v1958
    %1960 = vmatprep.mubr.bf16.mxu0 %v1170
    %1961 = vmatmul.mubr.bf16.gmra.mxu0 %v1169
    %v1962 = vpop.f32.mrf.mxu0
    %v1963 = vadd.f32 %v1286, %v1962
    %v1964 = vpop.f32.mrf.mxu0
    %v1965 = vadd.f32 %v1290, %v1964
    %v1966 = vpop.f32.mrf.mxu0
    %v1967 = vadd.f32 %v1286, %v1966
    %v1968 = vpop.f32.mrf.mxu0
    %v1969 = vadd.f32 %v1290, %v1968
    %1970 = vmatprep.mubr.bf16.mxu0 %v1172
    %1971 = vmatmul.mubr.bf16.gmra.mxu0 %v1171
    %v1972 = vpop.f32.mrf.mxu0
    %v1973 = vadd.f32 %v1286, %v1972
    %v1974 = vpop.f32.mrf.mxu0
    %v1975 = vadd.f32 %v1290, %v1974
    %v1976 = vpop.f32.mrf.mxu0
    %v1977 = vadd.f32 %v1286, %v1976
    %v1978 = vpop.f32.mrf.mxu0
    %v1979 = vadd.f32 %v1290, %v1978
    %1980 = vmatprep.mubr.bf16.mxu0 %v1174
    %1981 = vmatmul.mubr.bf16.gmra.mxu0 %v1173
    %v1982 = vpop.f32.mrf.mxu0
    %v1983 = vadd.f32 %v1286, %v1982
    %v1984 = vpop.f32.mrf.mxu0
    %v1985 = vadd.f32 %v1290, %v1984
    %v1986 = vpop.f32.mrf.mxu0
    %v1987 = vadd.f32 %v1286, %v1986
    %v1988 = vpop.f32.mrf.mxu0
    %v1989 = vadd.f32 %v1290, %v1988
    %1990 = vmatprep.mubr.bf16.mxu0 %v1176
    %1991 = vmatmul.mubr.bf16.gmra.mxu0 %v1175
    %v1992 = vpop.f32.mrf.mxu0
    %v1993 = vadd.f32 %v1286, %v1992
    %v1994 = vpop.f32.mrf.mxu0
    %v1995 = vadd.f32 %v1290, %v1994
    %v1996 = vpop.f32.mrf.mxu0
    %v1997 = vadd.f32 %v1286, %v1996
    %v1998 = vpop.f32.mrf.mxu0
    %v1999 = vadd.f32 %v1290, %v1998
    %2000 = vmatprep.mubr.bf16.mxu0 %v1178
    %2001 = vmatmul.mubr.bf16.gmra.mxu0 %v1177
    %v2002 = vpop.f32.mrf.mxu0
    %v2003 = vadd.f32 %v1286, %v2002
    %v2004 = vpop.f32.mrf.mxu0
    %v2005 = vadd.f32 %v1290, %v2004
    %v2006 = vpop.f32.mrf.mxu0
    %v2007 = vadd.f32 %v1286, %v2006
    %v2008 = vpop.f32.mrf.mxu0
    %v2009 = vadd.f32 %v1290, %v2008
    %2010 = vmatprep.mubr.bf16.mxu0 %v1180
    %2011 = vmatmul.mubr.bf16.gmra.mxu0 %v1179
    %v2012 = vpop.f32.mrf.mxu0
    %v2013 = vadd.f32 %v1286, %v2012
    %v2014 = vpop.f32.mrf.mxu0
    %v2015 = vadd.f32 %v1290, %v2014
    %v2016 = vpop.f32.mrf.mxu0
    %v2017 = vadd.f32 %v1286, %v2016
    %v2018 = vpop.f32.mrf.mxu0
    %v2019 = vadd.f32 %v1290, %v2018
    %2020 = vmatprep.mubr.bf16.mxu0 %v1182
    %2021 = vmatmul.mubr.bf16.gmra.mxu0 %v1181
    %v2022 = vpop.f32.mrf.mxu0
    %v2023 = vadd.f32 %v1286, %v2022
    %v2024 = vpop.f32.mrf.mxu0
    %v2025 = vadd.f32 %v1290, %v2024
    %v2026 = vpop.f32.mrf.mxu0
    %v2027 = vadd.f32 %v1286, %v2026
    %v2028 = vpop.f32.mrf.mxu0
    %v2029 = vadd.f32 %v1290, %v2028
    %2030 = vmatprep.mubr.bf16.mxu0 %v1184
    %2031 = vmatmul.mubr.bf16.gmra.mxu0 %v1183
    %v2032 = vpop.f32.mrf.mxu0
    %v2033 = vadd.f32 %v1286, %v2032
    %v2034 = vpop.f32.mrf.mxu0
    %v2035 = vadd.f32 %v1290, %v2034
    %v2036 = vpop.f32.mrf.mxu0
    %v2037 = vadd.f32 %v1286, %v2036
    %v2038 = vpop.f32.mrf.mxu0
    %v2039 = vadd.f32 %v1290, %v2038
    %2040 = vmatprep.mubr.bf16.mxu0 %v1186
    %2041 = vmatmul.mubr.bf16.gmra.mxu0 %v1185
    %v2042 = vpop.f32.mrf.mxu0
    %v2043 = vadd.f32 %v1286, %v2042
    %v2044 = vpop.f32.mrf.mxu0
    %v2045 = vadd.f32 %v1290, %v2044
    %v2046 = vpop.f32.mrf.mxu0
    %v2047 = vadd.f32 %v1286, %v2046
    %v2048 = vpop.f32.mrf.mxu0
    %v2049 = vadd.f32 %v1290, %v2048
    %2050 = vmatprep.mubr.bf16.mxu0 %v1188
    %2051 = vmatmul.mubr.bf16.gmra.mxu0 %v1187
    %v2052 = vpop.f32.mrf.mxu0
    %v2053 = vadd.f32 %v1286, %v2052
    %v2054 = vpop.f32.mrf.mxu0
    %v2055 = vadd.f32 %v1290, %v2054
    %v2056 = vpop.f32.mrf.mxu0
    %v2057 = vadd.f32 %v1286, %v2056
    %v2058 = vpop.f32.mrf.mxu0
    %v2059 = vadd.f32 %v1290, %v2058
    %2060 = vmatprep.mubr.bf16.mxu0 %v1190
    %2061 = vmatmul.mubr.bf16.gmra.mxu0 %v1189
    %v2062 = vpop.f32.mrf.mxu0
    %v2063 = vadd.f32 %v1286, %v2062
    %v2064 = vpop.f32.mrf.mxu0
    %v2065 = vadd.f32 %v1290, %v2064
    %v2066 = vpop.f32.mrf.mxu0
    %v2067 = vadd.f32 %v1286, %v2066
    %v2068 = vpop.f32.mrf.mxu0
    %v2069 = vadd.f32 %v1290, %v2068
    %2070 = vmatprep.mubr.bf16.mxu0 %v1192
    %2071 = vmatmul.mubr.bf16.gmra.mxu0 %v1191
    %v2072 = vpop.f32.mrf.mxu0
    %v2073 = vadd.f32 %v1286, %v2072
    %v2074 = vpop.f32.mrf.mxu0
    %v2075 = vadd.f32 %v1290, %v2074
    %v2076 = vpop.f32.mrf.mxu0
    %v2077 = vadd.f32 %v1286, %v2076
    %v2078 = vpop.f32.mrf.mxu0
    %v2079 = vadd.f32 %v1290, %v2078
    %2080 = vmatprep.mubr.bf16.mxu0 %v1194
    %2081 = vmatmul.mubr.bf16.gmra.mxu0 %v1193
    %v2082 = vpop.f32.mrf.mxu0
    %v2083 = vadd.f32 %v1286, %v2082
    %v2084 = vpop.f32.mrf.mxu0
    %v2085 = vadd.f32 %v1290, %v2084
    %v2086 = vpop.f32.mrf.mxu0
    %v2087 = vadd.f32 %v1286, %v2086
    %v2088 = vpop.f32.mrf.mxu0
    %v2089 = vadd.f32 %v1290, %v2088
    %2090 = vmatprep.mubr.bf16.mxu0 %v1196
    %2091 = vmatmul.mubr.bf16.gmra.mxu0 %v1195
    %v2092 = vpop.f32.mrf.mxu0
    %v2093 = vadd.f32 %v1286, %v2092
    %v2094 = vpop.f32.mrf.mxu0
    %v2095 = vadd.f32 %v1290, %v2094
    %v2096 = vpop.f32.mrf.mxu0
    %v2097 = vadd.f32 %v1286, %v2096
    %v2098 = vpop.f32.mrf.mxu0
    %v2099 = vadd.f32 %v1290, %v2098
    %2100 = vmatprep.mubr.bf16.mxu0 %v1198
    %2101 = vmatmul.mubr.bf16.gmra.mxu0 %v1197
    %v2102 = vpop.f32.mrf.mxu0
    %v2103 = vadd.f32 %v1286, %v2102
    %v2104 = vpop.f32.mrf.mxu0
    %v2105 = vadd.f32 %v1290, %v2104
    %v2106 = vpop.f32.mrf.mxu0
    %v2107 = vadd.f32 %v1286, %v2106
    %v2108 = vpop.f32.mrf.mxu0
    %v2109 = vadd.f32 %v1290, %v2108
    %2110 = vmatprep.mubr.bf16.mxu0 %v1200
    %2111 = vmatmul.mubr.bf16.gmra.mxu0 %v1199
    %v2112 = vpop.f32.mrf.mxu0
    %v2113 = vadd.f32 %v1286, %v2112
    %v2114 = vpop.f32.mrf.mxu0
    %v2115 = vadd.f32 %v1290, %v2114
    %v2116 = vpop.f32.mrf.mxu0
    %v2117 = vadd.f32 %v1286, %v2116
    %v2118 = vpop.f32.mrf.mxu0
    %v2119 = vadd.f32 %v1290, %v2118
    %2120 = vmatprep.mubr.bf16.mxu0 %v1202
    %2121 = vmatmul.mubr.bf16.gmra.mxu0 %v1201
    %v2122 = vpop.f32.mrf.mxu0
    %v2123 = vadd.f32 %v1286, %v2122
    %v2124 = vpop.f32.mrf.mxu0
    %v2125 = vadd.f32 %v1290, %v2124
    %v2126 = vpop.f32.mrf.mxu0
    %v2127 = vadd.f32 %v1286, %v2126
    %v2128 = vpop.f32.mrf.mxu0
    %v2129 = vadd.f32 %v1290, %v2128
    %2130 = vmatprep.mubr.bf16.mxu0 %v1204
    %2131 = vmatmul.mubr.bf16.gmra.mxu0 %v1203
    %v2132 = vpop.f32.mrf.mxu0
    %v2133 = vadd.f32 %v1286, %v2132
    %v2134 = vpop.f32.mrf.mxu0
    %v2135 = vadd.f32 %v1290, %v2134
    %v2136 = vpop.f32.mrf.mxu0
    %v2137 = vadd.f32 %v1286, %v2136
    %v2138 = vpop.f32.mrf.mxu0
    %v2139 = vadd.f32 %v1290, %v2138
    %2140 = vmatprep.mubr.bf16.mxu0 %v1206
    %2141 = vmatmul.mubr.bf16.gmra.mxu0 %v1205
    %v2142 = vpop.f32.mrf.mxu0
    %v2143 = vadd.f32 %v1286, %v2142
    %v2144 = vpop.f32.mrf.mxu0
    %v2145 = vadd.f32 %v1290, %v2144
    %v2146 = vpop.f32.mrf.mxu0
    %v2147 = vadd.f32 %v1286, %v2146
    %v2148 = vpop.f32.mrf.mxu0
    %v2149 = vadd.f32 %v1290, %v2148
    %2150 = vmatprep.mubr.bf16.mxu0 %v1208
    %2151 = vmatmul.mubr.bf16.gmra.mxu0 %v1207
    %v2152 = vpop.f32.mrf.mxu0
    %v2153 = vadd.f32 %v1286, %v2152
    %v2154 = vpop.f32.mrf.mxu0
    %v2155 = vadd.f32 %v1290, %v2154
    %v2156 = vpop.f32.mrf.mxu0
    %v2157 = vadd.f32 %v1286, %v2156
    %v2158 = vpop.f32.mrf.mxu0
    %v2159 = vadd.f32 %v1290, %v2158
    %2160 = vdwg.mxu0
    %v2161 = vmul.f32 %v1650, 0.5
    %v2162 = vmul.f32 %v1652, 0.5
    %v2163 = vmul.f32 %v1923, 0.5
    %v2164 = vmul.f32 %v1925, 0.5
    %v2165 = vmul.f32 %v1654, 0.5
    %v2166 = vmul.f32 %v1656, 0.5
    %v2167 = vmul.f32 %v1927, 0.5
    %v2168 = vmul.f32 %v1929, 0.5
    %v2169 = vmul.f32 %v1660, 0.5
    %v2170 = vmul.f32 %v1662, 0.5
    %v2171 = vmul.f32 %v1933, 0.5
    %v2172 = vmul.f32 %v1935, 0.5
    %v2173 = vmul.f32 %v1664, 0.5
    %v2174 = vmul.f32 %v1666, 0.5
    %v2175 = vmul.f32 %v1937, 0.5
    %v2176 = vmul.f32 %v1939, 0.5
    %v2177 = vmul.f32 %v1670, 0.5
    %v2178 = vmul.f32 %v1672, 0.5
    %v2179 = vmul.f32 %v1943, 0.5
    %v2180 = vmul.f32 %v1945, 0.5
    %v2181 = vmul.f32 %v1674, 0.5
    %v2182 = vmul.f32 %v1676, 0.5
    %v2183 = vmul.f32 %v1947, 0.5
    %v2184 = vmul.f32 %v1949, 0.5
    %v2185 = vmul.f32 %v1680, 0.5
    %v2186 = vmul.f32 %v1682, 0.5
    %v2187 = vmul.f32 %v1953, 0.5
    %v2188 = vmul.f32 %v1955, 0.5
    %v2189 = vmul.f32 %v1684, 0.5
    %v2190 = vmul.f32 %v1686, 0.5
    %v2191 = vmul.f32 %v1957, 0.5
    %v2192 = vmul.f32 %v1959, 0.5
    %v2193 = vmul.f32 %v1690, 0.5
    %v2194 = vmul.f32 %v1692, 0.5
    %v2195 = vmul.f32 %v1963, 0.5
    %v2196 = vmul.f32 %v1965, 0.5
    %v2197 = vmul.f32 %v1694, 0.5
    %v2198 = vmul.f32 %v1696, 0.5
    %v2199 = vmul.f32 %v1967, 0.5
    %v2200 = vmul.f32 %v1969, 0.5
    %v2201 = vmul.f32 %v1700, 0.5
    %v2202 = vmul.f32 %v1702, 0.5
    %v2203 = vmul.f32 %v1973, 0.5
    %v2204 = vmul.f32 %v1975, 0.5
    %v2205 = vmul.f32 %v1704, 0.5
    %v2206 = vmul.f32 %v1706, 0.5
    %v2207 = vmul.f32 %v1977, 0.5
    %v2208 = vmul.f32 %v1979, 0.5
    %v2209 = vmul.f32 %v1710, 0.5
    %v2210 = vmul.f32 %v1712, 0.5
    %v2211 = vmul.f32 %v1983, 0.5
    %v2212 = vmul.f32 %v1985, 0.5
    %v2213 = vmul.f32 %v1714, 0.5
    %v2214 = vmul.f32 %v1716, 0.5
    %v2215 = vmul.f32 %v1987, 0.5
    %v2216 = vmul.f32 %v1989, 0.5
    %v2217 = vmul.f32 %v1720, 0.5
    %v2218 = vmul.f32 %v1722, 0.5
    %v2219 = vmul.f32 %v1993, 0.5
    %v2220 = vmul.f32 %v1995, 0.5
    %v2221 = vmul.f32 %v1724, 0.5
    %v2222 = vmul.f32 %v1726, 0.5
    %v2223 = vmul.f32 %v1997, 0.5
    %v2224 = vmul.f32 %v1999, 0.5
    %v2225 = vmul.f32 %v1730, 0.5
    %v2226 = vmul.f32 %v1732, 0.5
    %v2227 = vmul.f32 %v2003, 0.5
    %v2228 = vmul.f32 %v2005, 0.5
    %v2229 = vmul.f32 %v1734, 0.5
    %v2230 = vmul.f32 %v1736, 0.5
    %v2231 = vmul.f32 %v2007, 0.5
    %v2232 = vmul.f32 %v2009, 0.5
    %v2233 = vmul.f32 %v1740, 0.5
    %v2234 = vmul.f32 %v1742, 0.5
    %v2235 = vmul.f32 %v2013, 0.5
    %v2236 = vmul.f32 %v2015, 0.5
    %v2237 = vmul.f32 %v1744, 0.5
    %v2238 = vmul.f32 %v1746, 0.5
    %v2239 = vmul.f32 %v2017, 0.5
    %v2240 = vmul.f32 %v2019, 0.5
    %v2241 = vmul.f32 %v1750, 0.5
    %v2242 = vmul.f32 %v1752, 0.5
    %v2243 = vmul.f32 %v2023, 0.5
    %v2244 = vmul.f32 %v2025, 0.5
    %v2245 = vmul.f32 %v1754, 0.5
    %v2246 = vmul.f32 %v1756, 0.5
    %v2247 = vmul.f32 %v2027, 0.5
    %v2248 = vmul.f32 %v2029, 0.5
    %v2249 = vmul.f32 %v1760, 0.5
    %v2250 = vmul.f32 %v1762, 0.5
    %v2251 = vmul.f32 %v2033, 0.5
    %v2252 = vmul.f32 %v2035, 0.5
    %v2253 = vmul.f32 %v1764, 0.5
    %v2254 = vmul.f32 %v1766, 0.5
    %v2255 = vmul.f32 %v2037, 0.5
    %v2256 = vmul.f32 %v2039, 0.5
    %v2257 = vmul.f32 %v1770, 0.5
    %v2258 = vmul.f32 %v1772, 0.5
    %v2259 = vmul.f32 %v2043, 0.5
    %v2260 = vmul.f32 %v2045, 0.5
    %v2261 = vmul.f32 %v1774, 0.5
    %v2262 = vmul.f32 %v1776, 0.5
    %v2263 = vmul.f32 %v2047, 0.5
    %v2264 = vmul.f32 %v2049, 0.5
    %v2265 = vmul.f32 %v1780, 0.5
    %v2266 = vmul.f32 %v1782, 0.5
    %v2267 = vmul.f32 %v2053, 0.5
    %v2268 = vmul.f32 %v2055, 0.5
    %v2269 = vmul.f32 %v1784, 0.5
    %v2270 = vmul.f32 %v1786, 0.5
    %v2271 = vmul.f32 %v2057, 0.5
    %v2272 = vmul.f32 %v2059, 0.5
    %v2273 = vmul.f32 %v1790, 0.5
    %v2274 = vmul.f32 %v1792, 0.5
    %v2275 = vmul.f32 %v2063, 0.5
    %v2276 = vmul.f32 %v2065, 0.5
    %v2277 = vmul.f32 %v1794, 0.5
    %v2278 = vmul.f32 %v1796, 0.5
    %v2279 = vmul.f32 %v2067, 0.5
    %v2280 = vmul.f32 %v2069, 0.5
    %v2281 = vmul.f32 %v1800, 0.5
    %v2282 = vmul.f32 %v1802, 0.5
    %v2283 = vmul.f32 %v2073, 0.5
    %v2284 = vmul.f32 %v2075, 0.5
    %v2285 = vmul.f32 %v1804, 0.5
    %v2286 = vmul.f32 %v1806, 0.5
    %v2287 = vmul.f32 %v2077, 0.5
    %v2288 = vmul.f32 %v2079, 0.5
    %v2289 = vmul.f32 %v1810, 0.5
    %v2290 = vmul.f32 %v1812, 0.5
    %v2291 = vmul.f32 %v2083, 0.5
    %v2292 = vmul.f32 %v2085, 0.5
    %v2293 = vmul.f32 %v1814, 0.5
    %v2294 = vmul.f32 %v1816, 0.5
    %v2295 = vmul.f32 %v2087, 0.5
    %v2296 = vmul.f32 %v2089, 0.5
    %v2297 = vmul.f32 %v1820, 0.5
    %v2298 = vmul.f32 %v1822, 0.5
    %v2299 = vmul.f32 %v2093, 0.5
    %v2300 = vmul.f32 %v2095, 0.5
    %v2301 = vmul.f32 %v1824, 0.5
    %v2302 = vmul.f32 %v1826, 0.5
    %v2303 = vmul.f32 %v2097, 0.5
    %v2304 = vmul.f32 %v2099, 0.5
    %v2305 = vmul.f32 %v1830, 0.5
    %v2306 = vmul.f32 %v1832, 0.5
    %v2307 = vmul.f32 %v2103, 0.5
    %v2308 = vmul.f32 %v2105, 0.5
    %v2309 = vmul.f32 %v1834, 0.5
    %v2310 = vmul.f32 %v1836, 0.5
    %v2311 = vmul.f32 %v2107, 0.5
    %v2312 = vmul.f32 %v2109, 0.5
    %v2313 = vmul.f32 %v1840, 0.5
    %v2314 = vmul.f32 %v1842, 0.5
    %v2315 = vmul.f32 %v2113, 0.5
    %v2316 = vmul.f32 %v2115, 0.5
    %v2317 = vmul.f32 %v1844, 0.5
    %v2318 = vmul.f32 %v1846, 0.5
    %v2319 = vmul.f32 %v2117, 0.5
    %v2320 = vmul.f32 %v2119, 0.5
    %v2321 = vmul.f32 %v1850, 0.5
    %v2322 = vmul.f32 %v1852, 0.5
    %v2323 = vmul.f32 %v2123, 0.5
    %v2324 = vmul.f32 %v2125, 0.5
    %v2325 = vmul.f32 %v1854, 0.5
    %v2326 = vmul.f32 %v1856, 0.5
    %v2327 = vmul.f32 %v2127, 0.5
    %v2328 = vmul.f32 %v2129, 0.5
    %v2329 = vmul.f32 %v1860, 0.5
    %v2330 = vmul.f32 %v1862, 0.5
    %v2331 = vmul.f32 %v2133, 0.5
    %v2332 = vmul.f32 %v2135, 0.5
    %v2333 = vmul.f32 %v1864, 0.5
    %v2334 = vmul.f32 %v1866, 0.5
    %v2335 = vmul.f32 %v2137, 0.5
    %v2336 = vmul.f32 %v2139, 0.5
    %v2337 = vmul.f32 %v1870, 0.5
    %v2338 = vmul.f32 %v1872, 0.5
    %v2339 = vmul.f32 %v2143, 0.5
    %v2340 = vmul.f32 %v2145, 0.5
    %v2341 = vmul.f32 %v1874, 0.5
    %v2342 = vmul.f32 %v1876, 0.5
    %v2343 = vmul.f32 %v2147, 0.5
    %v2344 = vmul.f32 %v2149, 0.5
    %v2345 = vmul.f32 %v1880, 0.5
    %v2346 = vmul.f32 %v1882, 0.5
    %v2347 = vmul.f32 %v2153, 0.5
    %v2348 = vmul.f32 %v2155, 0.5
    %v2349 = vmul.f32 %v1884, 0.5
    %v2350 = vmul.f32 %v1886, 0.5
    %v2351 = vmul.f32 %v2157, 0.5
    %v2352 = vmul.f32 %v2159, 0.5
    %v2353 = vrcp.pop 1.4142135
    %v2354 = vmul.f32 %v1650, %v2353
    %v2355 = vmul.f32 %v1652, %v2353
    %v2356 = vmul.f32 %v1923, %v2353
    %v2357 = vmul.f32 %v1925, %v2353
    %v2358 = vmul.f32 %v1654, %v2353
    %v2359 = vmul.f32 %v1656, %v2353
    %v2360 = vmul.f32 %v1927, %v2353
    %v2361 = vmul.f32 %v1929, %v2353
    %v2362 = vmul.f32 %v1660, %v2353
    %v2363 = vmul.f32 %v1662, %v2353
    %v2364 = vmul.f32 %v1933, %v2353
    %v2365 = vmul.f32 %v1935, %v2353
    %v2366 = vmul.f32 %v1664, %v2353
    %v2367 = vmul.f32 %v1666, %v2353
    %v2368 = vmul.f32 %v1937, %v2353
    %v2369 = vmul.f32 %v1939, %v2353
    %v2370 = vmul.f32 %v1670, %v2353
    %v2371 = vmul.f32 %v1672, %v2353
    %v2372 = vmul.f32 %v1943, %v2353
    %v2373 = vmul.f32 %v1945, %v2353
    %v2374 = vmul.f32 %v1674, %v2353
    %v2375 = vmul.f32 %v1676, %v2353
    %v2376 = vmul.f32 %v1947, %v2353
    %v2377 = vmul.f32 %v1949, %v2353
    %v2378 = vmul.f32 %v1680, %v2353
    %v2379 = vmul.f32 %v1682, %v2353
    %v2380 = vmul.f32 %v1953, %v2353
    %v2381 = vmul.f32 %v1955, %v2353
    %v2382 = vmul.f32 %v1684, %v2353
    %v2383 = vmul.f32 %v1686, %v2353
    %v2384 = vmul.f32 %v1957, %v2353
    %v2385 = vmul.f32 %v1959, %v2353
    %v2386 = vmul.f32 %v1690, %v2353
    %v2387 = vmul.f32 %v1692, %v2353
    %v2388 = vmul.f32 %v1963, %v2353
    %v2389 = vmul.f32 %v1965, %v2353
    %v2390 = vmul.f32 %v1694, %v2353
    %v2391 = vmul.f32 %v1696, %v2353
    %v2392 = vmul.f32 %v1967, %v2353
    %v2393 = vmul.f32 %v1969, %v2353
    %v2394 = vmul.f32 %v1700, %v2353
    %v2395 = vmul.f32 %v1702, %v2353
    %v2396 = vmul.f32 %v1973, %v2353
    %v2397 = vmul.f32 %v1975, %v2353
    %v2398 = vmul.f32 %v1704, %v2353
    %v2399 = vmul.f32 %v1706, %v2353
    %v2400 = vmul.f32 %v1977, %v2353
    %v2401 = vmul.f32 %v1979, %v2353
    %v2402 = vmul.f32 %v1710, %v2353
    %v2403 = vmul.f32 %v1712, %v2353
    %v2404 = vmul.f32 %v1983, %v2353
    %v2405 = vmul.f32 %v1985, %v2353
    %v2406 = vmul.f32 %v1714, %v2353
    %v2407 = vmul.f32 %v1716, %v2353
    %v2408 = vmul.f32 %v1987, %v2353
    %v2409 = vmul.f32 %v1989, %v2353
    %v2410 = vmul.f32 %v1720, %v2353
    %v2411 = vmul.f32 %v1722, %v2353
    %v2412 = vmul.f32 %v1993, %v2353
    %v2413 = vmul.f32 %v1995, %v2353
    %v2414 = vmul.f32 %v1724, %v2353
    %v2415 = vmul.f32 %v1726, %v2353
    %v2416 = vmul.f32 %v1997, %v2353
    %v2417 = vmul.f32 %v1999, %v2353
    %v2418 = vmul.f32 %v1730, %v2353
    %v2419 = vmul.f32 %v1732, %v2353
    %v2420 = vmul.f32 %v2003, %v2353
    %v2421 = vmul.f32 %v2005, %v2353
    %v2422 = vmul.f32 %v1734, %v2353
    %v2423 = vmul.f32 %v1736, %v2353
    %v2424 = vmul.f32 %v2007, %v2353
    %v2425 = vmul.f32 %v2009, %v2353
    %v2426 = vmul.f32 %v1740, %v2353
    %v2427 = vmul.f32 %v1742, %v2353
    %v2428 = vmul.f32 %v2013, %v2353
    %v2429 = vmul.f32 %v2015, %v2353
    %v2430 = vmul.f32 %v1744, %v2353
    %v2431 = vmul.f32 %v1746, %v2353
    %v2432 = vmul.f32 %v2017, %v2353
    %v2433 = vmul.f32 %v2019, %v2353
    %v2434 = vmul.f32 %v1750, %v2353
    %v2435 = vmul.f32 %v1752, %v2353
    %v2436 = vmul.f32 %v2023, %v2353
    %v2437 = vmul.f32 %v2025, %v2353
    %v2438 = vmul.f32 %v1754, %v2353
    %v2439 = vmul.f32 %v1756, %v2353
    %v2440 = vmul.f32 %v2027, %v2353
    %v2441 = vmul.f32 %v2029, %v2353
    %v2442 = vmul.f32 %v1760, %v2353
    %v2443 = vmul.f32 %v1762, %v2353
    %v2444 = vmul.f32 %v2033, %v2353
    %v2445 = vmul.f32 %v2035, %v2353
    %v2446 = vmul.f32 %v1764, %v2353
    %v2447 = vmul.f32 %v1766, %v2353
    %v2448 = vmul.f32 %v2037, %v2353
    %v2449 = vmul.f32 %v2039, %v2353
    %v2450 = vmul.f32 %v1770, %v2353
    %v2451 = vmul.f32 %v1772, %v2353
    %v2452 = vmul.f32 %v2043, %v2353
    %v2453 = vmul.f32 %v2045, %v2353
    %v2454 = vmul.f32 %v1774, %v2353
    %v2455 = vmul.f32 %v1776, %v2353
    %v2456 = vmul.f32 %v2047, %v2353
    %v2457 = vmul.f32 %v2049, %v2353
    %v2458 = vmul.f32 %v1780, %v2353
    %v2459 = vmul.f32 %v1782, %v2353
    %v2460 = vmul.f32 %v2053, %v2353
    %v2461 = vmul.f32 %v2055, %v2353
    %v2462 = vmul.f32 %v1784, %v2353
    %v2463 = vmul.f32 %v1786, %v2353
    %v2464 = vmul.f32 %v2057, %v2353
    %v2465 = vmul.f32 %v2059, %v2353
    %v2466 = vmul.f32 %v1790, %v2353
    %v2467 = vmul.f32 %v1792, %v2353
    %v2468 = vmul.f32 %v2063, %v2353
    %v2469 = vmul.f32 %v2065, %v2353
    %v2470 = vmul.f32 %v1794, %v2353
    %v2471 = vmul.f32 %v1796, %v2353
    %v2472 = vmul.f32 %v2067, %v2353
    %v2473 = vmul.f32 %v2069, %v2353
    %v2474 = vmul.f32 %v1800, %v2353
    %v2475 = vmul.f32 %v1802, %v2353
    %v2476 = vmul.f32 %v2073, %v2353
    %v2477 = vmul.f32 %v2075, %v2353
    %v2478 = vmul.f32 %v1804, %v2353
    %v2479 = vmul.f32 %v1806, %v2353
    %v2480 = vmul.f32 %v2077, %v2353
    %v2481 = vmul.f32 %v2079, %v2353
    %v2482 = vmul.f32 %v1810, %v2353
    %v2483 = vmul.f32 %v1812, %v2353
    %v2484 = vmul.f32 %v2083, %v2353
    %v2485 = vmul.f32 %v2085, %v2353
    %v2486 = vmul.f32 %v1814, %v2353
    %v2487 = vmul.f32 %v1816, %v2353
    %v2488 = vmul.f32 %v2087, %v2353
    %v2489 = vmul.f32 %v2089, %v2353
    %v2490 = vmul.f32 %v1820, %v2353
    %v2491 = vmul.f32 %v1822, %v2353
    %v2492 = vmul.f32 %v2093, %v2353
    %v2493 = vmul.f32 %v2095, %v2353
    %v2494 = vmul.f32 %v1824, %v2353
    %v2495 = vmul.f32 %v1826, %v2353
    %v2496 = vmul.f32 %v2097, %v2353
    %v2497 = vmul.f32 %v2099, %v2353
    %v2498 = vmul.f32 %v1830, %v2353
    %v2499 = vmul.f32 %v1832, %v2353
    %v2500 = vmul.f32 %v2103, %v2353
    %v2501 = vmul.f32 %v2105, %v2353
    %v2502 = vmul.f32 %v1834, %v2353
    %v2503 = vmul.f32 %v1836, %v2353
    %v2504 = vmul.f32 %v2107, %v2353
    %v2505 = vmul.f32 %v2109, %v2353
    %v2506 = vmul.f32 %v1840, %v2353
    %v2507 = vmul.f32 %v1842, %v2353
    %v2508 = vmul.f32 %v2113, %v2353
    %v2509 = vmul.f32 %v2115, %v2353
    %v2510 = vmul.f32 %v1844, %v2353
    %v2511 = vmul.f32 %v1846, %v2353
    %v2512 = vmul.f32 %v2117, %v2353
    %v2513 = vmul.f32 %v2119, %v2353
    %v2514 = vmul.f32 %v1850, %v2353
    %v2515 = vmul.f32 %v1852, %v2353
    %v2516 = vmul.f32 %v2123, %v2353
    %v2517 = vmul.f32 %v2125, %v2353
    %v2518 = vmul.f32 %v1854, %v2353
    %v2519 = vmul.f32 %v1856, %v2353
    %v2520 = vmul.f32 %v2127, %v2353
    %v2521 = vmul.f32 %v2129, %v2353
    %v2522 = vmul.f32 %v1860, %v2353
    %v2523 = vmul.f32 %v1862, %v2353
    %v2524 = vmul.f32 %v2133, %v2353
    %v2525 = vmul.f32 %v2135, %v2353
    %v2526 = vmul.f32 %v1864, %v2353
    %v2527 = vmul.f32 %v1866, %v2353
    %v2528 = vmul.f32 %v2137, %v2353
    %v2529 = vmul.f32 %v2139, %v2353
    %v2530 = vmul.f32 %v1870, %v2353
    %v2531 = vmul.f32 %v1872, %v2353
    %v2532 = vmul.f32 %v2143, %v2353
    %v2533 = vmul.f32 %v2145, %v2353
    %v2534 = vmul.f32 %v1874, %v2353
    %v2535 = vmul.f32 %v1876, %v2353
    %v2536 = vmul.f32 %v2147, %v2353
    %v2537 = vmul.f32 %v2149, %v2353
    %v2538 = vmul.f32 %v1880, %v2353
    %v2539 = vmul.f32 %v1882, %v2353
    %v2540 = vmul.f32 %v2153, %v2353
    %v2541 = vmul.f32 %v2155, %v2353
    %v2542 = vmul.f32 %v1884, %v2353
    %v2543 = vmul.f32 %v1886, %v2353
    %v2544 = vmul.f32 %v2157, %v2353
    %v2545 = vmul.f32 %v2159, %v2353
    %v2546 = verf.f32.pop %v2354
    %v2547 = verf.f32.pop %v2355
    %v2548 = verf.f32.pop %v2356
    %v2549 = verf.f32.pop %v2357
    %v2550 = verf.f32.pop %v2358
    %v2551 = verf.f32.pop %v2359
    %v2552 = verf.f32.pop %v2360
    %v2553 = verf.f32.pop %v2361
    %v2554 = verf.f32.pop %v2362
    %v2555 = verf.f32.pop %v2363
    %v2556 = verf.f32.pop %v2364
    %v2557 = verf.f32.pop %v2365
    %v2558 = verf.f32.pop %v2366
    %v2559 = verf.f32.pop %v2367
    %v2560 = verf.f32.pop %v2368
    %v2561 = verf.f32.pop %v2369
    %v2562 = verf.f32.pop %v2370
    %v2563 = verf.f32.pop %v2371
    %v2564 = verf.f32.pop %v2372
    %v2565 = verf.f32.pop %v2373
    %v2566 = verf.f32.pop %v2374
    %v2567 = verf.f32.pop %v2375
    %v2568 = verf.f32.pop %v2376
    %v2569 = verf.f32.pop %v2377
    %v2570 = verf.f32.pop %v2378
    %v2571 = verf.f32.pop %v2379
    %v2572 = verf.f32.pop %v2380
    %v2573 = verf.f32.pop %v2381
    %v2574 = verf.f32.pop %v2382
    %v2575 = verf.f32.pop %v2383
    %v2576 = verf.f32.pop %v2384
    %v2577 = verf.f32.pop %v2385
    %v2578 = verf.f32.pop %v2386
    %v2579 = verf.f32.pop %v2387
    %v2580 = verf.f32.pop %v2388
    %v2581 = verf.f32.pop %v2389
    %v2582 = verf.f32.pop %v2390
    %v2583 = verf.f32.pop %v2391
    %v2584 = verf.f32.pop %v2392
    %v2585 = verf.f32.pop %v2393
    %v2586 = verf.f32.pop %v2394
    %v2587 = verf.f32.pop %v2395
    %v2588 = verf.f32.pop %v2396
    %v2589 = verf.f32.pop %v2397
    %v2590 = verf.f32.pop %v2398
    %v2591 = verf.f32.pop %v2399
    %v2592 = verf.f32.pop %v2400
    %v2593 = verf.f32.pop %v2401
    %v2594 = verf.f32.pop %v2402
    %v2595 = verf.f32.pop %v2403
    %v2596 = verf.f32.pop %v2404
    %v2597 = verf.f32.pop %v2405
    %v2598 = verf.f32.pop %v2406
    %v2599 = verf.f32.pop %v2407
    %v2600 = verf.f32.pop %v2408
    %v2601 = verf.f32.pop %v2409
    %v2602 = verf.f32.pop %v2410
    %v2603 = verf.f32.pop %v2411
    %v2604 = verf.f32.pop %v2412
    %v2605 = verf.f32.pop %v2413
    %v2606 = verf.f32.pop %v2414
    %v2607 = verf.f32.pop %v2415
    %v2608 = verf.f32.pop %v2416
    %v2609 = verf.f32.pop %v2417
    %v2610 = verf.f32.pop %v2418
    %v2611 = verf.f32.pop %v2419
    %v2612 = verf.f32.pop %v2420
    %v2613 = verf.f32.pop %v2421
    %v2614 = verf.f32.pop %v2422
    %v2615 = verf.f32.pop %v2423
    %v2616 = verf.f32.pop %v2424
    %v2617 = verf.f32.pop %v2425
    %v2618 = verf.f32.pop %v2426
    %v2619 = verf.f32.pop %v2427
    %v2620 = verf.f32.pop %v2428
    %v2621 = verf.f32.pop %v2429
    %v2622 = verf.f32.pop %v2430
    %v2623 = verf.f32.pop %v2431
    %v2624 = verf.f32.pop %v2432
    %v2625 = verf.f32.pop %v2433
    %v2626 = verf.f32.pop %v2434
    %v2627 = verf.f32.pop %v2435
    %v2628 = verf.f32.pop %v2436
    %v2629 = verf.f32.pop %v2437
    %v2630 = verf.f32.pop %v2438
    %v2631 = verf.f32.pop %v2439
    %v2632 = verf.f32.pop %v2440
    %v2633 = verf.f32.pop %v2441
    %v2634 = verf.f32.pop %v2442
    %v2635 = verf.f32.pop %v2443
    %v2636 = verf.f32.pop %v2444
    %v2637 = verf.f32.pop %v2445
    %v2638 = verf.f32.pop %v2446
    %v2639 = verf.f32.pop %v2447
    %v2640 = verf.f32.pop %v2448
    %v2641 = verf.f32.pop %v2449
    %v2642 = verf.f32.pop %v2450
    %v2643 = verf.f32.pop %v2451
    %v2644 = verf.f32.pop %v2452
    %v2645 = verf.f32.pop %v2453
    %v2646 = verf.f32.pop %v2454
    %v2647 = verf.f32.pop %v2455
    %v2648 = verf.f32.pop %v2456
    %v2649 = verf.f32.pop %v2457
    %v2650 = verf.f32.pop %v2458
    %v2651 = verf.f32.pop %v2459
    %v2652 = verf.f32.pop %v2460
    %v2653 = verf.f32.pop %v2461
    %v2654 = verf.f32.pop %v2462
    %v2655 = verf.f32.pop %v2463
    %v2656 = verf.f32.pop %v2464
    %v2657 = verf.f32.pop %v2465
    %v2658 = verf.f32.pop %v2466
    %v2659 = verf.f32.pop %v2467
    %v2660 = verf.f32.pop %v2468
    %v2661 = verf.f32.pop %v2469
    %v2662 = verf.f32.pop %v2470
    %v2663 = verf.f32.pop %v2471
    %v2664 = verf.f32.pop %v2472
    %v2665 = verf.f32.pop %v2473
    %v2666 = verf.f32.pop %v2474
    %v2667 = verf.f32.pop %v2475
    %v2668 = verf.f32.pop %v2476
    %v2669 = verf.f32.pop %v2477
    %v2670 = verf.f32.pop %v2478
    %v2671 = verf.f32.pop %v2479
    %v2672 = verf.f32.pop %v2480
    %v2673 = verf.f32.pop %v2481
    %v2674 = verf.f32.pop %v2482
    %v2675 = verf.f32.pop %v2483
    %v2676 = verf.f32.pop %v2484
    %v2677 = verf.f32.pop %v2485
    %v2678 = verf.f32.pop %v2486
    %v2679 = verf.f32.pop %v2487
    %v2680 = verf.f32.pop %v2488
    %v2681 = verf.f32.pop %v2489
    %v2682 = verf.f32.pop %v2490
    %v2683 = verf.f32.pop %v2491
    %v2684 = verf.f32.pop %v2492
    %v2685 = verf.f32.pop %v2493
    %v2686 = verf.f32.pop %v2494
    %v2687 = verf.f32.pop %v2495
    %v2688 = verf.f32.pop %v2496
    %v2689 = verf.f32.pop %v2497
    %v2690 = verf.f32.pop %v2498
    %v2691 = verf.f32.pop %v2499
    %v2692 = verf.f32.pop %v2500
    %v2693 = verf.f32.pop %v2501
    %v2694 = verf.f32.pop %v2502
    %v2695 = verf.f32.pop %v2503
    %v2696 = verf.f32.pop %v2504
    %v2697 = verf.f32.pop %v2505
    %v2698 = verf.f32.pop %v2506
    %v2699 = verf.f32.pop %v2507
    %v2700 = verf.f32.pop %v2508
    %v2701 = verf.f32.pop %v2509
    %v2702 = verf.f32.pop %v2510
    %v2703 = verf.f32.pop %v2511
    %v2704 = verf.f32.pop %v2512
    %v2705 = verf.f32.pop %v2513
    %v2706 = verf.f32.pop %v2514
    %v2707 = verf.f32.pop %v2515
    %v2708 = verf.f32.pop %v2516
    %v2709 = verf.f32.pop %v2517
    %v2710 = verf.f32.pop %v2518
    %v2711 = verf.f32.pop %v2519
    %v2712 = verf.f32.pop %v2520
    %v2713 = verf.f32.pop %v2521
    %v2714 = verf.f32.pop %v2522
    %v2715 = verf.f32.pop %v2523
    %v2716 = verf.f32.pop %v2524
    %v2717 = verf.f32.pop %v2525
    %v2718 = verf.f32.pop %v2526
    %v2719 = verf.f32.pop %v2527
    %v2720 = verf.f32.pop %v2528
    %v2721 = verf.f32.pop %v2529
    %v2722 = verf.f32.pop %v2530
    %v2723 = verf.f32.pop %v2531
    %v2724 = verf.f32.pop %v2532
    %v2725 = verf.f32.pop %v2533
    %v2726 = verf.f32.pop %v2534
    %v2727 = verf.f32.pop %v2535
    %v2728 = verf.f32.pop %v2536
    %v2729 = verf.f32.pop %v2537
    %v2730 = verf.f32.pop %v2538
    %v2731 = verf.f32.pop %v2539
    %v2732 = verf.f32.pop %v2540
    %v2733 = verf.f32.pop %v2541
    %v2734 = verf.f32.pop %v2542
    %v2735 = verf.f32.pop %v2543
    %v2736 = verf.f32.pop %v2544
    %v2737 = verf.f32.pop %v2545
    %v2738 = vadd.f32 %v2546, 1.0
    %v2739 = vadd.f32 %v2547, 1.0
    %v2740 = vadd.f32 %v2548, 1.0
    %v2741 = vadd.f32 %v2549, 1.0
    %v2742 = vadd.f32 %v2550, 1.0
    %v2743 = vadd.f32 %v2551, 1.0
    %v2744 = vadd.f32 %v2552, 1.0
    %v2745 = vadd.f32 %v2553, 1.0
    %v2746 = vadd.f32 %v2554, 1.0
    %v2747 = vadd.f32 %v2555, 1.0
    %v2748 = vadd.f32 %v2556, 1.0
    %v2749 = vadd.f32 %v2557, 1.0
    %v2750 = vadd.f32 %v2558, 1.0
    %v2751 = vadd.f32 %v2559, 1.0
    %v2752 = vadd.f32 %v2560, 1.0
    %v2753 = vadd.f32 %v2561, 1.0
    %v2754 = vadd.f32 %v2562, 1.0
    %v2755 = vadd.f32 %v2563, 1.0
    %v2756 = vadd.f32 %v2564, 1.0
    %v2757 = vadd.f32 %v2565, 1.0
    %v2758 = vadd.f32 %v2566, 1.0
    %v2759 = vadd.f32 %v2567, 1.0
    %v2760 = vadd.f32 %v2568, 1.0
    %v2761 = vadd.f32 %v2569, 1.0
    %v2762 = vadd.f32 %v2570, 1.0
    %v2763 = vadd.f32 %v2571, 1.0
    %v2764 = vadd.f32 %v2572, 1.0
    %v2765 = vadd.f32 %v2573, 1.0
    %v2766 = vadd.f32 %v2574, 1.0
    %v2767 = vadd.f32 %v2575, 1.0
    %v2768 = vadd.f32 %v2576, 1.0
    %v2769 = vadd.f32 %v2577, 1.0
    %v2770 = vadd.f32 %v2578, 1.0
    %v2771 = vadd.f32 %v2579, 1.0
    %v2772 = vadd.f32 %v2580, 1.0
    %v2773 = vadd.f32 %v2581, 1.0
    %v2774 = vadd.f32 %v2582, 1.0
    %v2775 = vadd.f32 %v2583, 1.0
    %v2776 = vadd.f32 %v2584, 1.0
    %v2777 = vadd.f32 %v2585, 1.0
    %v2778 = vadd.f32 %v2586, 1.0
    %v2779 = vadd.f32 %v2587, 1.0
    %v2780 = vadd.f32 %v2588, 1.0
    %v2781 = vadd.f32 %v2589, 1.0
    %v2782 = vadd.f32 %v2590, 1.0
    %v2783 = vadd.f32 %v2591, 1.0
    %v2784 = vadd.f32 %v2592, 1.0
    %v2785 = vadd.f32 %v2593, 1.0
    %v2786 = vadd.f32 %v2594, 1.0
    %v2787 = vadd.f32 %v2595, 1.0
    %v2788 = vadd.f32 %v2596, 1.0
    %v2789 = vadd.f32 %v2597, 1.0
    %v2790 = vadd.f32 %v2598, 1.0
    %v2791 = vadd.f32 %v2599, 1.0
    %v2792 = vadd.f32 %v2600, 1.0
    %v2793 = vadd.f32 %v2601, 1.0
    %v2794 = vadd.f32 %v2602, 1.0
    %v2795 = vadd.f32 %v2603, 1.0
    %v2796 = vadd.f32 %v2604, 1.0
    %v2797 = vadd.f32 %v2605, 1.0
    %v2798 = vadd.f32 %v2606, 1.0
    %v2799 = vadd.f32 %v2607, 1.0
    %v2800 = vadd.f32 %v2608, 1.0
    %v2801 = vadd.f32 %v2609, 1.0
    %v2802 = vadd.f32 %v2610, 1.0
    %v2803 = vadd.f32 %v2611, 1.0
    %v2804 = vadd.f32 %v2612, 1.0
    %v2805 = vadd.f32 %v2613, 1.0
    %v2806 = vadd.f32 %v2614, 1.0
    %v2807 = vadd.f32 %v2615, 1.0
    %v2808 = vadd.f32 %v2616, 1.0
    %v2809 = vadd.f32 %v2617, 1.0
    %v2810 = vadd.f32 %v2618, 1.0
    %v2811 = vadd.f32 %v2619, 1.0
    %v2812 = vadd.f32 %v2620, 1.0
    %v2813 = vadd.f32 %v2621, 1.0
    %v2814 = vadd.f32 %v2622, 1.0
    %v2815 = vadd.f32 %v2623, 1.0
    %v2816 = vadd.f32 %v2624, 1.0
    %v2817 = vadd.f32 %v2625, 1.0
    %v2818 = vadd.f32 %v2626, 1.0
    %v2819 = vadd.f32 %v2627, 1.0
    %v2820 = vadd.f32 %v2628, 1.0
    %v2821 = vadd.f32 %v2629, 1.0
    %v2822 = vadd.f32 %v2630, 1.0
    %v2823 = vadd.f32 %v2631, 1.0
    %v2824 = vadd.f32 %v2632, 1.0
    %v2825 = vadd.f32 %v2633, 1.0
    %v2826 = vadd.f32 %v2634, 1.0
    %v2827 = vadd.f32 %v2635, 1.0
    %v2828 = vadd.f32 %v2636, 1.0
    %v2829 = vadd.f32 %v2637, 1.0
    %v2830 = vadd.f32 %v2638, 1.0
    %v2831 = vadd.f32 %v2639, 1.0
    %v2832 = vadd.f32 %v2640, 1.0
    %v2833 = vadd.f32 %v2641, 1.0
    %v2834 = vadd.f32 %v2642, 1.0
    %v2835 = vadd.f32 %v2643, 1.0
    %v2836 = vadd.f32 %v2644, 1.0
    %v2837 = vadd.f32 %v2645, 1.0
    %v2838 = vadd.f32 %v2646, 1.0
    %v2839 = vadd.f32 %v2647, 1.0
    %v2840 = vadd.f32 %v2648, 1.0
    %v2841 = vadd.f32 %v2649, 1.0
    %v2842 = vadd.f32 %v2650, 1.0
    %v2843 = vadd.f32 %v2651, 1.0
    %v2844 = vadd.f32 %v2652, 1.0
    %v2845 = vadd.f32 %v2653, 1.0
    %v2846 = vadd.f32 %v2654, 1.0
    %v2847 = vadd.f32 %v2655, 1.0
    %v2848 = vadd.f32 %v2656, 1.0
    %v2849 = vadd.f32 %v2657, 1.0
    %v2850 = vadd.f32 %v2658, 1.0
    %v2851 = vadd.f32 %v2659, 1.0
    %v2852 = vadd.f32 %v2660, 1.0
    %v2853 = vadd.f32 %v2661, 1.0
    %v2854 = vadd.f32 %v2662, 1.0
    %v2855 = vadd.f32 %v2663, 1.0
    %v2856 = vadd.f32 %v2664, 1.0
    %v2857 = vadd.f32 %v2665, 1.0
    %v2858 = vadd.f32 %v2666, 1.0
    %v2859 = vadd.f32 %v2667, 1.0
    %v2860 = vadd.f32 %v2668, 1.0
    %v2861 = vadd.f32 %v2669, 1.0
    %v2862 = vadd.f32 %v2670, 1.0
    %v2863 = vadd.f32 %v2671, 1.0
    %v2864 = vadd.f32 %v2672, 1.0
    %v2865 = vadd.f32 %v2673, 1.0
    %v2866 = vadd.f32 %v2674, 1.0
    %v2867 = vadd.f32 %v2675, 1.0
    %v2868 = vadd.f32 %v2676, 1.0
    %v2869 = vadd.f32 %v2677, 1.0
    %v2870 = vadd.f32 %v2678, 1.0
    %v2871 = vadd.f32 %v2679, 1.0
    %v2872 = vadd.f32 %v2680, 1.0
    %v2873 = vadd.f32 %v2681, 1.0
    %v2874 = vadd.f32 %v2682, 1.0
    %v2875 = vadd.f32 %v2683, 1.0
    %v2876 = vadd.f32 %v2684, 1.0
    %v2877 = vadd.f32 %v2685, 1.0
    %v2878 = vadd.f32 %v2686, 1.0
    %v2879 = vadd.f32 %v2687, 1.0
    %v2880 = vadd.f32 %v2688, 1.0
    %v2881 = vadd.f32 %v2689, 1.0
    %v2882 = vadd.f32 %v2690, 1.0
    %v2883 = vadd.f32 %v2691, 1.0
    %v2884 = vadd.f32 %v2692, 1.0
    %v2885 = vadd.f32 %v2693, 1.0
    %v2886 = vadd.f32 %v2694, 1.0
    %v2887 = vadd.f32 %v2695, 1.0
    %v2888 = vadd.f32 %v2696, 1.0
    %v2889 = vadd.f32 %v2697, 1.0
    %v2890 = vadd.f32 %v2698, 1.0
    %v2891 = vadd.f32 %v2699, 1.0
    %v2892 = vadd.f32 %v2700, 1.0
    %v2893 = vadd.f32 %v2701, 1.0
    %v2894 = vadd.f32 %v2702, 1.0
    %v2895 = vadd.f32 %v2703, 1.0
    %v2896 = vadd.f32 %v2704, 1.0
    %v2897 = vadd.f32 %v2705, 1.0
    %v2898 = vadd.f32 %v2706, 1.0
    %v2899 = vadd.f32 %v2707, 1.0
    %v2900 = vadd.f32 %v2708, 1.0
    %v2901 = vadd.f32 %v2709, 1.0
    %v2902 = vadd.f32 %v2710, 1.0
    %v2903 = vadd.f32 %v2711, 1.0
    %v2904 = vadd.f32 %v2712, 1.0
    %v2905 = vadd.f32 %v2713, 1.0
    %v2906 = vadd.f32 %v2714, 1.0
    %v2907 = vadd.f32 %v2715, 1.0
    %v2908 = vadd.f32 %v2716, 1.0
    %v2909 = vadd.f32 %v2717, 1.0
    %v2910 = vadd.f32 %v2718, 1.0
    %v2911 = vadd.f32 %v2719, 1.0
    %v2912 = vadd.f32 %v2720, 1.0
    %v2913 = vadd.f32 %v2721, 1.0
    %v2914 = vadd.f32 %v2722, 1.0
    %v2915 = vadd.f32 %v2723, 1.0
    %v2916 = vadd.f32 %v2724, 1.0
    %v2917 = vadd.f32 %v2725, 1.0
    %v2918 = vadd.f32 %v2726, 1.0
    %v2919 = vadd.f32 %v2727, 1.0
    %v2920 = vadd.f32 %v2728, 1.0
    %v2921 = vadd.f32 %v2729, 1.0
    %v2922 = vadd.f32 %v2730, 1.0
    %v2923 = vadd.f32 %v2731, 1.0
    %v2924 = vadd.f32 %v2732, 1.0
    %v2925 = vadd.f32 %v2733, 1.0
    %v2926 = vadd.f32 %v2734, 1.0
    %v2927 = vadd.f32 %v2735, 1.0
    %v2928 = vadd.f32 %v2736, 1.0
    %v2929 = vadd.f32 %v2737, 1.0
    %v2930 = vmul.f32 %v2161, %v2738
    %v2931 = vmul.f32 %v2162, %v2739
    %v2932 = vmul.f32 %v2163, %v2740
    %v2933 = vmul.f32 %v2164, %v2741
    %v2934 = vmul.f32 %v2165, %v2742
    %v2935 = vmul.f32 %v2166, %v2743
    %v2936 = vmul.f32 %v2167, %v2744
    %v2937 = vmul.f32 %v2168, %v2745
    %v2938 = vmul.f32 %v2169, %v2746
    %v2939 = vmul.f32 %v2170, %v2747
    %v2940 = vmul.f32 %v2171, %v2748
    %v2941 = vmul.f32 %v2172, %v2749
    %v2942 = vmul.f32 %v2173, %v2750
    %v2943 = vmul.f32 %v2174, %v2751
    %v2944 = vmul.f32 %v2175, %v2752
    %v2945 = vmul.f32 %v2176, %v2753
    %v2946 = vmul.f32 %v2177, %v2754
    %v2947 = vmul.f32 %v2178, %v2755
    %v2948 = vmul.f32 %v2179, %v2756
    %v2949 = vmul.f32 %v2180, %v2757
    %v2950 = vmul.f32 %v2181, %v2758
    %v2951 = vmul.f32 %v2182, %v2759
    %v2952 = vmul.f32 %v2183, %v2760
    %v2953 = vmul.f32 %v2184, %v2761
    %v2954 = vmul.f32 %v2185, %v2762
    %v2955 = vmul.f32 %v2186, %v2763
    %v2956 = vmul.f32 %v2187, %v2764
    %v2957 = vmul.f32 %v2188, %v2765
    %v2958 = vmul.f32 %v2189, %v2766
    %v2959 = vmul.f32 %v2190, %v2767
    %v2960 = vmul.f32 %v2191, %v2768
    %v2961 = vmul.f32 %v2192, %v2769
    %v2962 = vmul.f32 %v2193, %v2770
    %v2963 = vmul.f32 %v2194, %v2771
    %v2964 = vmul.f32 %v2195, %v2772
    %v2965 = vmul.f32 %v2196, %v2773
    %v2966 = vmul.f32 %v2197, %v2774
    %v2967 = vmul.f32 %v2198, %v2775
    %v2968 = vmul.f32 %v2199, %v2776
    %v2969 = vmul.f32 %v2200, %v2777
    %v2970 = vmul.f32 %v2201, %v2778
    %v2971 = vmul.f32 %v2202, %v2779
    %v2972 = vmul.f32 %v2203, %v2780
    %v2973 = vmul.f32 %v2204, %v2781
    %v2974 = vmul.f32 %v2205, %v2782
    %v2975 = vmul.f32 %v2206, %v2783
    %v2976 = vmul.f32 %v2207, %v2784
    %v2977 = vmul.f32 %v2208, %v2785
    %v2978 = vmul.f32 %v2209, %v2786
    %v2979 = vmul.f32 %v2210, %v2787
    %v2980 = vmul.f32 %v2211, %v2788
    %v2981 = vmul.f32 %v2212, %v2789
    %v2982 = vmul.f32 %v2213, %v2790
    %v2983 = vmul.f32 %v2214, %v2791
    %v2984 = vmul.f32 %v2215, %v2792
    %v2985 = vmul.f32 %v2216, %v2793
    %v2986 = vmul.f32 %v2217, %v2794
    %v2987 = vmul.f32 %v2218, %v2795
    %v2988 = vmul.f32 %v2219, %v2796
    %v2989 = vmul.f32 %v2220, %v2797
    %v2990 = vmul.f32 %v2221, %v2798
    %v2991 = vmul.f32 %v2222, %v2799
    %v2992 = vmul.f32 %v2223, %v2800
    %v2993 = vmul.f32 %v2224, %v2801
    %v2994 = vmul.f32 %v2225, %v2802
    %v2995 = vmul.f32 %v2226, %v2803
    %v2996 = vmul.f32 %v2227, %v2804
    %v2997 = vmul.f32 %v2228, %v2805
    %v2998 = vmul.f32 %v2229, %v2806
    %v2999 = vmul.f32 %v2230, %v2807
    %v3000 = vmul.f32 %v2231, %v2808
    %v3001 = vmul.f32 %v2232, %v2809
    %v3002 = vmul.f32 %v2233, %v2810
    %v3003 = vmul.f32 %v2234, %v2811
    %v3004 = vmul.f32 %v2235, %v2812
    %v3005 = vmul.f32 %v2236, %v2813
    %v3006 = vmul.f32 %v2237, %v2814
    %v3007 = vmul.f32 %v2238, %v2815
    %v3008 = vmul.f32 %v2239, %v2816
    %v3009 = vmul.f32 %v2240, %v2817
    %v3010 = vmul.f32 %v2241, %v2818
    %v3011 = vmul.f32 %v2242, %v2819
    %v3012 = vmul.f32 %v2243, %v2820
    %v3013 = vmul.f32 %v2244, %v2821
    %v3014 = vmul.f32 %v2245, %v2822
    %v3015 = vmul.f32 %v2246, %v2823
    %v3016 = vmul.f32 %v2247, %v2824
    %v3017 = vmul.f32 %v2248, %v2825
    %v3018 = vmul.f32 %v2249, %v2826
    %v3019 = vmul.f32 %v2250, %v2827
    %v3020 = vmul.f32 %v2251, %v2828
    %v3021 = vmul.f32 %v2252, %v2829
    %v3022 = vmul.f32 %v2253, %v2830
    %v3023 = vmul.f32 %v2254, %v2831
    %v3024 = vmul.f32 %v2255, %v2832
    %v3025 = vmul.f32 %v2256, %v2833
    %v3026 = vmul.f32 %v2257, %v2834
    %v3027 = vmul.f32 %v2258, %v2835
    %v3028 = vmul.f32 %v2259, %v2836
    %v3029 = vmul.f32 %v2260, %v2837
    %v3030 = vmul.f32 %v2261, %v2838
    %v3031 = vmul.f32 %v2262, %v2839
    %v3032 = vmul.f32 %v2263, %v2840
    %v3033 = vmul.f32 %v2264, %v2841
    %v3034 = vmul.f32 %v2265, %v2842
    %v3035 = vmul.f32 %v2266, %v2843
    %v3036 = vmul.f32 %v2267, %v2844
    %v3037 = vmul.f32 %v2268, %v2845
    %v3038 = vmul.f32 %v2269, %v2846
    %v3039 = vmul.f32 %v2270, %v2847
    %v3040 = vmul.f32 %v2271, %v2848
    %v3041 = vmul.f32 %v2272, %v2849
    %v3042 = vmul.f32 %v2273, %v2850
    %v3043 = vmul.f32 %v2274, %v2851
    %v3044 = vmul.f32 %v2275, %v2852
    %v3045 = vmul.f32 %v2276, %v2853
    %v3046 = vmul.f32 %v2277, %v2854
    %v3047 = vmul.f32 %v2278, %v2855
    %v3048 = vmul.f32 %v2279, %v2856
    %v3049 = vmul.f32 %v2280, %v2857
    %v3050 = vmul.f32 %v2281, %v2858
    %v3051 = vmul.f32 %v2282, %v2859
    %v3052 = vmul.f32 %v2283, %v2860
    %v3053 = vmul.f32 %v2284, %v2861
    %v3054 = vmul.f32 %v2285, %v2862
    %v3055 = vmul.f32 %v2286, %v2863
    %v3056 = vmul.f32 %v2287, %v2864
    %v3057 = vmul.f32 %v2288, %v2865
    %v3058 = vmul.f32 %v2289, %v2866
    %v3059 = vmul.f32 %v2290, %v2867
    %v3060 = vmul.f32 %v2291, %v2868
    %v3061 = vmul.f32 %v2292, %v2869
    %v3062 = vmul.f32 %v2293, %v2870
    %v3063 = vmul.f32 %v2294, %v2871
    %v3064 = vmul.f32 %v2295, %v2872
    %v3065 = vmul.f32 %v2296, %v2873
    %v3066 = vmul.f32 %v2297, %v2874
    %v3067 = vmul.f32 %v2298, %v2875
    %v3068 = vmul.f32 %v2299, %v2876
    %v3069 = vmul.f32 %v2300, %v2877
    %v3070 = vmul.f32 %v2301, %v2878
    %v3071 = vmul.f32 %v2302, %v2879
    %v3072 = vmul.f32 %v2303, %v2880
    %v3073 = vmul.f32 %v2304, %v2881
    %v3074 = vmul.f32 %v2305, %v2882
    %v3075 = vmul.f32 %v2306, %v2883
    %v3076 = vmul.f32 %v2307, %v2884
    %v3077 = vmul.f32 %v2308, %v2885
    %v3078 = vmul.f32 %v2309, %v2886
    %v3079 = vmul.f32 %v2310, %v2887
    %v3080 = vmul.f32 %v2311, %v2888
    %v3081 = vmul.f32 %v2312, %v2889
    %v3082 = vmul.f32 %v2313, %v2890
    %v3083 = vmul.f32 %v2314, %v2891
    %v3084 = vmul.f32 %v2315, %v2892
    %v3085 = vmul.f32 %v2316, %v2893
    %v3086 = vmul.f32 %v2317, %v2894
    %v3087 = vmul.f32 %v2318, %v2895
    %v3088 = vmul.f32 %v2319, %v2896
    %v3089 = vmul.f32 %v2320, %v2897
    %v3090 = vmul.f32 %v2321, %v2898
    %v3091 = vmul.f32 %v2322, %v2899
    %v3092 = vmul.f32 %v2323, %v2900
    %v3093 = vmul.f32 %v2324, %v2901
    %v3094 = vmul.f32 %v2325, %v2902
    %v3095 = vmul.f32 %v2326, %v2903
    %v3096 = vmul.f32 %v2327, %v2904
    %v3097 = vmul.f32 %v2328, %v2905
    %v3098 = vmul.f32 %v2329, %v2906
    %v3099 = vmul.f32 %v2330, %v2907
    %v3100 = vmul.f32 %v2331, %v2908
    %v3101 = vmul.f32 %v2332, %v2909
    %v3102 = vmul.f32 %v2333, %v2910
    %v3103 = vmul.f32 %v2334, %v2911
    %v3104 = vmul.f32 %v2335, %v2912
    %v3105 = vmul.f32 %v2336, %v2913
    %v3106 = vmul.f32 %v2337, %v2914
    %v3107 = vmul.f32 %v2338, %v2915
    %v3108 = vmul.f32 %v2339, %v2916
    %v3109 = vmul.f32 %v2340, %v2917
    %v3110 = vmul.f32 %v2341, %v2918
    %v3111 = vmul.f32 %v2342, %v2919
    %v3112 = vmul.f32 %v2343, %v2920
    %v3113 = vmul.f32 %v2344, %v2921
    %v3114 = vmul.f32 %v2345, %v2922
    %v3115 = vmul.f32 %v2346, %v2923
    %v3116 = vmul.f32 %v2347, %v2924
    %v3117 = vmul.f32 %v2348, %v2925
    %v3118 = vmul.f32 %v2349, %v2926
    %v3119 = vmul.f32 %v2350, %v2927
    %v3120 = vmul.f32 %v2351, %v2928
    %v3121 = vmul.f32 %v2352, %v2929
    %v3122 = vpack.c.bf16 %v2934, %v2930
    %v3123 = vpack.c.bf16 %v2935, %v2931
    %v3124 = vpack.c.bf16 %v2936, %v2932
    %v3125 = vpack.c.bf16 %v2937, %v2933
    %v3126 = vpack.c.bf16 %v2942, %v2938
    %v3127 = vpack.c.bf16 %v2943, %v2939
    %v3128 = vpack.c.bf16 %v2944, %v2940
    %v3129 = vpack.c.bf16 %v2945, %v2941
    %v3130 = vpack.c.bf16 %v2950, %v2946
    %v3131 = vpack.c.bf16 %v2951, %v2947
    %v3132 = vpack.c.bf16 %v2952, %v2948
    %v3133 = vpack.c.bf16 %v2953, %v2949
    %v3134 = vpack.c.bf16 %v2958, %v2954
    %v3135 = vpack.c.bf16 %v2959, %v2955
    %v3136 = vpack.c.bf16 %v2960, %v2956
    %v3137 = vpack.c.bf16 %v2961, %v2957
    %v3138 = vpack.c.bf16 %v2966, %v2962
    %v3139 = vpack.c.bf16 %v2967, %v2963
    %v3140 = vpack.c.bf16 %v2968, %v2964
    %v3141 = vpack.c.bf16 %v2969, %v2965
    %v3142 = vpack.c.bf16 %v2974, %v2970
    %v3143 = vpack.c.bf16 %v2975, %v2971
    %v3144 = vpack.c.bf16 %v2976, %v2972
    %v3145 = vpack.c.bf16 %v2977, %v2973
    %v3146 = vpack.c.bf16 %v2982, %v2978
    %v3147 = vpack.c.bf16 %v2983, %v2979
    %v3148 = vpack.c.bf16 %v2984, %v2980
    %v3149 = vpack.c.bf16 %v2985, %v2981
    %v3150 = vpack.c.bf16 %v2990, %v2986
    %v3151 = vpack.c.bf16 %v2991, %v2987
    %v3152 = vpack.c.bf16 %v2992, %v2988
    %v3153 = vpack.c.bf16 %v2993, %v2989
    %v3154 = vpack.c.bf16 %v2998, %v2994
    %v3155 = vpack.c.bf16 %v2999, %v2995
    %v3156 = vpack.c.bf16 %v3000, %v2996
    %v3157 = vpack.c.bf16 %v3001, %v2997
    %v3158 = vpack.c.bf16 %v3006, %v3002
    %v3159 = vpack.c.bf16 %v3007, %v3003
    %v3160 = vpack.c.bf16 %v3008, %v3004
    %v3161 = vpack.c.bf16 %v3009, %v3005
    %v3162 = vpack.c.bf16 %v3014, %v3010
    %v3163 = vpack.c.bf16 %v3015, %v3011
    %v3164 = vpack.c.bf16 %v3016, %v3012
    %v3165 = vpack.c.bf16 %v3017, %v3013
    %v3166 = vpack.c.bf16 %v3022, %v3018
    %v3167 = vpack.c.bf16 %v3023, %v3019
    %v3168 = vpack.c.bf16 %v3024, %v3020
    %v3169 = vpack.c.bf16 %v3025, %v3021
    %v3170 = vpack.c.bf16 %v3030, %v3026
    %v3171 = vpack.c.bf16 %v3031, %v3027
    %v3172 = vpack.c.bf16 %v3032, %v3028
    %v3173 = vpack.c.bf16 %v3033, %v3029
    %v3174 = vpack.c.bf16 %v3038, %v3034
    %v3175 = vpack.c.bf16 %v3039, %v3035
    %v3176 = vpack.c.bf16 %v3040, %v3036
    %v3177 = vpack.c.bf16 %v3041, %v3037
    %v3178 = vpack.c.bf16 %v3046, %v3042
    %v3179 = vpack.c.bf16 %v3047, %v3043
    %v3180 = vpack.c.bf16 %v3048, %v3044
    %v3181 = vpack.c.bf16 %v3049, %v3045
    %v3182 = vpack.c.bf16 %v3054, %v3050
    %v3183 = vpack.c.bf16 %v3055, %v3051
    %v3184 = vpack.c.bf16 %v3056, %v3052
    %v3185 = vpack.c.bf16 %v3057, %v3053
    %v3186 = vpack.c.bf16 %v3062, %v3058
    %v3187 = vpack.c.bf16 %v3063, %v3059
    %v3188 = vpack.c.bf16 %v3064, %v3060
    %v3189 = vpack.c.bf16 %v3065, %v3061
    %v3190 = vpack.c.bf16 %v3070, %v3066
    %v3191 = vpack.c.bf16 %v3071, %v3067
    %v3192 = vpack.c.bf16 %v3072, %v3068
    %v3193 = vpack.c.bf16 %v3073, %v3069
    %v3194 = vpack.c.bf16 %v3078, %v3074
    %v3195 = vpack.c.bf16 %v3079, %v3075
    %v3196 = vpack.c.bf16 %v3080, %v3076
    %v3197 = vpack.c.bf16 %v3081, %v3077
    %v3198 = vpack.c.bf16 %v3086, %v3082
    %v3199 = vpack.c.bf16 %v3087, %v3083
    %v3200 = vpack.c.bf16 %v3088, %v3084
    %v3201 = vpack.c.bf16 %v3089, %v3085
    %v3202 = vpack.c.bf16 %v3094, %v3090
    %v3203 = vpack.c.bf16 %v3095, %v3091
    %v3204 = vpack.c.bf16 %v3096, %v3092
    %v3205 = vpack.c.bf16 %v3097, %v3093
    %v3206 = vpack.c.bf16 %v3102, %v3098
    %v3207 = vpack.c.bf16 %v3103, %v3099
    %v3208 = vpack.c.bf16 %v3104, %v3100
    %v3209 = vpack.c.bf16 %v3105, %v3101
    %v3210 = vpack.c.bf16 %v3110, %v3106
    %v3211 = vpack.c.bf16 %v3111, %v3107
    %v3212 = vpack.c.bf16 %v3112, %v3108
    %v3213 = vpack.c.bf16 %v3113, %v3109
    %v3214 = vpack.c.bf16 %v3118, %v3114
    %v3215 = vpack.c.bf16 %v3119, %v3115
    %v3216 = vpack.c.bf16 %v3120, %v3116
    %v3217 = vpack.c.bf16 %v3121, %v3117
    %v3218 = vld [vmem:[#allocation8] sm:$0xff]
    %v3219 = vld [vmem:[#allocation8 + $0x8] sm:$0xff]
    %v3220 = vld [vmem:[#allocation8 + $0x10] sm:$0xff]
    %v3221 = vld [vmem:[#allocation8 + $0x18] sm:$0xff]
    %v3222 = vld [vmem:[#allocation8 + $0x20] sm:$0xff]
    %v3223 = vld [vmem:[#allocation8 + $0x28] sm:$0xff]
    %v3224 = vld [vmem:[#allocation8 + $0x30] sm:$0xff]
    %v3225 = vld [vmem:[#allocation8 + $0x38] sm:$0xff]
    %v3226 = vld [vmem:[#allocation8 + $0x40] sm:$0xff]
    %v3227 = vld [vmem:[#allocation8 + $0x48] sm:$0xff]
    %v3228 = vld [vmem:[#allocation8 + $0x50] sm:$0xff]
    %v3229 = vld [vmem:[#allocation8 + $0x58] sm:$0xff]
    %v3230 = vld [vmem:[#allocation8 + $0x60] sm:$0xff]
    %v3231 = vld [vmem:[#allocation8 + $0x68] sm:$0xff]
    %v3232 = vld [vmem:[#allocation8 + $0x70] sm:$0xff]
    %v3233 = vld [vmem:[#allocation8 + $0x78] sm:$0xff]
    %v3234 = vld [vmem:[#allocation8 + $0x80] sm:$0xff]
    %v3235 = vld [vmem:[#allocation8 + $0x88] sm:$0xff]
    %v3236 = vld [vmem:[#allocation8 + $0x90] sm:$0xff]
    %v3237 = vld [vmem:[#allocation8 + $0x98] sm:$0xff]
    %v3238 = vld [vmem:[#allocation8 + $0xa0] sm:$0xff]
    %v3239 = vld [vmem:[#allocation8 + $0xa8] sm:$0xff]
    %v3240 = vld [vmem:[#allocation8 + $0xb0] sm:$0xff]
    %v3241 = vld [vmem:[#allocation8 + $0xb8] sm:$0xff]
    %v3242 = vld [vmem:[#allocation8 + $0xc0] sm:$0xff]
    %v3243 = vld [vmem:[#allocation8 + $0xc8] sm:$0xff]
    %v3244 = vld [vmem:[#allocation8 + $0xd0] sm:$0xff]
    %v3245 = vld [vmem:[#allocation8 + $0xd8] sm:$0xff]
    %v3246 = vld [vmem:[#allocation8 + $0xe0] sm:$0xff]
    %v3247 = vld [vmem:[#allocation8 + $0xe8] sm:$0xff]
    %v3248 = vld [vmem:[#allocation8 + $0xf0] sm:$0xff]
    %v3249 = vld [vmem:[#allocation8 + $0xf8] sm:$0xff]
    %v3250 = vld [vmem:[#allocation8 + $0x100] sm:$0xff]
    %v3251 = vld [vmem:[#allocation8 + $0x108] sm:$0xff]
    %v3252 = vld [vmem:[#allocation8 + $0x110] sm:$0xff]
    %v3253 = vld [vmem:[#allocation8 + $0x118] sm:$0xff]
    %v3254 = vld [vmem:[#allocation8 + $0x120] sm:$0xff]
    %v3255 = vld [vmem:[#allocation8 + $0x128] sm:$0xff]
    %v3256 = vld [vmem:[#allocation8 + $0x130] sm:$0xff]
    %v3257 = vld [vmem:[#allocation8 + $0x138] sm:$0xff]
    %v3258 = vld [vmem:[#allocation8 + $0x140] sm:$0xff]
    %v3259 = vld [vmem:[#allocation8 + $0x148] sm:$0xff]
    %v3260 = vld [vmem:[#allocation8 + $0x150] sm:$0xff]
    %v3261 = vld [vmem:[#allocation8 + $0x158] sm:$0xff]
    %v3262 = vld [vmem:[#allocation8 + $0x160] sm:$0xff]
    %v3263 = vld [vmem:[#allocation8 + $0x168] sm:$0xff]
    %v3264 = vld [vmem:[#allocation8 + $0x170] sm:$0xff]
    %v3265 = vld [vmem:[#allocation8 + $0x178] sm:$0xff]
    %v3266 = vld [vmem:[#allocation8 + $0x180] sm:$0xff]
    %v3267 = vld [vmem:[#allocation8 + $0x188] sm:$0xff]
    %v3268 = vld [vmem:[#allocation8 + $0x190] sm:$0xff]
    %v3269 = vld [vmem:[#allocation8 + $0x198] sm:$0xff]
    %v3270 = vld [vmem:[#allocation8 + $0x1a0] sm:$0xff]
    %v3271 = vld [vmem:[#allocation8 + $0x1a8] sm:$0xff]
    %v3272 = vld [vmem:[#allocation8 + $0x1b0] sm:$0xff]
    %v3273 = vld [vmem:[#allocation8 + $0x1b8] sm:$0xff]
    %v3274 = vld [vmem:[#allocation8 + $0x1c0] sm:$0xff]
    %v3275 = vld [vmem:[#allocation8 + $0x1c8] sm:$0xff]
    %v3276 = vld [vmem:[#allocation8 + $0x1d0] sm:$0xff]
    %v3277 = vld [vmem:[#allocation8 + $0x1d8] sm:$0xff]
    %v3278 = vld [vmem:[#allocation8 + $0x1e0] sm:$0xff]
    %v3279 = vld [vmem:[#allocation8 + $0x1e8] sm:$0xff]
    %v3280 = vld [vmem:[#allocation8 + $0x1f0] sm:$0xff]
    %v3281 = vld [vmem:[#allocation8 + $0x1f8] sm:$0xff]
    %v3282 = vld [vmem:[%s6] sm:$0x3]
    %v3284 = vlaneseq
    %v3285 = vshrl.u32 %v3284, 7
    %v3286 = vsub.s32 0, %v3285
    %v3287 = vrot.slane %v3282, %v3286
    %v3288 = vlaneseq
    %v3289 = vshrl.u32 %v3288, 7
    %v3290 = vsub.s32 1, %v3289
    %v3291 = vrot.slane %v3282, %v3290
    %v3358 = vunpack.c.l.b16 %v3218
    %v3359 = vunpack.c.h.b16 %v3218
    %v3360 = vunpack.c.l.b16 %v3219
    %v3361 = vunpack.c.h.b16 %v3219
    %v3362 = vunpack.c.l.b16 %v3220
    %v3363 = vunpack.c.h.b16 %v3220
    %v3364 = vunpack.c.l.b16 %v3221
    %v3365 = vunpack.c.h.b16 %v3221
    %v3366 = vunpack.c.l.b16 %v3222
    %v3367 = vunpack.c.h.b16 %v3222
    %v3368 = vunpack.c.l.b16 %v3223
    %v3369 = vunpack.c.h.b16 %v3223
    %v3370 = vunpack.c.l.b16 %v3224
    %v3371 = vunpack.c.h.b16 %v3224
    %v3372 = vunpack.c.l.b16 %v3225
    %v3373 = vunpack.c.h.b16 %v3225
    %v3374 = vunpack.c.l.b16 %v3226
    %v3375 = vunpack.c.h.b16 %v3226
    %v3376 = vunpack.c.l.b16 %v3227
    %v3377 = vunpack.c.h.b16 %v3227
    %v3378 = vunpack.c.l.b16 %v3228
    %v3379 = vunpack.c.h.b16 %v3228
    %v3380 = vunpack.c.l.b16 %v3229
    %v3381 = vunpack.c.h.b16 %v3229
    %v3382 = vunpack.c.l.b16 %v3230
    %v3383 = vunpack.c.h.b16 %v3230
    %v3384 = vunpack.c.l.b16 %v3231
    %v3385 = vunpack.c.h.b16 %v3231
    %v3386 = vunpack.c.l.b16 %v3232
    %v3387 = vunpack.c.h.b16 %v3232
    %v3388 = vunpack.c.l.b16 %v3233
    %v3389 = vunpack.c.h.b16 %v3233
    %v3390 = vunpack.c.l.b16 %v3234
    %v3391 = vunpack.c.h.b16 %v3234
    %v3392 = vunpack.c.l.b16 %v3235
    %v3393 = vunpack.c.h.b16 %v3235
    %v3394 = vunpack.c.l.b16 %v3236
    %v3395 = vunpack.c.h.b16 %v3236
    %v3396 = vunpack.c.l.b16 %v3237
    %v3397 = vunpack.c.h.b16 %v3237
    %v3398 = vunpack.c.l.b16 %v3238
    %v3399 = vunpack.c.h.b16 %v3238
    %v3400 = vunpack.c.l.b16 %v3239
    %v3401 = vunpack.c.h.b16 %v3239
    %v3402 = vunpack.c.l.b16 %v3240
    %v3403 = vunpack.c.h.b16 %v3240
    %v3404 = vunpack.c.l.b16 %v3241
    %v3405 = vunpack.c.h.b16 %v3241
    %v3406 = vunpack.c.l.b16 %v3242
    %v3407 = vunpack.c.h.b16 %v3242
    %v3408 = vunpack.c.l.b16 %v3243
    %v3409 = vunpack.c.h.b16 %v3243
    %v3410 = vunpack.c.l.b16 %v3244
    %v3411 = vunpack.c.h.b16 %v3244
    %v3412 = vunpack.c.l.b16 %v3245
    %v3413 = vunpack.c.h.b16 %v3245
    %v3414 = vunpack.c.l.b16 %v3246
    %v3415 = vunpack.c.h.b16 %v3246
    %v3416 = vunpack.c.l.b16 %v3247
    %v3417 = vunpack.c.h.b16 %v3247
    %v3418 = vunpack.c.l.b16 %v3248
    %v3419 = vunpack.c.h.b16 %v3248
    %v3420 = vunpack.c.l.b16 %v3249
    %v3421 = vunpack.c.h.b16 %v3249
    %v3422 = vunpack.c.l.b16 %v3250
    %v3423 = vunpack.c.h.b16 %v3250
    %v3424 = vunpack.c.l.b16 %v3251
    %v3425 = vunpack.c.h.b16 %v3251
    %v3426 = vunpack.c.l.b16 %v3252
    %v3427 = vunpack.c.h.b16 %v3252
    %v3428 = vunpack.c.l.b16 %v3253
    %v3429 = vunpack.c.h.b16 %v3253
    %v3430 = vunpack.c.l.b16 %v3254
    %v3431 = vunpack.c.h.b16 %v3254
    %v3432 = vunpack.c.l.b16 %v3255
    %v3433 = vunpack.c.h.b16 %v3255
    %v3434 = vunpack.c.l.b16 %v3256
    %v3435 = vunpack.c.h.b16 %v3256
    %v3436 = vunpack.c.l.b16 %v3257
    %v3437 = vunpack.c.h.b16 %v3257
    %v3438 = vunpack.c.l.b16 %v3258
    %v3439 = vunpack.c.h.b16 %v3258
    %v3440 = vunpack.c.l.b16 %v3259
    %v3441 = vunpack.c.h.b16 %v3259
    %v3442 = vunpack.c.l.b16 %v3260
    %v3443 = vunpack.c.h.b16 %v3260
    %v3444 = vunpack.c.l.b16 %v3261
    %v3445 = vunpack.c.h.b16 %v3261
    %v3446 = vunpack.c.l.b16 %v3262
    %v3447 = vunpack.c.h.b16 %v3262
    %v3448 = vunpack.c.l.b16 %v3263
    %v3449 = vunpack.c.h.b16 %v3263
    %v3450 = vunpack.c.l.b16 %v3264
    %v3451 = vunpack.c.h.b16 %v3264
    %v3452 = vunpack.c.l.b16 %v3265
    %v3453 = vunpack.c.h.b16 %v3265
    %v3454 = vunpack.c.l.b16 %v3266
    %v3455 = vunpack.c.h.b16 %v3266
    %v3456 = vunpack.c.l.b16 %v3267
    %v3457 = vunpack.c.h.b16 %v3267
    %v3458 = vunpack.c.l.b16 %v3268
    %v3459 = vunpack.c.h.b16 %v3268
    %v3460 = vunpack.c.l.b16 %v3269
    %v3461 = vunpack.c.h.b16 %v3269
    %v3462 = vunpack.c.l.b16 %v3270
    %v3463 = vunpack.c.h.b16 %v3270
    %v3464 = vunpack.c.l.b16 %v3271
    %v3465 = vunpack.c.h.b16 %v3271
    %v3466 = vunpack.c.l.b16 %v3272
    %v3467 = vunpack.c.h.b16 %v3272
    %v3468 = vunpack.c.l.b16 %v3273
    %v3469 = vunpack.c.h.b16 %v3273
    %v3470 = vunpack.c.l.b16 %v3274
    %v3471 = vunpack.c.h.b16 %v3274
    %v3472 = vunpack.c.l.b16 %v3275
    %v3473 = vunpack.c.h.b16 %v3275
    %v3474 = vunpack.c.l.b16 %v3276
    %v3475 = vunpack.c.h.b16 %v3276
    %v3476 = vunpack.c.l.b16 %v3277
    %v3477 = vunpack.c.h.b16 %v3277
    %v3478 = vunpack.c.l.b16 %v3278
    %v3479 = vunpack.c.h.b16 %v3278
    %v3480 = vunpack.c.l.b16 %v3279
    %v3481 = vunpack.c.h.b16 %v3279
    %v3482 = vunpack.c.l.b16 %v3280
    %v3483 = vunpack.c.h.b16 %v3280
    %v3484 = vunpack.c.l.b16 %v3281
    %v3485 = vunpack.c.h.b16 %v3281
    %v3486 = vpack.c.b16 %v3360, %v3358
    %v3487 = vpack.c.b16 %v3361, %v3359
    %v3488 = vpack.c.b16 %v3364, %v3362
    %v3489 = vpack.c.b16 %v3365, %v3363
    %v3490 = vpack.c.b16 %v3368, %v3366
    %v3491 = vpack.c.b16 %v3369, %v3367
    %v3492 = vpack.c.b16 %v3372, %v3370
    %v3493 = vpack.c.b16 %v3373, %v3371
    %v3494 = vpack.c.b16 %v3376, %v3374
    %v3495 = vpack.c.b16 %v3377, %v3375
    %v3496 = vpack.c.b16 %v3380, %v3378
    %v3497 = vpack.c.b16 %v3381, %v3379
    %v3498 = vpack.c.b16 %v3384, %v3382
    %v3499 = vpack.c.b16 %v3385, %v3383
    %v3500 = vpack.c.b16 %v3388, %v3386
    %v3501 = vpack.c.b16 %v3389, %v3387
    %v3502 = vpack.c.b16 %v3392, %v3390
    %v3503 = vpack.c.b16 %v3393, %v3391
    %v3504 = vpack.c.b16 %v3396, %v3394
    %v3505 = vpack.c.b16 %v3397, %v3395
    %v3506 = vpack.c.b16 %v3400, %v3398
    %v3507 = vpack.c.b16 %v3401, %v3399
    %v3508 = vpack.c.b16 %v3404, %v3402
    %v3509 = vpack.c.b16 %v3405, %v3403
    %v3510 = vpack.c.b16 %v3408, %v3406
    %v3511 = vpack.c.b16 %v3409, %v3407
    %v3512 = vpack.c.b16 %v3412, %v3410
    %v3513 = vpack.c.b16 %v3413, %v3411
    %v3514 = vpack.c.b16 %v3416, %v3414
    %v3515 = vpack.c.b16 %v3417, %v3415
    %v3516 = vpack.c.b16 %v3420, %v3418
    %v3517 = vpack.c.b16 %v3421, %v3419
    %v3518 = vpack.c.b16 %v3424, %v3422
    %v3519 = vpack.c.b16 %v3425, %v3423
    %v3520 = vpack.c.b16 %v3428, %v3426
    %v3521 = vpack.c.b16 %v3429, %v3427
    %v3522 = vpack.c.b16 %v3432, %v3430
    %v3523 = vpack.c.b16 %v3433, %v3431
    %v3524 = vpack.c.b16 %v3436, %v3434
    %v3525 = vpack.c.b16 %v3437, %v3435
    %v3526 = vpack.c.b16 %v3440, %v3438
    %v3527 = vpack.c.b16 %v3441, %v3439
    %v3528 = vpack.c.b16 %v3444, %v3442
    %v3529 = vpack.c.b16 %v3445, %v3443
    %v3530 = vpack.c.b16 %v3448, %v3446
    %v3531 = vpack.c.b16 %v3449, %v3447
    %v3532 = vpack.c.b16 %v3452, %v3450
    %v3533 = vpack.c.b16 %v3453, %v3451
    %v3534 = vpack.c.b16 %v3456, %v3454
    %v3535 = vpack.c.b16 %v3457, %v3455
    %v3536 = vpack.c.b16 %v3460, %v3458
    %v3537 = vpack.c.b16 %v3461, %v3459
    %v3538 = vpack.c.b16 %v3464, %v3462
    %v3539 = vpack.c.b16 %v3465, %v3463
    %v3540 = vpack.c.b16 %v3468, %v3466
    %v3541 = vpack.c.b16 %v3469, %v3467
    %v3542 = vpack.c.b16 %v3472, %v3470
    %v3543 = vpack.c.b16 %v3473, %v3471
    %v3544 = vpack.c.b16 %v3476, %v3474
    %v3545 = vpack.c.b16 %v3477, %v3475
    %v3546 = vpack.c.b16 %v3480, %v3478
    %v3547 = vpack.c.b16 %v3481, %v3479
    %v3548 = vpack.c.b16 %v3484, %v3482
    %v3549 = vpack.c.b16 %v3485, %v3483
    %3614 = vmatprep.subr.bf16.mxu0 %v3501
    %3615 = vmatpush1.bf16.msra.mxu0 %v3500
    %3616 = vmatprep.subr.bf16.mxu0 %v3499
    %3617 = vmatpush1.bf16.msra.mxu0 %v3498
    %3618 = vmatprep.subr.bf16.mxu0 %v3497
    %3619 = vmatpush1.bf16.msra.mxu0 %v3496
    %3620 = vmatprep.subr.bf16.mxu0 %v3495
    %3621 = vmatpush1.bf16.msra.mxu0 %v3494
    %3622 = vmatprep.subr.bf16.mxu0 %v3493
    %3623 = vmatpush1.bf16.msra.mxu0 %v3492
    %3624 = vmatprep.subr.bf16.mxu0 %v3491
    %3625 = vmatpush1.bf16.msra.mxu0 %v3490
    %3626 = vmatprep.subr.bf16.mxu0 %v3489
    %3627 = vmatpush1.bf16.msra.mxu0 %v3488
    %3628 = vmatprep.subr.bf16.mxu0 %v3487
    %3629 = vmatpush1.bf16.msra.mxu0 %v3486
    %3630 = vmatprep.subr.bf16.mxu0 %v3517
    %3631 = vmatpush2.bf16.msra.mxu0 %v3516
    %3632 = vmatprep.subr.bf16.mxu0 %v3515
    %3633 = vmatpush2.bf16.msra.mxu0 %v3514
    %3634 = vmatprep.subr.bf16.mxu0 %v3513
    %3635 = vmatpush2.bf16.msra.mxu0 %v3512
    %3636 = vmatprep.subr.bf16.mxu0 %v3511
    %3637 = vmatpush2.bf16.msra.mxu0 %v3510
    %3638 = vmatprep.subr.bf16.mxu0 %v3509
    %3639 = vmatpush2.bf16.msra.mxu0 %v3508
    %3640 = vmatprep.subr.bf16.mxu0 %v3507
    %3641 = vmatpush2.bf16.msra.mxu0 %v3506
    %3642 = vmatprep.subr.bf16.mxu0 %v3505
    %3643 = vmatpush2.bf16.msra.mxu0 %v3504
    %3644 = vmatprep.subr.bf16.mxu0 %v3503
    %3645 = vmatpush2.bf16.msra.mxu0 %v3502
    %3646 = vmatprep.mubr.bf16.mxu0 %v3123
    %3647 = vmatmul.mubr.bf16.gmra.mxu0 %v3122
    %v3648 = vpop.f32.mrf.mxu0
    %v3649 = vadd.f32 %v3287, %v3648
    %v3650 = vpop.f32.mrf.mxu0
    %v3651 = vadd.f32 %v3291, %v3650
    %v3652 = vpop.f32.mrf.mxu0
    %v3653 = vadd.f32 %v3287, %v3652
    %v3654 = vpop.f32.mrf.mxu0
    %v3655 = vadd.f32 %v3291, %v3654
    %3656 = vmatprep.mubr.bf16.mxu0 %v3127
    %3657 = vmatmul.mubr.bf16.gmra.mxu0 %v3126
    %v3658 = vpop.f32.mrf.mxu0
    %v3659 = vadd.f32 %v3287, %v3658
    %v3660 = vpop.f32.mrf.mxu0
    %v3661 = vadd.f32 %v3291, %v3660
    %v3662 = vpop.f32.mrf.mxu0
    %v3663 = vadd.f32 %v3287, %v3662
    %v3664 = vpop.f32.mrf.mxu0
    %v3665 = vadd.f32 %v3291, %v3664
    %3666 = vmatprep.mubr.bf16.mxu0 %v3131
    %3667 = vmatmul.mubr.bf16.gmra.mxu0 %v3130
    %v3668 = vpop.f32.mrf.mxu0
    %v3669 = vadd.f32 %v3287, %v3668
    %v3670 = vpop.f32.mrf.mxu0
    %v3671 = vadd.f32 %v3291, %v3670
    %v3672 = vpop.f32.mrf.mxu0
    %v3673 = vadd.f32 %v3287, %v3672
    %v3674 = vpop.f32.mrf.mxu0
    %v3675 = vadd.f32 %v3291, %v3674
    %3676 = vmatprep.mubr.bf16.mxu0 %v3135
    %3677 = vmatmul.mubr.bf16.gmra.mxu0 %v3134
    %v3678 = vpop.f32.mrf.mxu0
    %v3679 = vadd.f32 %v3287, %v3678
    %v3680 = vpop.f32.mrf.mxu0
    %v3681 = vadd.f32 %v3291, %v3680
    %v3682 = vpop.f32.mrf.mxu0
    %v3683 = vadd.f32 %v3287, %v3682
    %v3684 = vpop.f32.mrf.mxu0
    %v3685 = vadd.f32 %v3291, %v3684
    %3686 = vmatprep.mubr.bf16.mxu0 %v3139
    %3687 = vmatmul.mubr.bf16.gmra.mxu0 %v3138
    %v3688 = vpop.f32.mrf.mxu0
    %v3689 = vadd.f32 %v3287, %v3688
    %v3690 = vpop.f32.mrf.mxu0
    %v3691 = vadd.f32 %v3291, %v3690
    %v3692 = vpop.f32.mrf.mxu0
    %v3693 = vadd.f32 %v3287, %v3692
    %v3694 = vpop.f32.mrf.mxu0
    %v3695 = vadd.f32 %v3291, %v3694
    %3696 = vmatprep.mubr.bf16.mxu0 %v3143
    %3697 = vmatmul.mubr.bf16.gmra.mxu0 %v3142
    %v3698 = vpop.f32.mrf.mxu0
    %v3699 = vadd.f32 %v3287, %v3698
    %v3700 = vpop.f32.mrf.mxu0
    %v3701 = vadd.f32 %v3291, %v3700
    %v3702 = vpop.f32.mrf.mxu0
    %v3703 = vadd.f32 %v3287, %v3702
    %v3704 = vpop.f32.mrf.mxu0
    %v3705 = vadd.f32 %v3291, %v3704
    %3706 = vmatprep.mubr.bf16.mxu0 %v3147
    %3707 = vmatmul.mubr.bf16.gmra.mxu0 %v3146
    %v3708 = vpop.f32.mrf.mxu0
    %v3709 = vadd.f32 %v3287, %v3708
    %v3710 = vpop.f32.mrf.mxu0
    %v3711 = vadd.f32 %v3291, %v3710
    %v3712 = vpop.f32.mrf.mxu0
    %v3713 = vadd.f32 %v3287, %v3712
    %v3714 = vpop.f32.mrf.mxu0
    %v3715 = vadd.f32 %v3291, %v3714
    %3716 = vmatprep.mubr.bf16.mxu0 %v3151
    %3717 = vmatmul.mubr.bf16.gmra.mxu0 %v3150
    %v3718 = vpop.f32.mrf.mxu0
    %v3719 = vadd.f32 %v3287, %v3718
    %v3720 = vpop.f32.mrf.mxu0
    %v3721 = vadd.f32 %v3291, %v3720
    %v3722 = vpop.f32.mrf.mxu0
    %v3723 = vadd.f32 %v3287, %v3722
    %v3724 = vpop.f32.mrf.mxu0
    %v3725 = vadd.f32 %v3291, %v3724
    %3726 = vmatprep.mubr.bf16.mxu0 %v3155
    %3727 = vmatmul.mubr.bf16.gmra.mxu0 %v3154
    %v3728 = vpop.f32.mrf.mxu0
    %v3729 = vadd.f32 %v3287, %v3728
    %v3730 = vpop.f32.mrf.mxu0
    %v3731 = vadd.f32 %v3291, %v3730
    %v3732 = vpop.f32.mrf.mxu0
    %v3733 = vadd.f32 %v3287, %v3732
    %v3734 = vpop.f32.mrf.mxu0
    %v3735 = vadd.f32 %v3291, %v3734
    %3736 = vmatprep.mubr.bf16.mxu0 %v3159
    %3737 = vmatmul.mubr.bf16.gmra.mxu0 %v3158
    %v3738 = vpop.f32.mrf.mxu0
    %v3739 = vadd.f32 %v3287, %v3738
    %v3740 = vpop.f32.mrf.mxu0
    %v3741 = vadd.f32 %v3291, %v3740
    %v3742 = vpop.f32.mrf.mxu0
    %v3743 = vadd.f32 %v3287, %v3742
    %v3744 = vpop.f32.mrf.mxu0
    %v3745 = vadd.f32 %v3291, %v3744
    %3746 = vmatprep.mubr.bf16.mxu0 %v3163
    %3747 = vmatmul.mubr.bf16.gmra.mxu0 %v3162
    %v3748 = vpop.f32.mrf.mxu0
    %v3749 = vadd.f32 %v3287, %v3748
    %v3750 = vpop.f32.mrf.mxu0
    %v3751 = vadd.f32 %v3291, %v3750
    %v3752 = vpop.f32.mrf.mxu0
    %v3753 = vadd.f32 %v3287, %v3752
    %v3754 = vpop.f32.mrf.mxu0
    %v3755 = vadd.f32 %v3291, %v3754
    %3756 = vmatprep.mubr.bf16.mxu0 %v3167
    %3757 = vmatmul.mubr.bf16.gmra.mxu0 %v3166
    %v3758 = vpop.f32.mrf.mxu0
    %v3759 = vadd.f32 %v3287, %v3758
    %v3760 = vpop.f32.mrf.mxu0
    %v3761 = vadd.f32 %v3291, %v3760
    %v3762 = vpop.f32.mrf.mxu0
    %v3763 = vadd.f32 %v3287, %v3762
    %v3764 = vpop.f32.mrf.mxu0
    %v3765 = vadd.f32 %v3291, %v3764
    %3766 = vmatprep.mubr.bf16.mxu0 %v3171
    %3767 = vmatmul.mubr.bf16.gmra.mxu0 %v3170
    %v3768 = vpop.f32.mrf.mxu0
    %v3769 = vadd.f32 %v3287, %v3768
    %v3770 = vpop.f32.mrf.mxu0
    %v3771 = vadd.f32 %v3291, %v3770
    %v3772 = vpop.f32.mrf.mxu0
    %v3773 = vadd.f32 %v3287, %v3772
    %v3774 = vpop.f32.mrf.mxu0
    %v3775 = vadd.f32 %v3291, %v3774
    %3776 = vmatprep.mubr.bf16.mxu0 %v3175
    %3777 = vmatmul.mubr.bf16.gmra.mxu0 %v3174
    %v3778 = vpop.f32.mrf.mxu0
    %v3779 = vadd.f32 %v3287, %v3778
    %v3780 = vpop.f32.mrf.mxu0
    %v3781 = vadd.f32 %v3291, %v3780
    %v3782 = vpop.f32.mrf.mxu0
    %v3783 = vadd.f32 %v3287, %v3782
    %v3784 = vpop.f32.mrf.mxu0
    %v3785 = vadd.f32 %v3291, %v3784
    %3786 = vmatprep.mubr.bf16.mxu0 %v3179
    %3787 = vmatmul.mubr.bf16.gmra.mxu0 %v3178
    %v3788 = vpop.f32.mrf.mxu0
    %v3789 = vadd.f32 %v3287, %v3788
    %v3790 = vpop.f32.mrf.mxu0
    %v3791 = vadd.f32 %v3291, %v3790
    %v3792 = vpop.f32.mrf.mxu0
    %v3793 = vadd.f32 %v3287, %v3792
    %v3794 = vpop.f32.mrf.mxu0
    %v3795 = vadd.f32 %v3291, %v3794
    %3796 = vmatprep.mubr.bf16.mxu0 %v3183
    %3797 = vmatmul.mubr.bf16.gmra.mxu0 %v3182
    %v3798 = vpop.f32.mrf.mxu0
    %v3799 = vadd.f32 %v3287, %v3798
    %v3800 = vpop.f32.mrf.mxu0
    %v3801 = vadd.f32 %v3291, %v3800
    %v3802 = vpop.f32.mrf.mxu0
    %v3803 = vadd.f32 %v3287, %v3802
    %v3804 = vpop.f32.mrf.mxu0
    %v3805 = vadd.f32 %v3291, %v3804
    %3806 = vmatprep.mubr.bf16.mxu0 %v3187
    %3807 = vmatmul.mubr.bf16.gmra.mxu0 %v3186
    %v3808 = vpop.f32.mrf.mxu0
    %v3809 = vadd.f32 %v3287, %v3808
    %v3810 = vpop.f32.mrf.mxu0
    %v3811 = vadd.f32 %v3291, %v3810
    %v3812 = vpop.f32.mrf.mxu0
    %v3813 = vadd.f32 %v3287, %v3812
    %v3814 = vpop.f32.mrf.mxu0
    %v3815 = vadd.f32 %v3291, %v3814
    %3816 = vmatprep.mubr.bf16.mxu0 %v3191
    %3817 = vmatmul.mubr.bf16.gmra.mxu0 %v3190
    %v3818 = vpop.f32.mrf.mxu0
    %v3819 = vadd.f32 %v3287, %v3818
    %v3820 = vpop.f32.mrf.mxu0
    %v3821 = vadd.f32 %v3291, %v3820
    %v3822 = vpop.f32.mrf.mxu0
    %v3823 = vadd.f32 %v3287, %v3822
    %v3824 = vpop.f32.mrf.mxu0
    %v3825 = vadd.f32 %v3291, %v3824
    %3826 = vmatprep.mubr.bf16.mxu0 %v3195
    %3827 = vmatmul.mubr.bf16.gmra.mxu0 %v3194
    %v3828 = vpop.f32.mrf.mxu0
    %v3829 = vadd.f32 %v3287, %v3828
    %v3830 = vpop.f32.mrf.mxu0
    %v3831 = vadd.f32 %v3291, %v3830
    %v3832 = vpop.f32.mrf.mxu0
    %v3833 = vadd.f32 %v3287, %v3832
    %v3834 = vpop.f32.mrf.mxu0
    %v3835 = vadd.f32 %v3291, %v3834
    %3836 = vmatprep.mubr.bf16.mxu0 %v3199
    %3837 = vmatmul.mubr.bf16.gmra.mxu0 %v3198
    %v3838 = vpop.f32.mrf.mxu0
    %v3839 = vadd.f32 %v3287, %v3838
    %v3840 = vpop.f32.mrf.mxu0
    %v3841 = vadd.f32 %v3291, %v3840
    %v3842 = vpop.f32.mrf.mxu0
    %v3843 = vadd.f32 %v3287, %v3842
    %v3844 = vpop.f32.mrf.mxu0
    %v3845 = vadd.f32 %v3291, %v3844
    %3846 = vmatprep.mubr.bf16.mxu0 %v3203
    %3847 = vmatmul.mubr.bf16.gmra.mxu0 %v3202
    %v3848 = vpop.f32.mrf.mxu0
    %v3849 = vadd.f32 %v3287, %v3848
    %v3850 = vpop.f32.mrf.mxu0
    %v3851 = vadd.f32 %v3291, %v3850
    %v3852 = vpop.f32.mrf.mxu0
    %v3853 = vadd.f32 %v3287, %v3852
    %v3854 = vpop.f32.mrf.mxu0
    %v3855 = vadd.f32 %v3291, %v3854
    %3856 = vmatprep.mubr.bf16.mxu0 %v3207
    %3857 = vmatmul.mubr.bf16.gmra.mxu0 %v3206
    %v3858 = vpop.f32.mrf.mxu0
    %v3859 = vadd.f32 %v3287, %v3858
    %v3860 = vpop.f32.mrf.mxu0
    %v3861 = vadd.f32 %v3291, %v3860
    %v3862 = vpop.f32.mrf.mxu0
    %v3863 = vadd.f32 %v3287, %v3862
    %v3864 = vpop.f32.mrf.mxu0
    %v3865 = vadd.f32 %v3291, %v3864
    %3866 = vmatprep.mubr.bf16.mxu0 %v3211
    %3867 = vmatmul.mubr.bf16.gmra.mxu0 %v3210
    %v3868 = vpop.f32.mrf.mxu0
    %v3869 = vadd.f32 %v3287, %v3868
    %v3870 = vpop.f32.mrf.mxu0
    %v3871 = vadd.f32 %v3291, %v3870
    %v3872 = vpop.f32.mrf.mxu0
    %v3873 = vadd.f32 %v3287, %v3872
    %v3874 = vpop.f32.mrf.mxu0
    %v3875 = vadd.f32 %v3291, %v3874
    %3876 = vmatprep.mubr.bf16.mxu0 %v3215
    %3877 = vmatmul.mubr.bf16.gmra.mxu0 %v3214
    %v3878 = vpop.f32.mrf.mxu0
    %v3879 = vadd.f32 %v3287, %v3878
    %v3880 = vpop.f32.mrf.mxu0
    %v3881 = vadd.f32 %v3291, %v3880
    %v3882 = vpop.f32.mrf.mxu0
    %v3883 = vadd.f32 %v3287, %v3882
    %v3884 = vpop.f32.mrf.mxu0
    %v3885 = vadd.f32 %v3291, %v3884
    %3886 = vdwg.mxu0
    %3887 = vmatprep.subr.bf16.mxu0 %v3533
    %3888 = vmatpush1.bf16.msra.mxu0 %v3532
    %3889 = vmatprep.subr.bf16.mxu0 %v3531
    %3890 = vmatpush1.bf16.msra.mxu0 %v3530
    %3891 = vmatprep.subr.bf16.mxu0 %v3529
    %3892 = vmatpush1.bf16.msra.mxu0 %v3528
    %3893 = vmatprep.subr.bf16.mxu0 %v3527
    %3894 = vmatpush1.bf16.msra.mxu0 %v3526
    %3895 = vmatprep.subr.bf16.mxu0 %v3525
    %3896 = vmatpush1.bf16.msra.mxu0 %v3524
    %3897 = vmatprep.subr.bf16.mxu0 %v3523
    %3898 = vmatpush1.bf16.msra.mxu0 %v3522
    %3899 = vmatprep.subr.bf16.mxu0 %v3521
    %3900 = vmatpush1.bf16.msra.mxu0 %v3520
    %3901 = vmatprep.subr.bf16.mxu0 %v3519
    %3902 = vmatpush1.bf16.msra.mxu0 %v3518
    %3903 = vmatprep.subr.bf16.mxu0 %v3549
    %3904 = vmatpush2.bf16.msra.mxu0 %v3548
    %3905 = vmatprep.subr.bf16.mxu0 %v3547
    %3906 = vmatpush2.bf16.msra.mxu0 %v3546
    %3907 = vmatprep.subr.bf16.mxu0 %v3545
    %3908 = vmatpush2.bf16.msra.mxu0 %v3544
    %3909 = vmatprep.subr.bf16.mxu0 %v3543
    %3910 = vmatpush2.bf16.msra.mxu0 %v3542
    %3911 = vmatprep.subr.bf16.mxu0 %v3541
    %3912 = vmatpush2.bf16.msra.mxu0 %v3540
    %3913 = vmatprep.subr.bf16.mxu0 %v3539
    %3914 = vmatpush2.bf16.msra.mxu0 %v3538
    %3915 = vmatprep.subr.bf16.mxu0 %v3537
    %3916 = vmatpush2.bf16.msra.mxu0 %v3536
    %3917 = vmatprep.subr.bf16.mxu0 %v3535
    %3918 = vmatpush2.bf16.msra.mxu0 %v3534
    %3919 = vmatprep.mubr.bf16.mxu0 %v3125
    %3920 = vmatmul.mubr.bf16.gmra.mxu0 %v3124
    %v3921 = vpop.f32.mrf.mxu0
    %v3922 = vadd.f32 %v3649, %v3921
    %v3923 = vpop.f32.mrf.mxu0
    %v3924 = vadd.f32 %v3651, %v3923
    %v3925 = vpop.f32.mrf.mxu0
    %v3926 = vadd.f32 %v3653, %v3925
    %v3927 = vpop.f32.mrf.mxu0
    %v3928 = vadd.f32 %v3655, %v3927
    %3929 = vmatprep.mubr.bf16.mxu0 %v3129
    %3930 = vmatmul.mubr.bf16.gmra.mxu0 %v3128
    %v3931 = vpop.f32.mrf.mxu0
    %v3932 = vadd.f32 %v3659, %v3931
    %v3933 = vpop.f32.mrf.mxu0
    %v3934 = vadd.f32 %v3661, %v3933
    %v3935 = vpop.f32.mrf.mxu0
    %v3936 = vadd.f32 %v3663, %v3935
    %v3937 = vpop.f32.mrf.mxu0
    %v3938 = vadd.f32 %v3665, %v3937
    %3939 = vmatprep.mubr.bf16.mxu0 %v3133
    %3940 = vmatmul.mubr.bf16.gmra.mxu0 %v3132
    %v3941 = vpop.f32.mrf.mxu0
    %v3942 = vadd.f32 %v3669, %v3941
    %v3943 = vpop.f32.mrf.mxu0
    %v3944 = vadd.f32 %v3671, %v3943
    %v3945 = vpop.f32.mrf.mxu0
    %v3946 = vadd.f32 %v3673, %v3945
    %v3947 = vpop.f32.mrf.mxu0
    %v3948 = vadd.f32 %v3675, %v3947
    %3949 = vmatprep.mubr.bf16.mxu0 %v3137
    %3950 = vmatmul.mubr.bf16.gmra.mxu0 %v3136
    %v3951 = vpop.f32.mrf.mxu0
    %v3952 = vadd.f32 %v3679, %v3951
    %v3953 = vpop.f32.mrf.mxu0
    %v3954 = vadd.f32 %v3681, %v3953
    %v3955 = vpop.f32.mrf.mxu0
    %v3956 = vadd.f32 %v3683, %v3955
    %v3957 = vpop.f32.mrf.mxu0
    %v3958 = vadd.f32 %v3685, %v3957
    %3959 = vmatprep.mubr.bf16.mxu0 %v3141
    %3960 = vmatmul.mubr.bf16.gmra.mxu0 %v3140
    %v3961 = vpop.f32.mrf.mxu0
    %v3962 = vadd.f32 %v3689, %v3961
    %v3963 = vpop.f32.mrf.mxu0
    %v3964 = vadd.f32 %v3691, %v3963
    %v3965 = vpop.f32.mrf.mxu0
    %v3966 = vadd.f32 %v3693, %v3965
    %v3967 = vpop.f32.mrf.mxu0
    %v3968 = vadd.f32 %v3695, %v3967
    %3969 = vmatprep.mubr.bf16.mxu0 %v3145
    %3970 = vmatmul.mubr.bf16.gmra.mxu0 %v3144
    %v3971 = vpop.f32.mrf.mxu0
    %v3972 = vadd.f32 %v3699, %v3971
    %v3973 = vpop.f32.mrf.mxu0
    %v3974 = vadd.f32 %v3701, %v3973
    %v3975 = vpop.f32.mrf.mxu0
    %v3976 = vadd.f32 %v3703, %v3975
    %v3977 = vpop.f32.mrf.mxu0
    %v3978 = vadd.f32 %v3705, %v3977
    %3979 = vmatprep.mubr.bf16.mxu0 %v3149
    %3980 = vmatmul.mubr.bf16.gmra.mxu0 %v3148
    %v3981 = vpop.f32.mrf.mxu0
    %v3982 = vadd.f32 %v3709, %v3981
    %v3983 = vpop.f32.mrf.mxu0
    %v3984 = vadd.f32 %v3711, %v3983
    %v3985 = vpop.f32.mrf.mxu0
    %v3986 = vadd.f32 %v3713, %v3985
    %v3987 = vpop.f32.mrf.mxu0
    %v3988 = vadd.f32 %v3715, %v3987
    %3989 = vmatprep.mubr.bf16.mxu0 %v3153
    %3990 = vmatmul.mubr.bf16.gmra.mxu0 %v3152
    %v3991 = vpop.f32.mrf.mxu0
    %v3992 = vadd.f32 %v3719, %v3991
    %v3993 = vpop.f32.mrf.mxu0
    %v3994 = vadd.f32 %v3721, %v3993
    %v3995 = vpop.f32.mrf.mxu0
    %v3996 = vadd.f32 %v3723, %v3995
    %v3997 = vpop.f32.mrf.mxu0
    %v3998 = vadd.f32 %v3725, %v3997
    %3999 = vmatprep.mubr.bf16.mxu0 %v3157
    %4000 = vmatmul.mubr.bf16.gmra.mxu0 %v3156
    %v4001 = vpop.f32.mrf.mxu0
    %v4002 = vadd.f32 %v3729, %v4001
    %v4003 = vpop.f32.mrf.mxu0
    %v4004 = vadd.f32 %v3731, %v4003
    %v4005 = vpop.f32.mrf.mxu0
    %v4006 = vadd.f32 %v3733, %v4005
    %v4007 = vpop.f32.mrf.mxu0
    %v4008 = vadd.f32 %v3735, %v4007
    %4009 = vmatprep.mubr.bf16.mxu0 %v3161
    %4010 = vmatmul.mubr.bf16.gmra.mxu0 %v3160
    %v4011 = vpop.f32.mrf.mxu0
    %v4012 = vadd.f32 %v3739, %v4011
    %v4013 = vpop.f32.mrf.mxu0
    %v4014 = vadd.f32 %v3741, %v4013
    %v4015 = vpop.f32.mrf.mxu0
    %v4016 = vadd.f32 %v3743, %v4015
    %v4017 = vpop.f32.mrf.mxu0
    %v4018 = vadd.f32 %v3745, %v4017
    %4019 = vmatprep.mubr.bf16.mxu0 %v3165
    %4020 = vmatmul.mubr.bf16.gmra.mxu0 %v3164
    %v4021 = vpop.f32.mrf.mxu0
    %v4022 = vadd.f32 %v3749, %v4021
    %v4023 = vpop.f32.mrf.mxu0
    %v4024 = vadd.f32 %v3751, %v4023
    %v4025 = vpop.f32.mrf.mxu0
    %v4026 = vadd.f32 %v3753, %v4025
    %v4027 = vpop.f32.mrf.mxu0
    %v4028 = vadd.f32 %v3755, %v4027
    %4029 = vmatprep.mubr.bf16.mxu0 %v3169
    %4030 = vmatmul.mubr.bf16.gmra.mxu0 %v3168
    %v4031 = vpop.f32.mrf.mxu0
    %v4032 = vadd.f32 %v3759, %v4031
    %v4033 = vpop.f32.mrf.mxu0
    %v4034 = vadd.f32 %v3761, %v4033
    %v4035 = vpop.f32.mrf.mxu0
    %v4036 = vadd.f32 %v3763, %v4035
    %v4037 = vpop.f32.mrf.mxu0
    %v4038 = vadd.f32 %v3765, %v4037
    %4039 = vmatprep.mubr.bf16.mxu0 %v3173
    %4040 = vmatmul.mubr.bf16.gmra.mxu0 %v3172
    %v4041 = vpop.f32.mrf.mxu0
    %v4042 = vadd.f32 %v3769, %v4041
    %v4043 = vpop.f32.mrf.mxu0
    %v4044 = vadd.f32 %v3771, %v4043
    %v4045 = vpop.f32.mrf.mxu0
    %v4046 = vadd.f32 %v3773, %v4045
    %v4047 = vpop.f32.mrf.mxu0
    %v4048 = vadd.f32 %v3775, %v4047
    %4049 = vmatprep.mubr.bf16.mxu0 %v3177
    %4050 = vmatmul.mubr.bf16.gmra.mxu0 %v3176
    %v4051 = vpop.f32.mrf.mxu0
    %v4052 = vadd.f32 %v3779, %v4051
    %v4053 = vpop.f32.mrf.mxu0
    %v4054 = vadd.f32 %v3781, %v4053
    %v4055 = vpop.f32.mrf.mxu0
    %v4056 = vadd.f32 %v3783, %v4055
    %v4057 = vpop.f32.mrf.mxu0
    %v4058 = vadd.f32 %v3785, %v4057
    %4059 = vmatprep.mubr.bf16.mxu0 %v3181
    %4060 = vmatmul.mubr.bf16.gmra.mxu0 %v3180
    %v4061 = vpop.f32.mrf.mxu0
    %v4062 = vadd.f32 %v3789, %v4061
    %v4063 = vpop.f32.mrf.mxu0
    %v4064 = vadd.f32 %v3791, %v4063
    %v4065 = vpop.f32.mrf.mxu0
    %v4066 = vadd.f32 %v3793, %v4065
    %v4067 = vpop.f32.mrf.mxu0
    %v4068 = vadd.f32 %v3795, %v4067
    %4069 = vmatprep.mubr.bf16.mxu0 %v3185
    %4070 = vmatmul.mubr.bf16.gmra.mxu0 %v3184
    %v4071 = vpop.f32.mrf.mxu0
    %v4072 = vadd.f32 %v3799, %v4071
    %v4073 = vpop.f32.mrf.mxu0
    %v4074 = vadd.f32 %v3801, %v4073
    %v4075 = vpop.f32.mrf.mxu0
    %v4076 = vadd.f32 %v3803, %v4075
    %v4077 = vpop.f32.mrf.mxu0
    %v4078 = vadd.f32 %v3805, %v4077
    %4079 = vmatprep.mubr.bf16.mxu0 %v3189
    %4080 = vmatmul.mubr.bf16.gmra.mxu0 %v3188
    %v4081 = vpop.f32.mrf.mxu0
    %v4082 = vadd.f32 %v3809, %v4081
    %v4083 = vpop.f32.mrf.mxu0
    %v4084 = vadd.f32 %v3811, %v4083
    %v4085 = vpop.f32.mrf.mxu0
    %v4086 = vadd.f32 %v3813, %v4085
    %v4087 = vpop.f32.mrf.mxu0
    %v4088 = vadd.f32 %v3815, %v4087
    %4089 = vmatprep.mubr.bf16.mxu0 %v3193
    %4090 = vmatmul.mubr.bf16.gmra.mxu0 %v3192
    %v4091 = vpop.f32.mrf.mxu0
    %v4092 = vadd.f32 %v3819, %v4091
    %v4093 = vpop.f32.mrf.mxu0
    %v4094 = vadd.f32 %v3821, %v4093
    %v4095 = vpop.f32.mrf.mxu0
    %v4096 = vadd.f32 %v3823, %v4095
    %v4097 = vpop.f32.mrf.mxu0
    %v4098 = vadd.f32 %v3825, %v4097
    %4099 = vmatprep.mubr.bf16.mxu0 %v3197
    %4100 = vmatmul.mubr.bf16.gmra.mxu0 %v3196
    %v4101 = vpop.f32.mrf.mxu0
    %v4102 = vadd.f32 %v3829, %v4101
    %v4103 = vpop.f32.mrf.mxu0
    %v4104 = vadd.f32 %v3831, %v4103
    %v4105 = vpop.f32.mrf.mxu0
    %v4106 = vadd.f32 %v3833, %v4105
    %v4107 = vpop.f32.mrf.mxu0
    %v4108 = vadd.f32 %v3835, %v4107
    %4109 = vmatprep.mubr.bf16.mxu0 %v3201
    %4110 = vmatmul.mubr.bf16.gmra.mxu0 %v3200
    %v4111 = vpop.f32.mrf.mxu0
    %v4112 = vadd.f32 %v3839, %v4111
    %v4113 = vpop.f32.mrf.mxu0
    %v4114 = vadd.f32 %v3841, %v4113
    %v4115 = vpop.f32.mrf.mxu0
    %v4116 = vadd.f32 %v3843, %v4115
    %v4117 = vpop.f32.mrf.mxu0
    %v4118 = vadd.f32 %v3845, %v4117
    %4119 = vmatprep.mubr.bf16.mxu0 %v3205
    %4120 = vmatmul.mubr.bf16.gmra.mxu0 %v3204
    %v4121 = vpop.f32.mrf.mxu0
    %v4122 = vadd.f32 %v3849, %v4121
    %v4123 = vpop.f32.mrf.mxu0
    %v4124 = vadd.f32 %v3851, %v4123
    %v4125 = vpop.f32.mrf.mxu0
    %v4126 = vadd.f32 %v3853, %v4125
    %v4127 = vpop.f32.mrf.mxu0
    %v4128 = vadd.f32 %v3855, %v4127
    %4129 = vmatprep.mubr.bf16.mxu0 %v3209
    %4130 = vmatmul.mubr.bf16.gmra.mxu0 %v3208
    %v4131 = vpop.f32.mrf.mxu0
    %v4132 = vadd.f32 %v3859, %v4131
    %v4133 = vpop.f32.mrf.mxu0
    %v4134 = vadd.f32 %v3861, %v4133
    %v4135 = vpop.f32.mrf.mxu0
    %v4136 = vadd.f32 %v3863, %v4135
    %v4137 = vpop.f32.mrf.mxu0
    %v4138 = vadd.f32 %v3865, %v4137
    %4139 = vmatprep.mubr.bf16.mxu0 %v3213
    %4140 = vmatmul.mubr.bf16.gmra.mxu0 %v3212
    %v4141 = vpop.f32.mrf.mxu0
    %v4142 = vadd.f32 %v3869, %v4141
    %v4143 = vpop.f32.mrf.mxu0
    %v4144 = vadd.f32 %v3871, %v4143
    %v4145 = vpop.f32.mrf.mxu0
    %v4146 = vadd.f32 %v3873, %v4145
    %v4147 = vpop.f32.mrf.mxu0
    %v4148 = vadd.f32 %v3875, %v4147
    %4149 = vmatprep.mubr.bf16.mxu0 %v3217
    %4150 = vmatmul.mubr.bf16.gmra.mxu0 %v3216
    %v4151 = vpop.f32.mrf.mxu0
    %v4152 = vadd.f32 %v3879, %v4151
    %v4153 = vpop.f32.mrf.mxu0
    %v4154 = vadd.f32 %v3881, %v4153
    %v4155 = vpop.f32.mrf.mxu0
    %v4156 = vadd.f32 %v3883, %v4155
    %v4157 = vpop.f32.mrf.mxu0
    %v4158 = vadd.f32 %v3885, %v4157
    %4159 = vdwg.mxu0
    %v4160 = vadd.f32 %v3922, %v80
    %v4161 = vadd.f32 %v3924, %v81
    %v4162 = vadd.f32 %v3926, %v82
    %v4163 = vadd.f32 %v3928, %v83
    %v4164 = vadd.f32 %v3932, %v84
    %v4165 = vadd.f32 %v3934, %v85
    %v4166 = vadd.f32 %v3936, %v86
    %v4167 = vadd.f32 %v3938, %v87
    %v4168 = vadd.f32 %v3942, %v88
    %v4169 = vadd.f32 %v3944, %v89
    %v4170 = vadd.f32 %v3946, %v90
    %v4171 = vadd.f32 %v3948, %v91
    %v4172 = vadd.f32 %v3952, %v92
    %v4173 = vadd.f32 %v3954, %v93
    %v4174 = vadd.f32 %v3956, %v94
    %v4175 = vadd.f32 %v3958, %v95
    %v4176 = vadd.f32 %v3962, %v96
    %v4177 = vadd.f32 %v3964, %v97
    %v4178 = vadd.f32 %v3966, %v98
    %v4179 = vadd.f32 %v3968, %v99
    %v4180 = vadd.f32 %v3972, %v100
    %v4181 = vadd.f32 %v3974, %v101
    %v4182 = vadd.f32 %v3976, %v102
    %v4183 = vadd.f32 %v3978, %v103
    %v4184 = vadd.f32 %v3982, %v104
    %v4185 = vadd.f32 %v3984, %v105
    %v4186 = vadd.f32 %v3986, %v106
    %v4187 = vadd.f32 %v3988, %v107
    %v4188 = vadd.f32 %v3992, %v108
    %v4189 = vadd.f32 %v3994, %v109
    %v4190 = vadd.f32 %v3996, %v110
    %v4191 = vadd.f32 %v3998, %v111
    %v4192 = vadd.f32 %v4002, %v112
    %v4193 = vadd.f32 %v4004, %v113
    %v4194 = vadd.f32 %v4006, %v114
    %v4195 = vadd.f32 %v4008, %v115
    %v4196 = vadd.f32 %v4012, %v116
    %v4197 = vadd.f32 %v4014, %v117
    %v4198 = vadd.f32 %v4016, %v118
    %v4199 = vadd.f32 %v4018, %v119
    %v4200 = vadd.f32 %v4022, %v120
    %v4201 = vadd.f32 %v4024, %v121
    %v4202 = vadd.f32 %v4026, %v122
    %v4203 = vadd.f32 %v4028, %v123
    %v4204 = vadd.f32 %v4032, %v124
    %v4205 = vadd.f32 %v4034, %v125
    %v4206 = vadd.f32 %v4036, %v126
    %v4207 = vadd.f32 %v4038, %v127
    %v4208 = vadd.f32 %v4042, %v128
    %v4209 = vadd.f32 %v4044, %v129
    %v4210 = vadd.f32 %v4046, %v130
    %v4211 = vadd.f32 %v4048, %v131
    %v4212 = vadd.f32 %v4052, %v132
    %v4213 = vadd.f32 %v4054, %v133
    %v4214 = vadd.f32 %v4056, %v134
    %v4215 = vadd.f32 %v4058, %v135
    %v4216 = vadd.f32 %v4062, %v136
    %v4217 = vadd.f32 %v4064, %v137
    %v4218 = vadd.f32 %v4066, %v138
    %v4219 = vadd.f32 %v4068, %v139
    %v4220 = vadd.f32 %v4072, %v140
    %v4221 = vadd.f32 %v4074, %v141
    %v4222 = vadd.f32 %v4076, %v142
    %v4223 = vadd.f32 %v4078, %v143
    %v4224 = vadd.f32 %v4082, %v144
    %v4225 = vadd.f32 %v4084, %v145
    %v4226 = vadd.f32 %v4086, %v146
    %v4227 = vadd.f32 %v4088, %v147
    %v4228 = vadd.f32 %v4092, %v148
    %v4229 = vadd.f32 %v4094, %v149
    %v4230 = vadd.f32 %v4096, %v150
    %v4231 = vadd.f32 %v4098, %v151
    %v4232 = vadd.f32 %v4102, %v152
    %v4233 = vadd.f32 %v4104, %v153
    %v4234 = vadd.f32 %v4106, %v154
    %v4235 = vadd.f32 %v4108, %v155
    %v4236 = vadd.f32 %v4112, %v156
    %v4237 = vadd.f32 %v4114, %v157
    %v4238 = vadd.f32 %v4116, %v158
    %v4239 = vadd.f32 %v4118, %v159
    %v4240 = vadd.f32 %v4122, %v160
    %v4241 = vadd.f32 %v4124, %v161
    %v4242 = vadd.f32 %v4126, %v162
    %v4243 = vadd.f32 %v4128, %v163
    %v4244 = vadd.f32 %v4132, %v164
    %v4245 = vadd.f32 %v4134, %v165
    %v4246 = vadd.f32 %v4136, %v166
    %v4247 = vadd.f32 %v4138, %v167
    %v4248 = vadd.f32 %v4142, %v168
    %v4249 = vadd.f32 %v4144, %v169
    %v4250 = vadd.f32 %v4146, %v170
    %v4251 = vadd.f32 %v4148, %v171
    %v4252 = vadd.f32 %v4152, %v172
    %v4253 = vadd.f32 %v4154, %v173
    %v4254 = vadd.f32 %v4156, %v174
    %v4255 = vadd.f32 %v4158, %v175
    %4256 = vst [vmem:[#allocation10] sm:$0xff] %v4160
    %4257 = vst [vmem:[#allocation10 + $0x8] sm:$0xff] %v4161
    %4258 = vst [vmem:[#allocation10 + $0x10] sm:$0xff] %v4162
    %4259 = vst [vmem:[#allocation10 + $0x18] sm:$0xff] %v4163
    %4260 = vst [vmem:[#allocation10 + $0x20] sm:$0xff] %v4164
    %4261 = vst [vmem:[#allocation10 + $0x28] sm:$0xff] %v4165
    %4262 = vst [vmem:[#allocation10 + $0x30] sm:$0xff] %v4166
    %4263 = vst [vmem:[#allocation10 + $0x38] sm:$0xff] %v4167
    %4264 = vst [vmem:[#allocation10 + $0x40] sm:$0xff] %v4168
    %4265 = vst [vmem:[#allocation10 + $0x48] sm:$0xff] %v4169
    %4266 = vst [vmem:[#allocation10 + $0x50] sm:$0xff] %v4170
    %4267 = vst [vmem:[#allocation10 + $0x58] sm:$0xff] %v4171
    %4268 = vst [vmem:[#allocation10 + $0x60] sm:$0xff] %v4172
    %4269 = vst [vmem:[#allocation10 + $0x68] sm:$0xff] %v4173
    %4270 = vst [vmem:[#allocation10 + $0x70] sm:$0xff] %v4174
    %4271 = vst [vmem:[#allocation10 + $0x78] sm:$0xff] %v4175
    %4272 = vst [vmem:[#allocation10 + $0x80] sm:$0xff] %v4176
    %4273 = vst [vmem:[#allocation10 + $0x88] sm:$0xff] %v4177
    %4274 = vst [vmem:[#allocation10 + $0x90] sm:$0xff] %v4178
    %4275 = vst [vmem:[#allocation10 + $0x98] sm:$0xff] %v4179
    %4276 = vst [vmem:[#allocation10 + $0xa0] sm:$0xff] %v4180
    %4277 = vst [vmem:[#allocation10 + $0xa8] sm:$0xff] %v4181
    %4278 = vst [vmem:[#allocation10 + $0xb0] sm:$0xff] %v4182
    %4279 = vst [vmem:[#allocation10 + $0xb8] sm:$0xff] %v4183
    %4280 = vst [vmem:[#allocation10 + $0xc0] sm:$0xff] %v4184
    %4281 = vst [vmem:[#allocation10 + $0xc8] sm:$0xff] %v4185
    %4282 = vst [vmem:[#allocation10 + $0xd0] sm:$0xff] %v4186
    %4283 = vst [vmem:[#allocation10 + $0xd8] sm:$0xff] %v4187
    %4284 = vst [vmem:[#allocation10 + $0xe0] sm:$0xff] %v4188
    %4285 = vst [vmem:[#allocation10 + $0xe8] sm:$0xff] %v4189
    %4286 = vst [vmem:[#allocation10 + $0xf0] sm:$0xff] %v4190
    %4287 = vst [vmem:[#allocation10 + $0xf8] sm:$0xff] %v4191
    %4288 = vst [vmem:[#allocation10 + $0x100] sm:$0xff] %v4192
    %4289 = vst [vmem:[#allocation10 + $0x108] sm:$0xff] %v4193
    %4290 = vst [vmem:[#allocation10 + $0x110] sm:$0xff] %v4194
    %4291 = vst [vmem:[#allocation10 + $0x118] sm:$0xff] %v4195
    %4292 = vst [vmem:[#allocation10 + $0x120] sm:$0xff] %v4196
    %4293 = vst [vmem:[#allocation10 + $0x128] sm:$0xff] %v4197
    %4294 = vst [vmem:[#allocation10 + $0x130] sm:$0xff] %v4198
    %4295 = vst [vmem:[#allocation10 + $0x138] sm:$0xff] %v4199
    %4296 = vst [vmem:[#allocation10 + $0x140] sm:$0xff] %v4200
    %4297 = vst [vmem:[#allocation10 + $0x148] sm:$0xff] %v4201
    %4298 = vst [vmem:[#allocation10 + $0x150] sm:$0xff] %v4202
    %4299 = vst [vmem:[#allocation10 + $0x158] sm:$0xff] %v4203
    %4300 = vst [vmem:[#allocation10 + $0x160] sm:$0xff] %v4204
    %4301 = vst [vmem:[#allocation10 + $0x168] sm:$0xff] %v4205
    %4302 = vst [vmem:[#allocation10 + $0x170] sm:$0xff] %v4206
    %4303 = vst [vmem:[#allocation10 + $0x178] sm:$0xff] %v4207
    %4304 = vst [vmem:[#allocation10 + $0x180] sm:$0xff] %v4208
    %4305 = vst [vmem:[#allocation10 + $0x188] sm:$0xff] %v4209
    %4306 = vst [vmem:[#allocation10 + $0x190] sm:$0xff] %v4210
    %4307 = vst [vmem:[#allocation10 + $0x198] sm:$0xff] %v4211
    %4308 = vst [vmem:[#allocation10 + $0x1a0] sm:$0xff] %v4212
    %4309 = vst [vmem:[#allocation10 + $0x1a8] sm:$0xff] %v4213
    %4310 = vst [vmem:[#allocation10 + $0x1b0] sm:$0xff] %v4214
    %4311 = vst [vmem:[#allocation10 + $0x1b8] sm:$0xff] %v4215
    %4312 = vst [vmem:[#allocation10 + $0x1c0] sm:$0xff] %v4216
    %4313 = vst [vmem:[#allocation10 + $0x1c8] sm:$0xff] %v4217
    %4314 = vst [vmem:[#allocation10 + $0x1d0] sm:$0xff] %v4218
    %4315 = vst [vmem:[#allocation10 + $0x1d8] sm:$0xff] %v4219
    %4316 = vst [vmem:[#allocation10 + $0x1e0] sm:$0xff] %v4220
    %4317 = vst [vmem:[#allocation10 + $0x1e8] sm:$0xff] %v4221
    %4318 = vst [vmem:[#allocation10 + $0x1f0] sm:$0xff] %v4222
    %4319 = vst [vmem:[#allocation10 + $0x1f8] sm:$0xff] %v4223
    %4320 = vst [vmem:[#allocation10 + $0x200] sm:$0xff] %v4224
    %4321 = vst [vmem:[#allocation10 + $0x208] sm:$0xff] %v4225
    %4322 = vst [vmem:[#allocation10 + $0x210] sm:$0xff] %v4226
    %4323 = vst [vmem:[#allocation10 + $0x218] sm:$0xff] %v4227
    %4324 = vst [vmem:[#allocation10 + $0x220] sm:$0xff] %v4228
    %4325 = vst [vmem:[#allocation10 + $0x228] sm:$0xff] %v4229
    %4326 = vst [vmem:[#allocation10 + $0x230] sm:$0xff] %v4230
    %4327 = vst [vmem:[#allocation10 + $0x238] sm:$0xff] %v4231
    %4328 = vst [vmem:[#allocation10 + $0x240] sm:$0xff] %v4232
    %4329 = vst [vmem:[#allocation10 + $0x248] sm:$0xff] %v4233
    %4330 = vst [vmem:[#allocation10 + $0x250] sm:$0xff] %v4234
    %4331 = vst [vmem:[#allocation10 + $0x258] sm:$0xff] %v4235
    %4332 = vst [vmem:[#allocation10 + $0x260] sm:$0xff] %v4236
    %4333 = vst [vmem:[#allocation10 + $0x268] sm:$0xff] %v4237
    %4334 = vst [vmem:[#allocation10 + $0x270] sm:$0xff] %v4238
    %4335 = vst [vmem:[#allocation10 + $0x278] sm:$0xff] %v4239
    %4336 = vst [vmem:[#allocation10 + $0x280] sm:$0xff] %v4240
    %4337 = vst [vmem:[#allocation10 + $0x288] sm:$0xff] %v4241
    %4338 = vst [vmem:[#allocation10 + $0x290] sm:$0xff] %v4242
    %4339 = vst [vmem:[#allocation10 + $0x298] sm:$0xff] %v4243
    %4340 = vst [vmem:[#allocation10 + $0x2a0] sm:$0xff] %v4244
    %4341 = vst [vmem:[#allocation10 + $0x2a8] sm:$0xff] %v4245
    %4342 = vst [vmem:[#allocation10 + $0x2b0] sm:$0xff] %v4246
    %4343 = vst [vmem:[#allocation10 + $0x2b8] sm:$0xff] %v4247
    %4344 = vst [vmem:[#allocation10 + $0x2c0] sm:$0xff] %v4248
    %4345 = vst [vmem:[#allocation10 + $0x2c8] sm:$0xff] %v4249
    %4346 = vst [vmem:[#allocation10 + $0x2d0] sm:$0xff] %v4250
    %4347 = vst [vmem:[#allocation10 + $0x2d8] sm:$0xff] %v4251
    %4348 = vst [vmem:[#allocation10 + $0x2e0] sm:$0xff] %v4252
    %4349 = vst [vmem:[#allocation10 + $0x2e8] sm:$0xff] %v4253
    %4350 = vst [vmem:[#allocation10 + $0x2f0] sm:$0xff] %v4254
    %4351 = vst [vmem:[#allocation10 + $0x2f8] sm:$0xff] %v4255
    // Predicated region
    $region46: #{tpu_custom_call.1} parent=1 // pred_check
      _
    $region47: #{tpu_custom_call.1} parent=1 // pred_check_branch
      %4353 = sbr.rel (0) target = $region49
    $region48: #{tpu_custom_call.1} parent=1 // pred_region
      %s4355 = ssub.s32 12288, 12288
      %4356 = vsyncadd [#allocation4], %s4355
      %s4357 = sshll.u32 [#allocation10], 4
      %s4358 = int_to_ptr.vmem [resolvable:$true] %s4357
      %4363 = dma.vmem_to_hbm [thread:$0]  %s4358, 12288, %s7, [#allocation4], 256, 256, 16
    $region49: #{tpu_custom_call.1} parent=1 // pred_fallthru
      _
    // Predicated region
    $region50: #{tpu_custom_call.1} parent=1 // pred_check
      _
    $region51: #{tpu_custom_call.1} parent=1 // pred_check_branch
      %4365 = sbr.rel (0) target = $region53
    $region52: #{tpu_custom_call.1} parent=1 // pred_region
      %4366 = dma.done [#allocation4], 12288
    $region53: #{tpu_custom_call.1} parent=1 // pred_fallthru
      _
    %4367 = vsyncpa [#allocation3], 1
    %4368 = vsyncpa [#allocation6], 1
    %4369 = vsyncpa [#allocation9], 1
    %4370 = vsyncpa [#allocation4], 1

// kernel: tpu_custom_call.1
$region0: #{tpu_custom_call.1}
  #allocation0 [shape = 'u32[]', space=smem, size = 0x4, offset = 0x4, fixed_abs, tag = 'smem constant byte address 0x4 - core index']
  #allocation1 [shape = 'u32[144,128]{1,0:T(1,128)}', space=vmem, size = 0x12000, scoped, tag = 'internal scratch']
  %s0 = inlined_call_operand.hbm [shape: f32[384,256], index: 0, kind: input, shape index: {}]
  %s1 = inlined_call_operand.hbm [shape: f32[1,256], index: 1, kind: input, shape index: {}]
  %s2 = inlined_call_operand.vmem [shape: f32[1,256], index: 2, kind: input, shape index: {}]
  %s3 = inlined_call_operand.hbm [shape: bf16[256,512], index: 3, kind: input, shape index: {}]
  %s4 = inlined_call_operand.vmem [shape: f32[1,512], index: 4, kind: input, shape index: {}]
  %s5 = inlined_call_operand.hbm [shape: bf16[512,256], index: 5, kind: input, shape index: {}]
  %s6 = inlined_call_operand.vmem [shape: f32[1,256], index: 6, kind: input, shape index: {}]
  %s7 = inlined_call_operand.hbm [shape: f32[384,256], index: 7, kind: output, shape index: {}]
  %s8 = sld [smem:[#allocation0]]
  $region54: #{tpu_custom_call.1} parent=0
    _
  %s10 = ssub.s32 1, %s8
  %s11 = scalar_select 0, %s10, %s8
  $region1: #{tpu_custom_call.1} parent=0
    #allocation2 [shape = 'u8[393216]{0}', space=vmem, size = 0x60000, scoped, tag = 'input window, operand 0, single buffered']
    #allocation3 [shape = 's32[1]{0}', space=sflag, size = 0x4, scoped, tag = 'scoped memory for tpu_custom_call.1']
    #allocation4 [shape = 's32[1]{0}', space=sflag, size = 0x4, scoped, tag = 'scoped memory for tpu_custom_call.1']
    #allocation5 [shape = 'u8[1024]{0}', space=vmem, size = 0x400, scoped, tag = 'input window, operand 1, single buffered']
    #allocation6 [shape = 's32[1]{0}', space=sflag, size = 0x4, scoped, tag = 'scoped memory for tpu_custom_call.1']
    #allocation7 [shape = 'u8[262144]{0}', space=vmem, size = 0x40000, scoped, tag = 'input window, operand 3, single buffered']
    #allocation8 [shape = 'u8[262144]{0}', space=vmem, size = 0x40000, scoped, tag = 'input window, operand 5, single buffered']
    #allocation9 [shape = 's32[1]{0}', space=sflag, size = 0x4, scoped, tag = 'scoped memory for tpu_custom_call.1']
    #allocation10 [shape = 'u8[393216]{0}', space=vmem, size = 0x60000, scoped, tag = 'output window, operand 0, single buffered']
    %12 = vsyncpa [#allocation3], 0
    %13 = vsyncpa [#allocation6], 0
    %14 = vsyncpa [#allocation9], 0
    %15 = vsyncpa [#allocation4], 0
    // Predicated region
    $region2: #{tpu_custom_call.1} parent=1 // pred_check
      _
    $region3: #{tpu_custom_call.1} parent=1 // pred_check_branch
      %17 = sbr.rel (0) target = $region5
    $region4: #{tpu_custom_call.1} parent=1 // pred_region
      %s19 = ssub.s32 12288, 12288
      %20 = vsyncadd [#allocation3], %s19
      %s21 = sshll.u32 [#allocation2], 4
      %s22 = int_to_ptr.vmem [resolvable:$true] %s21
      %27 = dma.hbm_to_vmem [thread:$0]  %s0, 12288, %s22, [#allocation3], 256, 256, 16
    $region5: #{tpu_custom_call.1} parent=1 // pred_fallthru
      _
    // Predicated region
    $region6: #{tpu_custom_call.1} parent=1 // pred_check
      _
    $region7: #{tpu_custom_call.1} parent=1 // pred_check_branch
      %29 = sbr.rel (0) target = $region9
    $region8: #{tpu_custom_call.1} parent=1 // pred_region
      %s31 = ssub.s32 32, 32
      %32 = vsyncadd [#allocation6], %s31
      %s34 = sshll.u32 [#allocation5], 4
      %s35 = int_to_ptr.vmem [resolvable:$true] %s34
      %37 = dma.hbm_to_vmem [thread:$0]  %s1, 32, %s35, [#allocation6]
    $region9: #{tpu_custom_call.1} parent=1 // pred_fallthru
      _
    // Predicated region
    $region10: #{tpu_custom_call.1} parent=1 // pred_check
      _
    $region11: #{tpu_custom_call.1} parent=1 // pred_check_branch
      %39 = sbr.rel (0) target = $region13
    $region12: #{tpu_custom_call.1} parent=1 // pred_region
      _
    $region13: #{tpu_custom_call.1} parent=1 // pred_fallthru
      _
    // Predicated region
    $region14: #{tpu_custom_call.1} parent=1 // pred_check
      _
    $region15: #{tpu_custom_call.1} parent=1 // pred_check_branch
      %41 = sbr.rel (0) target = $region17
    $region16: #{tpu_custom_call.1} parent=1 // pred_region
      %s43 = ssub.s32 8192, 8192
      %44 = vsyncadd [#allocation6], %s43
      %s45 = sshll.u32 [#allocation7], 4
      %s46 = int_to_ptr.vmem [resolvable:$true] %s45
      %51 = dma.hbm_to_vmem [thread:$0]  %s3, 8192, %s46, [#allocation6], 256, 256, 16
    $region17: #{tpu_custom_call.1} parent=1 // pred_fallthru
      _
    // Predicated region
    $region18: #{tpu_custom_call.1} parent=1 // pred_check
      _
    $region19: #{tpu_custom_call.1} parent=1 // pred_check_branch
      %53 = sbr.rel (0) target = $region21
    $region20: #{tpu_custom_call.1} parent=1 // pred_region
      _
    $region21: #{tpu_custom_call.1} parent=1 // pred_fallthru
      _
    // Predicated region
    $region22: #{tpu_custom_call.1} parent=1 // pred_check
      _
    $region23: #{tpu_custom_call.1} parent=1 // pred_check_branch
      %55 = sbr.rel (0) target = $region25
    $region24: #{tpu_custom_call.1} parent=1 // pred_region
      %s57 = ssub.s32 8192, 8192
      %58 = vsyncadd [#allocation9], %s57
      %s59 = sshll.u32 [#allocation8], 4
      %s60 = int_to_ptr.vmem [resolvable:$true] %s59
      %65 = dma.hbm_to_vmem [thread:$0]  %s5, 8192, %s60, [#allocation9], 128, 128, 8
    $region25: #{tpu_custom_call.1} parent=1 // pred_fallthru
      _
    // Predicated region
    $region26: #{tpu_custom_call.1} parent=1 // pred_check
      _
    $region27: #{tpu_custom_call.1} parent=1 // pred_check_branch
      %67 = sbr.rel (0) target = $region29
    $region28: #{tpu_custom_call.1} parent=1 // pred_region
      _
    $region29: #{tpu_custom_call.1} parent=1 // pred_fallthru
      _
    // Predicated region
    $region30: #{tpu_custom_call.1} parent=1 // pred_check
      _
    $region31: #{tpu_custom_call.1} parent=1 // pred_check_branch
      %69 = sbr.rel (0) target = $region33
    $region32: #{tpu_custom_call.1} parent=1 // pred_region
      %70 = dma.done [#allocation3], 12288
    $region33: #{tpu_custom_call.1} parent=1 // pred_fallthru
      _
    // Predicated region
    $region34: #{tpu_custom_call.1} parent=1 // pred_check
      _
    $region35: #{tpu_custom_call.1} parent=1 // pred_check_branch
      %72 = sbr.rel (0) target = $region37
    $region36: #{tpu_custom_call.1} parent=1 // pred_region
      %73 = dma.done [#allocation6], 32
    $region37: #{tpu_custom_call.1} parent=1 // pred_fallthru
      _
    // Predicated region
    $region38: #{tpu_custom_call.1} parent=1 // pred_check
      _
    $region39: #{tpu_custom_call.1} parent=1 // pred_check_branch
      %75 = sbr.rel (0) target = $region41
    $region40: #{tpu_custom_call.1} parent=1 // pred_region
      %76 = dma.done [#allocation6], 8192
    $region41: #{tpu_custom_call.1} parent=1 // pred_fallthru
      _
    // Predicated region
    $region42: #{tpu_custom_call.1} parent=1 // pred_check
      _
    $region43: #{tpu_custom_call.1} parent=1 // pred_check_branch
      %78 = sbr.rel (0) target = $region45
    $region44: #{tpu_custom_call.1} parent=1 // pred_region
      %79 = dma.done [#allocation9], 8192
    $region45: #{tpu_custom_call.1} parent=1 // pred_fallthru
      _
    %v80 = vld [vmem:[#allocation2] sm:$0xff]
    %v81 = vld [vmem:[#allocation2 + $0x8] sm:$0xff]
    %v82 = vld [vmem:[#allocation2 + $0x10] sm:$0xff]
    %v83 = vld [vmem:[#allocation2 + $0x18] sm:$0xff]
    %v84 = vld [vmem:[#allocation2 + $0x20] sm:$0xff]
    %v85 = vld [vmem:[#allocation2 + $0x28] sm:$0xff]
    %v86 = vld [vmem:[#allocation2 + $0x30] sm:$0xff]
    %v87 = vld [vmem:[#allocation2 + $0x38] sm:$0xff]
    %v88 = vld [vmem:[#allocation2 + $0x40] sm:$0xff]
    %v89 = vld [vmem:[#allocation2 + $0x48] sm:$0xff]
    %v90 = vld [vmem:[#allocation2 + $0x50] sm:$0xff]
    %v91 = vld [vmem:[#allocation2 + $0x58] sm:$0xff]
    %v92 = vld [vmem:[#allocation2 + $0x60] sm:$0xff]
    %v93 = vld [vmem:[#allocation2 + $0x68] sm:$0xff]
    %v94 = vld [vmem:[#allocation2 + $0x70] sm:$0xff]
    %v95 = vld [vmem:[#allocation2 + $0x78] sm:$0xff]
    %v96 = vld [vmem:[#allocation2 + $0x80] sm:$0xff]
    %v97 = vld [vmem:[#allocation2 + $0x88] sm:$0xff]
    %v98 = vld [vmem:[#allocation2 + $0x90] sm:$0xff]
    %v99 = vld [vmem:[#allocation2 + $0x98] sm:$0xff]
    %v100 = vld [vmem:[#allocation2 + $0xa0] sm:$0xff]
    %v101 = vld [vmem:[#allocation2 + $0xa8] sm:$0xff]
    %v102 = vld [vmem:[#allocation2 + $0xb0] sm:$0xff]
    %v103 = vld [vmem:[#allocation2 + $0xb8] sm:$0xff]
    %v104 = vld [vmem:[#allocation2 + $0xc0] sm:$0xff]
    %v105 = vld [vmem:[#allocation2 + $0xc8] sm:$0xff]
    %v106 = vld [vmem:[#allocation2 + $0xd0] sm:$0xff]
    %v107 = vld [vmem:[#allocation2 + $0xd8] sm:$0xff]
    %v108 = vld [vmem:[#allocation2 + $0xe0] sm:$0xff]
    %v109 = vld [vmem:[#allocation2 + $0xe8] sm:$0xff]
    %v110 = vld [vmem:[#allocation2 + $0xf0] sm:$0xff]
    %v111 = vld [vmem:[#allocation2 + $0xf8] sm:$0xff]
    %v112 = vld [vmem:[#allocation2 + $0x100] sm:$0xff]
    %v113 = vld [vmem:[#allocation2 + $0x108] sm:$0xff]
    %v114 = vld [vmem:[#allocation2 + $0x110] sm:$0xff]
    %v115 = vld [vmem:[#allocation2 + $0x118] sm:$0xff]
    %v116 = vld [vmem:[#allocation2 + $0x120] sm:$0xff]
    %v117 = vld [vmem:[#allocation2 + $0x128] sm:$0xff]
    %v118 = vld [vmem:[#allocation2 + $0x130] sm:$0xff]
    %v119 = vld [vmem:[#allocation2 + $0x138] sm:$0xff]
    %v120 = vld [vmem:[#allocation2 + $0x140] sm:$0xff]
    %v121 = vld [vmem:[#allocation2 + $0x148] sm:$0xff]
    %v122 = vld [vmem:[#allocation2 + $0x150] sm:$0xff]
    %v123 = vld [vmem:[#allocation2 + $0x158] sm:$0xff]
    %v124 = vld [vmem:[#allocation2 + $0x160] sm:$0xff]
    %v125 = vld [vmem:[#allocation2 + $0x168] sm:$0xff]
    %v126 = vld [vmem:[#allocation2 + $0x170] sm:$0xff]
    %v127 = vld [vmem:[#allocation2 + $0x178] sm:$0xff]
    %v128 = vld [vmem:[#allocation2 + $0x180] sm:$0xff]
    %v129 = vld [vmem:[#allocation2 + $0x188] sm:$0xff]
    %v130 = vld [vmem:[#allocation2 + $0x190] sm:$0xff]
    %v131 = vld [vmem:[#allocation2 + $0x198] sm:$0xff]
    %v132 = vld [vmem:[#allocation2 + $0x1a0] sm:$0xff]
    %v133 = vld [vmem:[#allocation2 + $0x1a8] sm:$0xff]
    %v134 = vld [vmem:[#allocation2 + $0x1b0] sm:$0xff]
    %v135 = vld [vmem:[#allocation2 + $0x1b8] sm:$0xff]
    %v136 = vld [vmem:[#allocation2 + $0x1c0] sm:$0xff]
    %v137 = vld [vmem:[#allocation2 + $0x1c8] sm:$0xff]
    %v138 = vld [vmem:[#allocation2 + $0x1d0] sm:$0xff]
    %v139 = vld [vmem:[#allocation2 + $0x1d8] sm:$0xff]
    %v140 = vld [vmem:[#allocation2 + $0x1e0] sm:$0xff]
    %v141 = vld [vmem:[#allocation2 + $0x1e8] sm:$0xff]
    %v142 = vld [vmem:[#allocation2 + $0x1f0] sm:$0xff]
    %v143 = vld [vmem:[#allocation2 + $0x1f8] sm:$0xff]
    %v144 = vld [vmem:[#allocation2 + $0x200] sm:$0xff]
    %v145 = vld [vmem:[#allocation2 + $0x208] sm:$0xff]
    %v146 = vld [vmem:[#allocation2 + $0x210] sm:$0xff]
    %v147 = vld [vmem:[#allocation2 + $0x218] sm:$0xff]
    %v148 = vld [vmem:[#allocation2 + $0x220] sm:$0xff]
    %v149 = vld [vmem:[#allocation2 + $0x228] sm:$0xff]
    %v150 = vld [vmem:[#allocation2 + $0x230] sm:$0xff]
    %v151 = vld [vmem:[#allocation2 + $0x238] sm:$0xff]
    %v152 = vld [vmem:[#allocation2 + $0x240] sm:$0xff]
    %v153 = vld [vmem:[#allocation2 + $0x248] sm:$0xff]
    %v154 = vld [vmem:[#allocation2 + $0x250] sm:$0xff]
    %v155 = vld [vmem:[#allocation2 + $0x258] sm:$0xff]
    %v156 = vld [vmem:[#allocation2 + $0x260] sm:$0xff]
    %v157 = vld [vmem:[#allocation2 + $0x268] sm:$0xff]
    %v158 = vld [vmem:[#allocation2 + $0x270] sm:$0xff]
    %v159 = vld [vmem:[#allocation2 + $0x278] sm:$0xff]
    %v160 = vld [vmem:[#allocation2 + $0x280] sm:$0xff]
    %v161 = vld [vmem:[#allocation2 + $0x288] sm:$0xff]
    %v162 = vld [vmem:[#allocation2 + $0x290] sm:$0xff]
    %v163 = vld [vmem:[#allocation2 + $0x298] sm:$0xff]
    %v164 = vld [vmem:[#allocation2 + $0x2a0] sm:$0xff]
    %v165 = vld [vmem:[#allocation2 + $0x2a8] sm:$0xff]
    %v166 = vld [vmem:[#allocation2 + $0x2b0] sm:$0xff]
    %v167 = vld [vmem:[#allocation2 + $0x2b8] sm:$0xff]
    %v168 = vld [vmem:[#allocation2 + $0x2c0] sm:$0xff]
    %v169 = vld [vmem:[#allocation2 + $0x2c8] sm:$0xff]
    %v170 = vld [vmem:[#allocation2 + $0x2d0] sm:$0xff]
    %v171 = vld [vmem:[#allocation2 + $0x2d8] sm:$0xff]
    %v172 = vld [vmem:[#allocation2 + $0x2e0] sm:$0xff]
    %v173 = vld [vmem:[#allocation2 + $0x2e8] sm:$0xff]
    %v174 = vld [vmem:[#allocation2 + $0x2f0] sm:$0xff]
    %v175 = vld [vmem:[#allocation2 + $0x2f8] sm:$0xff]
    %v176 = vadd.f32 %v80, %v81
    %177 = vadd.xlane.f32.xlu0 %v176
    %v178 = vpop.xlane.xlu0 %177
    %v179 = vadd.f32 %v82, %v83
    %180 = vadd.xlane.f32.xlu0 %v179
    %v181 = vpop.xlane.xlu0 %180
    %v182 = vadd.f32 %v84, %v85
    %183 = vadd.xlane.f32.xlu0 %v182
    %v184 = vpop.xlane.xlu0 %183
    %v185 = vadd.f32 %v86, %v87
    %186 = vadd.xlane.f32.xlu0 %v185
    %v187 = vpop.xlane.xlu0 %186
    %v188 = vadd.f32 %v88, %v89
    %189 = vadd.xlane.f32.xlu0 %v188
    %v190 = vpop.xlane.xlu0 %189
    %v191 = vadd.f32 %v90, %v91
    %192 = vadd.xlane.f32.xlu0 %v191
    %v193 = vpop.xlane.xlu0 %192
    %v194 = vadd.f32 %v92, %v93
    %195 = vadd.xlane.f32.xlu0 %v194
    %v196 = vpop.xlane.xlu0 %195
    %v197 = vadd.f32 %v94, %v95
    %198 = vadd.xlane.f32.xlu0 %v197
    %v199 = vpop.xlane.xlu0 %198
    %v200 = vadd.f32 %v96, %v97
    %201 = vadd.xlane.f32.xlu0 %v200
    %v202 = vpop.xlane.xlu0 %201
    %v203 = vadd.f32 %v98, %v99
    %204 = vadd.xlane.f32.xlu0 %v203
    %v205 = vpop.xlane.xlu0 %204
    %v206 = vadd.f32 %v100, %v101
    %207 = vadd.xlane.f32.xlu0 %v206
    %v208 = vpop.xlane.xlu0 %207
    %v209 = vadd.f32 %v102, %v103
    %210 = vadd.xlane.f32.xlu0 %v209
    %v211 = vpop.xlane.xlu0 %210
    %v212 = vadd.f32 %v104, %v105
    %213 = vadd.xlane.f32.xlu0 %v212
    %v214 = vpop.xlane.xlu0 %213
    %v215 = vadd.f32 %v106, %v107
    %216 = vadd.xlane.f32.xlu0 %v215
    %v217 = vpop.xlane.xlu0 %216
    %v218 = vadd.f32 %v108, %v109
    %219 = vadd.xlane.f32.xlu0 %v218
    %v220 = vpop.xlane.xlu0 %219
    %v221 = vadd.f32 %v110, %v111
    %222 = vadd.xlane.f32.xlu0 %v221
    %v223 = vpop.xlane.xlu0 %222
    %v224 = vadd.f32 %v112, %v113
    %225 = vadd.xlane.f32.xlu0 %v224
    %v226 = vpop.xlane.xlu0 %225
    %v227 = vadd.f32 %v114, %v115
    %228 = vadd.xlane.f32.xlu0 %v227
    %v229 = vpop.xlane.xlu0 %228
    %v230 = vadd.f32 %v116, %v117
    %231 = vadd.xlane.f32.xlu0 %v230
    %v232 = vpop.xlane.xlu0 %231
    %v233 = vadd.f32 %v118, %v119
    %234 = vadd.xlane.f32.xlu0 %v233
    %v235 = vpop.xlane.xlu0 %234
    %v236 = vadd.f32 %v120, %v121
    %237 = vadd.xlane.f32.xlu0 %v236
    %v238 = vpop.xlane.xlu0 %237
    %v239 = vadd.f32 %v122, %v123
    %240 = vadd.xlane.f32.xlu0 %v239
    %v241 = vpop.xlane.xlu0 %240
    %v242 = vadd.f32 %v124, %v125
    %243 = vadd.xlane.f32.xlu0 %v242
    %v244 = vpop.xlane.xlu0 %243
    %v245 = vadd.f32 %v126, %v127
    %246 = vadd.xlane.f32.xlu0 %v245
    %v247 = vpop.xlane.xlu0 %246
    %v248 = vadd.f32 %v128, %v129
    %249 = vadd.xlane.f32.xlu0 %v248
    %v250 = vpop.xlane.xlu0 %249
    %v251 = vadd.f32 %v130, %v131
    %252 = vadd.xlane.f32.xlu0 %v251
    %v253 = vpop.xlane.xlu0 %252
    %v254 = vadd.f32 %v132, %v133
    %255 = vadd.xlane.f32.xlu0 %v254
    %v256 = vpop.xlane.xlu0 %255
    %v257 = vadd.f32 %v134, %v135
    %258 = vadd.xlane.f32.xlu0 %v257
    %v259 = vpop.xlane.xlu0 %258
    %v260 = vadd.f32 %v136, %v137
    %261 = vadd.xlane.f32.xlu0 %v260
    %v262 = vpop.xlane.xlu0 %261
    %v263 = vadd.f32 %v138, %v139
    %264 = vadd.xlane.f32.xlu0 %v263
    %v265 = vpop.xlane.xlu0 %264
    %v266 = vadd.f32 %v140, %v141
    %267 = vadd.xlane.f32.xlu0 %v266
    %v268 = vpop.xlane.xlu0 %267
    %v269 = vadd.f32 %v142, %v143
    %270 = vadd.xlane.f32.xlu0 %v269
    %v271 = vpop.xlane.xlu0 %270
    %v272 = vadd.f32 %v144, %v145
    %273 = vadd.xlane.f32.xlu0 %v272
    %v274 = vpop.xlane.xlu0 %273
    %v275 = vadd.f32 %v146, %v147
    %276 = vadd.xlane.f32.xlu0 %v275
    %v277 = vpop.xlane.xlu0 %276
    %v278 = vadd.f32 %v148, %v149
    %279 = vadd.xlane.f32.xlu0 %v278
    %v280 = vpop.xlane.xlu0 %279
    %v281 = vadd.f32 %v150, %v151
    %282 = vadd.xlane.f32.xlu0 %v281
    %v283 = vpop.xlane.xlu0 %282
    %v284 = vadd.f32 %v152, %v153
    %285 = vadd.xlane.f32.xlu0 %v284
    %v286 = vpop.xlane.xlu0 %285
    %v287 = vadd.f32 %v154, %v155
    %288 = vadd.xlane.f32.xlu0 %v287
    %v289 = vpop.xlane.xlu0 %288
    %v290 = vadd.f32 %v156, %v157
    %291 = vadd.xlane.f32.xlu0 %v290
    %v292 = vpop.xlane.xlu0 %291
    %v293 = vadd.f32 %v158, %v159
    %294 = vadd.xlane.f32.xlu0 %v293
    %v295 = vpop.xlane.xlu0 %294
    %v296 = vadd.f32 %v160, %v161
    %297 = vadd.xlane.f32.xlu0 %v296
    %v298 = vpop.xlane.xlu0 %297
    %v299 = vadd.f32 %v162, %v163
    %300 = vadd.xlane.f32.xlu0 %v299
    %v301 = vpop.xlane.xlu0 %300
    %v302 = vadd.f32 %v164, %v165
    %303 = vadd.xlane.f32.xlu0 %v302
    %v304 = vpop.xlane.xlu0 %303
    %v305 = vadd.f32 %v166, %v167
    %306 = vadd.xlane.f32.xlu0 %v305
    %v307 = vpop.xlane.xlu0 %306
    %v308 = vadd.f32 %v168, %v169
    %309 = vadd.xlane.f32.xlu0 %v308
    %v310 = vpop.xlane.xlu0 %309
    %v311 = vadd.f32 %v170, %v171
    %312 = vadd.xlane.f32.xlu0 %v311
    %v313 = vpop.xlane.xlu0 %312
    %v314 = vadd.f32 %v172, %v173
    %315 = vadd.xlane.f32.xlu0 %v314
    %v316 = vpop.xlane.xlu0 %315
    %v317 = vadd.f32 %v174, %v175
    %318 = vadd.xlane.f32.xlu0 %v317
    %v319 = vpop.xlane.xlu0 %318
    %v320 = vrcp.pop 256.0
    %v321 = vmul.f32 %v178, %v320
    %v322 = vmul.f32 %v181, %v320
    %v323 = vmul.f32 %v184, %v320
    %v324 = vmul.f32 %v187, %v320
    %v325 = vmul.f32 %v190, %v320
    %v326 = vmul.f32 %v193, %v320
    %v327 = vmul.f32 %v196, %v320
    %v328 = vmul.f32 %v199, %v320
    %v329 = vmul.f32 %v202, %v320
    %v330 = vmul.f32 %v205, %v320
    %v331 = vmul.f32 %v208, %v320
    %v332 = vmul.f32 %v211, %v320
    %v333 = vmul.f32 %v214, %v320
    %v334 = vmul.f32 %v217, %v320
    %v335 = vmul.f32 %v220, %v320
    %v336 = vmul.f32 %v223, %v320
    %v337 = vmul.f32 %v226, %v320
    %v338 = vmul.f32 %v229, %v320
    %v339 = vmul.f32 %v232, %v320
    %v340 = vmul.f32 %v235, %v320
    %v341 = vmul.f32 %v238, %v320
    %v342 = vmul.f32 %v241, %v320
    %v343 = vmul.f32 %v244, %v320
    %v344 = vmul.f32 %v247, %v320
    %v345 = vmul.f32 %v250, %v320
    %v346 = vmul.f32 %v253, %v320
    %v347 = vmul.f32 %v256, %v320
    %v348 = vmul.f32 %v259, %v320
    %v349 = vmul.f32 %v262, %v320
    %v350 = vmul.f32 %v265, %v320
    %v351 = vmul.f32 %v268, %v320
    %v352 = vmul.f32 %v271, %v320
    %v353 = vmul.f32 %v274, %v320
    %v354 = vmul.f32 %v277, %v320
    %v355 = vmul.f32 %v280, %v320
    %v356 = vmul.f32 %v283, %v320
    %v357 = vmul.f32 %v286, %v320
    %v358 = vmul.f32 %v289, %v320
    %v359 = vmul.f32 %v292, %v320
    %v360 = vmul.f32 %v295, %v320
    %v361 = vmul.f32 %v298, %v320
    %v362 = vmul.f32 %v301, %v320
    %v363 = vmul.f32 %v304, %v320
    %v364 = vmul.f32 %v307, %v320
    %v365 = vmul.f32 %v310, %v320
    %v366 = vmul.f32 %v313, %v320
    %v367 = vmul.f32 %v316, %v320
    %v368 = vmul.f32 %v319, %v320
    %v369 = vsub.f32 %v80, %v321
    %v370 = vsub.f32 %v81, %v321
    %v371 = vsub.f32 %v82, %v322
    %v372 = vsub.f32 %v83, %v322
    %v373 = vsub.f32 %v84, %v323
    %v374 = vsub.f32 %v85, %v323
    %v375 = vsub.f32 %v86, %v324
    %v376 = vsub.f32 %v87, %v324
    %v377 = vsub.f32 %v88, %v325
    %v378 = vsub.f32 %v89, %v325
    %v379 = vsub.f32 %v90, %v326
    %v380 = vsub.f32 %v91, %v326
    %v381 = vsub.f32 %v92, %v327
    %v382 = vsub.f32 %v93, %v327
    %v383 = vsub.f32 %v94, %v328
    %v384 = vsub.f32 %v95, %v328
    %v385 = vsub.f32 %v96, %v329
    %v386 = vsub.f32 %v97, %v329
    %v387 = vsub.f32 %v98, %v330
    %v388 = vsub.f32 %v99, %v330
    %v389 = vsub.f32 %v100, %v331
    %v390 = vsub.f32 %v101, %v331
    %v391 = vsub.f32 %v102, %v332
    %v392 = vsub.f32 %v103, %v332
    %v393 = vsub.f32 %v104, %v333
    %v394 = vsub.f32 %v105, %v333
    %v395 = vsub.f32 %v106, %v334
    %v396 = vsub.f32 %v107, %v334
    %v397 = vsub.f32 %v108, %v335
    %v398 = vsub.f32 %v109, %v335
    %v399 = vsub.f32 %v110, %v336
    %v400 = vsub.f32 %v111, %v336
    %v401 = vsub.f32 %v112, %v337
    %v402 = vsub.f32 %v113, %v337
    %v403 = vsub.f32 %v114, %v338
    %v404 = vsub.f32 %v115, %v338
    %v405 = vsub.f32 %v116, %v339
    %v406 = vsub.f32 %v117, %v339
    %v407 = vsub.f32 %v118, %v340
    %v408 = vsub.f32 %v119, %v340
    %v409 = vsub.f32 %v120, %v341
    %v410 = vsub.f32 %v121, %v341
    %v411 = vsub.f32 %v122, %v342
    %v412 = vsub.f32 %v123, %v342
    %v413 = vsub.f32 %v124, %v343
    %v414 = vsub.f32 %v125, %v343
    %v415 = vsub.f32 %v126, %v344
    %v416 = vsub.f32 %v127, %v344
    %v417 = vsub.f32 %v128, %v345
    %v418 = vsub.f32 %v129, %v345
    %v419 = vsub.f32 %v130, %v346
    %v420 = vsub.f32 %v131, %v346
    %v421 = vsub.f32 %v132, %v347
    %v422 = vsub.f32 %v133, %v347
    %v423 = vsub.f32 %v134, %v348
    %v424 = vsub.f32 %v135, %v348
    %v425 = vsub.f32 %v136, %v349
    %v426 = vsub.f32 %v137, %v349
    %v427 = vsub.f32 %v138, %v350
    %v428 = vsub.f32 %v139, %v350
    %v429 = vsub.f32 %v140, %v351
    %v430 = vsub.f32 %v141, %v351
    %v431 = vsub.f32 %v142, %v352
    %v432 = vsub.f32 %v143, %v352
    %v433 = vsub.f32 %v144, %v353
    %v434 = vsub.f32 %v145, %v353
    %v435 = vsub.f32 %v146, %v354
    %v436 = vsub.f32 %v147, %v354
    %v437 = vsub.f32 %v148, %v355
    %v438 = vsub.f32 %v149, %v355
    %v439 = vsub.f32 %v150, %v356
    %v440 = vsub.f32 %v151, %v356
    %v441 = vsub.f32 %v152, %v357
    %v442 = vsub.f32 %v153, %v357
    %v443 = vsub.f32 %v154, %v358
    %v444 = vsub.f32 %v155, %v358
    %v445 = vsub.f32 %v156, %v359
    %v446 = vsub.f32 %v157, %v359
    %v447 = vsub.f32 %v158, %v360
    %v448 = vsub.f32 %v159, %v360
    %v449 = vsub.f32 %v160, %v361
    %v450 = vsub.f32 %v161, %v361
    %v451 = vsub.f32 %v162, %v362
    %v452 = vsub.f32 %v163, %v362
    %v453 = vsub.f32 %v164, %v363
    %v454 = vsub.f32 %v165, %v363
    %v455 = vsub.f32 %v166, %v364
    %v456 = vsub.f32 %v167, %v364
    %v457 = vsub.f32 %v168, %v365
    %v458 = vsub.f32 %v169, %v365
    %v459 = vsub.f32 %v170, %v366
    %v460 = vsub.f32 %v171, %v366
    %v461 = vsub.f32 %v172, %v367
    %v462 = vsub.f32 %v173, %v367
    %v463 = vsub.f32 %v174, %v368
    %v464 = vsub.f32 %v175, %v368
    %v465 = vmul.f32 %v369, %v369
    %v466 = vmul.f32 %v370, %v370
    %v467 = vmul.f32 %v371, %v371
    %v468 = vmul.f32 %v372, %v372
    %v469 = vmul.f32 %v373, %v373
    %v470 = vmul.f32 %v374, %v374
    %v471 = vmul.f32 %v375, %v375
    %v472 = vmul.f32 %v376, %v376
    %v473 = vmul.f32 %v377, %v377
    %v474 = vmul.f32 %v378, %v378
    %v475 = vmul.f32 %v379, %v379
    %v476 = vmul.f32 %v380, %v380
    %v477 = vmul.f32 %v381, %v381
    %v478 = vmul.f32 %v382, %v382
    %v479 = vmul.f32 %v383, %v383
    %v480 = vmul.f32 %v384, %v384
    %v481 = vmul.f32 %v385, %v385
    %v482 = vmul.f32 %v386, %v386
    %v483 = vmul.f32 %v387, %v387
    %v484 = vmul.f32 %v388, %v388
    %v485 = vmul.f32 %v389, %v389
    %v486 = vmul.f32 %v390, %v390
    %v487 = vmul.f32 %v391, %v391
    %v488 = vmul.f32 %v392, %v392
    %v489 = vmul.f32 %v393, %v393
    %v490 = vmul.f32 %v394, %v394
    %v491 = vmul.f32 %v395, %v395
    %v492 = vmul.f32 %v396, %v396
    %v493 = vmul.f32 %v397, %v397
    %v494 = vmul.f32 %v398, %v398
    %v495 = vmul.f32 %v399, %v399
    %v496 = vmul.f32 %v400, %v400
    %v497 = vmul.f32 %v401, %v401
    %v498 = vmul.f32 %v402, %v402
    %v499 = vmul.f32 %v403, %v403
    %v500 = vmul.f32 %v404, %v404
    %v501 = vmul.f32 %v405, %v405
    %v502 = vmul.f32 %v406, %v406
    %v503 = vmul.f32 %v407, %v407
    %v504 = vmul.f32 %v408, %v408
    %v505 = vmul.f32 %v409, %v409
    %v506 = vmul.f32 %v410, %v410
    %v507 = vmul.f32 %v411, %v411
    %v508 = vmul.f32 %v412, %v412
    %v509 = vmul.f32 %v413, %v413
    %v510 = vmul.f32 %v414, %v414
    %v511 = vmul.f32 %v415, %v415
    %v512 = vmul.f32 %v416, %v416
    %v513 = vmul.f32 %v417, %v417
    %v514 = vmul.f32 %v418, %v418
    %v515 = vmul.f32 %v419, %v419
    %v516 = vmul.f32 %v420, %v420
    %v517 = vmul.f32 %v421, %v421
    %v518 = vmul.f32 %v422, %v422
    %v519 = vmul.f32 %v423, %v423
    %v520 = vmul.f32 %v424, %v424
    %v521 = vmul.f32 %v425, %v425
    %v522 = vmul.f32 %v426, %v426
    %v523 = vmul.f32 %v427, %v427
    %v524 = vmul.f32 %v428, %v428
    %v525 = vmul.f32 %v429, %v429
    %v526 = vmul.f32 %v430, %v430
    %v527 = vmul.f32 %v431, %v431
    %v528 = vmul.f32 %v432, %v432
    %v529 = vmul.f32 %v433, %v433
    %v530 = vmul.f32 %v434, %v434
    %v531 = vmul.f32 %v435, %v435
    %v532 = vmul.f32 %v436, %v436
    %v533 = vmul.f32 %v437, %v437
    %v534 = vmul.f32 %v438, %v438
    %v535 = vmul.f32 %v439, %v439
    %v536 = vmul.f32 %v440, %v440
    %v537 = vmul.f32 %v441, %v441
    %v538 = vmul.f32 %v442, %v442
    %v539 = vmul.f32 %v443, %v443
    %v540 = vmul.f32 %v444, %v444
    %v541 = vmul.f32 %v445, %v445
    %v542 = vmul.f32 %v446, %v446
    %v543 = vmul.f32 %v447, %v447
    %v544 = vmul.f32 %v448, %v448
    %v545 = vmul.f32 %v449, %v449
    %v546 = vmul.f32 %v450, %v450
    %v547 = vmul.f32 %v451, %v451
    %v548 = vmul.f32 %v452, %v452
    %v549 = vmul.f32 %v453, %v453
    %v550 = vmul.f32 %v454, %v454
    %v551 = vmul.f32 %v455, %v455
    %v552 = vmul.f32 %v456, %v456
    %v553 = vmul.f32 %v457, %v457
    %v554 = vmul.f32 %v458, %v458
    %v555 = vmul.f32 %v459, %v459
    %v556 = vmul.f32 %v460, %v460
    %v557 = vmul.f32 %v461, %v461
    %v558 = vmul.f32 %v462, %v462
    %v559 = vmul.f32 %v463, %v463
    %v560 = vmul.f32 %v464, %v464
    %v561 = vadd.f32 %v465, %v466
    %562 = vadd.xlane.f32.xlu0 %v561
    %v563 = vpop.xlane.xlu0 %562
    %v564 = vadd.f32 %v467, %v468
    %565 = vadd.xlane.f32.xlu0 %v564
    %v566 = vpop.xlane.xlu0 %565
    %v567 = vadd.f32 %v469, %v470
    %568 = vadd.xlane.f32.xlu0 %v567
    %v569 = vpop.xlane.xlu0 %568
    %v570 = vadd.f32 %v471, %v472
    %571 = vadd.xlane.f32.xlu0 %v570
    %v572 = vpop.xlane.xlu0 %571
    %v573 = vadd.f32 %v473, %v474
    %574 = vadd.xlane.f32.xlu0 %v573
    %v575 = vpop.xlane.xlu0 %574
    %v576 = vadd.f32 %v475, %v476
    %577 = vadd.xlane.f32.xlu0 %v576
    %v578 = vpop.xlane.xlu0 %577
    %v579 = vadd.f32 %v477, %v478
    %580 = vadd.xlane.f32.xlu0 %v579
    %v581 = vpop.xlane.xlu0 %580
    %v582 = vadd.f32 %v479, %v480
    %583 = vadd.xlane.f32.xlu0 %v582
    %v584 = vpop.xlane.xlu0 %583
    %v585 = vadd.f32 %v481, %v482
    %586 = vadd.xlane.f32.xlu0 %v585
    %v587 = vpop.xlane.xlu0 %586
    %v588 = vadd.f32 %v483, %v484
    %589 = vadd.xlane.f32.xlu0 %v588
    %v590 = vpop.xlane.xlu0 %589
    %v591 = vadd.f32 %v485, %v486
    %592 = vadd.xlane.f32.xlu0 %v591
    %v593 = vpop.xlane.xlu0 %592
    %v594 = vadd.f32 %v487, %v488
    %595 = vadd.xlane.f32.xlu0 %v594
    %v596 = vpop.xlane.xlu0 %595
    %v597 = vadd.f32 %v489, %v490
    %598 = vadd.xlane.f32.xlu0 %v597
    %v599 = vpop.xlane.xlu0 %598
    %v600 = vadd.f32 %v491, %v492
    %601 = vadd.xlane.f32.xlu0 %v600
    %v602 = vpop.xlane.xlu0 %601
    %v603 = vadd.f32 %v493, %v494
    %604 = vadd.xlane.f32.xlu0 %v603
    %v605 = vpop.xlane.xlu0 %604
    %v606 = vadd.f32 %v495, %v496
    %607 = vadd.xlane.f32.xlu0 %v606
    %v608 = vpop.xlane.xlu0 %607
    %v609 = vadd.f32 %v497, %v498
    %610 = vadd.xlane.f32.xlu0 %v609
    %v611 = vpop.xlane.xlu0 %610
    %v612 = vadd.f32 %v499, %v500
    %613 = vadd.xlane.f32.xlu0 %v612
    %v614 = vpop.xlane.xlu0 %613
    %v615 = vadd.f32 %v501, %v502
    %616 = vadd.xlane.f32.xlu0 %v615
    %v617 = vpop.xlane.xlu0 %616
    %v618 = vadd.f32 %v503, %v504
    %619 = vadd.xlane.f32.xlu0 %v618
    %v620 = vpop.xlane.xlu0 %619
    %v621 = vadd.f32 %v505, %v506
    %622 = vadd.xlane.f32.xlu0 %v621
    %v623 = vpop.xlane.xlu0 %622
    %v624 = vadd.f32 %v507, %v508
    %625 = vadd.xlane.f32.xlu0 %v624
    %v626 = vpop.xlane.xlu0 %625
    %v627 = vadd.f32 %v509, %v510
    %628 = vadd.xlane.f32.xlu0 %v627
    %v629 = vpop.xlane.xlu0 %628
    %v630 = vadd.f32 %v511, %v512
    %631 = vadd.xlane.f32.xlu0 %v630
    %v632 = vpop.xlane.xlu0 %631
    %v633 = vadd.f32 %v513, %v514
    %634 = vadd.xlane.f32.xlu0 %v633
    %v635 = vpop.xlane.xlu0 %634
    %v636 = vadd.f32 %v515, %v516
    %637 = vadd.xlane.f32.xlu0 %v636
    %v638 = vpop.xlane.xlu0 %637
    %v639 = vadd.f32 %v517, %v518
    %640 = vadd.xlane.f32.xlu0 %v639
    %v641 = vpop.xlane.xlu0 %640
    %v642 = vadd.f32 %v519, %v520
    %643 = vadd.xlane.f32.xlu0 %v642
    %v644 = vpop.xlane.xlu0 %643
    %v645 = vadd.f32 %v521, %v522
    %646 = vadd.xlane.f32.xlu0 %v645
    %v647 = vpop.xlane.xlu0 %646
    %v648 = vadd.f32 %v523, %v524
    %649 = vadd.xlane.f32.xlu0 %v648
    %v650 = vpop.xlane.xlu0 %649
    %v651 = vadd.f32 %v525, %v526
    %652 = vadd.xlane.f32.xlu0 %v651
    %v653 = vpop.xlane.xlu0 %652
    %v654 = vadd.f32 %v527, %v528
    %655 = vadd.xlane.f32.xlu0 %v654
    %v656 = vpop.xlane.xlu0 %655
    %v657 = vadd.f32 %v529, %v530
    %658 = vadd.xlane.f32.xlu0 %v657
    %v659 = vpop.xlane.xlu0 %658
    %v660 = vadd.f32 %v531, %v532
    %661 = vadd.xlane.f32.xlu0 %v660
    %v662 = vpop.xlane.xlu0 %661
    %v663 = vadd.f32 %v533, %v534
    %664 = vadd.xlane.f32.xlu0 %v663
    %v665 = vpop.xlane.xlu0 %664
    %v666 = vadd.f32 %v535, %v536
    %667 = vadd.xlane.f32.xlu0 %v666
    %v668 = vpop.xlane.xlu0 %667
    %v669 = vadd.f32 %v537, %v538
    %670 = vadd.xlane.f32.xlu0 %v669
    %v671 = vpop.xlane.xlu0 %670
    %v672 = vadd.f32 %v539, %v540
    %673 = vadd.xlane.f32.xlu0 %v672
    %v674 = vpop.xlane.xlu0 %673
    %v675 = vadd.f32 %v541, %v542
    %676 = vadd.xlane.f32.xlu0 %v675
    %v677 = vpop.xlane.xlu0 %676
    %v678 = vadd.f32 %v543, %v544
    %679 = vadd.xlane.f32.xlu0 %v678
    %v680 = vpop.xlane.xlu0 %679
    %v681 = vadd.f32 %v545, %v546
    %682 = vadd.xlane.f32.xlu0 %v681
    %v683 = vpop.xlane.xlu0 %682
    %v684 = vadd.f32 %v547, %v548
    %685 = vadd.xlane.f32.xlu0 %v684
    %v686 = vpop.xlane.xlu0 %685
    %v687 = vadd.f32 %v549, %v550
    %688 = vadd.xlane.f32.xlu0 %v687
    %v689 = vpop.xlane.xlu0 %688
    %v690 = vadd.f32 %v551, %v552
    %691 = vadd.xlane.f32.xlu0 %v690
    %v692 = vpop.xlane.xlu0 %691
    %v693 = vadd.f32 %v553, %v554
    %694 = vadd.xlane.f32.xlu0 %v693
    %v695 = vpop.xlane.xlu0 %694
    %v696 = vadd.f32 %v555, %v556
    %697 = vadd.xlane.f32.xlu0 %v696
    %v698 = vpop.xlane.xlu0 %697
    %v699 = vadd.f32 %v557, %v558
    %700 = vadd.xlane.f32.xlu0 %v699
    %v701 = vpop.xlane.xlu0 %700
    %v702 = vadd.f32 %v559, %v560
    %703 = vadd.xlane.f32.xlu0 %v702
    %v704 = vpop.xlane.xlu0 %703
    %v705 = vmul.f32 %v563, %v320
    %v706 = vmul.f32 %v566, %v320
    %v707 = vmul.f32 %v569, %v320
    %v708 = vmul.f32 %v572, %v320
    %v709 = vmul.f32 %v575, %v320
    %v710 = vmul.f32 %v578, %v320
    %v711 = vmul.f32 %v581, %v320
    %v712 = vmul.f32 %v584, %v320
    %v713 = vmul.f32 %v587, %v320
    %v714 = vmul.f32 %v590, %v320
    %v715 = vmul.f32 %v593, %v320
    %v716 = vmul.f32 %v596, %v320
    %v717 = vmul.f32 %v599, %v320
    %v718 = vmul.f32 %v602, %v320
    %v719 = vmul.f32 %v605, %v320
    %v720 = vmul.f32 %v608, %v320
    %v721 = vmul.f32 %v611, %v320
    %v722 = vmul.f32 %v614, %v320
    %v723 = vmul.f32 %v617, %v320
    %v724 = vmul.f32 %v620, %v320
    %v725 = vmul.f32 %v623, %v320
    %v726 = vmul.f32 %v626, %v320
    %v727 = vmul.f32 %v629, %v320
    %v728 = vmul.f32 %v632, %v320
    %v729 = vmul.f32 %v635, %v320
    %v730 = vmul.f32 %v638, %v320
    %v731 = vmul.f32 %v641, %v320
    %v732 = vmul.f32 %v644, %v320
    %v733 = vmul.f32 %v647, %v320
    %v734 = vmul.f32 %v650, %v320
    %v735 = vmul.f32 %v653, %v320
    %v736 = vmul.f32 %v656, %v320
    %v737 = vmul.f32 %v659, %v320
    %v738 = vmul.f32 %v662, %v320
    %v739 = vmul.f32 %v665, %v320
    %v740 = vmul.f32 %v668, %v320
    %v741 = vmul.f32 %v671, %v320
    %v742 = vmul.f32 %v674, %v320
    %v743 = vmul.f32 %v677, %v320
    %v744 = vmul.f32 %v680, %v320
    %v745 = vmul.f32 %v683, %v320
    %v746 = vmul.f32 %v686, %v320
    %v747 = vmul.f32 %v689, %v320
    %v748 = vmul.f32 %v692, %v320
    %v749 = vmul.f32 %v695, %v320
    %v750 = vmul.f32 %v698, %v320
    %v751 = vmul.f32 %v701, %v320
    %v752 = vmul.f32 %v704, %v320
    %v753 = vadd.f32 %v705, 1e-05
    %v754 = vadd.f32 %v706, 1e-05
    %v755 = vadd.f32 %v707, 1e-05
    %v756 = vadd.f32 %v708, 1e-05
    %v757 = vadd.f32 %v709, 1e-05
    %v758 = vadd.f32 %v710, 1e-05
    %v759 = vadd.f32 %v711, 1e-05
    %v760 = vadd.f32 %v712, 1e-05
    %v761 = vadd.f32 %v713, 1e-05
    %v762 = vadd.f32 %v714, 1e-05
    %v763 = vadd.f32 %v715, 1e-05
    %v764 = vadd.f32 %v716, 1e-05
    %v765 = vadd.f32 %v717, 1e-05
    %v766 = vadd.f32 %v718, 1e-05
    %v767 = vadd.f32 %v719, 1e-05
    %v768 = vadd.f32 %v720, 1e-05
    %v769 = vadd.f32 %v721, 1e-05
    %v770 = vadd.f32 %v722, 1e-05
    %v771 = vadd.f32 %v723, 1e-05
    %v772 = vadd.f32 %v724, 1e-05
    %v773 = vadd.f32 %v725, 1e-05
    %v774 = vadd.f32 %v726, 1e-05
    %v775 = vadd.f32 %v727, 1e-05
    %v776 = vadd.f32 %v728, 1e-05
    %v777 = vadd.f32 %v729, 1e-05
    %v778 = vadd.f32 %v730, 1e-05
    %v779 = vadd.f32 %v731, 1e-05
    %v780 = vadd.f32 %v732, 1e-05
    %v781 = vadd.f32 %v733, 1e-05
    %v782 = vadd.f32 %v734, 1e-05
    %v783 = vadd.f32 %v735, 1e-05
    %v784 = vadd.f32 %v736, 1e-05
    %v785 = vadd.f32 %v737, 1e-05
    %v786 = vadd.f32 %v738, 1e-05
    %v787 = vadd.f32 %v739, 1e-05
    %v788 = vadd.f32 %v740, 1e-05
    %v789 = vadd.f32 %v741, 1e-05
    %v790 = vadd.f32 %v742, 1e-05
    %v791 = vadd.f32 %v743, 1e-05
    %v792 = vadd.f32 %v744, 1e-05
    %v793 = vadd.f32 %v745, 1e-05
    %v794 = vadd.f32 %v746, 1e-05
    %v795 = vadd.f32 %v747, 1e-05
    %v796 = vadd.f32 %v748, 1e-05
    %v797 = vadd.f32 %v749, 1e-05
    %v798 = vadd.f32 %v750, 1e-05
    %v799 = vadd.f32 %v751, 1e-05
    %v800 = vadd.f32 %v752, 1e-05
    %v801 = vrsqrt.pop %v753
    %v802 = vrsqrt.pop %v754
    %v803 = vrsqrt.pop %v755
    %v804 = vrsqrt.pop %v756
    %v805 = vrsqrt.pop %v757
    %v806 = vrsqrt.pop %v758
    %v807 = vrsqrt.pop %v759
    %v808 = vrsqrt.pop %v760
    %v809 = vrsqrt.pop %v761
    %v810 = vrsqrt.pop %v762
    %v811 = vrsqrt.pop %v763
    %v812 = vrsqrt.pop %v764
    %v813 = vrsqrt.pop %v765
    %v814 = vrsqrt.pop %v766
    %v815 = vrsqrt.pop %v767
    %v816 = vrsqrt.pop %v768
    %v817 = vrsqrt.pop %v769
    %v818 = vrsqrt.pop %v770
    %v819 = vrsqrt.pop %v771
    %v820 = vrsqrt.pop %v772
    %v821 = vrsqrt.pop %v773
    %v822 = vrsqrt.pop %v774
    %v823 = vrsqrt.pop %v775
    %v824 = vrsqrt.pop %v776
    %v825 = vrsqrt.pop %v777
    %v826 = vrsqrt.pop %v778
    %v827 = vrsqrt.pop %v779
    %v828 = vrsqrt.pop %v780
    %v829 = vrsqrt.pop %v781
    %v830 = vrsqrt.pop %v782
    %v831 = vrsqrt.pop %v783
    %v832 = vrsqrt.pop %v784
    %v833 = vrsqrt.pop %v785
    %v834 = vrsqrt.pop %v786
    %v835 = vrsqrt.pop %v787
    %v836 = vrsqrt.pop %v788
    %v837 = vrsqrt.pop %v789
    %v838 = vrsqrt.pop %v790
    %v839 = vrsqrt.pop %v791
    %v840 = vrsqrt.pop %v792
    %v841 = vrsqrt.pop %v793
    %v842 = vrsqrt.pop %v794
    %v843 = vrsqrt.pop %v795
    %v844 = vrsqrt.pop %v796
    %v845 = vrsqrt.pop %v797
    %v846 = vrsqrt.pop %v798
    %v847 = vrsqrt.pop %v799
    %v848 = vrsqrt.pop %v800
    %v849 = vmul.f32 %v369, %v801
    %v850 = vmul.f32 %v370, %v801
    %v851 = vmul.f32 %v371, %v802
    %v852 = vmul.f32 %v372, %v802
    %v853 = vmul.f32 %v373, %v803
    %v854 = vmul.f32 %v374, %v803
    %v855 = vmul.f32 %v375, %v804
    %v856 = vmul.f32 %v376, %v804
    %v857 = vmul.f32 %v377, %v805
    %v858 = vmul.f32 %v378, %v805
    %v859 = vmul.f32 %v379, %v806
    %v860 = vmul.f32 %v380, %v806
    %v861 = vmul.f32 %v381, %v807
    %v862 = vmul.f32 %v382, %v807
    %v863 = vmul.f32 %v383, %v808
    %v864 = vmul.f32 %v384, %v808
    %v865 = vmul.f32 %v385, %v809
    %v866 = vmul.f32 %v386, %v809
    %v867 = vmul.f32 %v387, %v810
    %v868 = vmul.f32 %v388, %v810
    %v869 = vmul.f32 %v389, %v811
    %v870 = vmul.f32 %v390, %v811
    %v871 = vmul.f32 %v391, %v812
    %v872 = vmul.f32 %v392, %v812
    %v873 = vmul.f32 %v393, %v813
    %v874 = vmul.f32 %v394, %v813
    %v875 = vmul.f32 %v395, %v814
    %v876 = vmul.f32 %v396, %v814
    %v877 = vmul.f32 %v397, %v815
    %v878 = vmul.f32 %v398, %v815
    %v879 = vmul.f32 %v399, %v816
    %v880 = vmul.f32 %v400, %v816
    %v881 = vmul.f32 %v401, %v817
    %v882 = vmul.f32 %v402, %v817
    %v883 = vmul.f32 %v403, %v818
    %v884 = vmul.f32 %v404, %v818
    %v885 = vmul.f32 %v405, %v819
    %v886 = vmul.f32 %v406, %v819
    %v887 = vmul.f32 %v407, %v820
    %v888 = vmul.f32 %v408, %v820
    %v889 = vmul.f32 %v409, %v821
    %v890 = vmul.f32 %v410, %v821
    %v891 = vmul.f32 %v411, %v822
    %v892 = vmul.f32 %v412, %v822
    %v893 = vmul.f32 %v413, %v823
    %v894 = vmul.f32 %v414, %v823
    %v895 = vmul.f32 %v415, %v824
    %v896 = vmul.f32 %v416, %v824
    %v897 = vmul.f32 %v417, %v825
    %v898 = vmul.f32 %v418, %v825
    %v899 = vmul.f32 %v419, %v826
    %v900 = vmul.f32 %v420, %v826
    %v901 = vmul.f32 %v421, %v827
    %v902 = vmul.f32 %v422, %v827
    %v903 = vmul.f32 %v423, %v828
    %v904 = vmul.f32 %v424, %v828
    %v905 = vmul.f32 %v425, %v829
    %v906 = vmul.f32 %v426, %v829
    %v907 = vmul.f32 %v427, %v830
    %v908 = vmul.f32 %v428, %v830
    %v909 = vmul.f32 %v429, %v831
    %v910 = vmul.f32 %v430, %v831
    %v911 = vmul.f32 %v431, %v832
    %v912 = vmul.f32 %v432, %v832
    %v913 = vmul.f32 %v433, %v833
    %v914 = vmul.f32 %v434, %v833
    %v915 = vmul.f32 %v435, %v834
    %v916 = vmul.f32 %v436, %v834
    %v917 = vmul.f32 %v437, %v835
    %v918 = vmul.f32 %v438, %v835
    %v919 = vmul.f32 %v439, %v836
    %v920 = vmul.f32 %v440, %v836
    %v921 = vmul.f32 %v441, %v837
    %v922 = vmul.f32 %v442, %v837
    %v923 = vmul.f32 %v443, %v838
    %v924 = vmul.f32 %v444, %v838
    %v925 = vmul.f32 %v445, %v839
    %v926 = vmul.f32 %v446, %v839
    %v927 = vmul.f32 %v447, %v840
    %v928 = vmul.f32 %v448, %v840
    %v929 = vmul.f32 %v449, %v841
    %v930 = vmul.f32 %v450, %v841
    %v931 = vmul.f32 %v451, %v842
    %v932 = vmul.f32 %v452, %v842
    %v933 = vmul.f32 %v453, %v843
    %v934 = vmul.f32 %v454, %v843
    %v935 = vmul.f32 %v455, %v844
    %v936 = vmul.f32 %v456, %v844
    %v937 = vmul.f32 %v457, %v845
    %v938 = vmul.f32 %v458, %v845
    %v939 = vmul.f32 %v459, %v846
    %v940 = vmul.f32 %v460, %v846
    %v941 = vmul.f32 %v461, %v847
    %v942 = vmul.f32 %v462, %v847
    %v943 = vmul.f32 %v463, %v848
    %v944 = vmul.f32 %v464, %v848
    %v945 = vld [vmem:[#allocation5] sm:$0x3]
    %v947 = vlaneseq
    %v948 = vshrl.u32 %v947, 7
    %v949 = vsub.s32 0, %v948
    %v950 = vrot.slane %v945, %v949
    %v951 = vlaneseq
    %v952 = vshrl.u32 %v951, 7
    %v953 = vsub.s32 1, %v952
    %v954 = vrot.slane %v945, %v953
    %v957 = vmul.f32 %v849, %v950
    %v958 = vmul.f32 %v850, %v954
    %v959 = vmul.f32 %v851, %v950
    %v960 = vmul.f32 %v852, %v954
    %v961 = vmul.f32 %v853, %v950
    %v962 = vmul.f32 %v854, %v954
    %v963 = vmul.f32 %v855, %v950
    %v964 = vmul.f32 %v856, %v954
    %v965 = vmul.f32 %v857, %v950
    %v966 = vmul.f32 %v858, %v954
    %v967 = vmul.f32 %v859, %v950
    %v968 = vmul.f32 %v860, %v954
    %v969 = vmul.f32 %v861, %v950
    %v970 = vmul.f32 %v862, %v954
    %v971 = vmul.f32 %v863, %v950
    %v972 = vmul.f32 %v864, %v954
    %v973 = vmul.f32 %v865, %v950
    %v974 = vmul.f32 %v866, %v954
    %v975 = vmul.f32 %v867, %v950
    %v976 = vmul.f32 %v868, %v954
    %v977 = vmul.f32 %v869, %v950
    %v978 = vmul.f32 %v870, %v954
    %v979 = vmul.f32 %v871, %v950
    %v980 = vmul.f32 %v872, %v954
    %v981 = vmul.f32 %v873, %v950
    %v982 = vmul.f32 %v874, %v954
    %v983 = vmul.f32 %v875, %v950
    %v984 = vmul.f32 %v876, %v954
    %v985 = vmul.f32 %v877, %v950
    %v986 = vmul.f32 %v878, %v954
    %v987 = vmul.f32 %v879, %v950
    %v988 = vmul.f32 %v880, %v954
    %v989 = vmul.f32 %v881, %v950
    %v990 = vmul.f32 %v882, %v954
    %v991 = vmul.f32 %v883, %v950
    %v992 = vmul.f32 %v884, %v954
    %v993 = vmul.f32 %v885, %v950
    %v994 = vmul.f32 %v886, %v954
    %v995 = vmul.f32 %v887, %v950
    %v996 = vmul.f32 %v888, %v954
    %v997 = vmul.f32 %v889, %v950
    %v998 = vmul.f32 %v890, %v954
    %v999 = vmul.f32 %v891, %v950
    %v1000 = vmul.f32 %v892, %v954
    %v1001 = vmul.f32 %v893, %v950
    %v1002 = vmul.f32 %v894, %v954
    %v1003 = vmul.f32 %v895, %v950
    %v1004 = vmul.f32 %v896, %v954
    %v1005 = vmul.f32 %v897, %v950
    %v1006 = vmul.f32 %v898, %v954
    %v1007 = vmul.f32 %v899, %v950
    %v1008 = vmul.f32 %v900, %v954
    %v1009 = vmul.f32 %v901, %v950
    %v1010 = vmul.f32 %v902, %v954
    %v1011 = vmul.f32 %v903, %v950
    %v1012 = vmul.f32 %v904, %v954
    %v1013 = vmul.f32 %v905, %v950
    %v1014 = vmul.f32 %v906, %v954
    %v1015 = vmul.f32 %v907, %v950
    %v1016 = vmul.f32 %v908, %v954
    %v1017 = vmul.f32 %v909, %v950
    %v1018 = vmul.f32 %v910, %v954
    %v1019 = vmul.f32 %v911, %v950
    %v1020 = vmul.f32 %v912, %v954
    %v1021 = vmul.f32 %v913, %v950
    %v1022 = vmul.f32 %v914, %v954
    %v1023 = vmul.f32 %v915, %v950
    %v1024 = vmul.f32 %v916, %v954
    %v1025 = vmul.f32 %v917, %v950
    %v1026 = vmul.f32 %v918, %v954
    %v1027 = vmul.f32 %v919, %v950
    %v1028 = vmul.f32 %v920, %v954
    %v1029 = vmul.f32 %v921, %v950
    %v1030 = vmul.f32 %v922, %v954
    %v1031 = vmul.f32 %v923, %v950
    %v1032 = vmul.f32 %v924, %v954
    %v1033 = vmul.f32 %v925, %v950
    %v1034 = vmul.f32 %v926, %v954
    %v1035 = vmul.f32 %v927, %v950
    %v1036 = vmul.f32 %v928, %v954
    %v1037 = vmul.f32 %v929, %v950
    %v1038 = vmul.f32 %v930, %v954
    %v1039 = vmul.f32 %v931, %v950
    %v1040 = vmul.f32 %v932, %v954
    %v1041 = vmul.f32 %v933, %v950
    %v1042 = vmul.f32 %v934, %v954
    %v1043 = vmul.f32 %v935, %v950
    %v1044 = vmul.f32 %v936, %v954
    %v1045 = vmul.f32 %v937, %v950
    %v1046 = vmul.f32 %v938, %v954
    %v1047 = vmul.f32 %v939, %v950
    %v1048 = vmul.f32 %v940, %v954
    %v1049 = vmul.f32 %v941, %v950
    %v1050 = vmul.f32 %v942, %v954
    %v1051 = vmul.f32 %v943, %v950
    %v1052 = vmul.f32 %v944, %v954
    %v1053 = vld [vmem:[%s2] sm:$0x3]
    %v1055 = vlaneseq
    %v1056 = vshrl.u32 %v1055, 7
    %v1057 = vsub.s32 0, %v1056
    %v1058 = vrot.slane %v1053, %v1057
    %v1059 = vlaneseq
    %v1060 = vshrl.u32 %v1059, 7
    %v1061 = vsub.s32 1, %v1060
    %v1062 = vrot.slane %v1053, %v1061
    %v1065 = vadd.f32 %v957, %v1058
    %v1066 = vadd.f32 %v958, %v1062
    %v1067 = vadd.f32 %v959, %v1058
    %v1068 = vadd.f32 %v960, %v1062
    %v1069 = vadd.f32 %v961, %v1058
    %v1070 = vadd.f32 %v962, %v1062
    %v1071 = vadd.f32 %v963, %v1058
    %v1072 = vadd.f32 %v964, %v1062
    %v1073 = vadd.f32 %v965, %v1058
    %v1074 = vadd.f32 %v966, %v1062
    %v1075 = vadd.f32 %v967, %v1058
    %v1076 = vadd.f32 %v968, %v1062
    %v1077 = vadd.f32 %v969, %v1058
    %v1078 = vadd.f32 %v970, %v1062
    %v1079 = vadd.f32 %v971, %v1058
    %v1080 = vadd.f32 %v972, %v1062
    %v1081 = vadd.f32 %v973, %v1058
    %v1082 = vadd.f32 %v974, %v1062
    %v1083 = vadd.f32 %v975, %v1058
    %v1084 = vadd.f32 %v976, %v1062
    %v1085 = vadd.f32 %v977, %v1058
    %v1086 = vadd.f32 %v978, %v1062
    %v1087 = vadd.f32 %v979, %v1058
    %v1088 = vadd.f32 %v980, %v1062
    %v1089 = vadd.f32 %v981, %v1058
    %v1090 = vadd.f32 %v982, %v1062
    %v1091 = vadd.f32 %v983, %v1058
    %v1092 = vadd.f32 %v984, %v1062
    %v1093 = vadd.f32 %v985, %v1058
    %v1094 = vadd.f32 %v986, %v1062
    %v1095 = vadd.f32 %v987, %v1058
    %v1096 = vadd.f32 %v988, %v1062
    %v1097 = vadd.f32 %v989, %v1058
    %v1098 = vadd.f32 %v990, %v1062
    %v1099 = vadd.f32 %v991, %v1058
    %v1100 = vadd.f32 %v992, %v1062
    %v1101 = vadd.f32 %v993, %v1058
    %v1102 = vadd.f32 %v994, %v1062
    %v1103 = vadd.f32 %v995, %v1058
    %v1104 = vadd.f32 %v996, %v1062
    %v1105 = vadd.f32 %v997, %v1058
    %v1106 = vadd.f32 %v998, %v1062
    %v1107 = vadd.f32 %v999, %v1058
    %v1108 = vadd.f32 %v1000, %v1062
    %v1109 = vadd.f32 %v1001, %v1058
    %v1110 = vadd.f32 %v1002, %v1062
    %v1111 = vadd.f32 %v1003, %v1058
    %v1112 = vadd.f32 %v1004, %v1062
    %v1113 = vadd.f32 %v1005, %v1058
    %v1114 = vadd.f32 %v1006, %v1062
    %v1115 = vadd.f32 %v1007, %v1058
    %v1116 = vadd.f32 %v1008, %v1062
    %v1117 = vadd.f32 %v1009, %v1058
    %v1118 = vadd.f32 %v1010, %v1062
    %v1119 = vadd.f32 %v1011, %v1058
    %v1120 = vadd.f32 %v1012, %v1062
    %v1121 = vadd.f32 %v1013, %v1058
    %v1122 = vadd.f32 %v1014, %v1062
    %v1123 = vadd.f32 %v1015, %v1058
    %v1124 = vadd.f32 %v1016, %v1062
    %v1125 = vadd.f32 %v1017, %v1058
    %v1126 = vadd.f32 %v1018, %v1062
    %v1127 = vadd.f32 %v1019, %v1058
    %v1128 = vadd.f32 %v1020, %v1062
    %v1129 = vadd.f32 %v1021, %v1058
    %v1130 = vadd.f32 %v1022, %v1062
    %v1131 = vadd.f32 %v1023, %v1058
    %v1132 = vadd.f32 %v1024, %v1062
    %v1133 = vadd.f32 %v1025, %v1058
    %v1134 = vadd.f32 %v1026, %v1062
    %v1135 = vadd.f32 %v1027, %v1058
    %v1136 = vadd.f32 %v1028, %v1062
    %v1137 = vadd.f32 %v1029, %v1058
    %v1138 = vadd.f32 %v1030, %v1062
    %v1139 = vadd.f32 %v1031, %v1058
    %v1140 = vadd.f32 %v1032, %v1062
    %v1141 = vadd.f32 %v1033, %v1058
    %v1142 = vadd.f32 %v1034, %v1062
    %v1143 = vadd.f32 %v1035, %v1058
    %v1144 = vadd.f32 %v1036, %v1062
    %v1145 = vadd.f32 %v1037, %v1058
    %v1146 = vadd.f32 %v1038, %v1062
    %v1147 = vadd.f32 %v1039, %v1058
    %v1148 = vadd.f32 %v1040, %v1062
    %v1149 = vadd.f32 %v1041, %v1058
    %v1150 = vadd.f32 %v1042, %v1062
    %v1151 = vadd.f32 %v1043, %v1058
    %v1152 = vadd.f32 %v1044, %v1062
    %v1153 = vadd.f32 %v1045, %v1058
    %v1154 = vadd.f32 %v1046, %v1062
    %v1155 = vadd.f32 %v1047, %v1058
    %v1156 = vadd.f32 %v1048, %v1062
    %v1157 = vadd.f32 %v1049, %v1058
    %v1158 = vadd.f32 %v1050, %v1062
    %v1159 = vadd.f32 %v1051, %v1058
    %v1160 = vadd.f32 %v1052, %v1062
    %v1161 = vpack.c.bf16 %v1067, %v1065
    %v1162 = vpack.c.bf16 %v1068, %v1066
    %v1163 = vpack.c.bf16 %v1071, %v1069
    %v1164 = vpack.c.bf16 %v1072, %v1070
    %v1165 = vpack.c.bf16 %v1075, %v1073
    %v1166 = vpack.c.bf16 %v1076, %v1074
    %v1167 = vpack.c.bf16 %v1079, %v1077
    %v1168 = vpack.c.bf16 %v1080, %v1078
    %v1169 = vpack.c.bf16 %v1083, %v1081
    %v1170 = vpack.c.bf16 %v1084, %v1082
    %v1171 = vpack.c.bf16 %v1087, %v1085
    %v1172 = vpack.c.bf16 %v1088, %v1086
    %v1173 = vpack.c.bf16 %v1091, %v1089
    %v1174 = vpack.c.bf16 %v1092, %v1090
    %v1175 = vpack.c.bf16 %v1095, %v1093
    %v1176 = vpack.c.bf16 %v1096, %v1094
    %v1177 = vpack.c.bf16 %v1099, %v1097
    %v1178 = vpack.c.bf16 %v1100, %v1098
    %v1179 = vpack.c.bf16 %v1103, %v1101
    %v1180 = vpack.c.bf16 %v1104, %v1102
    %v1181 = vpack.c.bf16 %v1107, %v1105
    %v1182 = vpack.c.bf16 %v1108, %v1106
    %v1183 = vpack.c.bf16 %v1111, %v1109
    %v1184 = vpack.c.bf16 %v1112, %v1110
    %v1185 = vpack.c.bf16 %v1115, %v1113
    %v1186 = vpack.c.bf16 %v1116, %v1114
    %v1187 = vpack.c.bf16 %v1119, %v1117
    %v1188 = vpack.c.bf16 %v1120, %v1118
    %v1189 = vpack.c.bf16 %v1123, %v1121
    %v1190 = vpack.c.bf16 %v1124, %v1122
    %v1191 = vpack.c.bf16 %v1127, %v1125
    %v1192 = vpack.c.bf16 %v1128, %v1126
    %v1193 = vpack.c.bf16 %v1131, %v1129
    %v1194 = vpack.c.bf16 %v1132, %v1130
    %v1195 = vpack.c.bf16 %v1135, %v1133
    %v1196 = vpack.c.bf16 %v1136, %v1134
    %v1197 = vpack.c.bf16 %v1139, %v1137
    %v1198 = vpack.c.bf16 %v1140, %v1138
    %v1199 = vpack.c.bf16 %v1143, %v1141
    %v1200 = vpack.c.bf16 %v1144, %v1142
    %v1201 = vpack.c.bf16 %v1147, %v1145
    %v1202 = vpack.c.bf16 %v1148, %v1146
    %v1203 = vpack.c.bf16 %v1151, %v1149
    %v1204 = vpack.c.bf16 %v1152, %v1150
    %v1205 = vpack.c.bf16 %v1155, %v1153
    %v1206 = vpack.c.bf16 %v1156, %v1154
    %v1207 = vpack.c.bf16 %v1159, %v1157
    %v1208 = vpack.c.bf16 %v1160, %v1158
    %v1209 = vld [vmem:[#allocation7] sm:$0xff]
    %v1210 = vld [vmem:[#allocation7 + $0x8] sm:$0xff]
    %v1211 = vld [vmem:[#allocation7 + $0x10] sm:$0xff]
    %v1212 = vld [vmem:[#allocation7 + $0x18] sm:$0xff]
    %v1213 = vld [vmem:[#allocation7 + $0x20] sm:$0xff]
    %v1214 = vld [vmem:[#allocation7 + $0x28] sm:$0xff]
    %v1215 = vld [vmem:[#allocation7 + $0x30] sm:$0xff]
    %v1216 = vld [vmem:[#allocation7 + $0x38] sm:$0xff]
    %v1217 = vld [vmem:[#allocation7 + $0x40] sm:$0xff]
    %v1218 = vld [vmem:[#allocation7 + $0x48] sm:$0xff]
    %v1219 = vld [vmem:[#allocation7 + $0x50] sm:$0xff]
    %v1220 = vld [vmem:[#allocation7 + $0x58] sm:$0xff]
    %v1221 = vld [vmem:[#allocation7 + $0x60] sm:$0xff]
    %v1222 = vld [vmem:[#allocation7 + $0x68] sm:$0xff]
    %v1223 = vld [vmem:[#allocation7 + $0x70] sm:$0xff]
    %v1224 = vld [vmem:[#allocation7 + $0x78] sm:$0xff]
    %v1225 = vld [vmem:[#allocation7 + $0x80] sm:$0xff]
    %v1226 = vld [vmem:[#allocation7 + $0x88] sm:$0xff]
    %v1227 = vld [vmem:[#allocation7 + $0x90] sm:$0xff]
    %v1228 = vld [vmem:[#allocation7 + $0x98] sm:$0xff]
    %v1229 = vld [vmem:[#allocation7 + $0xa0] sm:$0xff]
    %v1230 = vld [vmem:[#allocation7 + $0xa8] sm:$0xff]
    %v1231 = vld [vmem:[#allocation7 + $0xb0] sm:$0xff]
    %v1232 = vld [vmem:[#allocation7 + $0xb8] sm:$0xff]
    %v1233 = vld [vmem:[#allocation7 + $0xc0] sm:$0xff]
    %v1234 = vld [vmem:[#allocation7 + $0xc8] sm:$0xff]
    %v1235 = vld [vmem:[#allocation7 + $0xd0] sm:$0xff]
    %v1236 = vld [vmem:[#allocation7 + $0xd8] sm:$0xff]
    %v1237 = vld [vmem:[#allocation7 + $0xe0] sm:$0xff]
    %v1238 = vld [vmem:[#allocation7 + $0xe8] sm:$0xff]
    %v1239 = vld [vmem:[#allocation7 + $0xf0] sm:$0xff]
    %v1240 = vld [vmem:[#allocation7 + $0xf8] sm:$0xff]
    %v1241 = vld [vmem:[#allocation7 + $0x100] sm:$0xff]
    %v1242 = vld [vmem:[#allocation7 + $0x108] sm:$0xff]
    %v1243 = vld [vmem:[#allocation7 + $0x110] sm:$0xff]
    %v1244 = vld [vmem:[#allocation7 + $0x118] sm:$0xff]
    %v1245 = vld [vmem:[#allocation7 + $0x120] sm:$0xff]
    %v1246 = vld [vmem:[#allocation7 + $0x128] sm:$0xff]
    %v1247 = vld [vmem:[#allocation7 + $0x130] sm:$0xff]
    %v1248 = vld [vmem:[#allocation7 + $0x138] sm:$0xff]
    %v1249 = vld [vmem:[#allocation7 + $0x140] sm:$0xff]
    %v1250 = vld [vmem:[#allocation7 + $0x148] sm:$0xff]
    %v1251 = vld [vmem:[#allocation7 + $0x150] sm:$0xff]
    %v1252 = vld [vmem:[#allocation7 + $0x158] sm:$0xff]
    %v1253 = vld [vmem:[#allocation7 + $0x160] sm:$0xff]
    %v1254 = vld [vmem:[#allocation7 + $0x168] sm:$0xff]
    %v1255 = vld [vmem:[#allocation7 + $0x170] sm:$0xff]
    %v1256 = vld [vmem:[#allocation7 + $0x178] sm:$0xff]
    %v1257 = vld [vmem:[#allocation7 + $0x180] sm:$0xff]
    %v1258 = vld [vmem:[#allocation7 + $0x188] sm:$0xff]
    %v1259 = vld [vmem:[#allocation7 + $0x190] sm:$0xff]
    %v1260 = vld [vmem:[#allocation7 + $0x198] sm:$0xff]
    %v1261 = vld [vmem:[#allocation7 + $0x1a0] sm:$0xff]
    %v1262 = vld [vmem:[#allocation7 + $0x1a8] sm:$0xff]
    %v1263 = vld [vmem:[#allocation7 + $0x1b0] sm:$0xff]
    %v1264 = vld [vmem:[#allocation7 + $0x1b8] sm:$0xff]
    %v1265 = vld [vmem:[#allocation7 + $0x1c0] sm:$0xff]
    %v1266 = vld [vmem:[#allocation7 + $0x1c8] sm:$0xff]
    %v1267 = vld [vmem:[#allocation7 + $0x1d0] sm:$0xff]
    %v1268 = vld [vmem:[#allocation7 + $0x1d8] sm:$0xff]
    %v1269 = vld [vmem:[#allocation7 + $0x1e0] sm:$0xff]
    %v1270 = vld [vmem:[#allocation7 + $0x1e8] sm:$0xff]
    %v1271 = vld [vmem:[#allocation7 + $0x1f0] sm:$0xff]
    %v1272 = vld [vmem:[#allocation7 + $0x1f8] sm:$0xff]
    %v1273 = vld [vmem:[%s4] sm:$0xf]
    %v1275 = vlaneseq
    %v1276 = vshrl.u32 %v1275, 7
    %v1277 = vsub.s32 0, %v1276
    %v1278 = vrot.slane %v1273, %v1277
    %v1279 = vlaneseq
    %v1280 = vshrl.u32 %v1279, 7
    %v1281 = vsub.s32 1, %v1280
    %v1282 = vrot.slane %v1273, %v1281
    %v1283 = vlaneseq
    %v1284 = vshrl.u32 %v1283, 7
    %v1285 = vsub.s32 2, %v1284
    %v1286 = vrot.slane %v1273, %v1285
    %v1287 = vlaneseq
    %v1288 = vshrl.u32 %v1287, 7
    %v1289 = vsub.s32 3, %v1288
    %v1290 = vrot.slane %v1273, %v1289
    %v1359 = vunpack.c.l.b16 %v1209
    %v1360 = vunpack.c.h.b16 %v1209
    %v1361 = vunpack.c.l.b16 %v1210
    %v1362 = vunpack.c.h.b16 %v1210
    %v1363 = vunpack.c.l.b16 %v1211
    %v1364 = vunpack.c.h.b16 %v1211
    %v1365 = vunpack.c.l.b16 %v1212
    %v1366 = vunpack.c.h.b16 %v1212
    %v1367 = vunpack.c.l.b16 %v1213
    %v1368 = vunpack.c.h.b16 %v1213
    %v1369 = vunpack.c.l.b16 %v1214
    %v1370 = vunpack.c.h.b16 %v1214
    %v1371 = vunpack.c.l.b16 %v1215
    %v1372 = vunpack.c.h.b16 %v1215
    %v1373 = vunpack.c.l.b16 %v1216
    %v1374 = vunpack.c.h.b16 %v1216
    %v1375 = vunpack.c.l.b16 %v1217
    %v1376 = vunpack.c.h.b16 %v1217
    %v1377 = vunpack.c.l.b16 %v1218
    %v1378 = vunpack.c.h.b16 %v1218
    %v1379 = vunpack.c.l.b16 %v1219
    %v1380 = vunpack.c.h.b16 %v1219
    %v1381 = vunpack.c.l.b16 %v1220
    %v1382 = vunpack.c.h.b16 %v1220
    %v1383 = vunpack.c.l.b16 %v1221
    %v1384 = vunpack.c.h.b16 %v1221
    %v1385 = vunpack.c.l.b16 %v1222
    %v1386 = vunpack.c.h.b16 %v1222
    %v1387 = vunpack.c.l.b16 %v1223
    %v1388 = vunpack.c.h.b16 %v1223
    %v1389 = vunpack.c.l.b16 %v1224
    %v1390 = vunpack.c.h.b16 %v1224
    %v1391 = vunpack.c.l.b16 %v1225
    %v1392 = vunpack.c.h.b16 %v1225
    %v1393 = vunpack.c.l.b16 %v1226
    %v1394 = vunpack.c.h.b16 %v1226
    %v1395 = vunpack.c.l.b16 %v1227
    %v1396 = vunpack.c.h.b16 %v1227
    %v1397 = vunpack.c.l.b16 %v1228
    %v1398 = vunpack.c.h.b16 %v1228
    %v1399 = vunpack.c.l.b16 %v1229
    %v1400 = vunpack.c.h.b16 %v1229
    %v1401 = vunpack.c.l.b16 %v1230
    %v1402 = vunpack.c.h.b16 %v1230
    %v1403 = vunpack.c.l.b16 %v1231
    %v1404 = vunpack.c.h.b16 %v1231
    %v1405 = vunpack.c.l.b16 %v1232
    %v1406 = vunpack.c.h.b16 %v1232
    %v1407 = vunpack.c.l.b16 %v1233
    %v1408 = vunpack.c.h.b16 %v1233
    %v1409 = vunpack.c.l.b16 %v1234
    %v1410 = vunpack.c.h.b16 %v1234
    %v1411 = vunpack.c.l.b16 %v1235
    %v1412 = vunpack.c.h.b16 %v1235
    %v1413 = vunpack.c.l.b16 %v1236
    %v1414 = vunpack.c.h.b16 %v1236
    %v1415 = vunpack.c.l.b16 %v1237
    %v1416 = vunpack.c.h.b16 %v1237
    %v1417 = vunpack.c.l.b16 %v1238
    %v1418 = vunpack.c.h.b16 %v1238
    %v1419 = vunpack.c.l.b16 %v1239
    %v1420 = vunpack.c.h.b16 %v1239
    %v1421 = vunpack.c.l.b16 %v1240
    %v1422 = vunpack.c.h.b16 %v1240
    %v1423 = vunpack.c.l.b16 %v1241
    %v1424 = vunpack.c.h.b16 %v1241
    %v1425 = vunpack.c.l.b16 %v1242
    %v1426 = vunpack.c.h.b16 %v1242
    %v1427 = vunpack.c.l.b16 %v1243
    %v1428 = vunpack.c.h.b16 %v1243
    %v1429 = vunpack.c.l.b16 %v1244
    %v1430 = vunpack.c.h.b16 %v1244
    %v1431 = vunpack.c.l.b16 %v1245
    %v1432 = vunpack.c.h.b16 %v1245
    %v1433 = vunpack.c.l.b16 %v1246
    %v1434 = vunpack.c.h.b16 %v1246
    %v1435 = vunpack.c.l.b16 %v1247
    %v1436 = vunpack.c.h.b16 %v1247
    %v1437 = vunpack.c.l.b16 %v1248
    %v1438 = vunpack.c.h.b16 %v1248
    %v1439 = vunpack.c.l.b16 %v1249
    %v1440 = vunpack.c.h.b16 %v1249
    %v1441 = vunpack.c.l.b16 %v1250
    %v1442 = vunpack.c.h.b16 %v1250
    %v1443 = vunpack.c.l.b16 %v1251
    %v1444 = vunpack.c.h.b16 %v1251
    %v1445 = vunpack.c.l.b16 %v1252
    %v1446 = vunpack.c.h.b16 %v1252
    %v1447 = vunpack.c.l.b16 %v1253
    %v1448 = vunpack.c.h.b16 %v1253
    %v1449 = vunpack.c.l.b16 %v1254
    %v1450 = vunpack.c.h.b16 %v1254
    %v1451 = vunpack.c.l.b16 %v1255
    %v1452 = vunpack.c.h.b16 %v1255
    %v1453 = vunpack.c.l.b16 %v1256
    %v1454 = vunpack.c.h.b16 %v1256
    %v1455 = vunpack.c.l.b16 %v1257
    %v1456 = vunpack.c.h.b16 %v1257
    %v1457 = vunpack.c.l.b16 %v1258
    %v1458 = vunpack.c.h.b16 %v1258
    %v1459 = vunpack.c.l.b16 %v1259
    %v1460 = vunpack.c.h.b16 %v1259
    %v1461 = vunpack.c.l.b16 %v1260
    %v1462 = vunpack.c.h.b16 %v1260
    %v1463 = vunpack.c.l.b16 %v1261
    %v1464 = vunpack.c.h.b16 %v1261
    %v1465 = vunpack.c.l.b16 %v1262
    %v1466 = vunpack.c.h.b16 %v1262
    %v1467 = vunpack.c.l.b16 %v1263
    %v1468 = vunpack.c.h.b16 %v1263
    %v1469 = vunpack.c.l.b16 %v1264
    %v1470 = vunpack.c.h.b16 %v1264
    %v1471 = vunpack.c.l.b16 %v1265
    %v1472 = vunpack.c.h.b16 %v1265
    %v1473 = vunpack.c.l.b16 %v1266
    %v1474 = vunpack.c.h.b16 %v1266
    %v1475 = vunpack.c.l.b16 %v1267
    %v1476 = vunpack.c.h.b16 %v1267
    %v1477 = vunpack.c.l.b16 %v1268
    %v1478 = vunpack.c.h.b16 %v1268
    %v1479 = vunpack.c.l.b16 %v1269
    %v1480 = vunpack.c.h.b16 %v1269
    %v1481 = vunpack.c.l.b16 %v1270
    %v1482 = vunpack.c.h.b16 %v1270
    %v1483 = vunpack.c.l.b16 %v1271
    %v1484 = vunpack.c.h.b16 %v1271
    %v1485 = vunpack.c.l.b16 %v1272
    %v1486 = vunpack.c.h.b16 %v1272
    %v1487 = vpack.c.b16 %v1363, %v1359
    %v1488 = vpack.c.b16 %v1364, %v1360
    %v1489 = vpack.c.b16 %v1365, %v1361
    %v1490 = vpack.c.b16 %v1366, %v1362
    %v1491 = vpack.c.b16 %v1371, %v1367
    %v1492 = vpack.c.b16 %v1372, %v1368
    %v1493 = vpack.c.b16 %v1373, %v1369
    %v1494 = vpack.c.b16 %v1374, %v1370
    %v1495 = vpack.c.b16 %v1379, %v1375
    %v1496 = vpack.c.b16 %v1380, %v1376
    %v1497 = vpack.c.b16 %v1381, %v1377
    %v1498 = vpack.c.b16 %v1382, %v1378
    %v1499 = vpack.c.b16 %v1387, %v1383
    %v1500 = vpack.c.b16 %v1388, %v1384
    %v1501 = vpack.c.b16 %v1389, %v1385
    %v1502 = vpack.c.b16 %v1390, %v1386
    %v1503 = vpack.c.b16 %v1395, %v1391
    %v1504 = vpack.c.b16 %v1396, %v1392
    %v1505 = vpack.c.b16 %v1397, %v1393
    %v1506 = vpack.c.b16 %v1398, %v1394
    %v1507 = vpack.c.b16 %v1403, %v1399
    %v1508 = vpack.c.b16 %v1404, %v1400
    %v1509 = vpack.c.b16 %v1405, %v1401
    %v1510 = vpack.c.b16 %v1406, %v1402
    %v1511 = vpack.c.b16 %v1411, %v1407
    %v1512 = vpack.c.b16 %v1412, %v1408
    %v1513 = vpack.c.b16 %v1413, %v1409
    %v1514 = vpack.c.b16 %v1414, %v1410
    %v1515 = vpack.c.b16 %v1419, %v1415
    %v1516 = vpack.c.b16 %v1420, %v1416
    %v1517 = vpack.c.b16 %v1421, %v1417
    %v1518 = vpack.c.b16 %v1422, %v1418
    %v1519 = vpack.c.b16 %v1427, %v1423
    %v1520 = vpack.c.b16 %v1428, %v1424
    %v1521 = vpack.c.b16 %v1429, %v1425
    %v1522 = vpack.c.b16 %v1430, %v1426
    %v1523 = vpack.c.b16 %v1435, %v1431
    %v1524 = vpack.c.b16 %v1436, %v1432
    %v1525 = vpack.c.b16 %v1437, %v1433
    %v1526 = vpack.c.b16 %v1438, %v1434
    %v1527 = vpack.c.b16 %v1443, %v1439
    %v1528 = vpack.c.b16 %v1444, %v1440
    %v1529 = vpack.c.b16 %v1445, %v1441
    %v1530 = vpack.c.b16 %v1446, %v1442
    %v1531 = vpack.c.b16 %v1451, %v1447
    %v1532 = vpack.c.b16 %v1452, %v1448
    %v1533 = vpack.c.b16 %v1453, %v1449
    %v1534 = vpack.c.b16 %v1454, %v1450
    %v1535 = vpack.c.b16 %v1459, %v1455
    %v1536 = vpack.c.b16 %v1460, %v1456
    %v1537 = vpack.c.b16 %v1461, %v1457
    %v1538 = vpack.c.b16 %v1462, %v1458
    %v1539 = vpack.c.b16 %v1467, %v1463
    %v1540 = vpack.c.b16 %v1468, %v1464
    %v1541 = vpack.c.b16 %v1469, %v1465
    %v1542 = vpack.c.b16 %v1470, %v1466
    %v1543 = vpack.c.b16 %v1475, %v1471
    %v1544 = vpack.c.b16 %v1476, %v1472
    %v1545 = vpack.c.b16 %v1477, %v1473
    %v1546 = vpack.c.b16 %v1478, %v1474
    %v1547 = vpack.c.b16 %v1483, %v1479
    %v1548 = vpack.c.b16 %v1484, %v1480
    %v1549 = vpack.c.b16 %v1485, %v1481
    %v1550 = vpack.c.b16 %v1486, %v1482
    %1615 = vmatprep.subr.bf16.mxu0 %v1516
    %1616 = vmatpush1.bf16.msra.mxu0 %v1515
    %1617 = vmatprep.subr.bf16.mxu0 %v1512
    %1618 = vmatpush1.bf16.msra.mxu0 %v1511
    %1619 = vmatprep.subr.bf16.mxu0 %v1508
    %1620 = vmatpush1.bf16.msra.mxu0 %v1507
    %1621 = vmatprep.subr.bf16.mxu0 %v1504
    %1622 = vmatpush1.bf16.msra.mxu0 %v1503
    %1623 = vmatprep.subr.bf16.mxu0 %v1500
    %1624 = vmatpush1.bf16.msra.mxu0 %v1499
    %1625 = vmatprep.subr.bf16.mxu0 %v1496
    %1626 = vmatpush1.bf16.msra.mxu0 %v1495
    %1627 = vmatprep.subr.bf16.mxu0 %v1492
    %1628 = vmatpush1.bf16.msra.mxu0 %v1491
    %1629 = vmatprep.subr.bf16.mxu0 %v1488
    %1630 = vmatpush1.bf16.msra.mxu0 %v1487
    %1631 = vmatprep.subr.bf16.mxu0 %v1548
    %1632 = vmatpush2.bf16.msra.mxu0 %v1547
    %1633 = vmatprep.subr.bf16.mxu0 %v1544
    %1634 = vmatpush2.bf16.msra.mxu0 %v1543
    %1635 = vmatprep.subr.bf16.mxu0 %v1540
    %1636 = vmatpush2.bf16.msra.mxu0 %v1539
    %1637 = vmatprep.subr.bf16.mxu0 %v1536
    %1638 = vmatpush2.bf16.msra.mxu0 %v1535
    %1639 = vmatprep.subr.bf16.mxu0 %v1532
    %1640 = vmatpush2.bf16.msra.mxu0 %v1531
    %1641 = vmatprep.subr.bf16.mxu0 %v1528
    %1642 = vmatpush2.bf16.msra.mxu0 %v1527
    %1643 = vmatprep.subr.bf16.mxu0 %v1524
    %1644 = vmatpush2.bf16.msra.mxu0 %v1523
    %1645 = vmatprep.subr.bf16.mxu0 %v1520
    %1646 = vmatpush2.bf16.msra.mxu0 %v1519
    %1647 = vmatprep.mubr.bf16.mxu0 %v1162
    %1648 = vmatmul.mubr.bf16.gmra.mxu0 %v1161
    %v1649 = vpop.f32.mrf.mxu0
    %v1650 = vadd.f32 %v1278, %v1649
    %v1651 = vpop.f32.mrf.mxu0
    %v1652 = vadd.f32 %v1282, %v1651
    %v1653 = vpop.f32.mrf.mxu0
    %v1654 = vadd.f32 %v1278, %v1653
    %v1655 = vpop.f32.mrf.mxu0
    %v1656 = vadd.f32 %v1282, %v1655
    %1657 = vmatprep.mubr.bf16.mxu0 %v1164
    %1658 = vmatmul.mubr.bf16.gmra.mxu0 %v1163
    %v1659 = vpop.f32.mrf.mxu0
    %v1660 = vadd.f32 %v1278, %v1659
    %v1661 = vpop.f32.mrf.mxu0
    %v1662 = vadd.f32 %v1282, %v1661
    %v1663 = vpop.f32.mrf.mxu0
    %v1664 = vadd.f32 %v1278, %v1663
    %v1665 = vpop.f32.mrf.mxu0
    %v1666 = vadd.f32 %v1282, %v1665
    %1667 = vmatprep.mubr.bf16.mxu0 %v1166
    %1668 = vmatmul.mubr.bf16.gmra.mxu0 %v1165
    %v1669 = vpop.f32.mrf.mxu0
    %v1670 = vadd.f32 %v1278, %v1669
    %v1671 = vpop.f32.mrf.mxu0
    %v1672 = vadd.f32 %v1282, %v1671
    %v1673 = vpop.f32.mrf.mxu0
    %v1674 = vadd.f32 %v1278, %v1673
    %v1675 = vpop.f32.mrf.mxu0
    %v1676 = vadd.f32 %v1282, %v1675
    %1677 = vmatprep.mubr.bf16.mxu0 %v1168
    %1678 = vmatmul.mubr.bf16.gmra.mxu0 %v1167
    %v1679 = vpop.f32.mrf.mxu0
    %v1680 = vadd.f32 %v1278, %v1679
    %v1681 = vpop.f32.mrf.mxu0
    %v1682 = vadd.f32 %v1282, %v1681
    %v1683 = vpop.f32.mrf.mxu0
    %v1684 = vadd.f32 %v1278, %v1683
    %v1685 = vpop.f32.mrf.mxu0
    %v1686 = vadd.f32 %v1282, %v1685
    %1687 = vmatprep.mubr.bf16.mxu0 %v1170
    %1688 = vmatmul.mubr.bf16.gmra.mxu0 %v1169
    %v1689 = vpop.f32.mrf.mxu0
    %v1690 = vadd.f32 %v1278, %v1689
    %v1691 = vpop.f32.mrf.mxu0
    %v1692 = vadd.f32 %v1282, %v1691
    %v1693 = vpop.f32.mrf.mxu0
    %v1694 = vadd.f32 %v1278, %v1693
    %v1695 = vpop.f32.mrf.mxu0
    %v1696 = vadd.f32 %v1282, %v1695
    %1697 = vmatprep.mubr.bf16.mxu0 %v1172
    %1698 = vmatmul.mubr.bf16.gmra.mxu0 %v1171
    %v1699 = vpop.f32.mrf.mxu0
    %v1700 = vadd.f32 %v1278, %v1699
    %v1701 = vpop.f32.mrf.mxu0
    %v1702 = vadd.f32 %v1282, %v1701
    %v1703 = vpop.f32.mrf.mxu0
    %v1704 = vadd.f32 %v1278, %v1703
    %v1705 = vpop.f32.mrf.mxu0
    %v1706 = vadd.f32 %v1282, %v1705
    %1707 = vmatprep.mubr.bf16.mxu0 %v1174
    %1708 = vmatmul.mubr.bf16.gmra.mxu0 %v1173
    %v1709 = vpop.f32.mrf.mxu0
    %v1710 = vadd.f32 %v1278, %v1709
    %v1711 = vpop.f32.mrf.mxu0
    %v1712 = vadd.f32 %v1282, %v1711
    %v1713 = vpop.f32.mrf.mxu0
    %v1714 = vadd.f32 %v1278, %v1713
    %v1715 = vpop.f32.mrf.mxu0
    %v1716 = vadd.f32 %v1282, %v1715
    %1717 = vmatprep.mubr.bf16.mxu0 %v1176
    %1718 = vmatmul.mubr.bf16.gmra.mxu0 %v1175
    %v1719 = vpop.f32.mrf.mxu0
    %v1720 = vadd.f32 %v1278, %v1719
    %v1721 = vpop.f32.mrf.mxu0
    %v1722 = vadd.f32 %v1282, %v1721
    %v1723 = vpop.f32.mrf.mxu0
    %v1724 = vadd.f32 %v1278, %v1723
    %v1725 = vpop.f32.mrf.mxu0
    %v1726 = vadd.f32 %v1282, %v1725
    %1727 = vmatprep.mubr.bf16.mxu0 %v1178
    %1728 = vmatmul.mubr.bf16.gmra.mxu0 %v1177
    %v1729 = vpop.f32.mrf.mxu0
    %v1730 = vadd.f32 %v1278, %v1729
    %v1731 = vpop.f32.mrf.mxu0
    %v1732 = vadd.f32 %v1282, %v1731
    %v1733 = vpop.f32.mrf.mxu0
    %v1734 = vadd.f32 %v1278, %v1733
    %v1735 = vpop.f32.mrf.mxu0
    %v1736 = vadd.f32 %v1282, %v1735
    %1737 = vmatprep.mubr.bf16.mxu0 %v1180
    %1738 = vmatmul.mubr.bf16.gmra.mxu0 %v1179
    %v1739 = vpop.f32.mrf.mxu0
    %v1740 = vadd.f32 %v1278, %v1739
    %v1741 = vpop.f32.mrf.mxu0
    %v1742 = vadd.f32 %v1282, %v1741
    %v1743 = vpop.f32.mrf.mxu0
    %v1744 = vadd.f32 %v1278, %v1743
    %v1745 = vpop.f32.mrf.mxu0
    %v1746 = vadd.f32 %v1282, %v1745
    %1747 = vmatprep.mubr.bf16.mxu0 %v1182
    %1748 = vmatmul.mubr.bf16.gmra.mxu0 %v1181
    %v1749 = vpop.f32.mrf.mxu0
    %v1750 = vadd.f32 %v1278, %v1749
    %v1751 = vpop.f32.mrf.mxu0
    %v1752 = vadd.f32 %v1282, %v1751
    %v1753 = vpop.f32.mrf.mxu0
    %v1754 = vadd.f32 %v1278, %v1753
    %v1755 = vpop.f32.mrf.mxu0
    %v1756 = vadd.f32 %v1282, %v1755
    %1757 = vmatprep.mubr.bf16.mxu0 %v1184
    %1758 = vmatmul.mubr.bf16.gmra.mxu0 %v1183
    %v1759 = vpop.f32.mrf.mxu0
    %v1760 = vadd.f32 %v1278, %v1759
    %v1761 = vpop.f32.mrf.mxu0
    %v1762 = vadd.f32 %v1282, %v1761
    %v1763 = vpop.f32.mrf.mxu0
    %v1764 = vadd.f32 %v1278, %v1763
    %v1765 = vpop.f32.mrf.mxu0
    %v1766 = vadd.f32 %v1282, %v1765
    %1767 = vmatprep.mubr.bf16.mxu0 %v1186
    %1768 = vmatmul.mubr.bf16.gmra.mxu0 %v1185
    %v1769 = vpop.f32.mrf.mxu0
    %v1770 = vadd.f32 %v1278, %v1769
    %v1771 = vpop.f32.mrf.mxu0
    %v1772 = vadd.f32 %v1282, %v1771
    %v1773 = vpop.f32.mrf.mxu0
    %v1774 = vadd.f32 %v1278, %v1773
    %v1775 = vpop.f32.mrf.mxu0
    %v1776 = vadd.f32 %v1282, %v1775
    %1777 = vmatprep.mubr.bf16.mxu0 %v1188
    %1778 = vmatmul.mubr.bf16.gmra.mxu0 %v1187
    %v1779 = vpop.f32.mrf.mxu0
    %v1780 = vadd.f32 %v1278, %v1779
    %v1781 = vpop.f32.mrf.mxu0
    %v1782 = vadd.f32 %v1282, %v1781
    %v1783 = vpop.f32.mrf.mxu0
    %v1784 = vadd.f32 %v1278, %v1783
    %v1785 = vpop.f32.mrf.mxu0
    %v1786 = vadd.f32 %v1282, %v1785
    %1787 = vmatprep.mubr.bf16.mxu0 %v1190
    %1788 = vmatmul.mubr.bf16.gmra.mxu0 %v1189
    %v1789 = vpop.f32.mrf.mxu0
    %v1790 = vadd.f32 %v1278, %v1789
    %v1791 = vpop.f32.mrf.mxu0
    %v1792 = vadd.f32 %v1282, %v1791
    %v1793 = vpop.f32.mrf.mxu0
    %v1794 = vadd.f32 %v1278, %v1793
    %v1795 = vpop.f32.mrf.mxu0
    %v1796 = vadd.f32 %v1282, %v1795
    %1797 = vmatprep.mubr.bf16.mxu0 %v1192
    %1798 = vmatmul.mubr.bf16.gmra.mxu0 %v1191
    %v1799 = vpop.f32.mrf.mxu0
    %v1800 = vadd.f32 %v1278, %v1799
    %v1801 = vpop.f32.mrf.mxu0
    %v1802 = vadd.f32 %v1282, %v1801
    %v1803 = vpop.f32.mrf.mxu0
    %v1804 = vadd.f32 %v1278, %v1803
    %v1805 = vpop.f32.mrf.mxu0
    %v1806 = vadd.f32 %v1282, %v1805
    %1807 = vmatprep.mubr.bf16.mxu0 %v1194
    %1808 = vmatmul.mubr.bf16.gmra.mxu0 %v1193
    %v1809 = vpop.f32.mrf.mxu0
    %v1810 = vadd.f32 %v1278, %v1809
    %v1811 = vpop.f32.mrf.mxu0
    %v1812 = vadd.f32 %v1282, %v1811
    %v1813 = vpop.f32.mrf.mxu0
    %v1814 = vadd.f32 %v1278, %v1813
    %v1815 = vpop.f32.mrf.mxu0
    %v1816 = vadd.f32 %v1282, %v1815
    %1817 = vmatprep.mubr.bf16.mxu0 %v1196
    %1818 = vmatmul.mubr.bf16.gmra.mxu0 %v1195
    %v1819 = vpop.f32.mrf.mxu0
    %v1820 = vadd.f32 %v1278, %v1819
    %v1821 = vpop.f32.mrf.mxu0
    %v1822 = vadd.f32 %v1282, %v1821
    %v1823 = vpop.f32.mrf.mxu0
    %v1824 = vadd.f32 %v1278, %v1823
    %v1825 = vpop.f32.mrf.mxu0
    %v1826 = vadd.f32 %v1282, %v1825
    %1827 = vmatprep.mubr.bf16.mxu0 %v1198
    %1828 = vmatmul.mubr.bf16.gmra.mxu0 %v1197
    %v1829 = vpop.f32.mrf.mxu0
    %v1830 = vadd.f32 %v1278, %v1829
    %v1831 = vpop.f32.mrf.mxu0
    %v1832 = vadd.f32 %v1282, %v1831
    %v1833 = vpop.f32.mrf.mxu0
    %v1834 = vadd.f32 %v1278, %v1833
    %v1835 = vpop.f32.mrf.mxu0
    %v1836 = vadd.f32 %v1282, %v1835
    %1837 = vmatprep.mubr.bf16.mxu0 %v1200
    %1838 = vmatmul.mubr.bf16.gmra.mxu0 %v1199
    %v1839 = vpop.f32.mrf.mxu0
    %v1840 = vadd.f32 %v1278, %v1839
    %v1841 = vpop.f32.mrf.mxu0
    %v1842 = vadd.f32 %v1282, %v1841
    %v1843 = vpop.f32.mrf.mxu0
    %v1844 = vadd.f32 %v1278, %v1843
    %v1845 = vpop.f32.mrf.mxu0
    %v1846 = vadd.f32 %v1282, %v1845
    %1847 = vmatprep.mubr.bf16.mxu0 %v1202
    %1848 = vmatmul.mubr.bf16.gmra.mxu0 %v1201
    %v1849 = vpop.f32.mrf.mxu0
    %v1850 = vadd.f32 %v1278, %v1849
    %v1851 = vpop.f32.mrf.mxu0
    %v1852 = vadd.f32 %v1282, %v1851
    %v1853 = vpop.f32.mrf.mxu0
    %v1854 = vadd.f32 %v1278, %v1853
    %v1855 = vpop.f32.mrf.mxu0
    %v1856 = vadd.f32 %v1282, %v1855
    %1857 = vmatprep.mubr.bf16.mxu0 %v1204
    %1858 = vmatmul.mubr.bf16.gmra.mxu0 %v1203
    %v1859 = vpop.f32.mrf.mxu0
    %v1860 = vadd.f32 %v1278, %v1859
    %v1861 = vpop.f32.mrf.mxu0
    %v1862 = vadd.f32 %v1282, %v1861
    %v1863 = vpop.f32.mrf.mxu0
    %v1864 = vadd.f32 %v1278, %v1863
    %v1865 = vpop.f32.mrf.mxu0
    %v1866 = vadd.f32 %v1282, %v1865
    %1867 = vmatprep.mubr.bf16.mxu0 %v1206
    %1868 = vmatmul.mubr.bf16.gmra.mxu0 %v1205
    %v1869 = vpop.f32.mrf.mxu0
    %v1870 = vadd.f32 %v1278, %v1869
    %v1871 = vpop.f32.mrf.mxu0
    %v1872 = vadd.f32 %v1282, %v1871
    %v1873 = vpop.f32.mrf.mxu0
    %v1874 = vadd.f32 %v1278, %v1873
    %v1875 = vpop.f32.mrf.mxu0
    %v1876 = vadd.f32 %v1282, %v1875
    %1877 = vmatprep.mubr.bf16.mxu0 %v1208
    %1878 = vmatmul.mubr.bf16.gmra.mxu0 %v1207
    %v1879 = vpop.f32.mrf.mxu0
    %v1880 = vadd.f32 %v1278, %v1879
    %v1881 = vpop.f32.mrf.mxu0
    %v1882 = vadd.f32 %v1282, %v1881
    %v1883 = vpop.f32.mrf.mxu0
    %v1884 = vadd.f32 %v1278, %v1883
    %v1885 = vpop.f32.mrf.mxu0
    %v1886 = vadd.f32 %v1282, %v1885
    %1887 = vdwg.mxu0
    %1888 = vmatprep.subr.bf16.mxu0 %v1518
    %1889 = vmatpush1.bf16.msra.mxu0 %v1517
    %1890 = vmatprep.subr.bf16.mxu0 %v1514
    %1891 = vmatpush1.bf16.msra.mxu0 %v1513
    %1892 = vmatprep.subr.bf16.mxu0 %v1510
    %1893 = vmatpush1.bf16.msra.mxu0 %v1509
    %1894 = vmatprep.subr.bf16.mxu0 %v1506
    %1895 = vmatpush1.bf16.msra.mxu0 %v1505
    %1896 = vmatprep.subr.bf16.mxu0 %v1502
    %1897 = vmatpush1.bf16.msra.mxu0 %v1501
    %1898 = vmatprep.subr.bf16.mxu0 %v1498
    %1899 = vmatpush1.bf16.msra.mxu0 %v1497
    %1900 = vmatprep.subr.bf16.mxu0 %v1494
    %1901 = vmatpush1.bf16.msra.mxu0 %v1493
    %1902 = vmatprep.subr.bf16.mxu0 %v1490
    %1903 = vmatpush1.bf16.msra.mxu0 %v1489
    %1904 = vmatprep.subr.bf16.mxu0 %v1550
    %1905 = vmatpush2.bf16.msra.mxu0 %v1549
    %1906 = vmatprep.subr.bf16.mxu0 %v1546
    %1907 = vmatpush2.bf16.msra.mxu0 %v1545
    %1908 = vmatprep.subr.bf16.mxu0 %v1542
    %1909 = vmatpush2.bf16.msra.mxu0 %v1541
    %1910 = vmatprep.subr.bf16.mxu0 %v1538
    %1911 = vmatpush2.bf16.msra.mxu0 %v1537
    %1912 = vmatprep.subr.bf16.mxu0 %v1534
    %1913 = vmatpush2.bf16.msra.mxu0 %v1533
    %1914 = vmatprep.subr.bf16.mxu0 %v1530
    %1915 = vmatpush2.bf16.msra.mxu0 %v1529
    %1916 = vmatprep.subr.bf16.mxu0 %v1526
    %1917 = vmatpush2.bf16.msra.mxu0 %v1525
    %1918 = vmatprep.subr.bf16.mxu0 %v1522
    %1919 = vmatpush2.bf16.msra.mxu0 %v1521
    %1920 = vmatprep.mubr.bf16.mxu0 %v1162
    %1921 = vmatmul.mubr.bf16.gmra.mxu0 %v1161
    %v1922 = vpop.f32.mrf.mxu0
    %v1923 = vadd.f32 %v1286, %v1922
    %v1924 = vpop.f32.mrf.mxu0
    %v1925 = vadd.f32 %v1290, %v1924
    %v1926 = vpop.f32.mrf.mxu0
    %v1927 = vadd.f32 %v1286, %v1926
    %v1928 = vpop.f32.mrf.mxu0
    %v1929 = vadd.f32 %v1290, %v1928
    %1930 = vmatprep.mubr.bf16.mxu0 %v1164
    %1931 = vmatmul.mubr.bf16.gmra.mxu0 %v1163
    %v1932 = vpop.f32.mrf.mxu0
    %v1933 = vadd.f32 %v1286, %v1932
    %v1934 = vpop.f32.mrf.mxu0
    %v1935 = vadd.f32 %v1290, %v1934
    %v1936 = vpop.f32.mrf.mxu0
    %v1937 = vadd.f32 %v1286, %v1936
    %v1938 = vpop.f32.mrf.mxu0
    %v1939 = vadd.f32 %v1290, %v1938
    %1940 = vmatprep.mubr.bf16.mxu0 %v1166
    %1941 = vmatmul.mubr.bf16.gmra.mxu0 %v1165
    %v1942 = vpop.f32.mrf.mxu0
    %v1943 = vadd.f32 %v1286, %v1942
    %v1944 = vpop.f32.mrf.mxu0
    %v1945 = vadd.f32 %v1290, %v1944
    %v1946 = vpop.f32.mrf.mxu0
    %v1947 = vadd.f32 %v1286, %v1946
    %v1948 = vpop.f32.mrf.mxu0
    %v1949 = vadd.f32 %v1290, %v1948
    %1950 = vmatprep.mubr.bf16.mxu0 %v1168
    %1951 = vmatmul.mubr.bf16.gmra.mxu0 %v1167
    %v1952 = vpop.f32.mrf.mxu0
    %v1953 = vadd.f32 %v1286, %v1952
    %v1954 = vpop.f32.mrf.mxu0
    %v1955 = vadd.f32 %v1290, %v1954
    %v1956 = vpop.f32.mrf.mxu0
    %v1957 = vadd.f32 %v1286, %v1956
    %v1958 = vpop.f32.mrf.mxu0
    %v1959 = vadd.f32 %v1290, %v1958
    %1960 = vmatprep.mubr.bf16.mxu0 %v1170
    %1961 = vmatmul.mubr.bf16.gmra.mxu0 %v1169
    %v1962 = vpop.f32.mrf.mxu0
    %v1963 = vadd.f32 %v1286, %v1962
    %v1964 = vpop.f32.mrf.mxu0
    %v1965 = vadd.f32 %v1290, %v1964
    %v1966 = vpop.f32.mrf.mxu0
    %v1967 = vadd.f32 %v1286, %v1966
    %v1968 = vpop.f32.mrf.mxu0
    %v1969 = vadd.f32 %v1290, %v1968
    %1970 = vmatprep.mubr.bf16.mxu0 %v1172
    %1971 = vmatmul.mubr.bf16.gmra.mxu0 %v1171
    %v1972 = vpop.f32.mrf.mxu0
    %v1973 = vadd.f32 %v1286, %v1972
    %v1974 = vpop.f32.mrf.mxu0
    %v1975 = vadd.f32 %v1290, %v1974
    %v1976 = vpop.f32.mrf.mxu0
    %v1977 = vadd.f32 %v1286, %v1976
    %v1978 = vpop.f32.mrf.mxu0
    %v1979 = vadd.f32 %v1290, %v1978
    %1980 = vmatprep.mubr.bf16.mxu0 %v1174
    %1981 = vmatmul.mubr.bf16.gmra.mxu0 %v1173
    %v1982 = vpop.f32.mrf.mxu0
    %v1983 = vadd.f32 %v1286, %v1982
    %v1984 = vpop.f32.mrf.mxu0
    %v1985 = vadd.f32 %v1290, %v1984
    %v1986 = vpop.f32.mrf.mxu0
    %v1987 = vadd.f32 %v1286, %v1986
    %v1988 = vpop.f32.mrf.mxu0
    %v1989 = vadd.f32 %v1290, %v1988
    %1990 = vmatprep.mubr.bf16.mxu0 %v1176
    %1991 = vmatmul.mubr.bf16.gmra.mxu0 %v1175
    %v1992 = vpop.f32.mrf.mxu0
    %v1993 = vadd.f32 %v1286, %v1992
    %v1994 = vpop.f32.mrf.mxu0
    %v1995 = vadd.f32 %v1290, %v1994
    %v1996 = vpop.f32.mrf.mxu0
    %v1997 = vadd.f32 %v1286, %v1996
    %v1998 = vpop.f32.mrf.mxu0
    %v1999 = vadd.f32 %v1290, %v1998
    %2000 = vmatprep.mubr.bf16.mxu0 %v1178
    %2001 = vmatmul.mubr.bf16.gmra.mxu0 %v1177
    %v2002 = vpop.f32.mrf.mxu0
    %v2003 = vadd.f32 %v1286, %v2002
    %v2004 = vpop.f32.mrf.mxu0
    %v2005 = vadd.f32 %v1290, %v2004
    %v2006 = vpop.f32.mrf.mxu0
    %v2007 = vadd.f32 %v1286, %v2006
    %v2008 = vpop.f32.mrf.mxu0
    %v2009 = vadd.f32 %v1290, %v2008
    %2010 = vmatprep.mubr.bf16.mxu0 %v1180
    %2011 = vmatmul.mubr.bf16.gmra.mxu0 %v1179
    %v2012 = vpop.f32.mrf.mxu0
    %v2013 = vadd.f32 %v1286, %v2012
    %v2014 = vpop.f32.mrf.mxu0
    %v2015 = vadd.f32 %v1290, %v2014
    %v2016 = vpop.f32.mrf.mxu0
    %v2017 = vadd.f32 %v1286, %v2016
    %v2018 = vpop.f32.mrf.mxu0
    %v2019 = vadd.f32 %v1290, %v2018
    %2020 = vmatprep.mubr.bf16.mxu0 %v1182
    %2021 = vmatmul.mubr.bf16.gmra.mxu0 %v1181
    %v2022 = vpop.f32.mrf.mxu0
    %v2023 = vadd.f32 %v1286, %v2022
    %v2024 = vpop.f32.mrf.mxu0
    %v2025 = vadd.f32 %v1290, %v2024
    %v2026 = vpop.f32.mrf.mxu0
    %v2027 = vadd.f32 %v1286, %v2026
    %v2028 = vpop.f32.mrf.mxu0
    %v2029 = vadd.f32 %v1290, %v2028
    %2030 = vmatprep.mubr.bf16.mxu0 %v1184
    %2031 = vmatmul.mubr.bf16.gmra.mxu0 %v1183
    %v2032 = vpop.f32.mrf.mxu0
    %v2033 = vadd.f32 %v1286, %v2032
    %v2034 = vpop.f32.mrf.mxu0
    %v2035 = vadd.f32 %v1290, %v2034
    %v2036 = vpop.f32.mrf.mxu0
    %v2037 = vadd.f32 %v1286, %v2036
    %v2038 = vpop.f32.mrf.mxu0
    %v2039 = vadd.f32 %v1290, %v2038
    %2040 = vmatprep.mubr.bf16.mxu0 %v1186
    %2041 = vmatmul.mubr.bf16.gmra.mxu0 %v1185
    %v2042 = vpop.f32.mrf.mxu0
    %v2043 = vadd.f32 %v1286, %v2042
    %v2044 = vpop.f32.mrf.mxu0
    %v2045 = vadd.f32 %v1290, %v2044
    %v2046 = vpop.f32.mrf.mxu0
    %v2047 = vadd.f32 %v1286, %v2046
    %v2048 = vpop.f32.mrf.mxu0
    %v2049 = vadd.f32 %v1290, %v2048
    %2050 = vmatprep.mubr.bf16.mxu0 %v1188
    %2051 = vmatmul.mubr.bf16.gmra.mxu0 %v1187
    %v2052 = vpop.f32.mrf.mxu0
    %v2053 = vadd.f32 %v1286, %v2052
    %v2054 = vpop.f32.mrf.mxu0
    %v2055 = vadd.f32 %v1290, %v2054
    %v2056 = vpop.f32.mrf.mxu0
    %v2057 = vadd.f32 %v1286, %v2056
    %v2058 = vpop.f32.mrf.mxu0
    %v2059 = vadd.f32 %v1290, %v2058
    %2060 = vmatprep.mubr.bf16.mxu0 %v1190
    %2061 = vmatmul.mubr.bf16.gmra.mxu0 %v1189
    %v2062 = vpop.f32.mrf.mxu0
    %v2063 = vadd.f32 %v1286, %v2062
    %v2064 = vpop.f32.mrf.mxu0
    %v2065 = vadd.f32 %v1290, %v2064
    %v2066 = vpop.f32.mrf.mxu0
    %v2067 = vadd.f32 %v1286, %v2066
    %v2068 = vpop.f32.mrf.mxu0
    %v2069 = vadd.f32 %v1290, %v2068
    %2070 = vmatprep.mubr.bf16.mxu0 %v1192
    %2071 = vmatmul.mubr.bf16.gmra.mxu0 %v1191
    %v2072 = vpop.f32.mrf.mxu0
    %v2073 = vadd.f32 %v1286, %v2072
    %v2074 = vpop.f32.mrf.mxu0
    %v2075 = vadd.f32 %v1290, %v2074
    %v2076 = vpop.f32.mrf.mxu0
    %v2077 = vadd.f32 %v1286, %v2076
    %v2078 = vpop.f32.mrf.mxu0
    %v2079 = vadd.f32 %v1290, %v2078
    %2080 = vmatprep.mubr.bf16.mxu0 %v1194
    %2081 = vmatmul.mubr.bf16.gmra.mxu0 %v1193
    %v2082 = vpop.f32.mrf.mxu0
    %v2083 = vadd.f32 %v1286, %v2082
    %v2084 = vpop.f32.mrf.mxu0
    %v2085 = vadd.f32 %v1290, %v2084
    %v2086 = vpop.f32.mrf.mxu0
    %v2087 = vadd.f32 %v1286, %v2086
    %v2088 = vpop.f32.mrf.mxu0
    %v2089 = vadd.f32 %v1290, %v2088
    %2090 = vmatprep.mubr.bf16.mxu0 %v1196
    %2091 = vmatmul.mubr.bf16.gmra.mxu0 %v1195
    %v2092 = vpop.f32.mrf.mxu0
    %v2093 = vadd.f32 %v1286, %v2092
    %v2094 = vpop.f32.mrf.mxu0
    %v2095 = vadd.f32 %v1290, %v2094
    %v2096 = vpop.f32.mrf.mxu0
    %v2097 = vadd.f32 %v1286, %v2096
    %v2098 = vpop.f32.mrf.mxu0
    %v2099 = vadd.f32 %v1290, %v2098
    %2100 = vmatprep.mubr.bf16.mxu0 %v1198
    %2101 = vmatmul.mubr.bf16.gmra.mxu0 %v1197
    %v2102 = vpop.f32.mrf.mxu0
    %v2103 = vadd.f32 %v1286, %v2102
    %v2104 = vpop.f32.mrf.mxu0
    %v2105 = vadd.f32 %v1290, %v2104
    %v2106 = vpop.f32.mrf.mxu0
    %v2107 = vadd.f32 %v1286, %v2106
    %v2108 = vpop.f32.mrf.mxu0
    %v2109 = vadd.f32 %v1290, %v2108
    %2110 = vmatprep.mubr.bf16.mxu0 %v1200
    %2111 = vmatmul.mubr.bf16.gmra.mxu0 %v1199
    %v2112 = vpop.f32.mrf.mxu0
    %v2113 = vadd.f32 %v1286, %v2112
    %v2114 = vpop.f32.mrf.mxu0
    %v2115 = vadd.f32 %v1290, %v2114
    %v2116 = vpop.f32.mrf.mxu0
    %v2117 = vadd.f32 %v1286, %v2116
    %v2118 = vpop.f32.mrf.mxu0
    %v2119 = vadd.f32 %v1290, %v2118
    %2120 = vmatprep.mubr.bf16.mxu0 %v1202
    %2121 = vmatmul.mubr.bf16.gmra.mxu0 %v1201
    %v2122 = vpop.f32.mrf.mxu0
    %v2123 = vadd.f32 %v1286, %v2122
    %v2124 = vpop.f32.mrf.mxu0
    %v2125 = vadd.f32 %v1290, %v2124
    %v2126 = vpop.f32.mrf.mxu0
    %v2127 = vadd.f32 %v1286, %v2126
    %v2128 = vpop.f32.mrf.mxu0
    %v2129 = vadd.f32 %v1290, %v2128
    %2130 = vmatprep.mubr.bf16.mxu0 %v1204
    %2131 = vmatmul.mubr.bf16.gmra.mxu0 %v1203
    %v2132 = vpop.f32.mrf.mxu0
    %v2133 = vadd.f32 %v1286, %v2132
    %v2134 = vpop.f32.mrf.mxu0
    %v2135 = vadd.f32 %v1290, %v2134
    %v2136 = vpop.f32.mrf.mxu0
    %v2137 = vadd.f32 %v1286, %v2136
    %v2138 = vpop.f32.mrf.mxu0
    %v2139 = vadd.f32 %v1290, %v2138
    %2140 = vmatprep.mubr.bf16.mxu0 %v1206
    %2141 = vmatmul.mubr.bf16.gmra.mxu0 %v1205
    %v2142 = vpop.f32.mrf.mxu0
    %v2143 = vadd.f32 %v1286, %v2142
    %v2144 = vpop.f32.mrf.mxu0
    %v2145 = vadd.f32 %v1290, %v2144
    %v2146 = vpop.f32.mrf.mxu0
    %v2147 = vadd.f32 %v1286, %v2146
    %v2148 = vpop.f32.mrf.mxu0
    %v2149 = vadd.f32 %v1290, %v2148
    %2150 = vmatprep.mubr.bf16.mxu0 %v1208
    %2151 = vmatmul.mubr.bf16.gmra.mxu0 %v1207
    %v2152 = vpop.f32.mrf.mxu0
    %v2153 = vadd.f32 %v1286, %v2152
    %v2154 = vpop.f32.mrf.mxu0
    %v2155 = vadd.f32 %v1290, %v2154
    %v2156 = vpop.f32.mrf.mxu0
    %v2157 = vadd.f32 %v1286, %v2156
    %v2158 = vpop.f32.mrf.mxu0
    %v2159 = vadd.f32 %v1290, %v2158
    %2160 = vdwg.mxu0
    %v2161 = vmul.f32 %v1650, 0.5
    %v2162 = vmul.f32 %v1652, 0.5
    %v2163 = vmul.f32 %v1923, 0.5
    %v2164 = vmul.f32 %v1925, 0.5
    %v2165 = vmul.f32 %v1654, 0.5
    %v2166 = vmul.f32 %v1656, 0.5
    %v2167 = vmul.f32 %v1927, 0.5
    %v2168 = vmul.f32 %v1929, 0.5
    %v2169 = vmul.f32 %v1660, 0.5
    %v2170 = vmul.f32 %v1662, 0.5
    %v2171 = vmul.f32 %v1933, 0.5
    %v2172 = vmul.f32 %v1935, 0.5
    %v2173 = vmul.f32 %v1664, 0.5
    %v2174 = vmul.f32 %v1666, 0.5
    %v2175 = vmul.f32 %v1937, 0.5
    %v2176 = vmul.f32 %v1939, 0.5
    %v2177 = vmul.f32 %v1670, 0.5
    %v2178 = vmul.f32 %v1672, 0.5
    %v2179 = vmul.f32 %v1943, 0.5
    %v2180 = vmul.f32 %v1945, 0.5
    %v2181 = vmul.f32 %v1674, 0.5
    %v2182 = vmul.f32 %v1676, 0.5
    %v2183 = vmul.f32 %v1947, 0.5
    %v2184 = vmul.f32 %v1949, 0.5
    %v2185 = vmul.f32 %v1680, 0.5
    %v2186 = vmul.f32 %v1682, 0.5
    %v2187 = vmul.f32 %v1953, 0.5
    %v2188 = vmul.f32 %v1955, 0.5
    %v2189 = vmul.f32 %v1684, 0.5
    %v2190 = vmul.f32 %v1686, 0.5
    %v2191 = vmul.f32 %v1957, 0.5
    %v2192 = vmul.f32 %v1959, 0.5
    %v2193 = vmul.f32 %v1690, 0.5
    %v2194 = vmul.f32 %v1692, 0.5
    %v2195 = vmul.f32 %v1963, 0.5
    %v2196 = vmul.f32 %v1965, 0.5
    %v2197 = vmul.f32 %v1694, 0.5
    %v2198 = vmul.f32 %v1696, 0.5
    %v2199 = vmul.f32 %v1967, 0.5
    %v2200 = vmul.f32 %v1969, 0.5
    %v2201 = vmul.f32 %v1700, 0.5
    %v2202 = vmul.f32 %v1702, 0.5
    %v2203 = vmul.f32 %v1973, 0.5
    %v2204 = vmul.f32 %v1975, 0.5
    %v2205 = vmul.f32 %v1704, 0.5
    %v2206 = vmul.f32 %v1706, 0.5
    %v2207 = vmul.f32 %v1977, 0.5
    %v2208 = vmul.f32 %v1979, 0.5
    %v2209 = vmul.f32 %v1710, 0.5
    %v2210 = vmul.f32 %v1712, 0.5
    %v2211 = vmul.f32 %v1983, 0.5
    %v2212 = vmul.f32 %v1985, 0.5
    %v2213 = vmul.f32 %v1714, 0.5
    %v2214 = vmul.f32 %v1716, 0.5
    %v2215 = vmul.f32 %v1987, 0.5
    %v2216 = vmul.f32 %v1989, 0.5
    %v2217 = vmul.f32 %v1720, 0.5
    %v2218 = vmul.f32 %v1722, 0.5
    %v2219 = vmul.f32 %v1993, 0.5
    %v2220 = vmul.f32 %v1995, 0.5
    %v2221 = vmul.f32 %v1724, 0.5
    %v2222 = vmul.f32 %v1726, 0.5
    %v2223 = vmul.f32 %v1997, 0.5
    %v2224 = vmul.f32 %v1999, 0.5
    %v2225 = vmul.f32 %v1730, 0.5
    %v2226 = vmul.f32 %v1732, 0.5
    %v2227 = vmul.f32 %v2003, 0.5
    %v2228 = vmul.f32 %v2005, 0.5
    %v2229 = vmul.f32 %v1734, 0.5
    %v2230 = vmul.f32 %v1736, 0.5
    %v2231 = vmul.f32 %v2007, 0.5
    %v2232 = vmul.f32 %v2009, 0.5
    %v2233 = vmul.f32 %v1740, 0.5
    %v2234 = vmul.f32 %v1742, 0.5
    %v2235 = vmul.f32 %v2013, 0.5
    %v2236 = vmul.f32 %v2015, 0.5
    %v2237 = vmul.f32 %v1744, 0.5
    %v2238 = vmul.f32 %v1746, 0.5
    %v2239 = vmul.f32 %v2017, 0.5
    %v2240 = vmul.f32 %v2019, 0.5
    %v2241 = vmul.f32 %v1750, 0.5
    %v2242 = vmul.f32 %v1752, 0.5
    %v2243 = vmul.f32 %v2023, 0.5
    %v2244 = vmul.f32 %v2025, 0.5
    %v2245 = vmul.f32 %v1754, 0.5
    %v2246 = vmul.f32 %v1756, 0.5
    %v2247 = vmul.f32 %v2027, 0.5
    %v2248 = vmul.f32 %v2029, 0.5
    %v2249 = vmul.f32 %v1760, 0.5
    %v2250 = vmul.f32 %v1762, 0.5
    %v2251 = vmul.f32 %v2033, 0.5
    %v2252 = vmul.f32 %v2035, 0.5
    %v2253 = vmul.f32 %v1764, 0.5
    %v2254 = vmul.f32 %v1766, 0.5
    %v2255 = vmul.f32 %v2037, 0.5
    %v2256 = vmul.f32 %v2039, 0.5
    %v2257 = vmul.f32 %v1770, 0.5
    %v2258 = vmul.f32 %v1772, 0.5
    %v2259 = vmul.f32 %v2043, 0.5
    %v2260 = vmul.f32 %v2045, 0.5
    %v2261 = vmul.f32 %v1774, 0.5
    %v2262 = vmul.f32 %v1776, 0.5
    %v2263 = vmul.f32 %v2047, 0.5
    %v2264 = vmul.f32 %v2049, 0.5
    %v2265 = vmul.f32 %v1780, 0.5
    %v2266 = vmul.f32 %v1782, 0.5
    %v2267 = vmul.f32 %v2053, 0.5
    %v2268 = vmul.f32 %v2055, 0.5
    %v2269 = vmul.f32 %v1784, 0.5
    %v2270 = vmul.f32 %v1786, 0.5
    %v2271 = vmul.f32 %v2057, 0.5
    %v2272 = vmul.f32 %v2059, 0.5
    %v2273 = vmul.f32 %v1790, 0.5
    %v2274 = vmul.f32 %v1792, 0.5
    %v2275 = vmul.f32 %v2063, 0.5
    %v2276 = vmul.f32 %v2065, 0.5
    %v2277 = vmul.f32 %v1794, 0.5
    %v2278 = vmul.f32 %v1796, 0.5
    %v2279 = vmul.f32 %v2067, 0.5
    %v2280 = vmul.f32 %v2069, 0.5
    %v2281 = vmul.f32 %v1800, 0.5
    %v2282 = vmul.f32 %v1802, 0.5
    %v2283 = vmul.f32 %v2073, 0.5
    %v2284 = vmul.f32 %v2075, 0.5
    %v2285 = vmul.f32 %v1804, 0.5
    %v2286 = vmul.f32 %v1806, 0.5
    %v2287 = vmul.f32 %v2077, 0.5
    %v2288 = vmul.f32 %v2079, 0.5
    %v2289 = vmul.f32 %v1810, 0.5
    %v2290 = vmul.f32 %v1812, 0.5
    %v2291 = vmul.f32 %v2083, 0.5
    %v2292 = vmul.f32 %v2085, 0.5
    %v2293 = vmul.f32 %v1814, 0.5
    %v2294 = vmul.f32 %v1816, 0.5
    %v2295 = vmul.f32 %v2087, 0.5
    %v2296 = vmul.f32 %v2089, 0.5
    %v2297 = vmul.f32 %v1820, 0.5
    %v2298 = vmul.f32 %v1822, 0.5
    %v2299 = vmul.f32 %v2093, 0.5
    %v2300 = vmul.f32 %v2095, 0.5
    %v2301 = vmul.f32 %v1824, 0.5
    %v2302 = vmul.f32 %v1826, 0.5
    %v2303 = vmul.f32 %v2097, 0.5
    %v2304 = vmul.f32 %v2099, 0.5
    %v2305 = vmul.f32 %v1830, 0.5
    %v2306 = vmul.f32 %v1832, 0.5
    %v2307 = vmul.f32 %v2103, 0.5
    %v2308 = vmul.f32 %v2105, 0.5
    %v2309 = vmul.f32 %v1834, 0.5
    %v2310 = vmul.f32 %v1836, 0.5
    %v2311 = vmul.f32 %v2107, 0.5
    %v2312 = vmul.f32 %v2109, 0.5
    %v2313 = vmul.f32 %v1840, 0.5
    %v2314 = vmul.f32 %v1842, 0.5
    %v2315 = vmul.f32 %v2113, 0.5
    %v2316 = vmul.f32 %v2115, 0.5
    %v2317 = vmul.f32 %v1844, 0.5
    %v2318 = vmul.f32 %v1846, 0.5
    %v2319 = vmul.f32 %v2117, 0.5
    %v2320 = vmul.f32 %v2119, 0.5
    %v2321 = vmul.f32 %v1850, 0.5
    %v2322 = vmul.f32 %v1852, 0.5
    %v2323 = vmul.f32 %v2123, 0.5
    %v2324 = vmul.f32 %v2125, 0.5
    %v2325 = vmul.f32 %v1854, 0.5
    %v2326 = vmul.f32 %v1856, 0.5
    %v2327 = vmul.f32 %v2127, 0.5
    %v2328 = vmul.f32 %v2129, 0.5
    %v2329 = vmul.f32 %v1860, 0.5
    %v2330 = vmul.f32 %v1862, 0.5
    %v2331 = vmul.f32 %v2133, 0.5
    %v2332 = vmul.f32 %v2135, 0.5
    %v2333 = vmul.f32 %v1864, 0.5
    %v2334 = vmul.f32 %v1866, 0.5
    %v2335 = vmul.f32 %v2137, 0.5
    %v2336 = vmul.f32 %v2139, 0.5
    %v2337 = vmul.f32 %v1870, 0.5
    %v2338 = vmul.f32 %v1872, 0.5
    %v2339 = vmul.f32 %v2143, 0.5
    %v2340 = vmul.f32 %v2145, 0.5
    %v2341 = vmul.f32 %v1874, 0.5
    %v2342 = vmul.f32 %v1876, 0.5
    %v2343 = vmul.f32 %v2147, 0.5
    %v2344 = vmul.f32 %v2149, 0.5
    %v2345 = vmul.f32 %v1880, 0.5
    %v2346 = vmul.f32 %v1882, 0.5
    %v2347 = vmul.f32 %v2153, 0.5
    %v2348 = vmul.f32 %v2155, 0.5
    %v2349 = vmul.f32 %v1884, 0.5
    %v2350 = vmul.f32 %v1886, 0.5
    %v2351 = vmul.f32 %v2157, 0.5
    %v2352 = vmul.f32 %v2159, 0.5
    %v2353 = vrcp.pop 1.4142135
    %v2354 = vmul.f32 %v1650, %v2353
    %v2355 = vmul.f32 %v1652, %v2353
    %v2356 = vmul.f32 %v1923, %v2353
    %v2357 = vmul.f32 %v1925, %v2353
    %v2358 = vmul.f32 %v1654, %v2353
    %v2359 = vmul.f32 %v1656, %v2353
    %v2360 = vmul.f32 %v1927, %v2353
    %v2361 = vmul.f32 %v1929, %v2353
    %v2362 = vmul.f32 %v1660, %v2353
    %v2363 = vmul.f32 %v1662, %v2353
    %v2364 = vmul.f32 %v1933, %v2353
    %v2365 = vmul.f32 %v1935, %v2353
    %v2366 = vmul.f32 %v1664, %v2353
    %v2367 = vmul.f32 %v1666, %v2353
    %v2368 = vmul.f32 %v1937, %v2353
    %v2369 = vmul.f32 %v1939, %v2353
    %v2370 = vmul.f32 %v1670, %v2353
    %v2371 = vmul.f32 %v1672, %v2353
    %v2372 = vmul.f32 %v1943, %v2353
    %v2373 = vmul.f32 %v1945, %v2353
    %v2374 = vmul.f32 %v1674, %v2353
    %v2375 = vmul.f32 %v1676, %v2353
    %v2376 = vmul.f32 %v1947, %v2353
    %v2377 = vmul.f32 %v1949, %v2353
    %v2378 = vmul.f32 %v1680, %v2353
    %v2379 = vmul.f32 %v1682, %v2353
    %v2380 = vmul.f32 %v1953, %v2353
    %v2381 = vmul.f32 %v1955, %v2353
    %v2382 = vmul.f32 %v1684, %v2353
    %v2383 = vmul.f32 %v1686, %v2353
    %v2384 = vmul.f32 %v1957, %v2353
    %v2385 = vmul.f32 %v1959, %v2353
    %v2386 = vmul.f32 %v1690, %v2353
    %v2387 = vmul.f32 %v1692, %v2353
    %v2388 = vmul.f32 %v1963, %v2353
    %v2389 = vmul.f32 %v1965, %v2353
    %v2390 = vmul.f32 %v1694, %v2353
    %v2391 = vmul.f32 %v1696, %v2353
    %v2392 = vmul.f32 %v1967, %v2353
    %v2393 = vmul.f32 %v1969, %v2353
    %v2394 = vmul.f32 %v1700, %v2353
    %v2395 = vmul.f32 %v1702, %v2353
    %v2396 = vmul.f32 %v1973, %v2353
    %v2397 = vmul.f32 %v1975, %v2353
    %v2398 = vmul.f32 %v1704, %v2353
    %v2399 = vmul.f32 %v1706, %v2353
    %v2400 = vmul.f32 %v1977, %v2353
    %v2401 = vmul.f32 %v1979, %v2353
    %v2402 = vmul.f32 %v1710, %v2353
    %v2403 = vmul.f32 %v1712, %v2353
    %v2404 = vmul.f32 %v1983, %v2353
    %v2405 = vmul.f32 %v1985, %v2353
    %v2406 = vmul.f32 %v1714, %v2353
    %v2407 = vmul.f32 %v1716, %v2353
    %v2408 = vmul.f32 %v1987, %v2353
    %v2409 = vmul.f32 %v1989, %v2353
    %v2410 = vmul.f32 %v1720, %v2353
    %v2411 = vmul.f32 %v1722, %v2353
    %v2412 = vmul.f32 %v1993, %v2353
    %v2413 = vmul.f32 %v1995, %v2353
    %v2414 = vmul.f32 %v1724, %v2353
    %v2415 = vmul.f32 %v1726, %v2353
    %v2416 = vmul.f32 %v1997, %v2353
    %v2417 = vmul.f32 %v1999, %v2353
    %v2418 = vmul.f32 %v1730, %v2353
    %v2419 = vmul.f32 %v1732, %v2353
    %v2420 = vmul.f32 %v2003, %v2353
    %v2421 = vmul.f32 %v2005, %v2353
    %v2422 = vmul.f32 %v1734, %v2353
    %v2423 = vmul.f32 %v1736, %v2353
    %v2424 = vmul.f32 %v2007, %v2353
    %v2425 = vmul.f32 %v2009, %v2353
    %v2426 = vmul.f32 %v1740, %v2353
    %v2427 = vmul.f32 %v1742, %v2353
    %v2428 = vmul.f32 %v2013, %v2353
    %v2429 = vmul.f32 %v2015, %v2353
    %v2430 = vmul.f32 %v1744, %v2353
    %v2431 = vmul.f32 %v1746, %v2353
    %v2432 = vmul.f32 %v2017, %v2353
    %v2433 = vmul.f32 %v2019, %v2353
    %v2434 = vmul.f32 %v1750, %v2353
    %v2435 = vmul.f32 %v1752, %v2353
    %v2436 = vmul.f32 %v2023, %v2353
    %v2437 = vmul.f32 %v2025, %v2353
    %v2438 = vmul.f32 %v1754, %v2353
    %v2439 = vmul.f32 %v1756, %v2353
    %v2440 = vmul.f32 %v2027, %v2353
    %v2441 = vmul.f32 %v2029, %v2353
    %v2442 = vmul.f32 %v1760, %v2353
    %v2443 = vmul.f32 %v1762, %v2353
    %v2444 = vmul.f32 %v2033, %v2353
    %v2445 = vmul.f32 %v2035, %v2353
    %v2446 = vmul.f32 %v1764, %v2353
    %v2447 = vmul.f32 %v1766, %v2353
    %v2448 = vmul.f32 %v2037, %v2353
    %v2449 = vmul.f32 %v2039, %v2353
    %v2450 = vmul.f32 %v1770, %v2353
    %v2451 = vmul.f32 %v1772, %v2353
    %v2452 = vmul.f32 %v2043, %v2353
    %v2453 = vmul.f32 %v2045, %v2353
    %v2454 = vmul.f32 %v1774, %v2353
    %v2455 = vmul.f32 %v1776, %v2353
    %v2456 = vmul.f32 %v2047, %v2353
    %v2457 = vmul.f32 %v2049, %v2353
    %v2458 = vmul.f32 %v1780, %v2353
    %v2459 = vmul.f32 %v1782, %v2353
    %v2460 = vmul.f32 %v2053, %v2353
    %v2461 = vmul.f32 %v2055, %v2353
    %v2462 = vmul.f32 %v1784, %v2353
    %v2463 = vmul.f32 %v1786, %v2353
    %v2464 = vmul.f32 %v2057, %v2353
    %v2465 = vmul.f32 %v2059, %v2353
    %v2466 = vmul.f32 %v1790, %v2353
    %v2467 = vmul.f32 %v1792, %v2353
    %v2468 = vmul.f32 %v2063, %v2353
    %v2469 = vmul.f32 %v2065, %v2353
    %v2470 = vmul.f32 %v1794, %v2353
    %v2471 = vmul.f32 %v1796, %v2353
    %v2472 = vmul.f32 %v2067, %v2353
    %v2473 = vmul.f32 %v2069, %v2353
    %v2474 = vmul.f32 %v1800, %v2353
    %v2475 = vmul.f32 %v1802, %v2353
    %v2476 = vmul.f32 %v2073, %v2353
    %v2477 = vmul.f32 %v2075, %v2353
    %v2478 = vmul.f32 %v1804, %v2353
    %v2479 = vmul.f32 %v1806, %v2353
    %v2480 = vmul.f32 %v2077, %v2353
    %v2481 = vmul.f32 %v2079, %v2353
    %v2482 = vmul.f32 %v1810, %v2353
    %v2483 = vmul.f32 %v1812, %v2353
    %v2484 = vmul.f32 %v2083, %v2353
    %v2485 = vmul.f32 %v2085, %v2353
    %v2486 = vmul.f32 %v1814, %v2353
    %v2487 = vmul.f32 %v1816, %v2353
    %v2488 = vmul.f32 %v2087, %v2353
    %v2489 = vmul.f32 %v2089, %v2353
    %v2490 = vmul.f32 %v1820, %v2353
    %v2491 = vmul.f32 %v1822, %v2353
    %v2492 = vmul.f32 %v2093, %v2353
    %v2493 = vmul.f32 %v2095, %v2353
    %v2494 = vmul.f32 %v1824, %v2353
    %v2495 = vmul.f32 %v1826, %v2353
    %v2496 = vmul.f32 %v2097, %v2353
    %v2497 = vmul.f32 %v2099, %v2353
    %v2498 = vmul.f32 %v1830, %v2353
    %v2499 = vmul.f32 %v1832, %v2353
    %v2500 = vmul.f32 %v2103, %v2353
    %v2501 = vmul.f32 %v2105, %v2353
    %v2502 = vmul.f32 %v1834, %v2353
    %v2503 = vmul.f32 %v1836, %v2353
    %v2504 = vmul.f32 %v2107, %v2353
    %v2505 = vmul.f32 %v2109, %v2353
    %v2506 = vmul.f32 %v1840, %v2353
    %v2507 = vmul.f32 %v1842, %v2353
    %v2508 = vmul.f32 %v2113, %v2353
    %v2509 = vmul.f32 %v2115, %v2353
    %v2510 = vmul.f32 %v1844, %v2353
    %v2511 = vmul.f32 %v1846, %v2353
    %v2512 = vmul.f32 %v2117, %v2353
    %v2513 = vmul.f32 %v2119, %v2353
    %v2514 = vmul.f32 %v1850, %v2353
    %v2515 = vmul.f32 %v1852, %v2353
    %v2516 = vmul.f32 %v2123, %v2353
    %v2517 = vmul.f32 %v2125, %v2353
    %v2518 = vmul.f32 %v1854, %v2353
    %v2519 = vmul.f32 %v1856, %v2353
    %v2520 = vmul.f32 %v2127, %v2353
    %v2521 = vmul.f32 %v2129, %v2353
    %v2522 = vmul.f32 %v1860, %v2353
    %v2523 = vmul.f32 %v1862, %v2353
    %v2524 = vmul.f32 %v2133, %v2353
    %v2525 = vmul.f32 %v2135, %v2353
    %v2526 = vmul.f32 %v1864, %v2353
    %v2527 = vmul.f32 %v1866, %v2353
    %v2528 = vmul.f32 %v2137, %v2353
    %v2529 = vmul.f32 %v2139, %v2353
    %v2530 = vmul.f32 %v1870, %v2353
    %v2531 = vmul.f32 %v1872, %v2353
    %v2532 = vmul.f32 %v2143, %v2353
    %v2533 = vmul.f32 %v2145, %v2353
    %v2534 = vmul.f32 %v1874, %v2353
    %v2535 = vmul.f32 %v1876, %v2353
    %v2536 = vmul.f32 %v2147, %v2353
    %v2537 = vmul.f32 %v2149, %v2353
    %v2538 = vmul.f32 %v1880, %v2353
    %v2539 = vmul.f32 %v1882, %v2353
    %v2540 = vmul.f32 %v2153, %v2353
    %v2541 = vmul.f32 %v2155, %v2353
    %v2542 = vmul.f32 %v1884, %v2353
    %v2543 = vmul.f32 %v1886, %v2353
    %v2544 = vmul.f32 %v2157, %v2353
    %v2545 = vmul.f32 %v2159, %v2353
    %v2546 = verf.f32.pop %v2354
    %v2547 = verf.f32.pop %v2355
    %v2548 = verf.f32.pop %v2356
    %v2549 = verf.f32.pop %v2357
    %v2550 = verf.f32.pop %v2358
    %v2551 = verf.f32.pop %v2359
    %v2552 = verf.f32.pop %v2360
    %v2553 = verf.f32.pop %v2361
    %v2554 = verf.f32.pop %v2362
    %v2555 = verf.f32.pop %v2363
    %v2556 = verf.f32.pop %v2364
    %v2557 = verf.f32.pop %v2365
    %v2558 = verf.f32.pop %v2366
    %v2559 = verf.f32.pop %v2367
    %v2560 = verf.f32.pop %v2368
    %v2561 = verf.f32.pop %v2369
    %v2562 = verf.f32.pop %v2370
    %v2563 = verf.f32.pop %v2371
    %v2564 = verf.f32.pop %v2372
    %v2565 = verf.f32.pop %v2373
    %v2566 = verf.f32.pop %v2374
    %v2567 = verf.f32.pop %v2375
    %v2568 = verf.f32.pop %v2376
    %v2569 = verf.f32.pop %v2377
    %v2570 = verf.f32.pop %v2378
    %v2571 = verf.f32.pop %v2379
    %v2572 = verf.f32.pop %v2380
    %v2573 = verf.f32.pop %v2381
    %v2574 = verf.f32.pop %v2382
    %v2575 = verf.f32.pop %v2383
    %v2576 = verf.f32.pop %v2384
    %v2577 = verf.f32.pop %v2385
    %v2578 = verf.f32.pop %v2386
    %v2579 = verf.f32.pop %v2387
    %v2580 = verf.f32.pop %v2388
    %v2581 = verf.f32.pop %v2389
    %v2582 = verf.f32.pop %v2390
    %v2583 = verf.f32.pop %v2391
    %v2584 = verf.f32.pop %v2392
    %v2585 = verf.f32.pop %v2393
    %v2586 = verf.f32.pop %v2394
    %v2587 = verf.f32.pop %v2395
    %v2588 = verf.f32.pop %v2396
    %v2589 = verf.f32.pop %v2397
    %v2590 = verf.f32.pop %v2398
    %v2591 = verf.f32.pop %v2399
    %v2592 = verf.f32.pop %v2400
    %v2593 = verf.f32.pop %v2401
    %v2594 = verf.f32.pop %v2402
    %v2595 = verf.f32.pop %v2403
    %v2596 = verf.f32.pop %v2404
    %v2597 = verf.f32.pop %v2405
    %v2598 = verf.f32.pop %v2406
    %v2599 = verf.f32.pop %v2407
    %v2600 = verf.f32.pop %v2408
    %v2601 = verf.f32.pop %v2409
    %v2602 = verf.f32.pop %v2410
    %v2603 = verf.f32.pop %v2411
    %v2604 = verf.f32.pop %v2412
    %v2605 = verf.f32.pop %v2413
    %v2606 = verf.f32.pop %v2414
    %v2607 = verf.f32.pop %v2415
    %v2608 = verf.f32.pop %v2416
    %v2609 = verf.f32.pop %v2417
    %v2610 = verf.f32.pop %v2418
    %v2611 = verf.f32.pop %v2419
    %v2612 = verf.f32.pop %v2420
    %v2613 = verf.f32.pop %v2421
    %v2614 = verf.f32.pop %v2422
    %v2615 = verf.f32.pop %v2423
    %v2616 = verf.f32.pop %v2424
    %v2617 = verf.f32.pop %v2425
    %v2618 = verf.f32.pop %v2426
    %v2619 = verf.f32.pop %v2427
    %v2620 = verf.f32.pop %v2428
    %v2621 = verf.f32.pop %v2429
    %v2622 = verf.f32.pop %v2430
    %v2623 = verf.f32.pop %v2431
    %v2624 = verf.f32.pop %v2432
    %v2625 = verf.f32.pop %v2433
    %v2626 = verf.f32.pop %v2434
    %v2627 = verf.f32.pop %v2435
    %v2628 = verf.f32.pop %v2436
    %v2629 = verf.f32.pop %v2437
    %v2630 = verf.f32.pop %v2438
    %v2631 = verf.f32.pop %v2439
    %v2632 = verf.f32.pop %v2440
    %v2633 = verf.f32.pop %v2441
    %v2634 = verf.f32.pop %v2442
    %v2635 = verf.f32.pop %v2443
    %v2636 = verf.f32.pop %v2444
    %v2637 = verf.f32.pop %v2445
    %v2638 = verf.f32.pop %v2446
    %v2639 = verf.f32.pop %v2447
    %v2640 = verf.f32.pop %v2448
    %v2641 = verf.f32.pop %v2449
    %v2642 = verf.f32.pop %v2450
    %v2643 = verf.f32.pop %v2451
    %v2644 = verf.f32.pop %v2452
    %v2645 = verf.f32.pop %v2453
    %v2646 = verf.f32.pop %v2454
    %v2647 = verf.f32.pop %v2455
    %v2648 = verf.f32.pop %v2456
    %v2649 = verf.f32.pop %v2457
    %v2650 = verf.f32.pop %v2458
    %v2651 = verf.f32.pop %v2459
    %v2652 = verf.f32.pop %v2460
    %v2653 = verf.f32.pop %v2461
    %v2654 = verf.f32.pop %v2462
    %v2655 = verf.f32.pop %v2463
    %v2656 = verf.f32.pop %v2464
    %v2657 = verf.f32.pop %v2465
    %v2658 = verf.f32.pop %v2466
    %v2659 = verf.f32.pop %v2467
    %v2660 = verf.f32.pop %v2468
    %v2661 = verf.f32.pop %v2469
    %v2662 = verf.f32.pop %v2470
    %v2663 = verf.f32.pop %v2471
    %v2664 = verf.f32.pop %v2472
    %v2665 = verf.f32.pop %v2473
    %v2666 = verf.f32.pop %v2474
    %v2667 = verf.f32.pop %v2475
    %v2668 = verf.f32.pop %v2476
    %v2669 = verf.f32.pop %v2477
    %v2670 = verf.f32.pop %v2478
    %v2671 = verf.f32.pop %v2479
    %v2672 = verf.f32.pop %v2480
    %v2673 = verf.f32.pop %v2481
    %v2674 = verf.f32.pop %v2482
    %v2675 = verf.f32.pop %v2483
    %v2676 = verf.f32.pop %v2484
    %v2677 = verf.f32.pop %v2485
    %v2678 = verf.f32.pop %v2486
    %v2679 = verf.f32.pop %v2487
    %v2680 = verf.f32.pop %v2488
    %v2681 = verf.f32.pop %v2489
    %v2682 = verf.f32.pop %v2490
    %v2683 = verf.f32.pop %v2491
    %v2684 = verf.f32.pop %v2492
    %v2685 = verf.f32.pop %v2493
    %v2686 = verf.f32.pop %v2494
    %v2687 = verf.f32.pop %v2495
    %v2688 = verf.f32.pop %v2496
    %v2689 = verf.f32.pop %v2497
    %v2690 = verf.f32.pop %v2498
    %v2691 = verf.f32.pop %v2499
    %v2692 = verf.f32.pop %v2500
    %v2693 = verf.f32.pop %v2501
    %v2694 = verf.f32.pop %v2502
    %v2695 = verf.f32.pop %v2503
    %v2696 = verf.f32.pop %v2504
    %v2697 = verf.f32.pop %v2505
    %v2698 = verf.f32.pop %v2506
    %v2699 = verf.f32.pop %v2507
    %v2700 = verf.f32.pop %v2508
    %v2701 = verf.f32.pop %v2509
    %v2702 = verf.f32.pop %v2510
    %v2703 = verf.f32.pop %v2511
    %v2704 = verf.f32.pop %v2512
    %v2705 = verf.f32.pop %v2513
    %v2706 = verf.f32.pop %v2514
    %v2707 = verf.f32.pop %v2515
    %v2708 = verf.f32.pop %v2516
    %v2709 = verf.f32.pop %v2517
    %v2710 = verf.f32.pop %v2518
    %v2711 = verf.f32.pop %v2519
    %v2712 = verf.f32.pop %v2520
    %v2713 = verf.f32.pop %v2521
    %v2714 = verf.f32.pop %v2522
    %v2715 = verf.f32.pop %v2523
    %v2716 = verf.f32.pop %v2524
    %v2717 = verf.f32.pop %v2525
    %v2718 = verf.f32.pop %v2526
    %v2719 = verf.f32.pop %v2527
    %v2720 = verf.f32.pop %v2528
    %v2721 = verf.f32.pop %v2529
    %v2722 = verf.f32.pop %v2530
    %v2723 = verf.f32.pop %v2531
    %v2724 = verf.f32.pop %v2532
    %v2725 = verf.f32.pop %v2533
    %v2726 = verf.f32.pop %v2534
    %v2727 = verf.f32.pop %v2535
    %v2728 = verf.f32.pop %v2536
    %v2729 = verf.f32.pop %v2537
    %v2730 = verf.f32.pop %v2538
    %v2731 = verf.f32.pop %v2539
    %v2732 = verf.f32.pop %v2540
    %v2733 = verf.f32.pop %v2541
    %v2734 = verf.f32.pop %v2542
    %v2735 = verf.f32.pop %v2543
    %v2736 = verf.f32.pop %v2544
    %v2737 = verf.f32.pop %v2545
    %v2738 = vadd.f32 %v2546, 1.0
    %v2739 = vadd.f32 %v2547, 1.0
    %v2740 = vadd.f32 %v2548, 1.0
    %v2741 = vadd.f32 %v2549, 1.0
    %v2742 = vadd.f32 %v2550, 1.0
    %v2743 = vadd.f32 %v2551, 1.0
    %v2744 = vadd.f32 %v2552, 1.0
    %v2745 = vadd.f32 %v2553, 1.0
    %v2746 = vadd.f32 %v2554, 1.0
    %v2747 = vadd.f32 %v2555, 1.0
    %v2748 = vadd.f32 %v2556, 1.0
    %v2749 = vadd.f32 %v2557, 1.0
    %v2750 = vadd.f32 %v2558, 1.0
    %v2751 = vadd.f32 %v2559, 1.0
    %v2752 = vadd.f32 %v2560, 1.0
    %v2753 = vadd.f32 %v2561, 1.0
    %v2754 = vadd.f32 %v2562, 1.0
    %v2755 = vadd.f32 %v2563, 1.0
    %v2756 = vadd.f32 %v2564, 1.0
    %v2757 = vadd.f32 %v2565, 1.0
    %v2758 = vadd.f32 %v2566, 1.0
    %v2759 = vadd.f32 %v2567, 1.0
    %v2760 = vadd.f32 %v2568, 1.0
    %v2761 = vadd.f32 %v2569, 1.0
    %v2762 = vadd.f32 %v2570, 1.0
    %v2763 = vadd.f32 %v2571, 1.0
    %v2764 = vadd.f32 %v2572, 1.0
    %v2765 = vadd.f32 %v2573, 1.0
    %v2766 = vadd.f32 %v2574, 1.0
    %v2767 = vadd.f32 %v2575, 1.0
    %v2768 = vadd.f32 %v2576, 1.0
    %v2769 = vadd.f32 %v2577, 1.0
    %v2770 = vadd.f32 %v2578, 1.0
    %v2771 = vadd.f32 %v2579, 1.0
    %v2772 = vadd.f32 %v2580, 1.0
    %v2773 = vadd.f32 %v2581, 1.0
    %v2774 = vadd.f32 %v2582, 1.0
    %v2775 = vadd.f32 %v2583, 1.0
    %v2776 = vadd.f32 %v2584, 1.0
    %v2777 = vadd.f32 %v2585, 1.0
    %v2778 = vadd.f32 %v2586, 1.0
    %v2779 = vadd.f32 %v2587, 1.0
    %v2780 = vadd.f32 %v2588, 1.0
    %v2781 = vadd.f32 %v2589, 1.0
    %v2782 = vadd.f32 %v2590, 1.0
    %v2783 = vadd.f32 %v2591, 1.0
    %v2784 = vadd.f32 %v2592, 1.0
    %v2785 = vadd.f32 %v2593, 1.0
    %v2786 = vadd.f32 %v2594, 1.0
    %v2787 = vadd.f32 %v2595, 1.0
    %v2788 = vadd.f32 %v2596, 1.0
    %v2789 = vadd.f32 %v2597, 1.0
    %v2790 = vadd.f32 %v2598, 1.0
    %v2791 = vadd.f32 %v2599, 1.0
    %v2792 = vadd.f32 %v2600, 1.0
    %v2793 = vadd.f32 %v2601, 1.0
    %v2794 = vadd.f32 %v2602, 1.0
    %v2795 = vadd.f32 %v2603, 1.0
    %v2796 = vadd.f32 %v2604, 1.0
    %v2797 = vadd.f32 %v2605, 1.0
    %v2798 = vadd.f32 %v2606, 1.0
    %v2799 = vadd.f32 %v2607, 1.0
    %v2800 = vadd.f32 %v2608, 1.0
    %v2801 = vadd.f32 %v2609, 1.0
    %v2802 = vadd.f32 %v2610, 1.0
    %v2803 = vadd.f32 %v2611, 1.0
    %v2804 = vadd.f32 %v2612, 1.0
    %v2805 = vadd.f32 %v2613, 1.0
    %v2806 = vadd.f32 %v2614, 1.0
    %v2807 = vadd.f32 %v2615, 1.0
    %v2808 = vadd.f32 %v2616, 1.0
    %v2809 = vadd.f32 %v2617, 1.0
    %v2810 = vadd.f32 %v2618, 1.0
    %v2811 = vadd.f32 %v2619, 1.0
    %v2812 = vadd.f32 %v2620, 1.0
    %v2813 = vadd.f32 %v2621, 1.0
    %v2814 = vadd.f32 %v2622, 1.0
    %v2815 = vadd.f32 %v2623, 1.0
    %v2816 = vadd.f32 %v2624, 1.0
    %v2817 = vadd.f32 %v2625, 1.0
    %v2818 = vadd.f32 %v2626, 1.0
    %v2819 = vadd.f32 %v2627, 1.0
    %v2820 = vadd.f32 %v2628, 1.0
    %v2821 = vadd.f32 %v2629, 1.0
    %v2822 = vadd.f32 %v2630, 1.0
    %v2823 = vadd.f32 %v2631, 1.0
    %v2824 = vadd.f32 %v2632, 1.0
    %v2825 = vadd.f32 %v2633, 1.0
    %v2826 = vadd.f32 %v2634, 1.0
    %v2827 = vadd.f32 %v2635, 1.0
    %v2828 = vadd.f32 %v2636, 1.0
    %v2829 = vadd.f32 %v2637, 1.0
    %v2830 = vadd.f32 %v2638, 1.0
    %v2831 = vadd.f32 %v2639, 1.0
    %v2832 = vadd.f32 %v2640, 1.0
    %v2833 = vadd.f32 %v2641, 1.0
    %v2834 = vadd.f32 %v2642, 1.0
    %v2835 = vadd.f32 %v2643, 1.0
    %v2836 = vadd.f32 %v2644, 1.0
    %v2837 = vadd.f32 %v2645, 1.0
    %v2838 = vadd.f32 %v2646, 1.0
    %v2839 = vadd.f32 %v2647, 1.0
    %v2840 = vadd.f32 %v2648, 1.0
    %v2841 = vadd.f32 %v2649, 1.0
    %v2842 = vadd.f32 %v2650, 1.0
    %v2843 = vadd.f32 %v2651, 1.0
    %v2844 = vadd.f32 %v2652, 1.0
    %v2845 = vadd.f32 %v2653, 1.0
    %v2846 = vadd.f32 %v2654, 1.0
    %v2847 = vadd.f32 %v2655, 1.0
    %v2848 = vadd.f32 %v2656, 1.0
    %v2849 = vadd.f32 %v2657, 1.0
    %v2850 = vadd.f32 %v2658, 1.0
    %v2851 = vadd.f32 %v2659, 1.0
    %v2852 = vadd.f32 %v2660, 1.0
    %v2853 = vadd.f32 %v2661, 1.0
    %v2854 = vadd.f32 %v2662, 1.0
    %v2855 = vadd.f32 %v2663, 1.0
    %v2856 = vadd.f32 %v2664, 1.0
    %v2857 = vadd.f32 %v2665, 1.0
    %v2858 = vadd.f32 %v2666, 1.0
    %v2859 = vadd.f32 %v2667, 1.0
    %v2860 = vadd.f32 %v2668, 1.0
    %v2861 = vadd.f32 %v2669, 1.0
    %v2862 = vadd.f32 %v2670, 1.0
    %v2863 = vadd.f32 %v2671, 1.0
    %v2864 = vadd.f32 %v2672, 1.0
    %v2865 = vadd.f32 %v2673, 1.0
    %v2866 = vadd.f32 %v2674, 1.0
    %v2867 = vadd.f32 %v2675, 1.0
    %v2868 = vadd.f32 %v2676, 1.0
    %v2869 = vadd.f32 %v2677, 1.0
    %v2870 = vadd.f32 %v2678, 1.0
    %v2871 = vadd.f32 %v2679, 1.0
    %v2872 = vadd.f32 %v2680, 1.0
    %v2873 = vadd.f32 %v2681, 1.0
    %v2874 = vadd.f32 %v2682, 1.0
    %v2875 = vadd.f32 %v2683, 1.0
    %v2876 = vadd.f32 %v2684, 1.0
    %v2877 = vadd.f32 %v2685, 1.0
    %v2878 = vadd.f32 %v2686, 1.0
    %v2879 = vadd.f32 %v2687, 1.0
    %v2880 = vadd.f32 %v2688, 1.0
    %v2881 = vadd.f32 %v2689, 1.0
    %v2882 = vadd.f32 %v2690, 1.0
    %v2883 = vadd.f32 %v2691, 1.0
    %v2884 = vadd.f32 %v2692, 1.0
    %v2885 = vadd.f32 %v2693, 1.0
    %v2886 = vadd.f32 %v2694, 1.0
    %v2887 = vadd.f32 %v2695, 1.0
    %v2888 = vadd.f32 %v2696, 1.0
    %v2889 = vadd.f32 %v2697, 1.0
    %v2890 = vadd.f32 %v2698, 1.0
    %v2891 = vadd.f32 %v2699, 1.0
    %v2892 = vadd.f32 %v2700, 1.0
    %v2893 = vadd.f32 %v2701, 1.0
    %v2894 = vadd.f32 %v2702, 1.0
    %v2895 = vadd.f32 %v2703, 1.0
    %v2896 = vadd.f32 %v2704, 1.0
    %v2897 = vadd.f32 %v2705, 1.0
    %v2898 = vadd.f32 %v2706, 1.0
    %v2899 = vadd.f32 %v2707, 1.0
    %v2900 = vadd.f32 %v2708, 1.0
    %v2901 = vadd.f32 %v2709, 1.0
    %v2902 = vadd.f32 %v2710, 1.0
    %v2903 = vadd.f32 %v2711, 1.0
    %v2904 = vadd.f32 %v2712, 1.0
    %v2905 = vadd.f32 %v2713, 1.0
    %v2906 = vadd.f32 %v2714, 1.0
    %v2907 = vadd.f32 %v2715, 1.0
    %v2908 = vadd.f32 %v2716, 1.0
    %v2909 = vadd.f32 %v2717, 1.0
    %v2910 = vadd.f32 %v2718, 1.0
    %v2911 = vadd.f32 %v2719, 1.0
    %v2912 = vadd.f32 %v2720, 1.0
    %v2913 = vadd.f32 %v2721, 1.0
    %v2914 = vadd.f32 %v2722, 1.0
    %v2915 = vadd.f32 %v2723, 1.0
    %v2916 = vadd.f32 %v2724, 1.0
    %v2917 = vadd.f32 %v2725, 1.0
    %v2918 = vadd.f32 %v2726, 1.0
    %v2919 = vadd.f32 %v2727, 1.0
    %v2920 = vadd.f32 %v2728, 1.0
    %v2921 = vadd.f32 %v2729, 1.0
    %v2922 = vadd.f32 %v2730, 1.0
    %v2923 = vadd.f32 %v2731, 1.0
    %v2924 = vadd.f32 %v2732, 1.0
    %v2925 = vadd.f32 %v2733, 1.0
    %v2926 = vadd.f32 %v2734, 1.0
    %v2927 = vadd.f32 %v2735, 1.0
    %v2928 = vadd.f32 %v2736, 1.0
    %v2929 = vadd.f32 %v2737, 1.0
    %v2930 = vmul.f32 %v2161, %v2738
    %v2931 = vmul.f32 %v2162, %v2739
    %v2932 = vmul.f32 %v2163, %v2740
    %v2933 = vmul.f32 %v2164, %v2741
    %v2934 = vmul.f32 %v2165, %v2742
    %v2935 = vmul.f32 %v2166, %v2743
    %v2936 = vmul.f32 %v2167, %v2744
    %v2937 = vmul.f32 %v2168, %v2745
    %v2938 = vmul.f32 %v2169, %v2746
    %v2939 = vmul.f32 %v2170, %v2747
    %v2940 = vmul.f32 %v2171, %v2748
    %v2941 = vmul.f32 %v2172, %v2749
    %v2942 = vmul.f32 %v2173, %v2750
    %v2943 = vmul.f32 %v2174, %v2751
    %v2944 = vmul.f32 %v2175, %v2752
    %v2945 = vmul.f32 %v2176, %v2753
    %v2946 = vmul.f32 %v2177, %v2754
    %v2947 = vmul.f32 %v2178, %v2755
    %v2948 = vmul.f32 %v2179, %v2756
    %v2949 = vmul.f32 %v2180, %v2757
    %v2950 = vmul.f32 %v2181, %v2758
    %v2951 = vmul.f32 %v2182, %v2759
    %v2952 = vmul.f32 %v2183, %v2760
    %v2953 = vmul.f32 %v2184, %v2761
    %v2954 = vmul.f32 %v2185, %v2762
    %v2955 = vmul.f32 %v2186, %v2763
    %v2956 = vmul.f32 %v2187, %v2764
    %v2957 = vmul.f32 %v2188, %v2765
    %v2958 = vmul.f32 %v2189, %v2766
    %v2959 = vmul.f32 %v2190, %v2767
    %v2960 = vmul.f32 %v2191, %v2768
    %v2961 = vmul.f32 %v2192, %v2769
    %v2962 = vmul.f32 %v2193, %v2770
    %v2963 = vmul.f32 %v2194, %v2771
    %v2964 = vmul.f32 %v2195, %v2772
    %v2965 = vmul.f32 %v2196, %v2773
    %v2966 = vmul.f32 %v2197, %v2774
    %v2967 = vmul.f32 %v2198, %v2775
    %v2968 = vmul.f32 %v2199, %v2776
    %v2969 = vmul.f32 %v2200, %v2777
    %v2970 = vmul.f32 %v2201, %v2778
    %v2971 = vmul.f32 %v2202, %v2779
    %v2972 = vmul.f32 %v2203, %v2780
    %v2973 = vmul.f32 %v2204, %v2781
    %v2974 = vmul.f32 %v2205, %v2782
    %v2975 = vmul.f32 %v2206, %v2783
    %v2976 = vmul.f32 %v2207, %v2784
    %v2977 = vmul.f32 %v2208, %v2785
    %v2978 = vmul.f32 %v2209, %v2786
    %v2979 = vmul.f32 %v2210, %v2787
    %v2980 = vmul.f32 %v2211, %v2788
    %v2981 = vmul.f32 %v2212, %v2789
    %v2982 = vmul.f32 %v2213, %v2790
    %v2983 = vmul.f32 %v2214, %v2791
    %v2984 = vmul.f32 %v2215, %v2792
    %v2985 = vmul.f32 %v2216, %v2793
    %v2986 = vmul.f32 %v2217, %v2794
    %v2987 = vmul.f32 %v2218, %v2795
    %v2988 = vmul.f32 %v2219, %v2796
    %v2989 = vmul.f32 %v2220, %v2797
    %v2990 = vmul.f32 %v2221, %v2798
    %v2991 = vmul.f32 %v2222, %v2799
    %v2992 = vmul.f32 %v2223, %v2800
    %v2993 = vmul.f32 %v2224, %v2801
    %v2994 = vmul.f32 %v2225, %v2802
    %v2995 = vmul.f32 %v2226, %v2803
    %v2996 = vmul.f32 %v2227, %v2804
    %v2997 = vmul.f32 %v2228, %v2805
    %v2998 = vmul.f32 %v2229, %v2806
    %v2999 = vmul.f32 %v2230, %v2807
    %v3000 = vmul.f32 %v2231, %v2808
    %v3001 = vmul.f32 %v2232, %v2809
    %v3002 = vmul.f32 %v2233, %v2810
    %v3003 = vmul.f32 %v2234, %v2811
    %v3004 = vmul.f32 %v2235, %v2812
    %v3005 = vmul.f32 %v2236, %v2813
    %v3006 = vmul.f32 %v2237, %v2814
    %v3007 = vmul.f32 %v2238, %v2815
    %v3008 = vmul.f32 %v2239, %v2816
    %v3009 = vmul.f32 %v2240, %v2817
    %v3010 = vmul.f32 %v2241, %v2818
    %v3011 = vmul.f32 %v2242, %v2819
    %v3012 = vmul.f32 %v2243, %v2820
    %v3013 = vmul.f32 %v2244, %v2821
    %v3014 = vmul.f32 %v2245, %v2822
    %v3015 = vmul.f32 %v2246, %v2823
    %v3016 = vmul.f32 %v2247, %v2824
    %v3017 = vmul.f32 %v2248, %v2825
    %v3018 = vmul.f32 %v2249, %v2826
    %v3019 = vmul.f32 %v2250, %v2827
    %v3020 = vmul.f32 %v2251, %v2828
    %v3021 = vmul.f32 %v2252, %v2829
    %v3022 = vmul.f32 %v2253, %v2830
    %v3023 = vmul.f32 %v2254, %v2831
    %v3024 = vmul.f32 %v2255, %v2832
    %v3025 = vmul.f32 %v2256, %v2833
    %v3026 = vmul.f32 %v2257, %v2834
    %v3027 = vmul.f32 %v2258, %v2835
    %v3028 = vmul.f32 %v2259, %v2836
    %v3029 = vmul.f32 %v2260, %v2837
    %v3030 = vmul.f32 %v2261, %v2838
    %v3031 = vmul.f32 %v2262, %v2839
    %v3032 = vmul.f32 %v2263, %v2840
    %v3033 = vmul.f32 %v2264, %v2841
    %v3034 = vmul.f32 %v2265, %v2842
    %v3035 = vmul.f32 %v2266, %v2843
    %v3036 = vmul.f32 %v2267, %v2844
    %v3037 = vmul.f32 %v2268, %v2845
    %v3038 = vmul.f32 %v2269, %v2846
    %v3039 = vmul.f32 %v2270, %v2847
    %v3040 = vmul.f32 %v2271, %v2848
    %v3041 = vmul.f32 %v2272, %v2849
    %v3042 = vmul.f32 %v2273, %v2850
    %v3043 = vmul.f32 %v2274, %v2851
    %v3044 = vmul.f32 %v2275, %v2852
    %v3045 = vmul.f32 %v2276, %v2853
    %v3046 = vmul.f32 %v2277, %v2854
    %v3047 = vmul.f32 %v2278, %v2855
    %v3048 = vmul.f32 %v2279, %v2856
    %v3049 = vmul.f32 %v2280, %v2857
    %v3050 = vmul.f32 %v2281, %v2858
    %v3051 = vmul.f32 %v2282, %v2859
    %v3052 = vmul.f32 %v2283, %v2860
    %v3053 = vmul.f32 %v2284, %v2861
    %v3054 = vmul.f32 %v2285, %v2862
    %v3055 = vmul.f32 %v2286, %v2863
    %v3056 = vmul.f32 %v2287, %v2864
    %v3057 = vmul.f32 %v2288, %v2865
    %v3058 = vmul.f32 %v2289, %v2866
    %v3059 = vmul.f32 %v2290, %v2867
    %v3060 = vmul.f32 %v2291, %v2868
    %v3061 = vmul.f32 %v2292, %v2869
    %v3062 = vmul.f32 %v2293, %v2870
    %v3063 = vmul.f32 %v2294, %v2871
    %v3064 = vmul.f32 %v2295, %v2872
    %v3065 = vmul.f32 %v2296, %v2873
    %v3066 = vmul.f32 %v2297, %v2874
    %v3067 = vmul.f32 %v2298, %v2875
    %v3068 = vmul.f32 %v2299, %v2876
    %v3069 = vmul.f32 %v2300, %v2877
    %v3070 = vmul.f32 %v2301, %v2878
    %v3071 = vmul.f32 %v2302, %v2879
    %v3072 = vmul.f32 %v2303, %v2880
    %v3073 = vmul.f32 %v2304, %v2881
    %v3074 = vmul.f32 %v2305, %v2882
    %v3075 = vmul.f32 %v2306, %v2883
    %v3076 = vmul.f32 %v2307, %v2884
    %v3077 = vmul.f32 %v2308, %v2885
    %v3078 = vmul.f32 %v2309, %v2886
    %v3079 = vmul.f32 %v2310, %v2887
    %v3080 = vmul.f32 %v2311, %v2888
    %v3081 = vmul.f32 %v2312, %v2889
    %v3082 = vmul.f32 %v2313, %v2890
    %v3083 = vmul.f32 %v2314, %v2891
    %v3084 = vmul.f32 %v2315, %v2892
    %v3085 = vmul.f32 %v2316, %v2893
    %v3086 = vmul.f32 %v2317, %v2894
    %v3087 = vmul.f32 %v2318, %v2895
    %v3088 = vmul.f32 %v2319, %v2896
    %v3089 = vmul.f32 %v2320, %v2897
    %v3090 = vmul.f32 %v2321, %v2898
    %v3091 = vmul.f32 %v2322, %v2899
    %v3092 = vmul.f32 %v2323, %v2900
    %v3093 = vmul.f32 %v2324, %v2901
    %v3094 = vmul.f32 %v2325, %v2902
    %v3095 = vmul.f32 %v2326, %v2903
    %v3096 = vmul.f32 %v2327, %v2904
    %v3097 = vmul.f32 %v2328, %v2905
    %v3098 = vmul.f32 %v2329, %v2906
    %v3099 = vmul.f32 %v2330, %v2907
    %v3100 = vmul.f32 %v2331, %v2908
    %v3101 = vmul.f32 %v2332, %v2909
    %v3102 = vmul.f32 %v2333, %v2910
    %v3103 = vmul.f32 %v2334, %v2911
    %v3104 = vmul.f32 %v2335, %v2912
    %v3105 = vmul.f32 %v2336, %v2913
    %v3106 = vmul.f32 %v2337, %v2914
    %v3107 = vmul.f32 %v2338, %v2915
    %v3108 = vmul.f32 %v2339, %v2916
    %v3109 = vmul.f32 %v2340, %v2917
    %v3110 = vmul.f32 %v2341, %v2918
    %v3111 = vmul.f32 %v2342, %v2919
    %v3112 = vmul.f32 %v2343, %v2920
    %v3113 = vmul.f32 %v2344, %v2921
    %v3114 = vmul.f32 %v2345, %v2922
    %v3115 = vmul.f32 %v2346, %v2923
    %v3116 = vmul.f32 %v2347, %v2924
    %v3117 = vmul.f32 %v2348, %v2925
    %v3118 = vmul.f32 %v2349, %v2926
    %v3119 = vmul.f32 %v2350, %v2927
    %v3120 = vmul.f32 %v2351, %v2928
    %v3121 = vmul.f32 %v2352, %v2929
    %v3122 = vpack.c.bf16 %v2934, %v2930
    %v3123 = vpack.c.bf16 %v2935, %v2931
    %v3124 = vpack.c.bf16 %v2936, %v2932
    %v3125 = vpack.c.bf16 %v2937, %v2933
    %v3126 = vpack.c.bf16 %v2942, %v2938
    %v3127 = vpack.c.bf16 %v2943, %v2939
    %v3128 = vpack.c.bf16 %v2944, %v2940
    %v3129 = vpack.c.bf16 %v2945, %v2941
    %v3130 = vpack.c.bf16 %v2950, %v2946
    %v3131 = vpack.c.bf16 %v2951, %v2947
    %v3132 = vpack.c.bf16 %v2952, %v2948
    %v3133 = vpack.c.bf16 %v2953, %v2949
    %v3134 = vpack.c.bf16 %v2958, %v2954
    %v3135 = vpack.c.bf16 %v2959, %v2955
    %v3136 = vpack.c.bf16 %v2960, %v2956
    %v3137 = vpack.c.bf16 %v2961, %v2957
    %v3138 = vpack.c.bf16 %v2966, %v2962
    %v3139 = vpack.c.bf16 %v2967, %v2963
    %v3140 = vpack.c.bf16 %v2968, %v2964
    %v3141 = vpack.c.bf16 %v2969, %v2965
    %v3142 = vpack.c.bf16 %v2974, %v2970
    %v3143 = vpack.c.bf16 %v2975, %v2971
    %v3144 = vpack.c.bf16 %v2976, %v2972
    %v3145 = vpack.c.bf16 %v2977, %v2973
    %v3146 = vpack.c.bf16 %v2982, %v2978
    %v3147 = vpack.c.bf16 %v2983, %v2979
    %v3148 = vpack.c.bf16 %v2984, %v2980
    %v3149 = vpack.c.bf16 %v2985, %v2981
    %v3150 = vpack.c.bf16 %v2990, %v2986
    %v3151 = vpack.c.bf16 %v2991, %v2987
    %v3152 = vpack.c.bf16 %v2992, %v2988
    %v3153 = vpack.c.bf16 %v2993, %v2989
    %v3154 = vpack.c.bf16 %v2998, %v2994
    %v3155 = vpack.c.bf16 %v2999, %v2995
    %v3156 = vpack.c.bf16 %v3000, %v2996
    %v3157 = vpack.c.bf16 %v3001, %v2997
    %v3158 = vpack.c.bf16 %v3006, %v3002
    %v3159 = vpack.c.bf16 %v3007, %v3003
    %v3160 = vpack.c.bf16 %v3008, %v3004
    %v3161 = vpack.c.bf16 %v3009, %v3005
    %v3162 = vpack.c.bf16 %v3014, %v3010
    %v3163 = vpack.c.bf16 %v3015, %v3011
    %v3164 = vpack.c.bf16 %v3016, %v3012
    %v3165 = vpack.c.bf16 %v3017, %v3013
    %v3166 = vpack.c.bf16 %v3022, %v3018
    %v3167 = vpack.c.bf16 %v3023, %v3019
    %v3168 = vpack.c.bf16 %v3024, %v3020
    %v3169 = vpack.c.bf16 %v3025, %v3021
    %v3170 = vpack.c.bf16 %v3030, %v3026
    %v3171 = vpack.c.bf16 %v3031, %v3027
    %v3172 = vpack.c.bf16 %v3032, %v3028
    %v3173 = vpack.c.bf16 %v3033, %v3029
    %v3174 = vpack.c.bf16 %v3038, %v3034
    %v3175 = vpack.c.bf16 %v3039, %v3035
    %v3176 = vpack.c.bf16 %v3040, %v3036
    %v3177 = vpack.c.bf16 %v3041, %v3037
    %v3178 = vpack.c.bf16 %v3046, %v3042
    %v3179 = vpack.c.bf16 %v3047, %v3043
    %v3180 = vpack.c.bf16 %v3048, %v3044
    %v3181 = vpack.c.bf16 %v3049, %v3045
    %v3182 = vpack.c.bf16 %v3054, %v3050
    %v3183 = vpack.c.bf16 %v3055, %v3051
    %v3184 = vpack.c.bf16 %v3056, %v3052
    %v3185 = vpack.c.bf16 %v3057, %v3053
    %v3186 = vpack.c.bf16 %v3062, %v3058
    %v3187 = vpack.c.bf16 %v3063, %v3059
    %v3188 = vpack.c.bf16 %v3064, %v3060
    %v3189 = vpack.c.bf16 %v3065, %v3061
    %v3190 = vpack.c.bf16 %v3070, %v3066
    %v3191 = vpack.c.bf16 %v3071, %v3067
    %v3192 = vpack.c.bf16 %v3072, %v3068
    %v3193 = vpack.c.bf16 %v3073, %v3069
    %v3194 = vpack.c.bf16 %v3078, %v3074
    %v3195 = vpack.c.bf16 %v3079, %v3075
    %v3196 = vpack.c.bf16 %v3080, %v3076
    %v3197 = vpack.c.bf16 %v3081, %v3077
    %v3198 = vpack.c.bf16 %v3086, %v3082
    %v3199 = vpack.c.bf16 %v3087, %v3083
    %v3200 = vpack.c.bf16 %v3088, %v3084
    %v3201 = vpack.c.bf16 %v3089, %v3085
    %v3202 = vpack.c.bf16 %v3094, %v3090
    %v3203 = vpack.c.bf16 %v3095, %v3091
    %v3204 = vpack.c.bf16 %v3096, %v3092
    %v3205 = vpack.c.bf16 %v3097, %v3093
    %v3206 = vpack.c.bf16 %v3102, %v3098
    %v3207 = vpack.c.bf16 %v3103, %v3099
    %v3208 = vpack.c.bf16 %v3104, %v3100
    %v3209 = vpack.c.bf16 %v3105, %v3101
    %v3210 = vpack.c.bf16 %v3110, %v3106
    %v3211 = vpack.c.bf16 %v3111, %v3107
    %v3212 = vpack.c.bf16 %v3112, %v3108
    %v3213 = vpack.c.bf16 %v3113, %v3109
    %v3214 = vpack.c.bf16 %v3118, %v3114
    %v3215 = vpack.c.bf16 %v3119, %v3115
    %v3216 = vpack.c.bf16 %v3120, %v3116
    %v3217 = vpack.c.bf16 %v3121, %v3117
    %v3218 = vld [vmem:[#allocation8] sm:$0xff]
    %v3219 = vld [vmem:[#allocation8 + $0x8] sm:$0xff]
    %v3220 = vld [vmem:[#allocation8 + $0x10] sm:$0xff]
    %v3221 = vld [vmem:[#allocation8 + $0x18] sm:$0xff]
    %v3222 = vld [vmem:[#allocation8 + $0x20] sm:$0xff]
    %v3223 = vld [vmem:[#allocation8 + $0x28] sm:$0xff]
    %v3224 = vld [vmem:[#allocation8 + $0x30] sm:$0xff]
    %v3225 = vld [vmem:[#allocation8 + $0x38] sm:$0xff]
    %v3226 = vld [vmem:[#allocation8 + $0x40] sm:$0xff]
    %v3227 = vld [vmem:[#allocation8 + $0x48] sm:$0xff]
    %v3228 = vld [vmem:[#allocation8 + $0x50] sm:$0xff]
    %v3229 = vld [vmem:[#allocation8 + $0x58] sm:$0xff]
    %v3230 = vld [vmem:[#allocation8 + $0x60] sm:$0xff]
    %v3231 = vld [vmem:[#allocation8 + $0x68] sm:$0xff]
    %v3232 = vld [vmem:[#allocation8 + $0x70] sm:$0xff]
    %v3233 = vld [vmem:[#allocation8 + $0x78] sm:$0xff]
    %v3234 = vld [vmem:[#allocation8 + $0x80] sm:$0xff]
    %v3235 = vld [vmem:[#allocation8 + $0x88] sm:$0xff]
    %v3236 = vld [vmem:[#allocation8 + $0x90] sm:$0xff]
    %v3237 = vld [vmem:[#allocation8 + $0x98] sm:$0xff]
    %v3238 = vld [vmem:[#allocation8 + $0xa0] sm:$0xff]
    %v3239 = vld [vmem:[#allocation8 + $0xa8] sm:$0xff]
    %v3240 = vld [vmem:[#allocation8 + $0xb0] sm:$0xff]
    %v3241 = vld [vmem:[#allocation8 + $0xb8] sm:$0xff]
    %v3242 = vld [vmem:[#allocation8 + $0xc0] sm:$0xff]
    %v3243 = vld [vmem:[#allocation8 + $0xc8] sm:$0xff]
    %v3244 = vld [vmem:[#allocation8 + $0xd0] sm:$0xff]
    %v3245 = vld [vmem:[#allocation8 + $0xd8] sm:$0xff]
    %v3246 = vld [vmem:[#allocation8 + $0xe0] sm:$0xff]
    %v3247 = vld [vmem:[#allocation8 + $0xe8] sm:$0xff]
    %v3248 = vld [vmem:[#allocation8 + $0xf0] sm:$0xff]
    %v3249 = vld [vmem:[#allocation8 + $0xf8] sm:$0xff]
    %v3250 = vld [vmem:[#allocation8 + $0x100] sm:$0xff]
    %v3251 = vld [vmem:[#allocation8 + $0x108] sm:$0xff]
    %v3252 = vld [vmem:[#allocation8 + $0x110] sm:$0xff]
    %v3253 = vld [vmem:[#allocation8 + $0x118] sm:$0xff]
    %v3254 = vld [vmem:[#allocation8 + $0x120] sm:$0xff]
    %v3255 = vld [vmem:[#allocation8 + $0x128] sm:$0xff]
    %v3256 = vld [vmem:[#allocation8 + $0x130] sm:$0xff]
    %v3257 = vld [vmem:[#allocation8 + $0x138] sm:$0xff]
    %v3258 = vld [vmem:[#allocation8 + $0x140] sm:$0xff]
    %v3259 = vld [vmem:[#allocation8 + $0x148] sm:$0xff]
    %v3260 = vld [vmem:[#allocation8 + $0x150] sm:$0xff]
    %v3261 = vld [vmem:[#allocation8 + $0x158] sm:$0xff]
    %v3262 = vld [vmem:[#allocation8 + $0x160] sm:$0xff]
    %v3263 = vld [vmem:[#allocation8 + $0x168] sm:$0xff]
    %v3264 = vld [vmem:[#allocation8 + $0x170] sm:$0xff]
    %v3265 = vld [vmem:[#allocation8 + $0x178] sm:$0xff]
    %v3266 = vld [vmem:[#allocation8 + $0x180] sm:$0xff]
    %v3267 = vld [vmem:[#allocation8 + $0x188] sm:$0xff]
    %v3268 = vld [vmem:[#allocation8 + $0x190] sm:$0xff]
    %v3269 = vld [vmem:[#allocation8 + $0x198] sm:$0xff]
    %v3270 = vld [vmem:[#allocation8 + $0x1a0] sm:$0xff]
    %v3271 = vld [vmem:[#allocation8 + $0x1a8] sm:$0xff]
    %v3272 = vld [vmem:[#allocation8 + $0x1b0] sm:$0xff]
    %v3273 = vld [vmem:[#allocation8 + $0x1b8] sm:$0xff]
    %v3274 = vld [vmem:[#allocation8 + $0x1c0] sm:$0xff]
    %v3275 = vld [vmem:[#allocation8 + $0x1c8] sm:$0xff]
    %v3276 = vld [vmem:[#allocation8 + $0x1d0] sm:$0xff]
    %v3277 = vld [vmem:[#allocation8 + $0x1d8] sm:$0xff]
    %v3278 = vld [vmem:[#allocation8 + $0x1e0] sm:$0xff]
    %v3279 = vld [vmem:[#allocation8 + $0x1e8] sm:$0xff]
    %v3280 = vld [vmem:[#allocation8 + $0x1f0] sm:$0xff]
    %v3281 = vld [vmem:[#allocation8 + $0x1f8] sm:$0xff]
    %v3282 = vld [vmem:[%s6] sm:$0x3]
    %v3284 = vlaneseq
    %v3285 = vshrl.u32 %v3284, 7
    %v3286 = vsub.s32 0, %v3285
    %v3287 = vrot.slane %v3282, %v3286
    %v3288 = vlaneseq
    %v3289 = vshrl.u32 %v3288, 7
    %v3290 = vsub.s32 1, %v3289
    %v3291 = vrot.slane %v3282, %v3290
    %v3358 = vunpack.c.l.b16 %v3218
    %v3359 = vunpack.c.h.b16 %v3218
    %v3360 = vunpack.c.l.b16 %v3219
    %v3361 = vunpack.c.h.b16 %v3219
    %v3362 = vunpack.c.l.b16 %v3220
    %v3363 = vunpack.c.h.b16 %v3220
    %v3364 = vunpack.c.l.b16 %v3221
    %v3365 = vunpack.c.h.b16 %v3221
    %v3366 = vunpack.c.l.b16 %v3222
    %v3367 = vunpack.c.h.b16 %v3222
    %v3368 = vunpack.c.l.b16 %v3223
    %v3369 = vunpack.c.h.b16 %v3223
    %v3370 = vunpack.c.l.b16 %v3224
    %v3371 = vunpack.c.h.b16 %v3224
    %v3372 = vunpack.c.l.b16 %v3225
    %v3373 = vunpack.c.h.b16 %v3225
    %v3374 = vunpack.c.l.b16 %v3226
    %v3375 = vunpack.c.h.b16 %v3226
    %v3376 = vunpack.c.l.b16 %v3227
    %v3377 = vunpack.c.h.b16 %v3227
    %v3378 = vunpack.c.l.b16 %v3228
    %v3379 = vunpack.c.h.b16 %v3228
    %v3380 = vunpack.c.l.b16 %v3229
    %v3381 = vunpack.c.h.b16 %v3229
    %v3382 = vunpack.c.l.b16 %v3230
    %v3383 = vunpack.c.h.b16 %v3230
    %v3384 = vunpack.c.l.b16 %v3231
    %v3385 = vunpack.c.h.b16 %v3231
    %v3386 = vunpack.c.l.b16 %v3232
    %v3387 = vunpack.c.h.b16 %v3232
    %v3388 = vunpack.c.l.b16 %v3233
    %v3389 = vunpack.c.h.b16 %v3233
    %v3390 = vunpack.c.l.b16 %v3234
    %v3391 = vunpack.c.h.b16 %v3234
    %v3392 = vunpack.c.l.b16 %v3235
    %v3393 = vunpack.c.h.b16 %v3235
    %v3394 = vunpack.c.l.b16 %v3236
    %v3395 = vunpack.c.h.b16 %v3236
    %v3396 = vunpack.c.l.b16 %v3237
    %v3397 = vunpack.c.h.b16 %v3237
    %v3398 = vunpack.c.l.b16 %v3238
    %v3399 = vunpack.c.h.b16 %v3238
    %v3400 = vunpack.c.l.b16 %v3239
    %v3401 = vunpack.c.h.b16 %v3239
    %v3402 = vunpack.c.l.b16 %v3240
    %v3403 = vunpack.c.h.b16 %v3240
    %v3404 = vunpack.c.l.b16 %v3241
    %v3405 = vunpack.c.h.b16 %v3241
    %v3406 = vunpack.c.l.b16 %v3242
    %v3407 = vunpack.c.h.b16 %v3242
    %v3408 = vunpack.c.l.b16 %v3243
    %v3409 = vunpack.c.h.b16 %v3243
    %v3410 = vunpack.c.l.b16 %v3244
    %v3411 = vunpack.c.h.b16 %v3244
    %v3412 = vunpack.c.l.b16 %v3245
    %v3413 = vunpack.c.h.b16 %v3245
    %v3414 = vunpack.c.l.b16 %v3246
    %v3415 = vunpack.c.h.b16 %v3246
    %v3416 = vunpack.c.l.b16 %v3247
    %v3417 = vunpack.c.h.b16 %v3247
    %v3418 = vunpack.c.l.b16 %v3248
    %v3419 = vunpack.c.h.b16 %v3248
    %v3420 = vunpack.c.l.b16 %v3249
    %v3421 = vunpack.c.h.b16 %v3249
    %v3422 = vunpack.c.l.b16 %v3250
    %v3423 = vunpack.c.h.b16 %v3250
    %v3424 = vunpack.c.l.b16 %v3251
    %v3425 = vunpack.c.h.b16 %v3251
    %v3426 = vunpack.c.l.b16 %v3252
    %v3427 = vunpack.c.h.b16 %v3252
    %v3428 = vunpack.c.l.b16 %v3253
    %v3429 = vunpack.c.h.b16 %v3253
    %v3430 = vunpack.c.l.b16 %v3254
    %v3431 = vunpack.c.h.b16 %v3254
    %v3432 = vunpack.c.l.b16 %v3255
    %v3433 = vunpack.c.h.b16 %v3255
    %v3434 = vunpack.c.l.b16 %v3256
    %v3435 = vunpack.c.h.b16 %v3256
    %v3436 = vunpack.c.l.b16 %v3257
    %v3437 = vunpack.c.h.b16 %v3257
    %v3438 = vunpack.c.l.b16 %v3258
    %v3439 = vunpack.c.h.b16 %v3258
    %v3440 = vunpack.c.l.b16 %v3259
    %v3441 = vunpack.c.h.b16 %v3259
    %v3442 = vunpack.c.l.b16 %v3260
    %v3443 = vunpack.c.h.b16 %v3260
    %v3444 = vunpack.c.l.b16 %v3261
    %v3445 = vunpack.c.h.b16 %v3261
    %v3446 = vunpack.c.l.b16 %v3262
    %v3447 = vunpack.c.h.b16 %v3262
    %v3448 = vunpack.c.l.b16 %v3263
    %v3449 = vunpack.c.h.b16 %v3263
    %v3450 = vunpack.c.l.b16 %v3264
    %v3451 = vunpack.c.h.b16 %v3264
    %v3452 = vunpack.c.l.b16 %v3265
    %v3453 = vunpack.c.h.b16 %v3265
    %v3454 = vunpack.c.l.b16 %v3266
    %v3455 = vunpack.c.h.b16 %v3266
    %v3456 = vunpack.c.l.b16 %v3267
    %v3457 = vunpack.c.h.b16 %v3267
    %v3458 = vunpack.c.l.b16 %v3268
    %v3459 = vunpack.c.h.b16 %v3268
    %v3460 = vunpack.c.l.b16 %v3269
    %v3461 = vunpack.c.h.b16 %v3269
    %v3462 = vunpack.c.l.b16 %v3270
    %v3463 = vunpack.c.h.b16 %v3270
    %v3464 = vunpack.c.l.b16 %v3271
    %v3465 = vunpack.c.h.b16 %v3271
    %v3466 = vunpack.c.l.b16 %v3272
    %v3467 = vunpack.c.h.b16 %v3272
    %v3468 = vunpack.c.l.b16 %v3273
    %v3469 = vunpack.c.h.b16 %v3273
    %v3470 = vunpack.c.l.b16 %v3274
    %v3471 = vunpack.c.h.b16 %v3274
    %v3472 = vunpack.c.l.b16 %v3275
    %v3473 = vunpack.c.h.b16 %v3275
    %v3474 = vunpack.c.l.b16 %v3276
    %v3475 = vunpack.c.h.b16 %v3276
    %v3476 = vunpack.c.l.b16 %v3277
    %v3477 = vunpack.c.h.b16 %v3277
    %v3478 = vunpack.c.l.b16 %v3278
    %v3479 = vunpack.c.h.b16 %v3278
    %v3480 = vunpack.c.l.b16 %v3279
    %v3481 = vunpack.c.h.b16 %v3279
    %v3482 = vunpack.c.l.b16 %v3280
    %v3483 = vunpack.c.h.b16 %v3280
    %v3484 = vunpack.c.l.b16 %v3281
    %v3485 = vunpack.c.h.b16 %v3281
    %v3486 = vpack.c.b16 %v3360, %v3358
    %v3487 = vpack.c.b16 %v3361, %v3359
    %v3488 = vpack.c.b16 %v3364, %v3362
    %v3489 = vpack.c.b16 %v3365, %v3363
    %v3490 = vpack.c.b16 %v3368, %v3366
    %v3491 = vpack.c.b16 %v3369, %v3367
    %v3492 = vpack.c.b16 %v3372, %v3370
    %v3493 = vpack.c.b16 %v3373, %v3371
    %v3494 = vpack.c.b16 %v3376, %v3374
    %v3495 = vpack.c.b16 %v3377, %v3375
    %v3496 = vpack.c.b16 %v3380, %v3378
    %v3497 = vpack.c.b16 %v3381, %v3379
    %v3498 = vpack.c.b16 %v3384, %v3382
    %v3499 = vpack.c.b16 %v3385, %v3383
    %v3500 = vpack.c.b16 %v3388, %v3386
    %v3501 = vpack.c.b16 %v3389, %v3387
    %v3502 = vpack.c.b16 %v3392, %v3390
    %v3503 = vpack.c.b16 %v3393, %v3391
    %v3504 = vpack.c.b16 %v3396, %v3394
    %v3505 = vpack.c.b16 %v3397, %v3395
    %v3506 = vpack.c.b16 %v3400, %v3398
    %v3507 = vpack.c.b16 %v3401, %v3399
    %v3508 = vpack.c.b16 %v3404, %v3402
    %v3509 = vpack.c.b16 %v3405, %v3403
    %v3510 = vpack.c.b16 %v3408, %v3406
    %v3511 = vpack.c.b16 %v3409, %v3407
    %v3512 = vpack.c.b16 %v3412, %v3410
    %v3513 = vpack.c.b16 %v3413, %v3411
    %v3514 = vpack.c.b16 %v3416, %v3414
    %v3515 = vpack.c.b16 %v3417, %v3415
    %v3516 = vpack.c.b16 %v3420, %v3418
    %v3517 = vpack.c.b16 %v3421, %v3419
    %v3518 = vpack.c.b16 %v3424, %v3422
    %v3519 = vpack.c.b16 %v3425, %v3423
    %v3520 = vpack.c.b16 %v3428, %v3426
    %v3521 = vpack.c.b16 %v3429, %v3427
    %v3522 = vpack.c.b16 %v3432, %v3430
    %v3523 = vpack.c.b16 %v3433, %v3431
    %v3524 = vpack.c.b16 %v3436, %v3434
    %v3525 = vpack.c.b16 %v3437, %v3435
    %v3526 = vpack.c.b16 %v3440, %v3438
    %v3527 = vpack.c.b16 %v3441, %v3439
    %v3528 = vpack.c.b16 %v3444, %v3442
    %v3529 = vpack.c.b16 %v3445, %v3443
    %v3530 = vpack.c.b16 %v3448, %v3446
    %v3531 = vpack.c.b16 %v3449, %v3447
    %v3532 = vpack.c.b16 %v3452, %v3450
    %v3533 = vpack.c.b16 %v3453, %v3451
    %v3534 = vpack.c.b16 %v3456, %v3454
    %v3535 = vpack.c.b16 %v3457, %v3455
    %v3536 = vpack.c.b16 %v3460, %v3458
    %v3537 = vpack.c.b16 %v3461, %v3459
    %v3538 = vpack.c.b16 %v3464, %v3462
    %v3539 = vpack.c.b16 %v3465, %v3463
    %v3540 = vpack.c.b16 %v3468, %v3466
    %v3541 = vpack.c.b16 %v3469, %v3467
    %v3542 = vpack.c.b16 %v3472, %v3470
    %v3543 = vpack.c.b16 %v3473, %v3471
    %v3544 = vpack.c.b16 %v3476, %v3474
    %v3545 = vpack.c.b16 %v3477, %v3475
    %v3546 = vpack.c.b16 %v3480, %v3478
    %v3547 = vpack.c.b16 %v3481, %v3479
    %v3548 = vpack.c.b16 %v3484, %v3482
    %v3549 = vpack.c.b16 %v3485, %v3483
    %3614 = vmatprep.subr.bf16.mxu0 %v3501
    %3615 = vmatpush1.bf16.msra.mxu0 %v3500
    %3616 = vmatprep.subr.bf16.mxu0 %v3499
    %3617 = vmatpush1.bf16.msra.mxu0 %v3498
    %3618 = vmatprep.subr.bf16.mxu0 %v3497
    %3619 = vmatpush1.bf16.msra.mxu0 %v3496
    %3620 = vmatprep.subr.bf16.mxu0 %v3495
    %3621 = vmatpush1.bf16.msra.mxu0 %v3494
    %3622 = vmatprep.subr.bf16.mxu0 %v3493
    %3623 = vmatpush1.bf16.msra.mxu0 %v3492
    %3624 = vmatprep.subr.bf16.mxu0 %v3491
    %3625 = vmatpush1.bf16.msra.mxu0 %v3490
    %3626 = vmatprep.subr.bf16.mxu0 %v3489
    %3627 = vmatpush1.bf16.msra.mxu0 %v3488
    %3628 = vmatprep.subr.bf16.mxu0 %v3487
    %3629 = vmatpush1.bf16.msra.mxu0 %v3486
    %3630 = vmatprep.subr.bf16.mxu0 %v3517
    %3631 = vmatpush2.bf16.msra.mxu0 %v3516
    %3632 = vmatprep.subr.bf16.mxu0 %v3515
    %3633 = vmatpush2.bf16.msra.mxu0 %v3514
    %3634 = vmatprep.subr.bf16.mxu0 %v3513
    %3635 = vmatpush2.bf16.msra.mxu0 %v3512
    %3636 = vmatprep.subr.bf16.mxu0 %v3511
    %3637 = vmatpush2.bf16.msra.mxu0 %v3510
    %3638 = vmatprep.subr.bf16.mxu0 %v3509
    %3639 = vmatpush2.bf16.msra.mxu0 %v3508
    %3640 = vmatprep.subr.bf16.mxu0 %v3507
    %3641 = vmatpush2.bf16.msra.mxu0 %v3506
    %3642 = vmatprep.subr.bf16.mxu0 %v3505
    %3643 = vmatpush2.bf16.msra.mxu0 %v3504
    %3644 = vmatprep.subr.bf16.mxu0 %v3503
    %3645 = vmatpush2.bf16.msra.mxu0 %v3502
    %3646 = vmatprep.mubr.bf16.mxu0 %v3123
    %3647 = vmatmul.mubr.bf16.gmra.mxu0 %v3122
    %v3648 = vpop.f32.mrf.mxu0
    %v3649 = vadd.f32 %v3287, %v3648
    %v3650 = vpop.f32.mrf.mxu0
    %v3651 = vadd.f32 %v3291, %v3650
    %v3652 = vpop.f32.mrf.mxu0
    %v3653 = vadd.f32 %v3287, %v3652
    %v3654 = vpop.f32.mrf.mxu0
    %v3655 = vadd.f32 %v3291, %v3654
    %3656 = vmatprep.mubr.bf16.mxu0 %v3127
    %3657 = vmatmul.mubr.bf16.gmra.mxu0 %v3126
    %v3658 = vpop.f32.mrf.mxu0
    %v3659 = vadd.f32 %v3287, %v3658
    %v3660 = vpop.f32.mrf.mxu0
    %v3661 = vadd.f32 %v3291, %v3660
    %v3662 = vpop.f32.mrf.mxu0
    %v3663 = vadd.f32 %v3287, %v3662
    %v3664 = vpop.f32.mrf.mxu0
    %v3665 = vadd.f32 %v3291, %v3664
    %3666 = vmatprep.mubr.bf16.mxu0 %v3131
    %3667 = vmatmul.mubr.bf16.gmra.mxu0 %v3130
    %v3668 = vpop.f32.mrf.mxu0
    %v3669 = vadd.f32 %v3287, %v3668
    %v3670 = vpop.f32.mrf.mxu0
    %v3671 = vadd.f32 %v3291, %v3670
    %v3672 = vpop.f32.mrf.mxu0
    %v3673 = vadd.f32 %v3287, %v3672
    %v3674 = vpop.f32.mrf.mxu0
    %v3675 = vadd.f32 %v3291, %v3674
    %3676 = vmatprep.mubr.bf16.mxu0 %v3135
    %3677 = vmatmul.mubr.bf16.gmra.mxu0 %v3134
    %v3678 = vpop.f32.mrf.mxu0
    %v3679 = vadd.f32 %v3287, %v3678
    %v3680 = vpop.f32.mrf.mxu0
    %v3681 = vadd.f32 %v3291, %v3680
    %v3682 = vpop.f32.mrf.mxu0
    %v3683 = vadd.f32 %v3287, %v3682
    %v3684 = vpop.f32.mrf.mxu0
    %v3685 = vadd.f32 %v3291, %v3684
    %3686 = vmatprep.mubr.bf16.mxu0 %v3139
    %3687 = vmatmul.mubr.bf16.gmra.mxu0 %v3138
    %v3688 = vpop.f32.mrf.mxu0
    %v3689 = vadd.f32 %v3287, %v3688
    %v3690 = vpop.f32.mrf.mxu0
    %v3691 = vadd.f32 %v3291, %v3690
    %v3692 = vpop.f32.mrf.mxu0
    %v3693 = vadd.f32 %v3287, %v3692
    %v3694 = vpop.f32.mrf.mxu0
    %v3695 = vadd.f32 %v3291, %v3694
    %3696 = vmatprep.mubr.bf16.mxu0 %v3143
    %3697 = vmatmul.mubr.bf16.gmra.mxu0 %v3142
    %v3698 = vpop.f32.mrf.mxu0
    %v3699 = vadd.f32 %v3287, %v3698
    %v3700 = vpop.f32.mrf.mxu0
    %v3701 = vadd.f32 %v3291, %v3700
    %v3702 = vpop.f32.mrf.mxu0
    %v3703 = vadd.f32 %v3287, %v3702
    %v3704 = vpop.f32.mrf.mxu0
    %v3705 = vadd.f32 %v3291, %v3704
    %3706 = vmatprep.mubr.bf16.mxu0 %v3147
    %3707 = vmatmul.mubr.bf16.gmra.mxu0 %v3146
    %v3708 = vpop.f32.mrf.mxu0
    %v3709 = vadd.f32 %v3287, %v3708
    %v3710 = vpop.f32.mrf.mxu0
    %v3711 = vadd.f32 %v3291, %v3710
    %v3712 = vpop.f32.mrf.mxu0
    %v3713 = vadd.f32 %v3287, %v3712
    %v3714 = vpop.f32.mrf.mxu0
    %v3715 = vadd.f32 %v3291, %v3714
    %3716 = vmatprep.mubr.bf16.mxu0 %v3151
    %3717 = vmatmul.mubr.bf16.gmra.mxu0 %v3150
    %v3718 = vpop.f32.mrf.mxu0
    %v3719 = vadd.f32 %v3287, %v3718
    %v3720 = vpop.f32.mrf.mxu0
    %v3721 = vadd.f32 %v3291, %v3720
    %v3722 = vpop.f32.mrf.mxu0
    %v3723 = vadd.f32 %v3287, %v3722
    %v3724 = vpop.f32.mrf.mxu0
    %v3725 = vadd.f32 %v3291, %v3724
    %3726 = vmatprep.mubr.bf16.mxu0 %v3155
    %3727 = vmatmul.mubr.bf16.gmra.mxu0 %v3154
    %v3728 = vpop.f32.mrf.mxu0
    %v3729 = vadd.f32 %v3287, %v3728
    %v3730 = vpop.f32.mrf.mxu0
    %v3731 = vadd.f32 %v3291, %v3730
    %v3732 = vpop.f32.mrf.mxu0
    %v3733 = vadd.f32 %v3287, %v3732
    %v3734 = vpop.f32.mrf.mxu0
    %v3735 = vadd.f32 %v3291, %v3734
    %3736 = vmatprep.mubr.bf16.mxu0 %v3159
    %3737 = vmatmul.mubr.bf16.gmra.mxu0 %v3158
    %v3738 = vpop.f32.mrf.mxu0
    %v3739 = vadd.f32 %v3287, %v3738
    %v3740 = vpop.f32.mrf.mxu0
    %v3741 = vadd.f32 %v3291, %v3740
    %v3742 = vpop.f32.mrf.mxu0
    %v3743 = vadd.f32 %v3287, %v3742
    %v3744 = vpop.f32.mrf.mxu0
    %v3745 = vadd.f32 %v3291, %v3744
    %3746 = vmatprep.mubr.bf16.mxu0 %v3163
    %3747 = vmatmul.mubr.bf16.gmra.mxu0 %v3162
    %v3748 = vpop.f32.mrf.mxu0
    %v3749 = vadd.f32 %v3287, %v3748
    %v3750 = vpop.f32.mrf.mxu0
    %v3751 = vadd.f32 %v3291, %v3750
    %v3752 = vpop.f32.mrf.mxu0
    %v3753 = vadd.f32 %v3287, %v3752
    %v3754 = vpop.f32.mrf.mxu0
    %v3755 = vadd.f32 %v3291, %v3754
    %3756 = vmatprep.mubr.bf16.mxu0 %v3167
    %3757 = vmatmul.mubr.bf16.gmra.mxu0 %v3166
    %v3758 = vpop.f32.mrf.mxu0
    %v3759 = vadd.f32 %v3287, %v3758
    %v3760 = vpop.f32.mrf.mxu0
    %v3761 = vadd.f32 %v3291, %v3760
    %v3762 = vpop.f32.mrf.mxu0
    %v3763 = vadd.f32 %v3287, %v3762
    %v3764 = vpop.f32.mrf.mxu0
    %v3765 = vadd.f32 %v3291, %v3764
    %3766 = vmatprep.mubr.bf16.mxu0 %v3171
    %3767 = vmatmul.mubr.bf16.gmra.mxu0 %v3170
    %v3768 = vpop.f32.mrf.mxu0
    %v3769 = vadd.f32 %v3287, %v3768
    %v3770 = vpop.f32.mrf.mxu0
    %v3771 = vadd.f32 %v3291, %v3770
    %v3772 = vpop.f32.mrf.mxu0
    %v3773 = vadd.f32 %v3287, %v3772
    %v3774 = vpop.f32.mrf.mxu0
    %v3775 = vadd.f32 %v3291, %v3774
    %3776 = vmatprep.mubr.bf16.mxu0 %v3175
    %3777 = vmatmul.mubr.bf16.gmra.mxu0 %v3174
    %v3778 = vpop.f32.mrf.mxu0
    %v3779 = vadd.f32 %v3287, %v3778
    %v3780 = vpop.f32.mrf.mxu0
    %v3781 = vadd.f32 %v3291, %v3780
    %v3782 = vpop.f32.mrf.mxu0
    %v3783 = vadd.f32 %v3287, %v3782
    %v3784 = vpop.f32.mrf.mxu0
    %v3785 = vadd.f32 %v3291, %v3784
    %3786 = vmatprep.mubr.bf16.mxu0 %v3179
    %3787 = vmatmul.mubr.bf16.gmra.mxu0 %v3178
    %v3788 = vpop.f32.mrf.mxu0
    %v3789 = vadd.f32 %v3287, %v3788
    %v3790 = vpop.f32.mrf.mxu0
    %v3791 = vadd.f32 %v3291, %v3790
    %v3792 = vpop.f32.mrf.mxu0
    %v3793 = vadd.f32 %v3287, %v3792
    %v3794 = vpop.f32.mrf.mxu0
    %v3795 = vadd.f32 %v3291, %v3794
    %3796 = vmatprep.mubr.bf16.mxu0 %v3183
    %3797 = vmatmul.mubr.bf16.gmra.mxu0 %v3182
    %v3798 = vpop.f32.mrf.mxu0
    %v3799 = vadd.f32 %v3287, %v3798
    %v3800 = vpop.f32.mrf.mxu0
    %v3801 = vadd.f32 %v3291, %v3800
    %v3802 = vpop.f32.mrf.mxu0
    %v3803 = vadd.f32 %v3287, %v3802
    %v3804 = vpop.f32.mrf.mxu0
    %v3805 = vadd.f32 %v3291, %v3804
    %3806 = vmatprep.mubr.bf16.mxu0 %v3187
    %3807 = vmatmul.mubr.bf16.gmra.mxu0 %v3186
    %v3808 = vpop.f32.mrf.mxu0
    %v3809 = vadd.f32 %v3287, %v3808
    %v3810 = vpop.f32.mrf.mxu0
    %v3811 = vadd.f32 %v3291, %v3810
    %v3812 = vpop.f32.mrf.mxu0
    %v3813 = vadd.f32 %v3287, %v3812
    %v3814 = vpop.f32.mrf.mxu0
    %v3815 = vadd.f32 %v3291, %v3814
    %3816 = vmatprep.mubr.bf16.mxu0 %v3191
    %3817 = vmatmul.mubr.bf16.gmra.mxu0 %v3190
    %v3818 = vpop.f32.mrf.mxu0
    %v3819 = vadd.f32 %v3287, %v3818
    %v3820 = vpop.f32.mrf.mxu0
    %v3821 = vadd.f32 %v3291, %v3820
    %v3822 = vpop.f32.mrf.mxu0
    %v3823 = vadd.f32 %v3287, %v3822
    %v3824 = vpop.f32.mrf.mxu0
    %v3825 = vadd.f32 %v3291, %v3824
    %3826 = vmatprep.mubr.bf16.mxu0 %v3195
    %3827 = vmatmul.mubr.bf16.gmra.mxu0 %v3194
    %v3828 = vpop.f32.mrf.mxu0
    %v3829 = vadd.f32 %v3287, %v3828
    %v3830 = vpop.f32.mrf.mxu0
    %v3831 = vadd.f32 %v3291, %v3830
    %v3832 = vpop.f32.mrf.mxu0
    %v3833 = vadd.f32 %v3287, %v3832
    %v3834 = vpop.f32.mrf.mxu0
    %v3835 = vadd.f32 %v3291, %v3834
    %3836 = vmatprep.mubr.bf16.mxu0 %v3199
    %3837 = vmatmul.mubr.bf16.gmra.mxu0 %v3198
    %v3838 = vpop.f32.mrf.mxu0
    %v3839 = vadd.f32 %v3287, %v3838
    %v3840 = vpop.f32.mrf.mxu0
    %v3841 = vadd.f32 %v3291, %v3840
    %v3842 = vpop.f32.mrf.mxu0
    %v3843 = vadd.f32 %v3287, %v3842
    %v3844 = vpop.f32.mrf.mxu0
    %v3845 = vadd.f32 %v3291, %v3844
    %3846 = vmatprep.mubr.bf16.mxu0 %v3203
    %3847 = vmatmul.mubr.bf16.gmra.mxu0 %v3202
    %v3848 = vpop.f32.mrf.mxu0
    %v3849 = vadd.f32 %v3287, %v3848
    %v3850 = vpop.f32.mrf.mxu0
    %v3851 = vadd.f32 %v3291, %v3850
    %v3852 = vpop.f32.mrf.mxu0
    %v3853 = vadd.f32 %v3287, %v3852
    %v3854 = vpop.f32.mrf.mxu0
    %v3855 = vadd.f32 %v3291, %v3854
    %3856 = vmatprep.mubr.bf16.mxu0 %v3207
    %3857 = vmatmul.mubr.bf16.gmra.mxu0 %v3206
    %v3858 = vpop.f32.mrf.mxu0
    %v3859 = vadd.f32 %v3287, %v3858
    %v3860 = vpop.f32.mrf.mxu0
    %v3861 = vadd.f32 %v3291, %v3860
    %v3862 = vpop.f32.mrf.mxu0
    %v3863 = vadd.f32 %v3287, %v3862
    %v3864 = vpop.f32.mrf.mxu0
    %v3865 = vadd.f32 %v3291, %v3864
    %3866 = vmatprep.mubr.bf16.mxu0 %v3211
    %3867 = vmatmul.mubr.bf16.gmra.mxu0 %v3210
    %v3868 = vpop.f32.mrf.mxu0
    %v3869 = vadd.f32 %v3287, %v3868
    %v3870 = vpop.f32.mrf.mxu0
    %v3871 = vadd.f32 %v3291, %v3870
    %v3872 = vpop.f32.mrf.mxu0
    %v3873 = vadd.f32 %v3287, %v3872
    %v3874 = vpop.f32.mrf.mxu0
    %v3875 = vadd.f32 %v3291, %v3874
    %3876 = vmatprep.mubr.bf16.mxu0 %v3215
    %3877 = vmatmul.mubr.bf16.gmra.mxu0 %v3214
    %v3878 = vpop.f32.mrf.mxu0
    %v3879 = vadd.f32 %v3287, %v3878
    %v3880 = vpop.f32.mrf.mxu0
    %v3881 = vadd.f32 %v3291, %v3880
    %v3882 = vpop.f32.mrf.mxu0
    %v3883 = vadd.f32 %v3287, %v3882
    %v3884 = vpop.f32.mrf.mxu0
    %v3885 = vadd.f32 %v3291, %v3884
    %3886 = vdwg.mxu0
    %3887 = vmatprep.subr.bf16.mxu0 %v3533
    %3888 = vmatpush1.bf16.msra.mxu0 %v3532
    %3889 = vmatprep.subr.bf16.mxu0 %v3531
    %3890 = vmatpush1.bf16.msra.mxu0 %v3530
    %3891 = vmatprep.subr.bf16.mxu0 %v3529
    %3892 = vmatpush1.bf16.msra.mxu0 %v3528
    %3893 = vmatprep.subr.bf16.mxu0 %v3527
    %3894 = vmatpush1.bf16.msra.mxu0 %v3526
    %3895 = vmatprep.subr.bf16.mxu0 %v3525
    %3896 = vmatpush1.bf16.msra.mxu0 %v3524
    %3897 = vmatprep.subr.bf16.mxu0 %v3523
    %3898 = vmatpush1.bf16.msra.mxu0 %v3522
    %3899 = vmatprep.subr.bf16.mxu0 %v3521
    %3900 = vmatpush1.bf16.msra.mxu0 %v3520
    %3901 = vmatprep.subr.bf16.mxu0 %v3519
    %3902 = vmatpush1.bf16.msra.mxu0 %v3518
    %3903 = vmatprep.subr.bf16.mxu0 %v3549
    %3904 = vmatpush2.bf16.msra.mxu0 %v3548
    %3905 = vmatprep.subr.bf16.mxu0 %v3547
    %3906 = vmatpush2.bf16.msra.mxu0 %v3546
    %3907 = vmatprep.subr.bf16.mxu0 %v3545
    %3908 = vmatpush2.bf16.msra.mxu0 %v3544
    %3909 = vmatprep.subr.bf16.mxu0 %v3543
    %3910 = vmatpush2.bf16.msra.mxu0 %v3542
    %3911 = vmatprep.subr.bf16.mxu0 %v3541
    %3912 = vmatpush2.bf16.msra.mxu0 %v3540
    %3913 = vmatprep.subr.bf16.mxu0 %v3539
    %3914 = vmatpush2.bf16.msra.mxu0 %v3538
    %3915 = vmatprep.subr.bf16.mxu0 %v3537
    %3916 = vmatpush2.bf16.msra.mxu0 %v3536
    %3917 = vmatprep.subr.bf16.mxu0 %v3535
    %3918 = vmatpush2.bf16.msra.mxu0 %v3534
    %3919 = vmatprep.mubr.bf16.mxu0 %v3125
    %3920 = vmatmul.mubr.bf16.gmra.mxu0 %v3124
    %v3921 = vpop.f32.mrf.mxu0
    %v3922 = vadd.f32 %v3649, %v3921
    %v3923 = vpop.f32.mrf.mxu0
    %v3924 = vadd.f32 %v3651, %v3923
    %v3925 = vpop.f32.mrf.mxu0
    %v3926 = vadd.f32 %v3653, %v3925
    %v3927 = vpop.f32.mrf.mxu0
    %v3928 = vadd.f32 %v3655, %v3927
    %3929 = vmatprep.mubr.bf16.mxu0 %v3129
    %3930 = vmatmul.mubr.bf16.gmra.mxu0 %v3128
    %v3931 = vpop.f32.mrf.mxu0
    %v3932 = vadd.f32 %v3659, %v3931
    %v3933 = vpop.f32.mrf.mxu0
    %v3934 = vadd.f32 %v3661, %v3933
    %v3935 = vpop.f32.mrf.mxu0
    %v3936 = vadd.f32 %v3663, %v3935
    %v3937 = vpop.f32.mrf.mxu0
    %v3938 = vadd.f32 %v3665, %v3937
    %3939 = vmatprep.mubr.bf16.mxu0 %v3133
    %3940 = vmatmul.mubr.bf16.gmra.mxu0 %v3132
    %v3941 = vpop.f32.mrf.mxu0
    %v3942 = vadd.f32 %v3669, %v3941
    %v3943 = vpop.f32.mrf.mxu0
    %v3944 = vadd.f32 %v3671, %v3943
    %v3945 = vpop.f32.mrf.mxu0
    %v3946 = vadd.f32 %v3673, %v3945
    %v3947 = vpop.f32.mrf.mxu0
    %v3948 = vadd.f32 %v3675, %v3947
    %3949 = vmatprep.mubr.bf16.mxu0 %v3137
    %3950 = vmatmul.mubr.bf16.gmra.mxu0 %v3136
    %v3951 = vpop.f32.mrf.mxu0
    %v3952 = vadd.f32 %v3679, %v3951
    %v3953 = vpop.f32.mrf.mxu0
    %v3954 = vadd.f32 %v3681, %v3953
    %v3955 = vpop.f32.mrf.mxu0
    %v3956 = vadd.f32 %v3683, %v3955
    %v3957 = vpop.f32.mrf.mxu0
    %v3958 = vadd.f32 %v3685, %v3957
    %3959 = vmatprep.mubr.bf16.mxu0 %v3141
    %3960 = vmatmul.mubr.bf16.gmra.mxu0 %v3140
    %v3961 = vpop.f32.mrf.mxu0
    %v3962 = vadd.f32 %v3689, %v3961
    %v3963 = vpop.f32.mrf.mxu0
    %v3964 = vadd.f32 %v3691, %v3963
    %v3965 = vpop.f32.mrf.mxu0
    %v3966 = vadd.f32 %v3693, %v3965
    %v3967 = vpop.f32.mrf.mxu0
    %v3968 = vadd.f32 %v3695, %v3967
    %3969 = vmatprep.mubr.bf16.mxu0 %v3145
    %3970 = vmatmul.mubr.bf16.gmra.mxu0 %v3144
    %v3971 = vpop.f32.mrf.mxu0
    %v3972 = vadd.f32 %v3699, %v3971
    %v3973 = vpop.f32.mrf.mxu0
    %v3974 = vadd.f32 %v3701, %v3973
    %v3975 = vpop.f32.mrf.mxu0
    %v3976 = vadd.f32 %v3703, %v3975
    %v3977 = vpop.f32.mrf.mxu0
    %v3978 = vadd.f32 %v3705, %v3977
    %3979 = vmatprep.mubr.bf16.mxu0 %v3149
    %3980 = vmatmul.mubr.bf16.gmra.mxu0 %v3148
    %v3981 = vpop.f32.mrf.mxu0
    %v3982 = vadd.f32 %v3709, %v3981
    %v3983 = vpop.f32.mrf.mxu0
    %v3984 = vadd.f32 %v3711, %v3983
    %v3985 = vpop.f32.mrf.mxu0
    %v3986 = vadd.f32 %v3713, %v3985
    %v3987 = vpop.f32.mrf.mxu0
    %v3988 = vadd.f32 %v3715, %v3987
    %3989 = vmatprep.mubr.bf16.mxu0 %v3153
    %3990 = vmatmul.mubr.bf16.gmra.mxu0 %v3152
    %v3991 = vpop.f32.mrf.mxu0
    %v3992 = vadd.f32 %v3719, %v3991
    %v3993 = vpop.f32.mrf.mxu0
    %v3994 = vadd.f32 %v3721, %v3993
    %v3995 = vpop.f32.mrf.mxu0
    %v3996 = vadd.f32 %v3723, %v3995
    %v3997 = vpop.f32.mrf.mxu0
    %v3998 = vadd.f32 %v3725, %v3997
    %3999 = vmatprep.mubr.bf16.mxu0 %v3157
    %4000 = vmatmul.mubr.bf16.gmra.mxu0 %v3156
    %v4001 = vpop.f32.mrf.mxu0
    %v4002 = vadd.f32 %v3729, %v4001
    %v4003 = vpop.f32.mrf.mxu0
    %v4004 = vadd.f32 %v3731, %v4003
    %v4005 = vpop.f32.mrf.mxu0
    %v4006 = vadd.f32 %v3733, %v4005
    %v4007 = vpop.f32.mrf.mxu0
    %v4008 = vadd.f32 %v3735, %v4007
    %4009 = vmatprep.mubr.bf16.mxu0 %v3161
    %4010 = vmatmul.mubr.bf16.gmra.mxu0 %v3160
    %v4011 = vpop.f32.mrf.mxu0
    %v4012 = vadd.f32 %v3739, %v4011
    %v4013 = vpop.f32.mrf.mxu0
    %v4014 = vadd.f32 %v3741, %v4013
    %v4015 = vpop.f32.mrf.mxu0
    %v4016 = vadd.f32 %v3743, %v4015
    %v4017 = vpop.f32.mrf.mxu0
    %v4018 = vadd.f32 %v3745, %v4017
    %4019 = vmatprep.mubr.bf16.mxu0 %v3165
    %4020 = vmatmul.mubr.bf16.gmra.mxu0 %v3164
    %v4021 = vpop.f32.mrf.mxu0
    %v4022 = vadd.f32 %v3749, %v4021
    %v4023 = vpop.f32.mrf.mxu0
    %v4024 = vadd.f32 %v3751, %v4023
    %v4025 = vpop.f32.mrf.mxu0
    %v4026 = vadd.f32 %v3753, %v4025
    %v4027 = vpop.f32.mrf.mxu0
    %v4028 = vadd.f32 %v3755, %v4027
    %4029 = vmatprep.mubr.bf16.mxu0 %v3169
    %4030 = vmatmul.mubr.bf16.gmra.mxu0 %v3168
    %v4031 = vpop.f32.mrf.mxu0
    %v4032 = vadd.f32 %v3759, %v4031
    %v4033 = vpop.f32.mrf.mxu0
    %v4034 = vadd.f32 %v3761, %v4033
    %v4035 = vpop.f32.mrf.mxu0
    %v4036 = vadd.f32 %v3763, %v4035
    %v4037 = vpop.f32.mrf.mxu0
    %v4038 = vadd.f32 %v3765, %v4037
    %4039 = vmatprep.mubr.bf16.mxu0 %v3173
    %4040 = vmatmul.mubr.bf16.gmra.mxu0 %v3172
    %v4041 = vpop.f32.mrf.mxu0
    %v4042 = vadd.f32 %v3769, %v4041
    %v4043 = vpop.f32.mrf.mxu0
    %v4044 = vadd.f32 %v3771, %v4043
    %v4045 = vpop.f32.mrf.mxu0
    %v4046 = vadd.f32 %v3773, %v4045
    %v4047 = vpop.f32.mrf.mxu0
    %v4048 = vadd.f32 %v3775, %v4047
    %4049 = vmatprep.mubr.bf16.mxu0 %v3177
    %4050 = vmatmul.mubr.bf16.gmra.mxu0 %v3176
    %v4051 = vpop.f32.mrf.mxu0
    %v4052 = vadd.f32 %v3779, %v4051
    %v4053 = vpop.f32.mrf.mxu0
    %v4054 = vadd.f32 %v3781, %v4053
    %v4055 = vpop.f32.mrf.mxu0
    %v4056 = vadd.f32 %v3783, %v4055
    %v4057 = vpop.f32.mrf.mxu0
    %v4058 = vadd.f32 %v3785, %v4057
    %4059 = vmatprep.mubr.bf16.mxu0 %v3181
    %4060 = vmatmul.mubr.bf16.gmra.mxu0 %v3180
    %v4061 = vpop.f32.mrf.mxu0
    %v4062 = vadd.f32 %v3789, %v4061
    %v4063 = vpop.f32.mrf.mxu0
    %v4064 = vadd.f32 %v3791, %v4063
    %v4065 = vpop.f32.mrf.mxu0
    %v4066 = vadd.f32 %v3793, %v4065
    %v4067 = vpop.f32.mrf.mxu0
    %v4068 = vadd.f32 %v3795, %v4067
    %4069 = vmatprep.mubr.bf16.mxu0 %v3185
    %4070 = vmatmul.mubr.bf16.gmra.mxu0 %v3184
    %v4071 = vpop.f32.mrf.mxu0
    %v4072 = vadd.f32 %v3799, %v4071
    %v4073 = vpop.f32.mrf.mxu0
    %v4074 = vadd.f32 %v3801, %v4073
    %v4075 = vpop.f32.mrf.mxu0
    %v4076 = vadd.f32 %v3803, %v4075
    %v4077 = vpop.f32.mrf.mxu0
    %v4078 = vadd.f32 %v3805, %v4077
    %4079 = vmatprep.mubr.bf16.mxu0 %v3189
    %4080 = vmatmul.mubr.bf16.gmra.mxu0 %v3188
    %v4081 = vpop.f32.mrf.mxu0
    %v4082 = vadd.f32 %v3809, %v4081
    %v4083 = vpop.f32.mrf.mxu0
    %v4084 = vadd.f32 %v3811, %v4083
    %v4085 = vpop.f32.mrf.mxu0
    %v4086 = vadd.f32 %v3813, %v4085
    %v4087 = vpop.f32.mrf.mxu0
    %v4088 = vadd.f32 %v3815, %v4087
    %4089 = vmatprep.mubr.bf16.mxu0 %v3193
    %4090 = vmatmul.mubr.bf16.gmra.mxu0 %v3192
    %v4091 = vpop.f32.mrf.mxu0
    %v4092 = vadd.f32 %v3819, %v4091
    %v4093 = vpop.f32.mrf.mxu0
    %v4094 = vadd.f32 %v3821, %v4093
    %v4095 = vpop.f32.mrf.mxu0
    %v4096 = vadd.f32 %v3823, %v4095
    %v4097 = vpop.f32.mrf.mxu0
    %v4098 = vadd.f32 %v3825, %v4097
    %4099 = vmatprep.mubr.bf16.mxu0 %v3197
    %4100 = vmatmul.mubr.bf16.gmra.mxu0 %v3196
    %v4101 = vpop.f32.mrf.mxu0
    %v4102 = vadd.f32 %v3829, %v4101
    %v4103 = vpop.f32.mrf.mxu0
    %v4104 = vadd.f32 %v3831, %v4103
    %v4105 = vpop.f32.mrf.mxu0
    %v4106 = vadd.f32 %v3833, %v4105
    %v4107 = vpop.f32.mrf.mxu0
    %v4108 = vadd.f32 %v3835, %v4107
    %4109 = vmatprep.mubr.bf16.mxu0 %v3201
    %4110 = vmatmul.mubr.bf16.gmra.mxu0 %v3200
    %v4111 = vpop.f32.mrf.mxu0
    %v4112 = vadd.f32 %v3839, %v4111
    %v4113 = vpop.f32.mrf.mxu0
    %v4114 = vadd.f32 %v3841, %v4113
    %v4115 = vpop.f32.mrf.mxu0
    %v4116 = vadd.f32 %v3843, %v4115
    %v4117 = vpop.f32.mrf.mxu0
    %v4118 = vadd.f32 %v3845, %v4117
    %4119 = vmatprep.mubr.bf16.mxu0 %v3205
    %4120 = vmatmul.mubr.bf16.gmra.mxu0 %v3204
    %v4121 = vpop.f32.mrf.mxu0
    %v4122 = vadd.f32 %v3849, %v4121
    %v4123 = vpop.f32.mrf.mxu0
    %v4124 = vadd.f32 %v3851, %v4123
    %v4125 = vpop.f32.mrf.mxu0
    %v4126 = vadd.f32 %v3853, %v4125
    %v4127 = vpop.f32.mrf.mxu0
    %v4128 = vadd.f32 %v3855, %v4127
    %4129 = vmatprep.mubr.bf16.mxu0 %v3209
    %4130 = vmatmul.mubr.bf16.gmra.mxu0 %v3208
    %v4131 = vpop.f32.mrf.mxu0
    %v4132 = vadd.f32 %v3859, %v4131
    %v4133 = vpop.f32.mrf.mxu0
    %v4134 = vadd.f32 %v3861, %v4133
    %v4135 = vpop.f32.mrf.mxu0
    %v4136 = vadd.f32 %v3863, %v4135
    %v4137 = vpop.f32.mrf.mxu0
    %v4138 = vadd.f32 %v3865, %v4137
    %4139 = vmatprep.mubr.bf16.mxu0 %v3213
    %4140 = vmatmul.mubr.bf16.gmra.mxu0 %v3212
    %v4141 = vpop.f32.mrf.mxu0
    %v4142 = vadd.f32 %v3869, %v4141
    %v4143 = vpop.f32.mrf.mxu0
    %v4144 = vadd.f32 %v3871, %v4143
    %v4145 = vpop.f32.mrf.mxu0
    %v4146 = vadd.f32 %v3873, %v4145
    %v4147 = vpop.f32.mrf.mxu0
    %v4148 = vadd.f32 %v3875, %v4147
    %4149 = vmatprep.mubr.bf16.mxu0 %v3217
    %4150 = vmatmul.mubr.bf16.gmra.mxu0 %v3216
    %v4151 = vpop.f32.mrf.mxu0
    %v4152 = vadd.f32 %v3879, %v4151
    %v4153 = vpop.f32.mrf.mxu0
    %v4154 = vadd.f32 %v3881, %v4153
    %v4155 = vpop.f32.mrf.mxu0
    %v4156 = vadd.f32 %v3883, %v4155
    %v4157 = vpop.f32.mrf.mxu0
    %v4158 = vadd.f32 %v3885, %v4157
    %4159 = vdwg.mxu0
    %v4160 = vadd.f32 %v3922, %v80
    %v4161 = vadd.f32 %v3924, %v81
    %v4162 = vadd.f32 %v3926, %v82
    %v4163 = vadd.f32 %v3928, %v83
    %v4164 = vadd.f32 %v3932, %v84
    %v4165 = vadd.f32 %v3934, %v85
    %v4166 = vadd.f32 %v3936, %v86
    %v4167 = vadd.f32 %v3938, %v87
    %v4168 = vadd.f32 %v3942, %v88
    %v4169 = vadd.f32 %v3944, %v89
    %v4170 = vadd.f32 %v3946, %v90
    %v4171 = vadd.f32 %v3948, %v91
    %v4172 = vadd.f32 %v3952, %v92
    %v4173 = vadd.f32 %v3954, %v93
    %v4174 = vadd.f32 %v3956, %v94
    %v4175 = vadd.f32 %v3958, %v95
    %v4176 = vadd.f32 %v3962, %v96
    %v4177 = vadd.f32 %v3964, %v97
    %v4178 = vadd.f32 %v3966, %v98
    %v4179 = vadd.f32 %v3968, %v99
    %v4180 = vadd.f32 %v3972, %v100
    %v4181 = vadd.f32 %v3974, %v101
    %v4182 = vadd.f32 %v3976, %v102
    %v4183 = vadd.f32 %v3978, %v103
    %v4184 = vadd.f32 %v3982, %v104
    %v4185 = vadd.f32 %v3984, %v105
    %v4186 = vadd.f32 %v3986, %v106
    %v4187 = vadd.f32 %v3988, %v107
    %v4188 = vadd.f32 %v3992, %v108
    %v4189 = vadd.f32 %v3994, %v109
    %v4190 = vadd.f32 %v3996, %v110
    %v4191 = vadd.f32 %v3998, %v111
    %v4192 = vadd.f32 %v4002, %v112
    %v4193 = vadd.f32 %v4004, %v113
    %v4194 = vadd.f32 %v4006, %v114
    %v4195 = vadd.f32 %v4008, %v115
    %v4196 = vadd.f32 %v4012, %v116
    %v4197 = vadd.f32 %v4014, %v117
    %v4198 = vadd.f32 %v4016, %v118
    %v4199 = vadd.f32 %v4018, %v119
    %v4200 = vadd.f32 %v4022, %v120
    %v4201 = vadd.f32 %v4024, %v121
    %v4202 = vadd.f32 %v4026, %v122
    %v4203 = vadd.f32 %v4028, %v123
    %v4204 = vadd.f32 %v4032, %v124
    %v4205 = vadd.f32 %v4034, %v125
    %v4206 = vadd.f32 %v4036, %v126
    %v4207 = vadd.f32 %v4038, %v127
    %v4208 = vadd.f32 %v4042, %v128
    %v4209 = vadd.f32 %v4044, %v129
    %v4210 = vadd.f32 %v4046, %v130
    %v4211 = vadd.f32 %v4048, %v131
    %v4212 = vadd.f32 %v4052, %v132
    %v4213 = vadd.f32 %v4054, %v133
    %v4214 = vadd.f32 %v4056, %v134
    %v4215 = vadd.f32 %v4058, %v135
    %v4216 = vadd.f32 %v4062, %v136
    %v4217 = vadd.f32 %v4064, %v137
    %v4218 = vadd.f32 %v4066, %v138
    %v4219 = vadd.f32 %v4068, %v139
    %v4220 = vadd.f32 %v4072, %v140
    %v4221 = vadd.f32 %v4074, %v141
    %v4222 = vadd.f32 %v4076, %v142
    %v4223 = vadd.f32 %v4078, %v143
    %v4224 = vadd.f32 %v4082, %v144
    %v4225 = vadd.f32 %v4084, %v145
    %v4226 = vadd.f32 %v4086, %v146
    %v4227 = vadd.f32 %v4088, %v147
    %v4228 = vadd.f32 %v4092, %v148
    %v4229 = vadd.f32 %v4094, %v149
    %v4230 = vadd.f32 %v4096, %v150
    %v4231 = vadd.f32 %v4098, %v151
    %v4232 = vadd.f32 %v4102, %v152
    %v4233 = vadd.f32 %v4104, %v153
    %v4234 = vadd.f32 %v4106, %v154
    %v4235 = vadd.f32 %v4108, %v155
    %v4236 = vadd.f32 %v4112, %v156
    %v4237 = vadd.f32 %v4114, %v157
    %v4238 = vadd.f32 %v4116, %v158
    %v4239 = vadd.f32 %v4118, %v159
    %v4240 = vadd.f32 %v4122, %v160
    %v4241 = vadd.f32 %v4124, %v161
    %v4242 = vadd.f32 %v4126, %v162
    %v4243 = vadd.f32 %v4128, %v163
    %v4244 = vadd.f32 %v4132, %v164
    %v4245 = vadd.f32 %v4134, %v165
    %v4246 = vadd.f32 %v4136, %v166
    %v4247 = vadd.f32 %v4138, %v167
    %v4248 = vadd.f32 %v4142, %v168
    %v4249 = vadd.f32 %v4144, %v169
    %v4250 = vadd.f32 %v4146, %v170
    %v4251 = vadd.f32 %v4148, %v171
    %v4252 = vadd.f32 %v4152, %v172
    %v4253 = vadd.f32 %v4154, %v173
    %v4254 = vadd.f32 %v4156, %v174
    %v4255 = vadd.f32 %v4158, %v175
    %4256 = vst [vmem:[#allocation10] sm:$0xff] %v4160
    %4257 = vst [vmem:[#allocation10 + $0x8] sm:$0xff] %v4161
    %4258 = vst [vmem:[#allocation10 + $0x10] sm:$0xff] %v4162
    %4259 = vst [vmem:[#allocation10 + $0x18] sm:$0xff] %v4163
    %4260 = vst [vmem:[#allocation10 + $0x20] sm:$0xff] %v4164
    %4261 = vst [vmem:[#allocation10 + $0x28] sm:$0xff] %v4165
    %4262 = vst [vmem:[#allocation10 + $0x30] sm:$0xff] %v4166
    %4263 = vst [vmem:[#allocation10 + $0x38] sm:$0xff] %v4167
    %4264 = vst [vmem:[#allocation10 + $0x40] sm:$0xff] %v4168
    %4265 = vst [vmem:[#allocation10 + $0x48] sm:$0xff] %v4169
    %4266 = vst [vmem:[#allocation10 + $0x50] sm:$0xff] %v4170
    %4267 = vst [vmem:[#allocation10 + $0x58] sm:$0xff] %v4171
    %4268 = vst [vmem:[#allocation10 + $0x60] sm:$0xff] %v4172
    %4269 = vst [vmem:[#allocation10 + $0x68] sm:$0xff] %v4173
    %4270 = vst [vmem:[#allocation10 + $0x70] sm:$0xff] %v4174
    %4271 = vst [vmem:[#allocation10 + $0x78] sm:$0xff] %v4175
    %4272 = vst [vmem:[#allocation10 + $0x80] sm:$0xff] %v4176
    %4273 = vst [vmem:[#allocation10 + $0x88] sm:$0xff] %v4177
    %4274 = vst [vmem:[#allocation10 + $0x90] sm:$0xff] %v4178
    %4275 = vst [vmem:[#allocation10 + $0x98] sm:$0xff] %v4179
    %4276 = vst [vmem:[#allocation10 + $0xa0] sm:$0xff] %v4180
    %4277 = vst [vmem:[#allocation10 + $0xa8] sm:$0xff] %v4181
    %4278 = vst [vmem:[#allocation10 + $0xb0] sm:$0xff] %v4182
    %4279 = vst [vmem:[#allocation10 + $0xb8] sm:$0xff] %v4183
    %4280 = vst [vmem:[#allocation10 + $0xc0] sm:$0xff] %v4184
    %4281 = vst [vmem:[#allocation10 + $0xc8] sm:$0xff] %v4185
    %4282 = vst [vmem:[#allocation10 + $0xd0] sm:$0xff] %v4186
    %4283 = vst [vmem:[#allocation10 + $0xd8] sm:$0xff] %v4187
    %4284 = vst [vmem:[#allocation10 + $0xe0] sm:$0xff] %v4188
    %4285 = vst [vmem:[#allocation10 + $0xe8] sm:$0xff] %v4189
    %4286 = vst [vmem:[#allocation10 + $0xf0] sm:$0xff] %v4190
    %4287 = vst [vmem:[#allocation10 + $0xf8] sm:$0xff] %v4191
    %4288 = vst [vmem:[#allocation10 + $0x100] sm:$0xff] %v4192
    %4289 = vst [vmem:[#allocation10 + $0x108] sm:$0xff] %v4193
    %4290 = vst [vmem:[#allocation10 + $0x110] sm:$0xff] %v4194
    %4291 = vst [vmem:[#allocation10 + $0x118] sm:$0xff] %v4195
    %4292 = vst [vmem:[#allocation10 + $0x120] sm:$0xff] %v4196
    %4293 = vst [vmem:[#allocation10 + $0x128] sm:$0xff] %v4197
    %4294 = vst [vmem:[#allocation10 + $0x130] sm:$0xff] %v4198
    %4295 = vst [vmem:[#allocation10 + $0x138] sm:$0xff] %v4199
    %4296 = vst [vmem:[#allocation10 + $0x140] sm:$0xff] %v4200
    %4297 = vst [vmem:[#allocation10 + $0x148] sm:$0xff] %v4201
    %4298 = vst [vmem:[#allocation10 + $0x150] sm:$0xff] %v4202
    %4299 = vst [vmem:[#allocation10 + $0x158] sm:$0xff] %v4203
    %4300 = vst [vmem:[#allocation10 + $0x160] sm:$0xff] %v4204
    %4301 = vst [vmem:[#allocation10 + $0x168] sm:$0xff] %v4205
    %4302 = vst [vmem:[#allocation10 + $0x170] sm:$0xff] %v4206
    %4303 = vst [vmem:[#allocation10 + $0x178] sm:$0xff] %v4207
    %4304 = vst [vmem:[#allocation10 + $0x180] sm:$0xff] %v4208
    %4305 = vst [vmem:[#allocation10 + $0x188] sm:$0xff] %v4209
    %4306 = vst [vmem:[#allocation10 + $0x190] sm:$0xff] %v4210
    %4307 = vst [vmem:[#allocation10 + $0x198] sm:$0xff] %v4211
    %4308 = vst [vmem:[#allocation10 + $0x1a0] sm:$0xff] %v4212
    %4309 = vst [vmem:[#allocation10 + $0x1a8] sm:$0xff] %v4213
    %4310 = vst [vmem:[#allocation10 + $0x1b0] sm:$0xff] %v4214
    %4311 = vst [vmem:[#allocation10 + $0x1b8] sm:$0xff] %v4215
    %4312 = vst [vmem:[#allocation10 + $0x1c0] sm:$0xff] %v4216
    %4313 = vst [vmem:[#allocation10 + $0x1c8] sm:$0xff] %v4217
    %4314 = vst [vmem:[#allocation10 + $0x1d0] sm:$0xff] %v4218
    %4315 = vst [vmem:[#allocation10 + $0x1d8] sm:$0xff] %v4219
    %4316 = vst [vmem:[#allocation10 + $0x1e0] sm:$0xff] %v4220
    %4317 = vst [vmem:[#allocation10 + $0x1e8] sm:$0xff] %v4221
    %4318 = vst [vmem:[#allocation10 + $0x1f0] sm:$0xff] %v4222
    %4319 = vst [vmem:[#allocation10 + $0x1f8] sm:$0xff] %v4223
    %4320 = vst [vmem:[#allocation10 + $0x200] sm:$0xff] %v4224
    %4321 = vst [vmem:[#allocation10 + $0x208] sm:$0xff] %v4225
    %4322 = vst [vmem:[#allocation10 + $0x210] sm:$0xff] %v4226
    %4323 = vst [vmem:[#allocation10 + $0x218] sm:$0xff] %v4227
    %4324 = vst [vmem:[#allocation10 + $0x220] sm:$0xff] %v4228
    %4325 = vst [vmem:[#allocation10 + $0x228] sm:$0xff] %v4229
    %4326 = vst [vmem:[#allocation10 + $0x230] sm:$0xff] %v4230
    %4327 = vst [vmem:[#allocation10 + $0x238] sm:$0xff] %v4231
    %4328 = vst [vmem:[#allocation10 + $0x240] sm:$0xff] %v4232
    %4329 = vst [vmem:[#allocation10 + $0x248] sm:$0xff] %v4233
    %4330 = vst [vmem:[#allocation10 + $0x250] sm:$0xff] %v4234
    %4331 = vst [vmem:[#allocation10 + $0x258] sm:$0xff] %v4235
    %4332 = vst [vmem:[#allocation10 + $0x260] sm:$0xff] %v4236
    %4333 = vst [vmem:[#allocation10 + $0x268] sm:$0xff] %v4237
    %4334 = vst [vmem:[#allocation10 + $0x270] sm:$0xff] %v4238
    %4335 = vst [vmem:[#allocation10 + $0x278] sm:$0xff] %v4239
    %4336 = vst [vmem:[#allocation10 + $0x280] sm:$0xff] %v4240
    %4337 = vst [vmem:[#allocation10 + $0x288] sm:$0xff] %v4241
    %4338 = vst [vmem:[#allocation10 + $0x290] sm:$0xff] %v4242
    %4339 = vst [vmem:[#allocation10 + $0x298] sm:$0xff] %v4243
    %4340 = vst [vmem:[#allocation10 + $0x2a0] sm:$0xff] %v4244
    %4341 = vst [vmem:[#allocation10 + $0x2a8] sm:$0xff] %v4245
    %4342 = vst [vmem:[#allocation10 + $0x2b0] sm:$0xff] %v4246
    %4343 = vst [vmem:[#allocation10 + $0x2b8] sm:$0xff] %v4247
    %4344 = vst [vmem:[#allocation10 + $0x2c0] sm:$0xff] %v4248
    %4345 = vst [vmem:[#allocation10 + $0x2c8] sm:$0xff] %v4249
    %4346 = vst [vmem:[#allocation10 + $0x2d0] sm:$0xff] %v4250
    %4347 = vst [vmem:[#allocation10 + $0x2d8] sm:$0xff] %v4251
    %4348 = vst [vmem:[#allocation10 + $0x2e0] sm:$0xff] %v4252
    %4349 = vst [vmem:[#allocation10 + $0x2e8] sm:$0xff] %v4253
    %4350 = vst [vmem:[#allocation10 + $0x2f0] sm:$0xff] %v4254
    %4351 = vst [vmem:[#allocation10 + $0x2f8] sm:$0xff] %v4255
    // Predicated region
    $region46: #{tpu_custom_call.1} parent=1 // pred_check
      _
    $region47: #{tpu_custom_call.1} parent=1 // pred_check_branch
      %4353 = sbr.rel (0) target = $region49
    $region48: #{tpu_custom_call.1} parent=1 // pred_region
      %s4355 = ssub.s32 12288, 12288
      %4356 = vsyncadd [#allocation4], %s4355
      %s4357 = sshll.u32 [#allocation10], 4
      %s4358 = int_to_ptr.vmem [resolvable:$true] %s4357
      %4363 = dma.vmem_to_hbm [thread:$0]  %s4358, 12288, %s7, [#allocation4], 256, 256, 16
    $region49: #{tpu_custom_call.1} parent=1 // pred_fallthru
      _
    // Predicated region
    $region50: #{tpu_custom_call.1} parent=1 // pred_check
      _
    $region51: #{tpu_custom_call.1} parent=1 // pred_check_branch
      %4365 = sbr.rel (0) target = $region53
    $region52: #{tpu_custom_call.1} parent=1 // pred_region
      %4366 = dma.done [#allocation4], 12288
    $region53: #{tpu_custom_call.1} parent=1 // pred_fallthru
      _
    %4367 = vsyncpa [#allocation3], 1
    %4368 = vsyncpa [#allocation6], 1
    %4369 = vsyncpa [#allocation9], 1
    %4370 = vsyncpa [#allocation4], 1

</llo_original>
